<compile_context>
chip_gen: v7x
topology: tpu7x:2x2x1
jax: 0.10.0
libtpu: 0.0.40
codegen_flags: <defaults>
</compile_context>

<pallas_src>
import jax
import jax.numpy as jnp
from jax.experimental import pallas as pl
from jax.experimental.pallas import tpu as pltpu

LANE = 128  # lane width / contraction & output-dim alignment


def _round_up(n, m):
    return ((n + m - 1) // m) * m


def classifier_kernel(x_ref,
                      w1_ref, b1_ref,
                      w2_ref, b2_ref,
                      w3_ref, b3_ref,
                      w34_ref, b34_ref,
                      out_ref, bottleneck_ref):
    # encoder: Linear(784,1024) -> ReLU -> Linear(1024,1024) -> ReLU -> Linear(1024, bd)
    # x arrives pre-cast to bf16 (wrapper); w1/w2 are bf16 -> native MXU bf16 path
    # with fp32 accumulation.
    h = jnp.dot(x_ref[...], w1_ref[...],
                preferred_element_type=jnp.float32) + b1_ref[...]
    h = jnp.maximum(h, 0.0)
    h = jnp.dot(h.astype(jnp.bfloat16), w2_ref[...],
                preferred_element_type=jnp.float32) + b2_ref[...]
    h = jnp.maximum(h, 0.0)
    # bottleneck z from the unfolded w3 path (exact torch semantics); logits from
    # the pre-folded w34 = w3 @ w4 so the two tail matmuls have no serial MXU dep.
    bottleneck_ref[...] = jnp.dot(h, w3_ref[...],
                                  preferred_element_type=jnp.float32) + b3_ref[...]
    out_ref[...] = jnp.dot(h, w34_ref[...],
                           preferred_element_type=jnp.float32) + b34_ref[...]


def init_params(key, input_dim=784, hidden=1024, bottleneck_dim=32, output_dim=10):
    """Matches weight_init_fn: weight ~ N(0, 0.01), bias = 0. Weights stored (in, out)."""
    ks = jax.random.split(key, 4)
    dims = [(input_dim, hidden), (hidden, hidden), (hidden, bottleneck_dim),
            (bottleneck_dim, output_dim)]
    params = []
    for k, (din, dout) in zip(ks, dims):
        w = 0.01 * jax.random.normal(k, (din, dout), dtype=jnp.float32)
        b = jnp.zeros((1, dout), dtype=jnp.float32)  # 2D for TPU-friendly broadcast
        params.append((w, b))
    return params


def prepare_params(params):
    """One-time prep:
      * pad w1's contraction dim to a multiple of 128 (zero rows) and cast the two
        big weights to bf16 (halves the dominant HBM bytes),
      * fold w3->w4 into (w34, b34) for the logits path,
      * pad the narrow output dims (bottleneck, logits) to 128 lanes for dense stores.
    """
    (w1, b1), (w2, b2), (w3, b3), (w4, b4) = params
    k = w1.shape[0]
    k_pad = _round_up(k, LANE)
    bd_pad = _round_up(w3.shape[1], LANE)
    od_pad = _round_up(w4.shape[1], LANE)

    w1p = jnp.pad(w1, ((0, k_pad - k), (0, 0))).astype(jnp.bfloat16)
    w2p = w2.astype(jnp.bfloat16)

    w3p = jnp.pad(w3, ((0, 0), (0, bd_pad - w3.shape[1])))
    b3p = jnp.pad(b3, ((0, 0), (0, bd_pad - b3.shape[1])))

    w34 = jnp.dot(w3, w4)           # no nonlinearity between layers -> exact fold (f32)
    b34 = jnp.dot(b3, w4) + b4
    w34p = jnp.pad(w34, ((0, 0), (0, od_pad - w34.shape[1])))
    b34p = jnp.pad(b34, ((0, 0), (0, od_pad - b34.shape[1])))

    return ((w1p, b1), (w2p, b2), (w3p, b3p), (w34p, b34p))


def _pick_tile_b(b):
    # bf16 x -> 16-row sublane packing; one tile for small batches (no dead 128-row
    # padding), 256-row tiles for big batches to amortize per-step grid overhead.
    if b <= 256:
        return _round_up(b, 16)
    return 256


def classifier_forward(x, prepared_params, *, bottleneck_dim, output_dim):
    (w1, b1), (w2, b2), (w3, b3), (w34, b34) = prepared_params
    B, K = x.shape
    k_pad = w1.shape[0]
    bd_pad = w3.shape[1]
    od_pad = w34.shape[1]

    tile_b = _pick_tile_b(B)
    b_pad = _round_up(B, tile_b)
    n_tiles = b_pad // tile_b

    # pad batch + contraction dim (zero rows/cols -> no-op math) and pre-cast to
    # bf16 so the recurring per-tile x DMA is half-size, no in-kernel convert.
    x_p = jnp.pad(x, ((0, b_pad - B), (0, k_pad - K))).astype(jnp.bfloat16)

    def resident(shape):
        # constant block index -> fetched once, stays in VMEM for every batch tile;
        # single-buffered (nothing to prefetch) to free VMEM headroom.
        return pl.BlockSpec(shape, lambda i: (0,) * len(shape),
                            pipeline_mode=pl.Buffered(1))

    in_specs = [
        pl.BlockSpec((tile_b, k_pad), lambda i: (i, 0)),   # x: tiled over batch
        resident(w1.shape), resident(b1.shape),
        resident(w2.shape), resident(b2.shape),
        resident(w3.shape), resident(b3.shape),
        resident(w34.shape), resident(b34.shape),
    ]
    out_shapes = (
        jax.ShapeDtypeStruct((b_pad, od_pad), jnp.float32),   # logits (lane-padded)
        jax.ShapeDtypeStruct((b_pad, bd_pad), jnp.float32),   # bottleneck (lane-padded)
    )
    out_specs = (
        pl.BlockSpec((tile_b, od_pad), lambda i: (i, 0)),
        pl.BlockSpec((tile_b, bd_pad), lambda i: (i, 0)),
    )

    out, bottleneck = pl.pallas_call(
        classifier_kernel,
        out_shape=out_shapes,
        grid=(n_tiles,),
        in_specs=in_specs,
        out_specs=out_specs,
        compiler_params=pltpu.CompilerParams(
            dimension_semantics=("parallel",),   # batch tiles independent (v7x: 2 TCs)
            vmem_limit_bytes=32 << 20,
        ),
    )(x_p, w1, b1, w2, b2, w3, b3, w34, b34)

    return out[:B, :output_dim], bottleneck[:B, :bottleneck_dim]


def reference_forward(x, params):
    """Pure-JAX reference with the same numerics (bf16 weights on the two big layers)."""
    (w1, b1), (w2, b2), (w3, b3), (w4, b4) = params
    h = jnp.dot(x.astype(jnp.bfloat16), w1.astype(jnp.bfloat16),
                preferred_element_type=jnp.float32) + b1
    h = jnp.maximum(h, 0.0)
    h = jnp.dot(h.astype(jnp.bfloat16), w2.astype(jnp.bfloat16),
                preferred_element_type=jnp.float32) + b2
    h = jnp.maximum(h, 0.0)
    z = jnp.dot(h, w3, preferred_element_type=jnp.float32) + b3
    out = jnp.dot(z, w4, preferred_element_type=jnp.float32) + b4
    return out, z


if __name__ == "__main__":
    key = jax.random.PRNGKey(0)
    k_x, k_p = jax.random.split(key)

    batch = 8
    bottleneck_dim = 32
    output_dim = 10
    x = jax.random.normal(k_x, (batch, 784), dtype=jnp.float32)

    params = init_params(k_p, bottleneck_dim=bottleneck_dim, output_dim=output_dim)
    prepared = prepare_params(params)

    fwd = jax.jit(classifier_forward,
                  static_argnames=("bottleneck_dim", "output_dim"))
    out, bottleneck = fwd(x, prepared,
                          bottleneck_dim=bottleneck_dim, output_dim=output_dim)
    out = jax.block_until_ready(out)
    bottleneck = jax.block_until_ready(bottleneck)

    ref_out, ref_bottleneck = reference_forward(x, params)

    assert out.shape == (batch, output_dim)
    assert bottleneck.shape == (batch, bottleneck_dim)
    assert jnp.allclose(out, ref_out, atol=1e-4, rtol=1e-3), \
        float(jnp.max(jnp.abs(out - ref_out)))
    assert jnp.allclose(bottleneck, ref_bottleneck, atol=1e-4, rtol=1e-3), \
        float(jnp.max(jnp.abs(bottleneck - ref_bottleneck)))

    print("KERNEL_OK")
</pallas_src>

<mosaic_0001>
module attributes {stable_mosaic.version = 11 : i64} {
  func.func @classifier_kernel(%arg0: i32, %arg1: memref<16x896xbf16, #tpu.memory_space<vmem>>, %arg2: memref<896x1024xbf16, #tpu.memory_space<vmem>>, %arg3: memref<1x1024xf32, #tpu.memory_space<vmem>>, %arg4: memref<1024x1024xbf16, #tpu.memory_space<vmem>>, %arg5: memref<1x1024xf32, #tpu.memory_space<vmem>>, %arg6: memref<1024x128xf32, #tpu.memory_space<vmem>>, %arg7: memref<1x128xf32, #tpu.memory_space<vmem>>, %arg8: memref<1024x128xf32, #tpu.memory_space<vmem>>, %arg9: memref<1x128xf32, #tpu.memory_space<vmem>>, %arg10: memref<16x128xf32, #tpu.memory_space<vmem>>, %arg11: memref<16x128xf32, #tpu.memory_space<vmem>>) attributes {dimension_semantics = [#tpu.dimension_semantics<parallel>], iteration_bounds = array<i64: 1>, scalar_prefetch = 0 : i64, scratch_operands = 0 : i64, tpu.core_type = #tpu.core_type<tc>, window_params = [{transform_indices = @transform_0, window_bounds = array<i64: 16, 896>}, {pipeline_mode = #tpu.pipeline_mode<synchronous>, transform_indices = @transform_1, window_bounds = array<i64: 896, 1024>}, {pipeline_mode = #tpu.pipeline_mode<synchronous>, transform_indices = @transform_2, window_bounds = array<i64: 1, 1024>}, {pipeline_mode = #tpu.pipeline_mode<synchronous>, transform_indices = @transform_3, window_bounds = array<i64: 1024, 1024>}, {pipeline_mode = #tpu.pipeline_mode<synchronous>, transform_indices = @transform_4, window_bounds = array<i64: 1, 1024>}, {pipeline_mode = #tpu.pipeline_mode<synchronous>, transform_indices = @transform_5, window_bounds = array<i64: 1024, 128>}, {pipeline_mode = #tpu.pipeline_mode<synchronous>, transform_indices = @transform_6, window_bounds = array<i64: 1, 128>}, {pipeline_mode = #tpu.pipeline_mode<synchronous>, transform_indices = @transform_7, window_bounds = array<i64: 1024, 128>}, {pipeline_mode = #tpu.pipeline_mode<synchronous>, transform_indices = @transform_8, window_bounds = array<i64: 1, 128>}, {transform_indices = @transform_9, window_bounds = array<i64: 16, 128>}, {transform_indices = @transform_10, window_bounds = array<i64: 16, 128>}]} {
    %c0 = arith.constant 0 : index
    %c0_0 = arith.constant 0 : index
    %0 = vector.load %arg1[%c0, %c0_0] : memref<16x896xbf16, #tpu.memory_space<vmem>>, vector<16x896xbf16>
    %c0_1 = arith.constant 0 : index
    %c0_2 = arith.constant 0 : index
    %1 = vector.load %arg2[%c0_1, %c0_2] : memref<896x1024xbf16, #tpu.memory_space<vmem>>, vector<896x1024xbf16>
    %cst = arith.constant dense<0.000000e+00> : vector<16x1024xf32>
    %2 = tpu.matmul %0, %1, %cst {dimension_numbers = #tpu.dot_dimension_numbers<[1], [0], [0], [1], [0, 0, 1, 1], [], []>} : vector<16x896xbf16>, vector<896x1024xbf16>, vector<16x1024xf32> -> vector<16x1024xf32>
    %c0_3 = arith.constant 0 : index
    %c0_4 = arith.constant 0 : index
    %3 = vector.load %arg3[%c0_3, %c0_4] : memref<1x1024xf32, #tpu.memory_space<vmem>>, vector<1x1024xf32>
    %4 = vector.broadcast %3 : vector<1x1024xf32> to vector<16x1024xf32>
    %5 = arith.addf %2, %4 : vector<16x1024xf32>
    %cst_5 = arith.constant 0.000000e+00 : f32
    %6 = vector.broadcast %cst_5 : f32 to vector<16x1024xf32>
    %7 = arith.maximumf %5, %6 : vector<16x1024xf32>
    %8 = arith.truncf %7 : vector<16x1024xf32> to vector<16x1024xbf16>
    %c0_6 = arith.constant 0 : index
    %c0_7 = arith.constant 0 : index
    %9 = vector.load %arg4[%c0_6, %c0_7] : memref<1024x1024xbf16, #tpu.memory_space<vmem>>, vector<1024x1024xbf16>
    %cst_8 = arith.constant dense<0.000000e+00> : vector<16x1024xf32>
    %10 = tpu.matmul %8, %9, %cst_8 {dimension_numbers = #tpu.dot_dimension_numbers<[1], [0], [0], [1], [0, 0, 1, 1], [], []>} : vector<16x1024xbf16>, vector<1024x1024xbf16>, vector<16x1024xf32> -> vector<16x1024xf32>
    %c0_9 = arith.constant 0 : index
    %c0_10 = arith.constant 0 : index
    %11 = vector.load %arg5[%c0_9, %c0_10] : memref<1x1024xf32, #tpu.memory_space<vmem>>, vector<1x1024xf32>
    %12 = vector.broadcast %11 : vector<1x1024xf32> to vector<16x1024xf32>
    %13 = arith.addf %10, %12 : vector<16x1024xf32>
    %cst_11 = arith.constant 0.000000e+00 : f32
    %14 = vector.broadcast %cst_11 : f32 to vector<16x1024xf32>
    %15 = arith.maximumf %13, %14 : vector<16x1024xf32>
    %c0_12 = arith.constant 0 : index
    %c0_13 = arith.constant 0 : index
    %16 = vector.load %arg6[%c0_12, %c0_13] : memref<1024x128xf32, #tpu.memory_space<vmem>>, vector<1024x128xf32>
    %cst_14 = arith.constant dense<0.000000e+00> : vector<16x128xf32>
    %17 = tpu.matmul %15, %16, %cst_14 {dimension_numbers = #tpu.dot_dimension_numbers<[1], [0], [0], [1], [0, 0, 1, 1], [], []>} : vector<16x1024xf32>, vector<1024x128xf32>, vector<16x128xf32> -> vector<16x128xf32>
    %c0_15 = arith.constant 0 : index
    %c0_16 = arith.constant 0 : index
    %18 = vector.load %arg7[%c0_15, %c0_16] : memref<1x128xf32, #tpu.memory_space<vmem>>, vector<1x128xf32>
    %19 = vector.broadcast %18 : vector<1x128xf32> to vector<16x128xf32>
    %20 = arith.addf %17, %19 : vector<16x128xf32>
    %c0_17 = arith.constant 0 : index
    %c0_18 = arith.constant 0 : index
    %21 = vector.load %arg11[%c0_17, %c0_18] : memref<16x128xf32, #tpu.memory_space<vmem>>, vector<16x128xf32>
    tpu.vector_store %arg11[%c0_17, %c0_18], %20 {strides = array<i32>} : memref<16x128xf32, #tpu.memory_space<vmem>>, vector<16x128xf32>,
    %c0_19 = arith.constant 0 : index
    %c0_20 = arith.constant 0 : index
    %22 = vector.load %arg8[%c0_19, %c0_20] : memref<1024x128xf32, #tpu.memory_space<vmem>>, vector<1024x128xf32>
    %cst_21 = arith.constant dense<0.000000e+00> : vector<16x128xf32>
    %23 = tpu.matmul %15, %22, %cst_21 {dimension_numbers = #tpu.dot_dimension_numbers<[1], [0], [0], [1], [0, 0, 1, 1], [], []>} : vector<16x1024xf32>, vector<1024x128xf32>, vector<16x128xf32> -> vector<16x128xf32>
    %c0_22 = arith.constant 0 : index
    %c0_23 = arith.constant 0 : index
    %24 = vector.load %arg9[%c0_22, %c0_23] : memref<1x128xf32, #tpu.memory_space<vmem>>, vector<1x128xf32>
    %25 = vector.broadcast %24 : vector<1x128xf32> to vector<16x128xf32>
    %26 = arith.addf %23, %25 : vector<16x128xf32>
    %c0_24 = arith.constant 0 : index
    %c0_25 = arith.constant 0 : index
    %27 = vector.load %arg10[%c0_24, %c0_25] : memref<16x128xf32, #tpu.memory_space<vmem>>, vector<16x128xf32>
    tpu.vector_store %arg10[%c0_24, %c0_25], %26 {strides = array<i32>} : memref<16x128xf32, #tpu.memory_space<vmem>>, vector<16x128xf32>,
    return
  }
  func.func @transform_0(%arg0: i32) -> (i32, i32) {
    %c0_i32 = arith.constant 0 : i32
    %c0_i32_0 = arith.constant 0 : i32
    return %arg0, %c0_i32 : i32, i32
  }
  func.func @transform_1(%arg0: i32) -> (i32, i32) {
    %c0_i32 = arith.constant 0 : i32
    %c0_i32_0 = arith.constant 0 : i32
    %c0_i32_1 = arith.constant 0 : i32
    return %c0_i32, %c0_i32_0 : i32, i32
  }
  func.func @transform_2(%arg0: i32) -> (i32, i32) {
    %c0_i32 = arith.constant 0 : i32
    %c0_i32_0 = arith.constant 0 : i32
    %c0_i32_1 = arith.constant 0 : i32
    return %c0_i32, %c0_i32_0 : i32, i32
  }
  func.func @transform_3(%arg0: i32) -> (i32, i32) {
    %c0_i32 = arith.constant 0 : i32
    %c0_i32_0 = arith.constant 0 : i32
    %c0_i32_1 = arith.constant 0 : i32
    return %c0_i32, %c0_i32_0 : i32, i32
  }
  func.func @transform_4(%arg0: i32) -> (i32, i32) {
    %c0_i32 = arith.constant 0 : i32
    %c0_i32_0 = arith.constant 0 : i32
    %c0_i32_1 = arith.constant 0 : i32
    return %c0_i32, %c0_i32_0 : i32, i32
  }
  func.func @transform_5(%arg0: i32) -> (i32, i32) {
    %c0_i32 = arith.constant 0 : i32
    %c0_i32_0 = arith.constant 0 : i32
    %c0_i32_1 = arith.constant 0 : i32
    return %c0_i32, %c0_i32_0 : i32, i32
  }
  func.func @transform_6(%arg0: i32) -> (i32, i32) {
    %c0_i32 = arith.constant 0 : i32
    %c0_i32_0 = arith.constant 0 : i32
    %c0_i32_1 = arith.constant 0 : i32
    return %c0_i32, %c0_i32_0 : i32, i32
  }
  func.func @transform_7(%arg0: i32) -> (i32, i32) {
    %c0_i32 = arith.constant 0 : i32
    %c0_i32_0 = arith.constant 0 : i32
    %c0_i32_1 = arith.constant 0 : i32
    return %c0_i32, %c0_i32_0 : i32, i32
  }
  func.func @transform_8(%arg0: i32) -> (i32, i32) {
    %c0_i32 = arith.constant 0 : i32
    %c0_i32_0 = arith.constant 0 : i32
    %c0_i32_1 = arith.constant 0 : i32
    return %c0_i32, %c0_i32_0 : i32, i32
  }
  func.func @transform_9(%arg0: i32) -> (i32, i32) {
    %c0_i32 = arith.constant 0 : i32
    %c0_i32_0 = arith.constant 0 : i32
    return %arg0, %c0_i32 : i32, i32
  }
  func.func @transform_10(%arg0: i32) -> (i32, i32) {
    %c0_i32 = arith.constant 0 : i32
    %c0_i32_0 = arith.constant 0 : i32
    return %arg0, %c0_i32 : i32, i32
  }
}

</mosaic_0001>

<llo_original>
// kernel: classifier_forward.1
$region0: #{classifier_forward.1}
  #allocation0 [shape = 'u32[]', space=smem, size = 0x4, offset = 0x4, fixed_abs, tag = 'smem constant byte address 0x4 - core index']
  #allocation1 [shape = 'u32[144,128]{1,0:T(1,128)}', space=vmem, size = 0x12000, scoped, tag = 'internal scratch']
  %s0 = inlined_call_operand.vmem [shape: bf16[16,896], index: 0, kind: input, shape index: {}]
  %s1 = inlined_call_operand.hbm [shape: bf16[896,1024], index: 1, kind: input, shape index: {}]
  %s2 = inlined_call_operand.hbm [shape: f32[1,1024], index: 2, kind: input, shape index: {}]
  %s3 = inlined_call_operand.hbm [shape: bf16[1024,1024], index: 3, kind: input, shape index: {}]
  %s4 = inlined_call_operand.hbm [shape: f32[1,1024], index: 4, kind: input, shape index: {}]
  %s5 = inlined_call_operand.hbm [shape: f32[1024,128], index: 5, kind: input, shape index: {}]
  %s6 = inlined_call_operand.hbm [shape: f32[1,128], index: 6, kind: input, shape index: {}]
  %s7 = inlined_call_operand.hbm [shape: f32[1024,128], index: 7, kind: input, shape index: {}]
  %s8 = inlined_call_operand.hbm [shape: f32[1,128], index: 8, kind: input, shape index: {}]
  %s9 = inlined_call_operand.vmem [shape: f32[16,128], index: 9, kind: output, shape index: {0}]
  %s10 = inlined_call_operand.vmem [shape: f32[16,128], index: 10, kind: output, shape index: {1}]
  %11 = xla_tuple %s9, %s10
  %s12 = sld [smem:[#allocation0]]
  $region86: #{classifier_forward.1} parent=0
    _
  %s14 = ssub.s32 1, %s12
  %s15 = scalar_select 0, %s14, %s12
  $region1: #{classifier_forward.1} parent=0
    #allocation2 [shape = 'u8[1835008]{0}', space=vmem, size = 0x1c0000, scoped, tag = 'input window, operand 1, single buffered']
    #allocation3 [shape = 's32[1]{0}', space=sflag, size = 0x4, scoped, tag = 'scoped memory for classifier_forward.1']
    #allocation4 [shape = 'u8[4096]{0}', space=vmem, size = 0x1000, scoped, tag = 'input window, operand 2, single buffered']
    #allocation5 [shape = 's32[1]{0}', space=sflag, size = 0x4, scoped, tag = 'scoped memory for classifier_forward.1']
    #allocation6 [shape = 'u8[2097152]{0}', space=vmem, size = 0x200000, scoped, tag = 'input window, operand 3, single buffered']
    #allocation7 [shape = 'u8[4096]{0}', space=vmem, size = 0x1000, scoped, tag = 'input window, operand 4, single buffered']
    #allocation8 [shape = 's32[1]{0}', space=sflag, size = 0x4, scoped, tag = 'scoped memory for classifier_forward.1']
    #allocation9 [shape = 'u8[524288]{0}', space=vmem, size = 0x80000, scoped, tag = 'input window, operand 5, single buffered']
    #allocation10 [shape = 'u8[512]{0}', space=vmem, size = 0x400, scoped, tag = 'input window, operand 6, single buffered']
    #allocation11 [shape = 's32[1]{0}', space=sflag, size = 0x4, scoped, tag = 'scoped memory for classifier_forward.1']
    #allocation12 [shape = 'u8[524288]{0}', space=vmem, size = 0x80000, scoped, tag = 'input window, operand 7, single buffered']
    #allocation13 [shape = 'u8[512]{0}', space=vmem, size = 0x400, scoped, tag = 'input window, operand 8, single buffered']
    #allocation14 [shape = 's32[1]{0}', space=sflag, size = 0x4, scoped, tag = 'scoped memory for classifier_forward.1']
    %16 = vsyncpa [#allocation3], 0
    %17 = vsyncpa [#allocation5], 0
    %18 = vsyncpa [#allocation8], 0
    %19 = vsyncpa [#allocation11], 0
    %20 = vsyncpa [#allocation14], 0
    // Predicated region
    $region2: #{classifier_forward.1} parent=1 // pred_check
      _
    $region3: #{classifier_forward.1} parent=1 // pred_check_branch
      %22 = sbr.rel (0) target = $region5
    $region4: #{classifier_forward.1} parent=1 // pred_region
      _
    $region5: #{classifier_forward.1} parent=1 // pred_fallthru
      _
    // Predicated region
    $region6: #{classifier_forward.1} parent=1 // pred_check
      _
    $region7: #{classifier_forward.1} parent=1 // pred_check_branch
      %24 = sbr.rel (0) target = $region9
    $region8: #{classifier_forward.1} parent=1 // pred_region
      %s26 = ssub.s32 57344, 57344
      %27 = vsyncadd [#allocation3], %s26
      %s28 = sshll.u32 [#allocation2], 4
      %s29 = int_to_ptr.vmem [resolvable:$true] %s28
      %34 = dma.hbm_to_vmem [thread:$0]  %s1, 57344, %s29, [#allocation3], 512, 512, 32
    $region9: #{classifier_forward.1} parent=1 // pred_fallthru
      _
    // Predicated region
    $region10: #{classifier_forward.1} parent=1 // pred_check
      _
    $region11: #{classifier_forward.1} parent=1 // pred_check_branch
      %36 = sbr.rel (0) target = $region13
    $region12: #{classifier_forward.1} parent=1 // pred_region
      %s38 = ssub.s32 128, 128
      %39 = vsyncadd [#allocation5], %s38
      %s41 = sshll.u32 [#allocation4], 4
      %s42 = int_to_ptr.vmem [resolvable:$true] %s41
      %44 = dma.hbm_to_vmem [thread:$0]  %s2, 128, %s42, [#allocation5]
    $region13: #{classifier_forward.1} parent=1 // pred_fallthru
      _
    // Predicated region
    $region14: #{classifier_forward.1} parent=1 // pred_check
      _
    $region15: #{classifier_forward.1} parent=1 // pred_check_branch
      %46 = sbr.rel (0) target = $region17
    $region16: #{classifier_forward.1} parent=1 // pred_region
      %s48 = ssub.s32 65536, 65536
      %49 = vsyncadd [#allocation5], %s48
      %s50 = sshll.u32 [#allocation6], 4
      %s51 = int_to_ptr.vmem [resolvable:$true] %s50
      %56 = dma.hbm_to_vmem [thread:$0]  %s3, 65536, %s51, [#allocation5], 512, 512, 32
    $region17: #{classifier_forward.1} parent=1 // pred_fallthru
      _
    // Predicated region
    $region18: #{classifier_forward.1} parent=1 // pred_check
      _
    $region19: #{classifier_forward.1} parent=1 // pred_check_branch
      %58 = sbr.rel (0) target = $region21
    $region20: #{classifier_forward.1} parent=1 // pred_region
      %s60 = ssub.s32 128, 128
      %61 = vsyncadd [#allocation8], %s60
      %s63 = sshll.u32 [#allocation7], 4
      %s64 = int_to_ptr.vmem [resolvable:$true] %s63
      %66 = dma.hbm_to_vmem [thread:$0]  %s4, 128, %s64, [#allocation8]
    $region21: #{classifier_forward.1} parent=1 // pred_fallthru
      _
    // Predicated region
    $region22: #{classifier_forward.1} parent=1 // pred_check
      _
    $region23: #{classifier_forward.1} parent=1 // pred_check_branch
      %68 = sbr.rel (0) target = $region25
    $region24: #{classifier_forward.1} parent=1 // pred_region
      %s70 = ssub.s32 16384, 16384
      %71 = vsyncadd [#allocation8], %s70
      %s72 = sshll.u32 [#allocation9], 4
      %s73 = int_to_ptr.vmem [resolvable:$true] %s72
      %78 = dma.hbm_to_vmem [thread:$0]  %s5, 16384, %s73, [#allocation8], 128, 128, 8
    $region25: #{classifier_forward.1} parent=1 // pred_fallthru
      _
    // Predicated region
    $region26: #{classifier_forward.1} parent=1 // pred_check
      _
    $region27: #{classifier_forward.1} parent=1 // pred_check_branch
      %80 = sbr.rel (0) target = $region29
    $region28: #{classifier_forward.1} parent=1 // pred_region
      %s82 = ssub.s32 16, 16
      %83 = vsyncadd [#allocation11], %s82
      %s85 = sshll.u32 [#allocation10], 4
      %s86 = int_to_ptr.vmem [resolvable:$true] %s85
      %88 = dma.hbm_to_vmem [thread:$0]  %s6, 16, %s86, [#allocation11]
    $region29: #{classifier_forward.1} parent=1 // pred_fallthru
      _
    // Predicated region
    $region30: #{classifier_forward.1} parent=1 // pred_check
      _
    $region31: #{classifier_forward.1} parent=1 // pred_check_branch
      %90 = sbr.rel (0) target = $region33
    $region32: #{classifier_forward.1} parent=1 // pred_region
      %s92 = ssub.s32 16384, 16384
      %93 = vsyncadd [#allocation11], %s92
      %s94 = sshll.u32 [#allocation12], 4
      %s95 = int_to_ptr.vmem [resolvable:$true] %s94
      %100 = dma.hbm_to_vmem [thread:$0]  %s7, 16384, %s95, [#allocation11], 128, 128, 8
    $region33: #{classifier_forward.1} parent=1 // pred_fallthru
      _
    // Predicated region
    $region34: #{classifier_forward.1} parent=1 // pred_check
      _
    $region35: #{classifier_forward.1} parent=1 // pred_check_branch
      %102 = sbr.rel (0) target = $region37
    $region36: #{classifier_forward.1} parent=1 // pred_region
      %s104 = ssub.s32 16, 16
      %105 = vsyncadd [#allocation14], %s104
      %s107 = sshll.u32 [#allocation13], 4
      %s108 = int_to_ptr.vmem [resolvable:$true] %s107
      %110 = dma.hbm_to_vmem [thread:$0]  %s8, 16, %s108, [#allocation14]
    $region37: #{classifier_forward.1} parent=1 // pred_fallthru
      _
    // Predicated region
    $region38: #{classifier_forward.1} parent=1 // pred_check
      _
    $region39: #{classifier_forward.1} parent=1 // pred_check_branch
      %112 = sbr.rel (0) target = $region41
    $region40: #{classifier_forward.1} parent=1 // pred_region
      %113 = dma.done [#allocation3], 57344
    $region41: #{classifier_forward.1} parent=1 // pred_fallthru
      _
    // Predicated region
    $region42: #{classifier_forward.1} parent=1 // pred_check
      _
    $region43: #{classifier_forward.1} parent=1 // pred_check_branch
      %115 = sbr.rel (0) target = $region45
    $region44: #{classifier_forward.1} parent=1 // pred_region
      %116 = dma.done [#allocation5], 128
    $region45: #{classifier_forward.1} parent=1 // pred_fallthru
      _
    // Predicated region
    $region46: #{classifier_forward.1} parent=1 // pred_check
      _
    $region47: #{classifier_forward.1} parent=1 // pred_check_branch
      %118 = sbr.rel (0) target = $region49
    $region48: #{classifier_forward.1} parent=1 // pred_region
      %119 = dma.done [#allocation5], 65536
    $region49: #{classifier_forward.1} parent=1 // pred_fallthru
      _
    // Predicated region
    $region50: #{classifier_forward.1} parent=1 // pred_check
      _
    $region51: #{classifier_forward.1} parent=1 // pred_check_branch
      %121 = sbr.rel (0) target = $region53
    $region52: #{classifier_forward.1} parent=1 // pred_region
      %122 = dma.done [#allocation8], 128
    $region53: #{classifier_forward.1} parent=1 // pred_fallthru
      _
    // Predicated region
    $region54: #{classifier_forward.1} parent=1 // pred_check
      _
    $region55: #{classifier_forward.1} parent=1 // pred_check_branch
      %124 = sbr.rel (0) target = $region57
    $region56: #{classifier_forward.1} parent=1 // pred_region
      %125 = dma.done [#allocation8], 16384
    $region57: #{classifier_forward.1} parent=1 // pred_fallthru
      _
    // Predicated region
    $region58: #{classifier_forward.1} parent=1 // pred_check
      _
    $region59: #{classifier_forward.1} parent=1 // pred_check_branch
      %127 = sbr.rel (0) target = $region61
    $region60: #{classifier_forward.1} parent=1 // pred_region
      %128 = dma.done [#allocation11], 16
    $region61: #{classifier_forward.1} parent=1 // pred_fallthru
      _
    // Predicated region
    $region62: #{classifier_forward.1} parent=1 // pred_check
      _
    $region63: #{classifier_forward.1} parent=1 // pred_check_branch
      %130 = sbr.rel (0) target = $region65
    $region64: #{classifier_forward.1} parent=1 // pred_region
      %131 = dma.done [#allocation11], 16384
    $region65: #{classifier_forward.1} parent=1 // pred_fallthru
      _
    // Predicated region
    $region66: #{classifier_forward.1} parent=1 // pred_check
      _
    $region67: #{classifier_forward.1} parent=1 // pred_check_branch
      %133 = sbr.rel (0) target = $region69
    $region68: #{classifier_forward.1} parent=1 // pred_region
      %134 = dma.done [#allocation14], 16
    $region69: #{classifier_forward.1} parent=1 // pred_fallthru
      _
    %v136 = vld [vmem:[%s0] sm:$0xff]
    %v137 = vld [vmem:[%s0 + $0x8] sm:$0xff]
    %v138 = vld [vmem:[%s0 + $0x10] sm:$0xff]
    %v139 = vld [vmem:[%s0 + $0x18] sm:$0xf]
    %v140 = vld [vmem:[%s0 + $0x1c] sm:$0xff]
    %v141 = vld [vmem:[%s0 + $0x24] sm:$0xff]
    %v142 = vld [vmem:[%s0 + $0x2c] sm:$0xff]
    %v143 = vld [vmem:[%s0 + $0x34] sm:$0xf]
    %v144 = vld [vmem:[#allocation2] sm:$0xff]
    %v145 = vld [vmem:[#allocation2 + $0x8] sm:$0xff]
    %v146 = vld [vmem:[#allocation2 + $0x10] sm:$0xff]
    %v147 = vld [vmem:[#allocation2 + $0x18] sm:$0xff]
    %v148 = vld [vmem:[#allocation2 + $0x20] sm:$0xff]
    %v149 = vld [vmem:[#allocation2 + $0x28] sm:$0xff]
    %v150 = vld [vmem:[#allocation2 + $0x30] sm:$0xff]
    %v151 = vld [vmem:[#allocation2 + $0x38] sm:$0xff]
    %v152 = vld [vmem:[#allocation2 + $0x40] sm:$0xff]
    %v153 = vld [vmem:[#allocation2 + $0x48] sm:$0xff]
    %v154 = vld [vmem:[#allocation2 + $0x50] sm:$0xff]
    %v155 = vld [vmem:[#allocation2 + $0x58] sm:$0xff]
    %v156 = vld [vmem:[#allocation2 + $0x60] sm:$0xff]
    %v157 = vld [vmem:[#allocation2 + $0x68] sm:$0xff]
    %v158 = vld [vmem:[#allocation2 + $0x70] sm:$0xff]
    %v159 = vld [vmem:[#allocation2 + $0x78] sm:$0xff]
    %v160 = vld [vmem:[#allocation2 + $0x80] sm:$0xff]
    %v161 = vld [vmem:[#allocation2 + $0x88] sm:$0xff]
    %v162 = vld [vmem:[#allocation2 + $0x90] sm:$0xff]
    %v163 = vld [vmem:[#allocation2 + $0x98] sm:$0xff]
    %v164 = vld [vmem:[#allocation2 + $0xa0] sm:$0xff]
    %v165 = vld [vmem:[#allocation2 + $0xa8] sm:$0xff]
    %v166 = vld [vmem:[#allocation2 + $0xb0] sm:$0xff]
    %v167 = vld [vmem:[#allocation2 + $0xb8] sm:$0xff]
    %v168 = vld [vmem:[#allocation2 + $0xc0] sm:$0xff]
    %v169 = vld [vmem:[#allocation2 + $0xc8] sm:$0xff]
    %v170 = vld [vmem:[#allocation2 + $0xd0] sm:$0xff]
    %v171 = vld [vmem:[#allocation2 + $0xd8] sm:$0xff]
    %v172 = vld [vmem:[#allocation2 + $0xe0] sm:$0xff]
    %v173 = vld [vmem:[#allocation2 + $0xe8] sm:$0xff]
    %v174 = vld [vmem:[#allocation2 + $0xf0] sm:$0xff]
    %v175 = vld [vmem:[#allocation2 + $0xf8] sm:$0xff]
    %v176 = vld [vmem:[#allocation2 + $0x100] sm:$0xff]
    %v177 = vld [vmem:[#allocation2 + $0x108] sm:$0xff]
    %v178 = vld [vmem:[#allocation2 + $0x110] sm:$0xff]
    %v179 = vld [vmem:[#allocation2 + $0x118] sm:$0xff]
    %v180 = vld [vmem:[#allocation2 + $0x120] sm:$0xff]
    %v181 = vld [vmem:[#allocation2 + $0x128] sm:$0xff]
    %v182 = vld [vmem:[#allocation2 + $0x130] sm:$0xff]
    %v183 = vld [vmem:[#allocation2 + $0x138] sm:$0xff]
    %v184 = vld [vmem:[#allocation2 + $0x140] sm:$0xff]
    %v185 = vld [vmem:[#allocation2 + $0x148] sm:$0xff]
    %v186 = vld [vmem:[#allocation2 + $0x150] sm:$0xff]
    %v187 = vld [vmem:[#allocation2 + $0x158] sm:$0xff]
    %v188 = vld [vmem:[#allocation2 + $0x160] sm:$0xff]
    %v189 = vld [vmem:[#allocation2 + $0x168] sm:$0xff]
    %v190 = vld [vmem:[#allocation2 + $0x170] sm:$0xff]
    %v191 = vld [vmem:[#allocation2 + $0x178] sm:$0xff]
    %v192 = vld [vmem:[#allocation2 + $0x180] sm:$0xff]
    %v193 = vld [vmem:[#allocation2 + $0x188] sm:$0xff]
    %v194 = vld [vmem:[#allocation2 + $0x190] sm:$0xff]
    %v195 = vld [vmem:[#allocation2 + $0x198] sm:$0xff]
    %v196 = vld [vmem:[#allocation2 + $0x1a0] sm:$0xff]
    %v197 = vld [vmem:[#allocation2 + $0x1a8] sm:$0xff]
    %v198 = vld [vmem:[#allocation2 + $0x1b0] sm:$0xff]
    %v199 = vld [vmem:[#allocation2 + $0x1b8] sm:$0xff]
    %v200 = vld [vmem:[#allocation2 + $0x1c0] sm:$0xff]
    %v201 = vld [vmem:[#allocation2 + $0x1c8] sm:$0xff]
    %v202 = vld [vmem:[#allocation2 + $0x1d0] sm:$0xff]
    %v203 = vld [vmem:[#allocation2 + $0x1d8] sm:$0xff]
    %v204 = vld [vmem:[#allocation2 + $0x1e0] sm:$0xff]
    %v205 = vld [vmem:[#allocation2 + $0x1e8] sm:$0xff]
    %v206 = vld [vmem:[#allocation2 + $0x1f0] sm:$0xff]
    %v207 = vld [vmem:[#allocation2 + $0x1f8] sm:$0xff]
    %v208 = vld [vmem:[#allocation2 + $0x200] sm:$0xff]
    %v209 = vld [vmem:[#allocation2 + $0x208] sm:$0xff]
    %v210 = vld [vmem:[#allocation2 + $0x210] sm:$0xff]
    %v211 = vld [vmem:[#allocation2 + $0x218] sm:$0xff]
    %v212 = vld [vmem:[#allocation2 + $0x220] sm:$0xff]
    %v213 = vld [vmem:[#allocation2 + $0x228] sm:$0xff]
    %v214 = vld [vmem:[#allocation2 + $0x230] sm:$0xff]
    %v215 = vld [vmem:[#allocation2 + $0x238] sm:$0xff]
    %v216 = vld [vmem:[#allocation2 + $0x240] sm:$0xff]
    %v217 = vld [vmem:[#allocation2 + $0x248] sm:$0xff]
    %v218 = vld [vmem:[#allocation2 + $0x250] sm:$0xff]
    %v219 = vld [vmem:[#allocation2 + $0x258] sm:$0xff]
    %v220 = vld [vmem:[#allocation2 + $0x260] sm:$0xff]
    %v221 = vld [vmem:[#allocation2 + $0x268] sm:$0xff]
    %v222 = vld [vmem:[#allocation2 + $0x270] sm:$0xff]
    %v223 = vld [vmem:[#allocation2 + $0x278] sm:$0xff]
    %v224 = vld [vmem:[#allocation2 + $0x280] sm:$0xff]
    %v225 = vld [vmem:[#allocation2 + $0x288] sm:$0xff]
    %v226 = vld [vmem:[#allocation2 + $0x290] sm:$0xff]
    %v227 = vld [vmem:[#allocation2 + $0x298] sm:$0xff]
    %v228 = vld [vmem:[#allocation2 + $0x2a0] sm:$0xff]
    %v229 = vld [vmem:[#allocation2 + $0x2a8] sm:$0xff]
    %v230 = vld [vmem:[#allocation2 + $0x2b0] sm:$0xff]
    %v231 = vld [vmem:[#allocation2 + $0x2b8] sm:$0xff]
    %v232 = vld [vmem:[#allocation2 + $0x2c0] sm:$0xff]
    %v233 = vld [vmem:[#allocation2 + $0x2c8] sm:$0xff]
    %v234 = vld [vmem:[#allocation2 + $0x2d0] sm:$0xff]
    %v235 = vld [vmem:[#allocation2 + $0x2d8] sm:$0xff]
    %v236 = vld [vmem:[#allocation2 + $0x2e0] sm:$0xff]
    %v237 = vld [vmem:[#allocation2 + $0x2e8] sm:$0xff]
    %v238 = vld [vmem:[#allocation2 + $0x2f0] sm:$0xff]
    %v239 = vld [vmem:[#allocation2 + $0x2f8] sm:$0xff]
    %v240 = vld [vmem:[#allocation2 + $0x300] sm:$0xff]
    %v241 = vld [vmem:[#allocation2 + $0x308] sm:$0xff]
    %v242 = vld [vmem:[#allocation2 + $0x310] sm:$0xff]
    %v243 = vld [vmem:[#allocation2 + $0x318] sm:$0xff]
    %v244 = vld [vmem:[#allocation2 + $0x320] sm:$0xff]
    %v245 = vld [vmem:[#allocation2 + $0x328] sm:$0xff]
    %v246 = vld [vmem:[#allocation2 + $0x330] sm:$0xff]
    %v247 = vld [vmem:[#allocation2 + $0x338] sm:$0xff]
    %v248 = vld [vmem:[#allocation2 + $0x340] sm:$0xff]
    %v249 = vld [vmem:[#allocation2 + $0x348] sm:$0xff]
    %v250 = vld [vmem:[#allocation2 + $0x350] sm:$0xff]
    %v251 = vld [vmem:[#allocation2 + $0x358] sm:$0xff]
    %v252 = vld [vmem:[#allocation2 + $0x360] sm:$0xff]
    %v253 = vld [vmem:[#allocation2 + $0x368] sm:$0xff]
    %v254 = vld [vmem:[#allocation2 + $0x370] sm:$0xff]
    %v255 = vld [vmem:[#allocation2 + $0x378] sm:$0xff]
    %v256 = vld [vmem:[#allocation2 + $0x380] sm:$0xff]
    %v257 = vld [vmem:[#allocation2 + $0x388] sm:$0xff]
    %v258 = vld [vmem:[#allocation2 + $0x390] sm:$0xff]
    %v259 = vld [vmem:[#allocation2 + $0x398] sm:$0xff]
    %v260 = vld [vmem:[#allocation2 + $0x3a0] sm:$0xff]
    %v261 = vld [vmem:[#allocation2 + $0x3a8] sm:$0xff]
    %v262 = vld [vmem:[#allocation2 + $0x3b0] sm:$0xff]
    %v263 = vld [vmem:[#allocation2 + $0x3b8] sm:$0xff]
    %v264 = vld [vmem:[#allocation2 + $0x3c0] sm:$0xff]
    %v265 = vld [vmem:[#allocation2 + $0x3c8] sm:$0xff]
    %v266 = vld [vmem:[#allocation2 + $0x3d0] sm:$0xff]
    %v267 = vld [vmem:[#allocation2 + $0x3d8] sm:$0xff]
    %v268 = vld [vmem:[#allocation2 + $0x3e0] sm:$0xff]
    %v269 = vld [vmem:[#allocation2 + $0x3e8] sm:$0xff]
    %v270 = vld [vmem:[#allocation2 + $0x3f0] sm:$0xff]
    %v271 = vld [vmem:[#allocation2 + $0x3f8] sm:$0xff]
    %v272 = vld [vmem:[#allocation2 + $0x400] sm:$0xff]
    %v273 = vld [vmem:[#allocation2 + $0x408] sm:$0xff]
    %v274 = vld [vmem:[#allocation2 + $0x410] sm:$0xff]
    %v275 = vld [vmem:[#allocation2 + $0x418] sm:$0xff]
    %v276 = vld [vmem:[#allocation2 + $0x420] sm:$0xff]
    %v277 = vld [vmem:[#allocation2 + $0x428] sm:$0xff]
    %v278 = vld [vmem:[#allocation2 + $0x430] sm:$0xff]
    %v279 = vld [vmem:[#allocation2 + $0x438] sm:$0xff]
    %v280 = vld [vmem:[#allocation2 + $0x440] sm:$0xff]
    %v281 = vld [vmem:[#allocation2 + $0x448] sm:$0xff]
    %v282 = vld [vmem:[#allocation2 + $0x450] sm:$0xff]
    %v283 = vld [vmem:[#allocation2 + $0x458] sm:$0xff]
    %v284 = vld [vmem:[#allocation2 + $0x460] sm:$0xff]
    %v285 = vld [vmem:[#allocation2 + $0x468] sm:$0xff]
    %v286 = vld [vmem:[#allocation2 + $0x470] sm:$0xff]
    %v287 = vld [vmem:[#allocation2 + $0x478] sm:$0xff]
    %v288 = vld [vmem:[#allocation2 + $0x480] sm:$0xff]
    %v289 = vld [vmem:[#allocation2 + $0x488] sm:$0xff]
    %v290 = vld [vmem:[#allocation2 + $0x490] sm:$0xff]
    %v291 = vld [vmem:[#allocation2 + $0x498] sm:$0xff]
    %v292 = vld [vmem:[#allocation2 + $0x4a0] sm:$0xff]
    %v293 = vld [vmem:[#allocation2 + $0x4a8] sm:$0xff]
    %v294 = vld [vmem:[#allocation2 + $0x4b0] sm:$0xff]
    %v295 = vld [vmem:[#allocation2 + $0x4b8] sm:$0xff]
    %v296 = vld [vmem:[#allocation2 + $0x4c0] sm:$0xff]
    %v297 = vld [vmem:[#allocation2 + $0x4c8] sm:$0xff]
    %v298 = vld [vmem:[#allocation2 + $0x4d0] sm:$0xff]
    %v299 = vld [vmem:[#allocation2 + $0x4d8] sm:$0xff]
    %v300 = vld [vmem:[#allocation2 + $0x4e0] sm:$0xff]
    %v301 = vld [vmem:[#allocation2 + $0x4e8] sm:$0xff]
    %v302 = vld [vmem:[#allocation2 + $0x4f0] sm:$0xff]
    %v303 = vld [vmem:[#allocation2 + $0x4f8] sm:$0xff]
    %v304 = vld [vmem:[#allocation2 + $0x500] sm:$0xff]
    %v305 = vld [vmem:[#allocation2 + $0x508] sm:$0xff]
    %v306 = vld [vmem:[#allocation2 + $0x510] sm:$0xff]
    %v307 = vld [vmem:[#allocation2 + $0x518] sm:$0xff]
    %v308 = vld [vmem:[#allocation2 + $0x520] sm:$0xff]
    %v309 = vld [vmem:[#allocation2 + $0x528] sm:$0xff]
    %v310 = vld [vmem:[#allocation2 + $0x530] sm:$0xff]
    %v311 = vld [vmem:[#allocation2 + $0x538] sm:$0xff]
    %v312 = vld [vmem:[#allocation2 + $0x540] sm:$0xff]
    %v313 = vld [vmem:[#allocation2 + $0x548] sm:$0xff]
    %v314 = vld [vmem:[#allocation2 + $0x550] sm:$0xff]
    %v315 = vld [vmem:[#allocation2 + $0x558] sm:$0xff]
    %v316 = vld [vmem:[#allocation2 + $0x560] sm:$0xff]
    %v317 = vld [vmem:[#allocation2 + $0x568] sm:$0xff]
    %v318 = vld [vmem:[#allocation2 + $0x570] sm:$0xff]
    %v319 = vld [vmem:[#allocation2 + $0x578] sm:$0xff]
    %v320 = vld [vmem:[#allocation2 + $0x580] sm:$0xff]
    %v321 = vld [vmem:[#allocation2 + $0x588] sm:$0xff]
    %v322 = vld [vmem:[#allocation2 + $0x590] sm:$0xff]
    %v323 = vld [vmem:[#allocation2 + $0x598] sm:$0xff]
    %v324 = vld [vmem:[#allocation2 + $0x5a0] sm:$0xff]
    %v325 = vld [vmem:[#allocation2 + $0x5a8] sm:$0xff]
    %v326 = vld [vmem:[#allocation2 + $0x5b0] sm:$0xff]
    %v327 = vld [vmem:[#allocation2 + $0x5b8] sm:$0xff]
    %v328 = vld [vmem:[#allocation2 + $0x5c0] sm:$0xff]
    %v329 = vld [vmem:[#allocation2 + $0x5c8] sm:$0xff]
    %v330 = vld [vmem:[#allocation2 + $0x5d0] sm:$0xff]
    %v331 = vld [vmem:[#allocation2 + $0x5d8] sm:$0xff]
    %v332 = vld [vmem:[#allocation2 + $0x5e0] sm:$0xff]
    %v333 = vld [vmem:[#allocation2 + $0x5e8] sm:$0xff]
    %v334 = vld [vmem:[#allocation2 + $0x5f0] sm:$0xff]
    %v335 = vld [vmem:[#allocation2 + $0x5f8] sm:$0xff]
    %v336 = vld [vmem:[#allocation2 + $0x600] sm:$0xff]
    %v337 = vld [vmem:[#allocation2 + $0x608] sm:$0xff]
    %v338 = vld [vmem:[#allocation2 + $0x610] sm:$0xff]
    %v339 = vld [vmem:[#allocation2 + $0x618] sm:$0xff]
    %v340 = vld [vmem:[#allocation2 + $0x620] sm:$0xff]
    %v341 = vld [vmem:[#allocation2 + $0x628] sm:$0xff]
    %v342 = vld [vmem:[#allocation2 + $0x630] sm:$0xff]
    %v343 = vld [vmem:[#allocation2 + $0x638] sm:$0xff]
    %v344 = vld [vmem:[#allocation2 + $0x640] sm:$0xff]
    %v345 = vld [vmem:[#allocation2 + $0x648] sm:$0xff]
    %v346 = vld [vmem:[#allocation2 + $0x650] sm:$0xff]
    %v347 = vld [vmem:[#allocation2 + $0x658] sm:$0xff]
    %v348 = vld [vmem:[#allocation2 + $0x660] sm:$0xff]
    %v349 = vld [vmem:[#allocation2 + $0x668] sm:$0xff]
    %v350 = vld [vmem:[#allocation2 + $0x670] sm:$0xff]
    %v351 = vld [vmem:[#allocation2 + $0x678] sm:$0xff]
    %v352 = vld [vmem:[#allocation2 + $0x680] sm:$0xff]
    %v353 = vld [vmem:[#allocation2 + $0x688] sm:$0xff]
    %v354 = vld [vmem:[#allocation2 + $0x690] sm:$0xff]
    %v355 = vld [vmem:[#allocation2 + $0x698] sm:$0xff]
    %v356 = vld [vmem:[#allocation2 + $0x6a0] sm:$0xff]
    %v357 = vld [vmem:[#allocation2 + $0x6a8] sm:$0xff]
    %v358 = vld [vmem:[#allocation2 + $0x6b0] sm:$0xff]
    %v359 = vld [vmem:[#allocation2 + $0x6b8] sm:$0xff]
    %v360 = vld [vmem:[#allocation2 + $0x6c0] sm:$0xff]
    %v361 = vld [vmem:[#allocation2 + $0x6c8] sm:$0xff]
    %v362 = vld [vmem:[#allocation2 + $0x6d0] sm:$0xff]
    %v363 = vld [vmem:[#allocation2 + $0x6d8] sm:$0xff]
    %v364 = vld [vmem:[#allocation2 + $0x6e0] sm:$0xff]
    %v365 = vld [vmem:[#allocation2 + $0x6e8] sm:$0xff]
    %v366 = vld [vmem:[#allocation2 + $0x6f0] sm:$0xff]
    %v367 = vld [vmem:[#allocation2 + $0x6f8] sm:$0xff]
    %v368 = vld [vmem:[#allocation2 + $0x700] sm:$0xff]
    %v369 = vld [vmem:[#allocation2 + $0x708] sm:$0xff]
    %v370 = vld [vmem:[#allocation2 + $0x710] sm:$0xff]
    %v371 = vld [vmem:[#allocation2 + $0x718] sm:$0xff]
    %v372 = vld [vmem:[#allocation2 + $0x720] sm:$0xff]
    %v373 = vld [vmem:[#allocation2 + $0x728] sm:$0xff]
    %v374 = vld [vmem:[#allocation2 + $0x730] sm:$0xff]
    %v375 = vld [vmem:[#allocation2 + $0x738] sm:$0xff]
    %v376 = vld [vmem:[#allocation2 + $0x740] sm:$0xff]
    %v377 = vld [vmem:[#allocation2 + $0x748] sm:$0xff]
    %v378 = vld [vmem:[#allocation2 + $0x750] sm:$0xff]
    %v379 = vld [vmem:[#allocation2 + $0x758] sm:$0xff]
    %v380 = vld [vmem:[#allocation2 + $0x760] sm:$0xff]
    %v381 = vld [vmem:[#allocation2 + $0x768] sm:$0xff]
    %v382 = vld [vmem:[#allocation2 + $0x770] sm:$0xff]
    %v383 = vld [vmem:[#allocation2 + $0x778] sm:$0xff]
    %v384 = vld [vmem:[#allocation2 + $0x780] sm:$0xff]
    %v385 = vld [vmem:[#allocation2 + $0x788] sm:$0xff]
    %v386 = vld [vmem:[#allocation2 + $0x790] sm:$0xff]
    %v387 = vld [vmem:[#allocation2 + $0x798] sm:$0xff]
    %v388 = vld [vmem:[#allocation2 + $0x7a0] sm:$0xff]
    %v389 = vld [vmem:[#allocation2 + $0x7a8] sm:$0xff]
    %v390 = vld [vmem:[#allocation2 + $0x7b0] sm:$0xff]
    %v391 = vld [vmem:[#allocation2 + $0x7b8] sm:$0xff]
    %v392 = vld [vmem:[#allocation2 + $0x7c0] sm:$0xff]
    %v393 = vld [vmem:[#allocation2 + $0x7c8] sm:$0xff]
    %v394 = vld [vmem:[#allocation2 + $0x7d0] sm:$0xff]
    %v395 = vld [vmem:[#allocation2 + $0x7d8] sm:$0xff]
    %v396 = vld [vmem:[#allocation2 + $0x7e0] sm:$0xff]
    %v397 = vld [vmem:[#allocation2 + $0x7e8] sm:$0xff]
    %v398 = vld [vmem:[#allocation2 + $0x7f0] sm:$0xff]
    %v399 = vld [vmem:[#allocation2 + $0x7f8] sm:$0xff]
    %v400 = vld [vmem:[#allocation2 + $0x800] sm:$0xff]
    %v401 = vld [vmem:[#allocation2 + $0x808] sm:$0xff]
    %v402 = vld [vmem:[#allocation2 + $0x810] sm:$0xff]
    %v403 = vld [vmem:[#allocation2 + $0x818] sm:$0xff]
    %v404 = vld [vmem:[#allocation2 + $0x820] sm:$0xff]
    %v405 = vld [vmem:[#allocation2 + $0x828] sm:$0xff]
    %v406 = vld [vmem:[#allocation2 + $0x830] sm:$0xff]
    %v407 = vld [vmem:[#allocation2 + $0x838] sm:$0xff]
    %v408 = vld [vmem:[#allocation2 + $0x840] sm:$0xff]
    %v409 = vld [vmem:[#allocation2 + $0x848] sm:$0xff]
    %v410 = vld [vmem:[#allocation2 + $0x850] sm:$0xff]
    %v411 = vld [vmem:[#allocation2 + $0x858] sm:$0xff]
    %v412 = vld [vmem:[#allocation2 + $0x860] sm:$0xff]
    %v413 = vld [vmem:[#allocation2 + $0x868] sm:$0xff]
    %v414 = vld [vmem:[#allocation2 + $0x870] sm:$0xff]
    %v415 = vld [vmem:[#allocation2 + $0x878] sm:$0xff]
    %v416 = vld [vmem:[#allocation2 + $0x880] sm:$0xff]
    %v417 = vld [vmem:[#allocation2 + $0x888] sm:$0xff]
    %v418 = vld [vmem:[#allocation2 + $0x890] sm:$0xff]
    %v419 = vld [vmem:[#allocation2 + $0x898] sm:$0xff]
    %v420 = vld [vmem:[#allocation2 + $0x8a0] sm:$0xff]
    %v421 = vld [vmem:[#allocation2 + $0x8a8] sm:$0xff]
    %v422 = vld [vmem:[#allocation2 + $0x8b0] sm:$0xff]
    %v423 = vld [vmem:[#allocation2 + $0x8b8] sm:$0xff]
    %v424 = vld [vmem:[#allocation2 + $0x8c0] sm:$0xff]
    %v425 = vld [vmem:[#allocation2 + $0x8c8] sm:$0xff]
    %v426 = vld [vmem:[#allocation2 + $0x8d0] sm:$0xff]
    %v427 = vld [vmem:[#allocation2 + $0x8d8] sm:$0xff]
    %v428 = vld [vmem:[#allocation2 + $0x8e0] sm:$0xff]
    %v429 = vld [vmem:[#allocation2 + $0x8e8] sm:$0xff]
    %v430 = vld [vmem:[#allocation2 + $0x8f0] sm:$0xff]
    %v431 = vld [vmem:[#allocation2 + $0x8f8] sm:$0xff]
    %v432 = vld [vmem:[#allocation2 + $0x900] sm:$0xff]
    %v433 = vld [vmem:[#allocation2 + $0x908] sm:$0xff]
    %v434 = vld [vmem:[#allocation2 + $0x910] sm:$0xff]
    %v435 = vld [vmem:[#allocation2 + $0x918] sm:$0xff]
    %v436 = vld [vmem:[#allocation2 + $0x920] sm:$0xff]
    %v437 = vld [vmem:[#allocation2 + $0x928] sm:$0xff]
    %v438 = vld [vmem:[#allocation2 + $0x930] sm:$0xff]
    %v439 = vld [vmem:[#allocation2 + $0x938] sm:$0xff]
    %v440 = vld [vmem:[#allocation2 + $0x940] sm:$0xff]
    %v441 = vld [vmem:[#allocation2 + $0x948] sm:$0xff]
    %v442 = vld [vmem:[#allocation2 + $0x950] sm:$0xff]
    %v443 = vld [vmem:[#allocation2 + $0x958] sm:$0xff]
    %v444 = vld [vmem:[#allocation2 + $0x960] sm:$0xff]
    %v445 = vld [vmem:[#allocation2 + $0x968] sm:$0xff]
    %v446 = vld [vmem:[#allocation2 + $0x970] sm:$0xff]
    %v447 = vld [vmem:[#allocation2 + $0x978] sm:$0xff]
    %v448 = vld [vmem:[#allocation2 + $0x980] sm:$0xff]
    %v449 = vld [vmem:[#allocation2 + $0x988] sm:$0xff]
    %v450 = vld [vmem:[#allocation2 + $0x990] sm:$0xff]
    %v451 = vld [vmem:[#allocation2 + $0x998] sm:$0xff]
    %v452 = vld [vmem:[#allocation2 + $0x9a0] sm:$0xff]
    %v453 = vld [vmem:[#allocation2 + $0x9a8] sm:$0xff]
    %v454 = vld [vmem:[#allocation2 + $0x9b0] sm:$0xff]
    %v455 = vld [vmem:[#allocation2 + $0x9b8] sm:$0xff]
    %v456 = vld [vmem:[#allocation2 + $0x9c0] sm:$0xff]
    %v457 = vld [vmem:[#allocation2 + $0x9c8] sm:$0xff]
    %v458 = vld [vmem:[#allocation2 + $0x9d0] sm:$0xff]
    %v459 = vld [vmem:[#allocation2 + $0x9d8] sm:$0xff]
    %v460 = vld [vmem:[#allocation2 + $0x9e0] sm:$0xff]
    %v461 = vld [vmem:[#allocation2 + $0x9e8] sm:$0xff]
    %v462 = vld [vmem:[#allocation2 + $0x9f0] sm:$0xff]
    %v463 = vld [vmem:[#allocation2 + $0x9f8] sm:$0xff]
    %v464 = vld [vmem:[#allocation2 + $0xa00] sm:$0xff]
    %v465 = vld [vmem:[#allocation2 + $0xa08] sm:$0xff]
    %v466 = vld [vmem:[#allocation2 + $0xa10] sm:$0xff]
    %v467 = vld [vmem:[#allocation2 + $0xa18] sm:$0xff]
    %v468 = vld [vmem:[#allocation2 + $0xa20] sm:$0xff]
    %v469 = vld [vmem:[#allocation2 + $0xa28] sm:$0xff]
    %v470 = vld [vmem:[#allocation2 + $0xa30] sm:$0xff]
    %v471 = vld [vmem:[#allocation2 + $0xa38] sm:$0xff]
    %v472 = vld [vmem:[#allocation2 + $0xa40] sm:$0xff]
    %v473 = vld [vmem:[#allocation2 + $0xa48] sm:$0xff]
    %v474 = vld [vmem:[#allocation2 + $0xa50] sm:$0xff]
    %v475 = vld [vmem:[#allocation2 + $0xa58] sm:$0xff]
    %v476 = vld [vmem:[#allocation2 + $0xa60] sm:$0xff]
    %v477 = vld [vmem:[#allocation2 + $0xa68] sm:$0xff]
    %v478 = vld [vmem:[#allocation2 + $0xa70] sm:$0xff]
    %v479 = vld [vmem:[#allocation2 + $0xa78] sm:$0xff]
    %v480 = vld [vmem:[#allocation2 + $0xa80] sm:$0xff]
    %v481 = vld [vmem:[#allocation2 + $0xa88] sm:$0xff]
    %v482 = vld [vmem:[#allocation2 + $0xa90] sm:$0xff]
    %v483 = vld [vmem:[#allocation2 + $0xa98] sm:$0xff]
    %v484 = vld [vmem:[#allocation2 + $0xaa0] sm:$0xff]
    %v485 = vld [vmem:[#allocation2 + $0xaa8] sm:$0xff]
    %v486 = vld [vmem:[#allocation2 + $0xab0] sm:$0xff]
    %v487 = vld [vmem:[#allocation2 + $0xab8] sm:$0xff]
    %v488 = vld [vmem:[#allocation2 + $0xac0] sm:$0xff]
    %v489 = vld [vmem:[#allocation2 + $0xac8] sm:$0xff]
    %v490 = vld [vmem:[#allocation2 + $0xad0] sm:$0xff]
    %v491 = vld [vmem:[#allocation2 + $0xad8] sm:$0xff]
    %v492 = vld [vmem:[#allocation2 + $0xae0] sm:$0xff]
    %v493 = vld [vmem:[#allocation2 + $0xae8] sm:$0xff]
    %v494 = vld [vmem:[#allocation2 + $0xaf0] sm:$0xff]
    %v495 = vld [vmem:[#allocation2 + $0xaf8] sm:$0xff]
    %v496 = vld [vmem:[#allocation2 + $0xb00] sm:$0xff]
    %v497 = vld [vmem:[#allocation2 + $0xb08] sm:$0xff]
    %v498 = vld [vmem:[#allocation2 + $0xb10] sm:$0xff]
    %v499 = vld [vmem:[#allocation2 + $0xb18] sm:$0xff]
    %v500 = vld [vmem:[#allocation2 + $0xb20] sm:$0xff]
    %v501 = vld [vmem:[#allocation2 + $0xb28] sm:$0xff]
    %v502 = vld [vmem:[#allocation2 + $0xb30] sm:$0xff]
    %v503 = vld [vmem:[#allocation2 + $0xb38] sm:$0xff]
    %v504 = vld [vmem:[#allocation2 + $0xb40] sm:$0xff]
    %v505 = vld [vmem:[#allocation2 + $0xb48] sm:$0xff]
    %v506 = vld [vmem:[#allocation2 + $0xb50] sm:$0xff]
    %v507 = vld [vmem:[#allocation2 + $0xb58] sm:$0xff]
    %v508 = vld [vmem:[#allocation2 + $0xb60] sm:$0xff]
    %v509 = vld [vmem:[#allocation2 + $0xb68] sm:$0xff]
    %v510 = vld [vmem:[#allocation2 + $0xb70] sm:$0xff]
    %v511 = vld [vmem:[#allocation2 + $0xb78] sm:$0xff]
    %v512 = vld [vmem:[#allocation2 + $0xb80] sm:$0xff]
    %v513 = vld [vmem:[#allocation2 + $0xb88] sm:$0xff]
    %v514 = vld [vmem:[#allocation2 + $0xb90] sm:$0xff]
    %v515 = vld [vmem:[#allocation2 + $0xb98] sm:$0xff]
    %v516 = vld [vmem:[#allocation2 + $0xba0] sm:$0xff]
    %v517 = vld [vmem:[#allocation2 + $0xba8] sm:$0xff]
    %v518 = vld [vmem:[#allocation2 + $0xbb0] sm:$0xff]
    %v519 = vld [vmem:[#allocation2 + $0xbb8] sm:$0xff]
    %v520 = vld [vmem:[#allocation2 + $0xbc0] sm:$0xff]
    %v521 = vld [vmem:[#allocation2 + $0xbc8] sm:$0xff]
    %v522 = vld [vmem:[#allocation2 + $0xbd0] sm:$0xff]
    %v523 = vld [vmem:[#allocation2 + $0xbd8] sm:$0xff]
    %v524 = vld [vmem:[#allocation2 + $0xbe0] sm:$0xff]
    %v525 = vld [vmem:[#allocation2 + $0xbe8] sm:$0xff]
    %v526 = vld [vmem:[#allocation2 + $0xbf0] sm:$0xff]
    %v527 = vld [vmem:[#allocation2 + $0xbf8] sm:$0xff]
    %v528 = vld [vmem:[#allocation2 + $0xc00] sm:$0xff]
    %v529 = vld [vmem:[#allocation2 + $0xc08] sm:$0xff]
    %v530 = vld [vmem:[#allocation2 + $0xc10] sm:$0xff]
    %v531 = vld [vmem:[#allocation2 + $0xc18] sm:$0xff]
    %v532 = vld [vmem:[#allocation2 + $0xc20] sm:$0xff]
    %v533 = vld [vmem:[#allocation2 + $0xc28] sm:$0xff]
    %v534 = vld [vmem:[#allocation2 + $0xc30] sm:$0xff]
    %v535 = vld [vmem:[#allocation2 + $0xc38] sm:$0xff]
    %v536 = vld [vmem:[#allocation2 + $0xc40] sm:$0xff]
    %v537 = vld [vmem:[#allocation2 + $0xc48] sm:$0xff]
    %v538 = vld [vmem:[#allocation2 + $0xc50] sm:$0xff]
    %v539 = vld [vmem:[#allocation2 + $0xc58] sm:$0xff]
    %v540 = vld [vmem:[#allocation2 + $0xc60] sm:$0xff]
    %v541 = vld [vmem:[#allocation2 + $0xc68] sm:$0xff]
    %v542 = vld [vmem:[#allocation2 + $0xc70] sm:$0xff]
    %v543 = vld [vmem:[#allocation2 + $0xc78] sm:$0xff]
    %v544 = vld [vmem:[#allocation2 + $0xc80] sm:$0xff]
    %v545 = vld [vmem:[#allocation2 + $0xc88] sm:$0xff]
    %v546 = vld [vmem:[#allocation2 + $0xc90] sm:$0xff]
    %v547 = vld [vmem:[#allocation2 + $0xc98] sm:$0xff]
    %v548 = vld [vmem:[#allocation2 + $0xca0] sm:$0xff]
    %v549 = vld [vmem:[#allocation2 + $0xca8] sm:$0xff]
    %v550 = vld [vmem:[#allocation2 + $0xcb0] sm:$0xff]
    %v551 = vld [vmem:[#allocation2 + $0xcb8] sm:$0xff]
    %v552 = vld [vmem:[#allocation2 + $0xcc0] sm:$0xff]
    %v553 = vld [vmem:[#allocation2 + $0xcc8] sm:$0xff]
    %v554 = vld [vmem:[#allocation2 + $0xcd0] sm:$0xff]
    %v555 = vld [vmem:[#allocation2 + $0xcd8] sm:$0xff]
    %v556 = vld [vmem:[#allocation2 + $0xce0] sm:$0xff]
    %v557 = vld [vmem:[#allocation2 + $0xce8] sm:$0xff]
    %v558 = vld [vmem:[#allocation2 + $0xcf0] sm:$0xff]
    %v559 = vld [vmem:[#allocation2 + $0xcf8] sm:$0xff]
    %v560 = vld [vmem:[#allocation2 + $0xd00] sm:$0xff]
    %v561 = vld [vmem:[#allocation2 + $0xd08] sm:$0xff]
    %v562 = vld [vmem:[#allocation2 + $0xd10] sm:$0xff]
    %v563 = vld [vmem:[#allocation2 + $0xd18] sm:$0xff]
    %v564 = vld [vmem:[#allocation2 + $0xd20] sm:$0xff]
    %v565 = vld [vmem:[#allocation2 + $0xd28] sm:$0xff]
    %v566 = vld [vmem:[#allocation2 + $0xd30] sm:$0xff]
    %v567 = vld [vmem:[#allocation2 + $0xd38] sm:$0xff]
    %v568 = vld [vmem:[#allocation2 + $0xd40] sm:$0xff]
    %v569 = vld [vmem:[#allocation2 + $0xd48] sm:$0xff]
    %v570 = vld [vmem:[#allocation2 + $0xd50] sm:$0xff]
    %v571 = vld [vmem:[#allocation2 + $0xd58] sm:$0xff]
    %v572 = vld [vmem:[#allocation2 + $0xd60] sm:$0xff]
    %v573 = vld [vmem:[#allocation2 + $0xd68] sm:$0xff]
    %v574 = vld [vmem:[#allocation2 + $0xd70] sm:$0xff]
    %v575 = vld [vmem:[#allocation2 + $0xd78] sm:$0xff]
    %v576 = vld [vmem:[#allocation2 + $0xd80] sm:$0xff]
    %v577 = vld [vmem:[#allocation2 + $0xd88] sm:$0xff]
    %v578 = vld [vmem:[#allocation2 + $0xd90] sm:$0xff]
    %v579 = vld [vmem:[#allocation2 + $0xd98] sm:$0xff]
    %v580 = vld [vmem:[#allocation2 + $0xda0] sm:$0xff]
    %v581 = vld [vmem:[#allocation2 + $0xda8] sm:$0xff]
    %v582 = vld [vmem:[#allocation2 + $0xdb0] sm:$0xff]
    %v583 = vld [vmem:[#allocation2 + $0xdb8] sm:$0xff]
    %v584 = vld [vmem:[#allocation2 + $0xdc0] sm:$0xff]
    %v585 = vld [vmem:[#allocation2 + $0xdc8] sm:$0xff]
    %v586 = vld [vmem:[#allocation2 + $0xdd0] sm:$0xff]
    %v587 = vld [vmem:[#allocation2 + $0xdd8] sm:$0xff]
    %v588 = vld [vmem:[#allocation2 + $0xde0] sm:$0xff]
    %v589 = vld [vmem:[#allocation2 + $0xde8] sm:$0xff]
    %v590 = vld [vmem:[#allocation2 + $0xdf0] sm:$0xff]
    %v591 = vld [vmem:[#allocation2 + $0xdf8] sm:$0xff]
    %v592 = vld [vmem:[#allocation4] sm:$0xff]
    %v594 = vlaneseq
    %v595 = vshrl.u32 %v594, 7
    %v596 = vsub.s32 0, %v595
    %v597 = vrot.slane %v592, %v596
    %v598 = vlaneseq
    %v599 = vshrl.u32 %v598, 7
    %v600 = vsub.s32 1, %v599
    %v601 = vrot.slane %v592, %v600
    %v602 = vlaneseq
    %v603 = vshrl.u32 %v602, 7
    %v604 = vsub.s32 2, %v603
    %v605 = vrot.slane %v592, %v604
    %v606 = vlaneseq
    %v607 = vshrl.u32 %v606, 7
    %v608 = vsub.s32 3, %v607
    %v609 = vrot.slane %v592, %v608
    %v610 = vlaneseq
    %v611 = vshrl.u32 %v610, 7
    %v612 = vsub.s32 4, %v611
    %v613 = vrot.slane %v592, %v612
    %v614 = vlaneseq
    %v615 = vshrl.u32 %v614, 7
    %v616 = vsub.s32 5, %v615
    %v617 = vrot.slane %v592, %v616
    %v618 = vlaneseq
    %v619 = vshrl.u32 %v618, 7
    %v620 = vsub.s32 6, %v619
    %v621 = vrot.slane %v592, %v620
    %v622 = vlaneseq
    %v623 = vshrl.u32 %v622, 7
    %v624 = vsub.s32 7, %v623
    %v625 = vrot.slane %v592, %v624
    %v642 = vunpack.c.l.b16 %v136
    %v643 = vunpack.c.h.b16 %v136
    %v644 = vunpack.c.l.b16 %v137
    %v645 = vunpack.c.h.b16 %v137
    %v646 = vunpack.c.l.b16 %v138
    %v647 = vunpack.c.h.b16 %v138
    %v648 = vunpack.c.l.b16 %v139
    %v649 = vunpack.c.l.b16 %v140
    %v650 = vunpack.c.h.b16 %v140
    %v651 = vunpack.c.l.b16 %v141
    %v652 = vunpack.c.h.b16 %v141
    %v653 = vunpack.c.l.b16 %v142
    %v654 = vunpack.c.h.b16 %v142
    %v655 = vunpack.c.l.b16 %v143
    %v656 = vpack.c.b16 %v649, %v642
    %v657 = vpack.c.b16 %v650, %v643
    %v658 = vpack.c.b16 %v651, %v644
    %v659 = vpack.c.b16 %v652, %v645
    %v660 = vpack.c.b16 %v653, %v646
    %v661 = vpack.c.b16 %v654, %v647
    %v662 = vpack.c.b16 %v655, %v648
    %v1118 = vunpack.c.l.b16 %v144
    %v1119 = vunpack.c.h.b16 %v144
    %v1120 = vunpack.c.l.b16 %v145
    %v1121 = vunpack.c.h.b16 %v145
    %v1122 = vunpack.c.l.b16 %v146
    %v1123 = vunpack.c.h.b16 %v146
    %v1124 = vunpack.c.l.b16 %v147
    %v1125 = vunpack.c.h.b16 %v147
    %v1126 = vunpack.c.l.b16 %v148
    %v1127 = vunpack.c.h.b16 %v148
    %v1128 = vunpack.c.l.b16 %v149
    %v1129 = vunpack.c.h.b16 %v149
    %v1130 = vunpack.c.l.b16 %v150
    %v1131 = vunpack.c.h.b16 %v150
    %v1132 = vunpack.c.l.b16 %v151
    %v1133 = vunpack.c.h.b16 %v151
    %v1134 = vunpack.c.l.b16 %v152
    %v1135 = vunpack.c.h.b16 %v152
    %v1136 = vunpack.c.l.b16 %v153
    %v1137 = vunpack.c.h.b16 %v153
    %v1138 = vunpack.c.l.b16 %v154
    %v1139 = vunpack.c.h.b16 %v154
    %v1140 = vunpack.c.l.b16 %v155
    %v1141 = vunpack.c.h.b16 %v155
    %v1142 = vunpack.c.l.b16 %v156
    %v1143 = vunpack.c.h.b16 %v156
    %v1144 = vunpack.c.l.b16 %v157
    %v1145 = vunpack.c.h.b16 %v157
    %v1146 = vunpack.c.l.b16 %v158
    %v1147 = vunpack.c.h.b16 %v158
    %v1148 = vunpack.c.l.b16 %v159
    %v1149 = vunpack.c.h.b16 %v159
    %v1150 = vunpack.c.l.b16 %v160
    %v1151 = vunpack.c.h.b16 %v160
    %v1152 = vunpack.c.l.b16 %v161
    %v1153 = vunpack.c.h.b16 %v161
    %v1154 = vunpack.c.l.b16 %v162
    %v1155 = vunpack.c.h.b16 %v162
    %v1156 = vunpack.c.l.b16 %v163
    %v1157 = vunpack.c.h.b16 %v163
    %v1158 = vunpack.c.l.b16 %v164
    %v1159 = vunpack.c.h.b16 %v164
    %v1160 = vunpack.c.l.b16 %v165
    %v1161 = vunpack.c.h.b16 %v165
    %v1162 = vunpack.c.l.b16 %v166
    %v1163 = vunpack.c.h.b16 %v166
    %v1164 = vunpack.c.l.b16 %v167
    %v1165 = vunpack.c.h.b16 %v167
    %v1166 = vunpack.c.l.b16 %v168
    %v1167 = vunpack.c.h.b16 %v168
    %v1168 = vunpack.c.l.b16 %v169
    %v1169 = vunpack.c.h.b16 %v169
    %v1170 = vunpack.c.l.b16 %v170
    %v1171 = vunpack.c.h.b16 %v170
    %v1172 = vunpack.c.l.b16 %v171
    %v1173 = vunpack.c.h.b16 %v171
    %v1174 = vunpack.c.l.b16 %v172
    %v1175 = vunpack.c.h.b16 %v172
    %v1176 = vunpack.c.l.b16 %v173
    %v1177 = vunpack.c.h.b16 %v173
    %v1178 = vunpack.c.l.b16 %v174
    %v1179 = vunpack.c.h.b16 %v174
    %v1180 = vunpack.c.l.b16 %v175
    %v1181 = vunpack.c.h.b16 %v175
    %v1182 = vunpack.c.l.b16 %v176
    %v1183 = vunpack.c.h.b16 %v176
    %v1184 = vunpack.c.l.b16 %v177
    %v1185 = vunpack.c.h.b16 %v177
    %v1186 = vunpack.c.l.b16 %v178
    %v1187 = vunpack.c.h.b16 %v178
    %v1188 = vunpack.c.l.b16 %v179
    %v1189 = vunpack.c.h.b16 %v179
    %v1190 = vunpack.c.l.b16 %v180
    %v1191 = vunpack.c.h.b16 %v180
    %v1192 = vunpack.c.l.b16 %v181
    %v1193 = vunpack.c.h.b16 %v181
    %v1194 = vunpack.c.l.b16 %v182
    %v1195 = vunpack.c.h.b16 %v182
    %v1196 = vunpack.c.l.b16 %v183
    %v1197 = vunpack.c.h.b16 %v183
    %v1198 = vunpack.c.l.b16 %v184
    %v1199 = vunpack.c.h.b16 %v184
    %v1200 = vunpack.c.l.b16 %v185
    %v1201 = vunpack.c.h.b16 %v185
    %v1202 = vunpack.c.l.b16 %v186
    %v1203 = vunpack.c.h.b16 %v186
    %v1204 = vunpack.c.l.b16 %v187
    %v1205 = vunpack.c.h.b16 %v187
    %v1206 = vunpack.c.l.b16 %v188
    %v1207 = vunpack.c.h.b16 %v188
    %v1208 = vunpack.c.l.b16 %v189
    %v1209 = vunpack.c.h.b16 %v189
    %v1210 = vunpack.c.l.b16 %v190
    %v1211 = vunpack.c.h.b16 %v190
    %v1212 = vunpack.c.l.b16 %v191
    %v1213 = vunpack.c.h.b16 %v191
    %v1214 = vunpack.c.l.b16 %v192
    %v1215 = vunpack.c.h.b16 %v192
    %v1216 = vunpack.c.l.b16 %v193
    %v1217 = vunpack.c.h.b16 %v193
    %v1218 = vunpack.c.l.b16 %v194
    %v1219 = vunpack.c.h.b16 %v194
    %v1220 = vunpack.c.l.b16 %v195
    %v1221 = vunpack.c.h.b16 %v195
    %v1222 = vunpack.c.l.b16 %v196
    %v1223 = vunpack.c.h.b16 %v196
    %v1224 = vunpack.c.l.b16 %v197
    %v1225 = vunpack.c.h.b16 %v197
    %v1226 = vunpack.c.l.b16 %v198
    %v1227 = vunpack.c.h.b16 %v198
    %v1228 = vunpack.c.l.b16 %v199
    %v1229 = vunpack.c.h.b16 %v199
    %v1230 = vunpack.c.l.b16 %v200
    %v1231 = vunpack.c.h.b16 %v200
    %v1232 = vunpack.c.l.b16 %v201
    %v1233 = vunpack.c.h.b16 %v201
    %v1234 = vunpack.c.l.b16 %v202
    %v1235 = vunpack.c.h.b16 %v202
    %v1236 = vunpack.c.l.b16 %v203
    %v1237 = vunpack.c.h.b16 %v203
    %v1238 = vunpack.c.l.b16 %v204
    %v1239 = vunpack.c.h.b16 %v204
    %v1240 = vunpack.c.l.b16 %v205
    %v1241 = vunpack.c.h.b16 %v205
    %v1242 = vunpack.c.l.b16 %v206
    %v1243 = vunpack.c.h.b16 %v206
    %v1244 = vunpack.c.l.b16 %v207
    %v1245 = vunpack.c.h.b16 %v207
    %v1246 = vunpack.c.l.b16 %v208
    %v1247 = vunpack.c.h.b16 %v208
    %v1248 = vunpack.c.l.b16 %v209
    %v1249 = vunpack.c.h.b16 %v209
    %v1250 = vunpack.c.l.b16 %v210
    %v1251 = vunpack.c.h.b16 %v210
    %v1252 = vunpack.c.l.b16 %v211
    %v1253 = vunpack.c.h.b16 %v211
    %v1254 = vunpack.c.l.b16 %v212
    %v1255 = vunpack.c.h.b16 %v212
    %v1256 = vunpack.c.l.b16 %v213
    %v1257 = vunpack.c.h.b16 %v213
    %v1258 = vunpack.c.l.b16 %v214
    %v1259 = vunpack.c.h.b16 %v214
    %v1260 = vunpack.c.l.b16 %v215
    %v1261 = vunpack.c.h.b16 %v215
    %v1262 = vunpack.c.l.b16 %v216
    %v1263 = vunpack.c.h.b16 %v216
    %v1264 = vunpack.c.l.b16 %v217
    %v1265 = vunpack.c.h.b16 %v217
    %v1266 = vunpack.c.l.b16 %v218
    %v1267 = vunpack.c.h.b16 %v218
    %v1268 = vunpack.c.l.b16 %v219
    %v1269 = vunpack.c.h.b16 %v219
    %v1270 = vunpack.c.l.b16 %v220
    %v1271 = vunpack.c.h.b16 %v220
    %v1272 = vunpack.c.l.b16 %v221
    %v1273 = vunpack.c.h.b16 %v221
    %v1274 = vunpack.c.l.b16 %v222
    %v1275 = vunpack.c.h.b16 %v222
    %v1276 = vunpack.c.l.b16 %v223
    %v1277 = vunpack.c.h.b16 %v223
    %v1278 = vunpack.c.l.b16 %v224
    %v1279 = vunpack.c.h.b16 %v224
    %v1280 = vunpack.c.l.b16 %v225
    %v1281 = vunpack.c.h.b16 %v225
    %v1282 = vunpack.c.l.b16 %v226
    %v1283 = vunpack.c.h.b16 %v226
    %v1284 = vunpack.c.l.b16 %v227
    %v1285 = vunpack.c.h.b16 %v227
    %v1286 = vunpack.c.l.b16 %v228
    %v1287 = vunpack.c.h.b16 %v228
    %v1288 = vunpack.c.l.b16 %v229
    %v1289 = vunpack.c.h.b16 %v229
    %v1290 = vunpack.c.l.b16 %v230
    %v1291 = vunpack.c.h.b16 %v230
    %v1292 = vunpack.c.l.b16 %v231
    %v1293 = vunpack.c.h.b16 %v231
    %v1294 = vunpack.c.l.b16 %v232
    %v1295 = vunpack.c.h.b16 %v232
    %v1296 = vunpack.c.l.b16 %v233
    %v1297 = vunpack.c.h.b16 %v233
    %v1298 = vunpack.c.l.b16 %v234
    %v1299 = vunpack.c.h.b16 %v234
    %v1300 = vunpack.c.l.b16 %v235
    %v1301 = vunpack.c.h.b16 %v235
    %v1302 = vunpack.c.l.b16 %v236
    %v1303 = vunpack.c.h.b16 %v236
    %v1304 = vunpack.c.l.b16 %v237
    %v1305 = vunpack.c.h.b16 %v237
    %v1306 = vunpack.c.l.b16 %v238
    %v1307 = vunpack.c.h.b16 %v238
    %v1308 = vunpack.c.l.b16 %v239
    %v1309 = vunpack.c.h.b16 %v239
    %v1310 = vunpack.c.l.b16 %v240
    %v1311 = vunpack.c.h.b16 %v240
    %v1312 = vunpack.c.l.b16 %v241
    %v1313 = vunpack.c.h.b16 %v241
    %v1314 = vunpack.c.l.b16 %v242
    %v1315 = vunpack.c.h.b16 %v242
    %v1316 = vunpack.c.l.b16 %v243
    %v1317 = vunpack.c.h.b16 %v243
    %v1318 = vunpack.c.l.b16 %v244
    %v1319 = vunpack.c.h.b16 %v244
    %v1320 = vunpack.c.l.b16 %v245
    %v1321 = vunpack.c.h.b16 %v245
    %v1322 = vunpack.c.l.b16 %v246
    %v1323 = vunpack.c.h.b16 %v246
    %v1324 = vunpack.c.l.b16 %v247
    %v1325 = vunpack.c.h.b16 %v247
    %v1326 = vunpack.c.l.b16 %v248
    %v1327 = vunpack.c.h.b16 %v248
    %v1328 = vunpack.c.l.b16 %v249
    %v1329 = vunpack.c.h.b16 %v249
    %v1330 = vunpack.c.l.b16 %v250
    %v1331 = vunpack.c.h.b16 %v250
    %v1332 = vunpack.c.l.b16 %v251
    %v1333 = vunpack.c.h.b16 %v251
    %v1334 = vunpack.c.l.b16 %v252
    %v1335 = vunpack.c.h.b16 %v252
    %v1336 = vunpack.c.l.b16 %v253
    %v1337 = vunpack.c.h.b16 %v253
    %v1338 = vunpack.c.l.b16 %v254
    %v1339 = vunpack.c.h.b16 %v254
    %v1340 = vunpack.c.l.b16 %v255
    %v1341 = vunpack.c.h.b16 %v255
    %v1342 = vunpack.c.l.b16 %v256
    %v1343 = vunpack.c.h.b16 %v256
    %v1344 = vunpack.c.l.b16 %v257
    %v1345 = vunpack.c.h.b16 %v257
    %v1346 = vunpack.c.l.b16 %v258
    %v1347 = vunpack.c.h.b16 %v258
    %v1348 = vunpack.c.l.b16 %v259
    %v1349 = vunpack.c.h.b16 %v259
    %v1350 = vunpack.c.l.b16 %v260
    %v1351 = vunpack.c.h.b16 %v260
    %v1352 = vunpack.c.l.b16 %v261
    %v1353 = vunpack.c.h.b16 %v261
    %v1354 = vunpack.c.l.b16 %v262
    %v1355 = vunpack.c.h.b16 %v262
    %v1356 = vunpack.c.l.b16 %v263
    %v1357 = vunpack.c.h.b16 %v263
    %v1358 = vunpack.c.l.b16 %v264
    %v1359 = vunpack.c.h.b16 %v264
    %v1360 = vunpack.c.l.b16 %v265
    %v1361 = vunpack.c.h.b16 %v265
    %v1362 = vunpack.c.l.b16 %v266
    %v1363 = vunpack.c.h.b16 %v266
    %v1364 = vunpack.c.l.b16 %v267
    %v1365 = vunpack.c.h.b16 %v267
    %v1366 = vunpack.c.l.b16 %v268
    %v1367 = vunpack.c.h.b16 %v268
    %v1368 = vunpack.c.l.b16 %v269
    %v1369 = vunpack.c.h.b16 %v269
    %v1370 = vunpack.c.l.b16 %v270
    %v1371 = vunpack.c.h.b16 %v270
    %v1372 = vunpack.c.l.b16 %v271
    %v1373 = vunpack.c.h.b16 %v271
    %v1374 = vunpack.c.l.b16 %v272
    %v1375 = vunpack.c.h.b16 %v272
    %v1376 = vunpack.c.l.b16 %v273
    %v1377 = vunpack.c.h.b16 %v273
    %v1378 = vunpack.c.l.b16 %v274
    %v1379 = vunpack.c.h.b16 %v274
    %v1380 = vunpack.c.l.b16 %v275
    %v1381 = vunpack.c.h.b16 %v275
    %v1382 = vunpack.c.l.b16 %v276
    %v1383 = vunpack.c.h.b16 %v276
    %v1384 = vunpack.c.l.b16 %v277
    %v1385 = vunpack.c.h.b16 %v277
    %v1386 = vunpack.c.l.b16 %v278
    %v1387 = vunpack.c.h.b16 %v278
    %v1388 = vunpack.c.l.b16 %v279
    %v1389 = vunpack.c.h.b16 %v279
    %v1390 = vunpack.c.l.b16 %v280
    %v1391 = vunpack.c.h.b16 %v280
    %v1392 = vunpack.c.l.b16 %v281
    %v1393 = vunpack.c.h.b16 %v281
    %v1394 = vunpack.c.l.b16 %v282
    %v1395 = vunpack.c.h.b16 %v282
    %v1396 = vunpack.c.l.b16 %v283
    %v1397 = vunpack.c.h.b16 %v283
    %v1398 = vunpack.c.l.b16 %v284
    %v1399 = vunpack.c.h.b16 %v284
    %v1400 = vunpack.c.l.b16 %v285
    %v1401 = vunpack.c.h.b16 %v285
    %v1402 = vunpack.c.l.b16 %v286
    %v1403 = vunpack.c.h.b16 %v286
    %v1404 = vunpack.c.l.b16 %v287
    %v1405 = vunpack.c.h.b16 %v287
    %v1406 = vunpack.c.l.b16 %v288
    %v1407 = vunpack.c.h.b16 %v288
    %v1408 = vunpack.c.l.b16 %v289
    %v1409 = vunpack.c.h.b16 %v289
    %v1410 = vunpack.c.l.b16 %v290
    %v1411 = vunpack.c.h.b16 %v290
    %v1412 = vunpack.c.l.b16 %v291
    %v1413 = vunpack.c.h.b16 %v291
    %v1414 = vunpack.c.l.b16 %v292
    %v1415 = vunpack.c.h.b16 %v292
    %v1416 = vunpack.c.l.b16 %v293
    %v1417 = vunpack.c.h.b16 %v293
    %v1418 = vunpack.c.l.b16 %v294
    %v1419 = vunpack.c.h.b16 %v294
    %v1420 = vunpack.c.l.b16 %v295
    %v1421 = vunpack.c.h.b16 %v295
    %v1422 = vunpack.c.l.b16 %v296
    %v1423 = vunpack.c.h.b16 %v296
    %v1424 = vunpack.c.l.b16 %v297
    %v1425 = vunpack.c.h.b16 %v297
    %v1426 = vunpack.c.l.b16 %v298
    %v1427 = vunpack.c.h.b16 %v298
    %v1428 = vunpack.c.l.b16 %v299
    %v1429 = vunpack.c.h.b16 %v299
    %v1430 = vunpack.c.l.b16 %v300
    %v1431 = vunpack.c.h.b16 %v300
    %v1432 = vunpack.c.l.b16 %v301
    %v1433 = vunpack.c.h.b16 %v301
    %v1434 = vunpack.c.l.b16 %v302
    %v1435 = vunpack.c.h.b16 %v302
    %v1436 = vunpack.c.l.b16 %v303
    %v1437 = vunpack.c.h.b16 %v303
    %v1438 = vunpack.c.l.b16 %v304
    %v1439 = vunpack.c.h.b16 %v304
    %v1440 = vunpack.c.l.b16 %v305
    %v1441 = vunpack.c.h.b16 %v305
    %v1442 = vunpack.c.l.b16 %v306
    %v1443 = vunpack.c.h.b16 %v306
    %v1444 = vunpack.c.l.b16 %v307
    %v1445 = vunpack.c.h.b16 %v307
    %v1446 = vunpack.c.l.b16 %v308
    %v1447 = vunpack.c.h.b16 %v308
    %v1448 = vunpack.c.l.b16 %v309
    %v1449 = vunpack.c.h.b16 %v309
    %v1450 = vunpack.c.l.b16 %v310
    %v1451 = vunpack.c.h.b16 %v310
    %v1452 = vunpack.c.l.b16 %v311
    %v1453 = vunpack.c.h.b16 %v311
    %v1454 = vunpack.c.l.b16 %v312
    %v1455 = vunpack.c.h.b16 %v312
    %v1456 = vunpack.c.l.b16 %v313
    %v1457 = vunpack.c.h.b16 %v313
    %v1458 = vunpack.c.l.b16 %v314
    %v1459 = vunpack.c.h.b16 %v314
    %v1460 = vunpack.c.l.b16 %v315
    %v1461 = vunpack.c.h.b16 %v315
    %v1462 = vunpack.c.l.b16 %v316
    %v1463 = vunpack.c.h.b16 %v316
    %v1464 = vunpack.c.l.b16 %v317
    %v1465 = vunpack.c.h.b16 %v317
    %v1466 = vunpack.c.l.b16 %v318
    %v1467 = vunpack.c.h.b16 %v318
    %v1468 = vunpack.c.l.b16 %v319
    %v1469 = vunpack.c.h.b16 %v319
    %v1470 = vunpack.c.l.b16 %v320
    %v1471 = vunpack.c.h.b16 %v320
    %v1472 = vunpack.c.l.b16 %v321
    %v1473 = vunpack.c.h.b16 %v321
    %v1474 = vunpack.c.l.b16 %v322
    %v1475 = vunpack.c.h.b16 %v322
    %v1476 = vunpack.c.l.b16 %v323
    %v1477 = vunpack.c.h.b16 %v323
    %v1478 = vunpack.c.l.b16 %v324
    %v1479 = vunpack.c.h.b16 %v324
    %v1480 = vunpack.c.l.b16 %v325
    %v1481 = vunpack.c.h.b16 %v325
    %v1482 = vunpack.c.l.b16 %v326
    %v1483 = vunpack.c.h.b16 %v326
    %v1484 = vunpack.c.l.b16 %v327
    %v1485 = vunpack.c.h.b16 %v327
    %v1486 = vunpack.c.l.b16 %v328
    %v1487 = vunpack.c.h.b16 %v328
    %v1488 = vunpack.c.l.b16 %v329
    %v1489 = vunpack.c.h.b16 %v329
    %v1490 = vunpack.c.l.b16 %v330
    %v1491 = vunpack.c.h.b16 %v330
    %v1492 = vunpack.c.l.b16 %v331
    %v1493 = vunpack.c.h.b16 %v331
    %v1494 = vunpack.c.l.b16 %v332
    %v1495 = vunpack.c.h.b16 %v332
    %v1496 = vunpack.c.l.b16 %v333
    %v1497 = vunpack.c.h.b16 %v333
    %v1498 = vunpack.c.l.b16 %v334
    %v1499 = vunpack.c.h.b16 %v334
    %v1500 = vunpack.c.l.b16 %v335
    %v1501 = vunpack.c.h.b16 %v335
    %v1502 = vunpack.c.l.b16 %v336
    %v1503 = vunpack.c.h.b16 %v336
    %v1504 = vunpack.c.l.b16 %v337
    %v1505 = vunpack.c.h.b16 %v337
    %v1506 = vunpack.c.l.b16 %v338
    %v1507 = vunpack.c.h.b16 %v338
    %v1508 = vunpack.c.l.b16 %v339
    %v1509 = vunpack.c.h.b16 %v339
    %v1510 = vunpack.c.l.b16 %v340
    %v1511 = vunpack.c.h.b16 %v340
    %v1512 = vunpack.c.l.b16 %v341
    %v1513 = vunpack.c.h.b16 %v341
    %v1514 = vunpack.c.l.b16 %v342
    %v1515 = vunpack.c.h.b16 %v342
    %v1516 = vunpack.c.l.b16 %v343
    %v1517 = vunpack.c.h.b16 %v343
    %v1518 = vunpack.c.l.b16 %v344
    %v1519 = vunpack.c.h.b16 %v344
    %v1520 = vunpack.c.l.b16 %v345
    %v1521 = vunpack.c.h.b16 %v345
    %v1522 = vunpack.c.l.b16 %v346
    %v1523 = vunpack.c.h.b16 %v346
    %v1524 = vunpack.c.l.b16 %v347
    %v1525 = vunpack.c.h.b16 %v347
    %v1526 = vunpack.c.l.b16 %v348
    %v1527 = vunpack.c.h.b16 %v348
    %v1528 = vunpack.c.l.b16 %v349
    %v1529 = vunpack.c.h.b16 %v349
    %v1530 = vunpack.c.l.b16 %v350
    %v1531 = vunpack.c.h.b16 %v350
    %v1532 = vunpack.c.l.b16 %v351
    %v1533 = vunpack.c.h.b16 %v351
    %v1534 = vunpack.c.l.b16 %v352
    %v1535 = vunpack.c.h.b16 %v352
    %v1536 = vunpack.c.l.b16 %v353
    %v1537 = vunpack.c.h.b16 %v353
    %v1538 = vunpack.c.l.b16 %v354
    %v1539 = vunpack.c.h.b16 %v354
    %v1540 = vunpack.c.l.b16 %v355
    %v1541 = vunpack.c.h.b16 %v355
    %v1542 = vunpack.c.l.b16 %v356
    %v1543 = vunpack.c.h.b16 %v356
    %v1544 = vunpack.c.l.b16 %v357
    %v1545 = vunpack.c.h.b16 %v357
    %v1546 = vunpack.c.l.b16 %v358
    %v1547 = vunpack.c.h.b16 %v358
    %v1548 = vunpack.c.l.b16 %v359
    %v1549 = vunpack.c.h.b16 %v359
    %v1550 = vunpack.c.l.b16 %v360
    %v1551 = vunpack.c.h.b16 %v360
    %v1552 = vunpack.c.l.b16 %v361
    %v1553 = vunpack.c.h.b16 %v361
    %v1554 = vunpack.c.l.b16 %v362
    %v1555 = vunpack.c.h.b16 %v362
    %v1556 = vunpack.c.l.b16 %v363
    %v1557 = vunpack.c.h.b16 %v363
    %v1558 = vunpack.c.l.b16 %v364
    %v1559 = vunpack.c.h.b16 %v364
    %v1560 = vunpack.c.l.b16 %v365
    %v1561 = vunpack.c.h.b16 %v365
    %v1562 = vunpack.c.l.b16 %v366
    %v1563 = vunpack.c.h.b16 %v366
    %v1564 = vunpack.c.l.b16 %v367
    %v1565 = vunpack.c.h.b16 %v367
    %v1566 = vunpack.c.l.b16 %v368
    %v1567 = vunpack.c.h.b16 %v368
    %v1568 = vunpack.c.l.b16 %v369
    %v1569 = vunpack.c.h.b16 %v369
    %v1570 = vunpack.c.l.b16 %v370
    %v1571 = vunpack.c.h.b16 %v370
    %v1572 = vunpack.c.l.b16 %v371
    %v1573 = vunpack.c.h.b16 %v371
    %v1574 = vunpack.c.l.b16 %v372
    %v1575 = vunpack.c.h.b16 %v372
    %v1576 = vunpack.c.l.b16 %v373
    %v1577 = vunpack.c.h.b16 %v373
    %v1578 = vunpack.c.l.b16 %v374
    %v1579 = vunpack.c.h.b16 %v374
    %v1580 = vunpack.c.l.b16 %v375
    %v1581 = vunpack.c.h.b16 %v375
    %v1582 = vunpack.c.l.b16 %v376
    %v1583 = vunpack.c.h.b16 %v376
    %v1584 = vunpack.c.l.b16 %v377
    %v1585 = vunpack.c.h.b16 %v377
    %v1586 = vunpack.c.l.b16 %v378
    %v1587 = vunpack.c.h.b16 %v378
    %v1588 = vunpack.c.l.b16 %v379
    %v1589 = vunpack.c.h.b16 %v379
    %v1590 = vunpack.c.l.b16 %v380
    %v1591 = vunpack.c.h.b16 %v380
    %v1592 = vunpack.c.l.b16 %v381
    %v1593 = vunpack.c.h.b16 %v381
    %v1594 = vunpack.c.l.b16 %v382
    %v1595 = vunpack.c.h.b16 %v382
    %v1596 = vunpack.c.l.b16 %v383
    %v1597 = vunpack.c.h.b16 %v383
    %v1598 = vunpack.c.l.b16 %v384
    %v1599 = vunpack.c.h.b16 %v384
    %v1600 = vunpack.c.l.b16 %v385
    %v1601 = vunpack.c.h.b16 %v385
    %v1602 = vunpack.c.l.b16 %v386
    %v1603 = vunpack.c.h.b16 %v386
    %v1604 = vunpack.c.l.b16 %v387
    %v1605 = vunpack.c.h.b16 %v387
    %v1606 = vunpack.c.l.b16 %v388
    %v1607 = vunpack.c.h.b16 %v388
    %v1608 = vunpack.c.l.b16 %v389
    %v1609 = vunpack.c.h.b16 %v389
    %v1610 = vunpack.c.l.b16 %v390
    %v1611 = vunpack.c.h.b16 %v390
    %v1612 = vunpack.c.l.b16 %v391
    %v1613 = vunpack.c.h.b16 %v391
    %v1614 = vunpack.c.l.b16 %v392
    %v1615 = vunpack.c.h.b16 %v392
    %v1616 = vunpack.c.l.b16 %v393
    %v1617 = vunpack.c.h.b16 %v393
    %v1618 = vunpack.c.l.b16 %v394
    %v1619 = vunpack.c.h.b16 %v394
    %v1620 = vunpack.c.l.b16 %v395
    %v1621 = vunpack.c.h.b16 %v395
    %v1622 = vunpack.c.l.b16 %v396
    %v1623 = vunpack.c.h.b16 %v396
    %v1624 = vunpack.c.l.b16 %v397
    %v1625 = vunpack.c.h.b16 %v397
    %v1626 = vunpack.c.l.b16 %v398
    %v1627 = vunpack.c.h.b16 %v398
    %v1628 = vunpack.c.l.b16 %v399
    %v1629 = vunpack.c.h.b16 %v399
    %v1630 = vunpack.c.l.b16 %v400
    %v1631 = vunpack.c.h.b16 %v400
    %v1632 = vunpack.c.l.b16 %v401
    %v1633 = vunpack.c.h.b16 %v401
    %v1634 = vunpack.c.l.b16 %v402
    %v1635 = vunpack.c.h.b16 %v402
    %v1636 = vunpack.c.l.b16 %v403
    %v1637 = vunpack.c.h.b16 %v403
    %v1638 = vunpack.c.l.b16 %v404
    %v1639 = vunpack.c.h.b16 %v404
    %v1640 = vunpack.c.l.b16 %v405
    %v1641 = vunpack.c.h.b16 %v405
    %v1642 = vunpack.c.l.b16 %v406
    %v1643 = vunpack.c.h.b16 %v406
    %v1644 = vunpack.c.l.b16 %v407
    %v1645 = vunpack.c.h.b16 %v407
    %v1646 = vunpack.c.l.b16 %v408
    %v1647 = vunpack.c.h.b16 %v408
    %v1648 = vunpack.c.l.b16 %v409
    %v1649 = vunpack.c.h.b16 %v409
    %v1650 = vunpack.c.l.b16 %v410
    %v1651 = vunpack.c.h.b16 %v410
    %v1652 = vunpack.c.l.b16 %v411
    %v1653 = vunpack.c.h.b16 %v411
    %v1654 = vunpack.c.l.b16 %v412
    %v1655 = vunpack.c.h.b16 %v412
    %v1656 = vunpack.c.l.b16 %v413
    %v1657 = vunpack.c.h.b16 %v413
    %v1658 = vunpack.c.l.b16 %v414
    %v1659 = vunpack.c.h.b16 %v414
    %v1660 = vunpack.c.l.b16 %v415
    %v1661 = vunpack.c.h.b16 %v415
    %v1662 = vunpack.c.l.b16 %v416
    %v1663 = vunpack.c.h.b16 %v416
    %v1664 = vunpack.c.l.b16 %v417
    %v1665 = vunpack.c.h.b16 %v417
    %v1666 = vunpack.c.l.b16 %v418
    %v1667 = vunpack.c.h.b16 %v418
    %v1668 = vunpack.c.l.b16 %v419
    %v1669 = vunpack.c.h.b16 %v419
    %v1670 = vunpack.c.l.b16 %v420
    %v1671 = vunpack.c.h.b16 %v420
    %v1672 = vunpack.c.l.b16 %v421
    %v1673 = vunpack.c.h.b16 %v421
    %v1674 = vunpack.c.l.b16 %v422
    %v1675 = vunpack.c.h.b16 %v422
    %v1676 = vunpack.c.l.b16 %v423
    %v1677 = vunpack.c.h.b16 %v423
    %v1678 = vunpack.c.l.b16 %v424
    %v1679 = vunpack.c.h.b16 %v424
    %v1680 = vunpack.c.l.b16 %v425
    %v1681 = vunpack.c.h.b16 %v425
    %v1682 = vunpack.c.l.b16 %v426
    %v1683 = vunpack.c.h.b16 %v426
    %v1684 = vunpack.c.l.b16 %v427
    %v1685 = vunpack.c.h.b16 %v427
    %v1686 = vunpack.c.l.b16 %v428
    %v1687 = vunpack.c.h.b16 %v428
    %v1688 = vunpack.c.l.b16 %v429
    %v1689 = vunpack.c.h.b16 %v429
    %v1690 = vunpack.c.l.b16 %v430
    %v1691 = vunpack.c.h.b16 %v430
    %v1692 = vunpack.c.l.b16 %v431
    %v1693 = vunpack.c.h.b16 %v431
    %v1694 = vunpack.c.l.b16 %v432
    %v1695 = vunpack.c.h.b16 %v432
    %v1696 = vunpack.c.l.b16 %v433
    %v1697 = vunpack.c.h.b16 %v433
    %v1698 = vunpack.c.l.b16 %v434
    %v1699 = vunpack.c.h.b16 %v434
    %v1700 = vunpack.c.l.b16 %v435
    %v1701 = vunpack.c.h.b16 %v435
    %v1702 = vunpack.c.l.b16 %v436
    %v1703 = vunpack.c.h.b16 %v436
    %v1704 = vunpack.c.l.b16 %v437
    %v1705 = vunpack.c.h.b16 %v437
    %v1706 = vunpack.c.l.b16 %v438
    %v1707 = vunpack.c.h.b16 %v438
    %v1708 = vunpack.c.l.b16 %v439
    %v1709 = vunpack.c.h.b16 %v439
    %v1710 = vunpack.c.l.b16 %v440
    %v1711 = vunpack.c.h.b16 %v440
    %v1712 = vunpack.c.l.b16 %v441
    %v1713 = vunpack.c.h.b16 %v441
    %v1714 = vunpack.c.l.b16 %v442
    %v1715 = vunpack.c.h.b16 %v442
    %v1716 = vunpack.c.l.b16 %v443
    %v1717 = vunpack.c.h.b16 %v443
    %v1718 = vunpack.c.l.b16 %v444
    %v1719 = vunpack.c.h.b16 %v444
    %v1720 = vunpack.c.l.b16 %v445
    %v1721 = vunpack.c.h.b16 %v445
    %v1722 = vunpack.c.l.b16 %v446
    %v1723 = vunpack.c.h.b16 %v446
    %v1724 = vunpack.c.l.b16 %v447
    %v1725 = vunpack.c.h.b16 %v447
    %v1726 = vunpack.c.l.b16 %v448
    %v1727 = vunpack.c.h.b16 %v448
    %v1728 = vunpack.c.l.b16 %v449
    %v1729 = vunpack.c.h.b16 %v449
    %v1730 = vunpack.c.l.b16 %v450
    %v1731 = vunpack.c.h.b16 %v450
    %v1732 = vunpack.c.l.b16 %v451
    %v1733 = vunpack.c.h.b16 %v451
    %v1734 = vunpack.c.l.b16 %v452
    %v1735 = vunpack.c.h.b16 %v452
    %v1736 = vunpack.c.l.b16 %v453
    %v1737 = vunpack.c.h.b16 %v453
    %v1738 = vunpack.c.l.b16 %v454
    %v1739 = vunpack.c.h.b16 %v454
    %v1740 = vunpack.c.l.b16 %v455
    %v1741 = vunpack.c.h.b16 %v455
    %v1742 = vunpack.c.l.b16 %v456
    %v1743 = vunpack.c.h.b16 %v456
    %v1744 = vunpack.c.l.b16 %v457
    %v1745 = vunpack.c.h.b16 %v457
    %v1746 = vunpack.c.l.b16 %v458
    %v1747 = vunpack.c.h.b16 %v458
    %v1748 = vunpack.c.l.b16 %v459
    %v1749 = vunpack.c.h.b16 %v459
    %v1750 = vunpack.c.l.b16 %v460
    %v1751 = vunpack.c.h.b16 %v460
    %v1752 = vunpack.c.l.b16 %v461
    %v1753 = vunpack.c.h.b16 %v461
    %v1754 = vunpack.c.l.b16 %v462
    %v1755 = vunpack.c.h.b16 %v462
    %v1756 = vunpack.c.l.b16 %v463
    %v1757 = vunpack.c.h.b16 %v463
    %v1758 = vunpack.c.l.b16 %v464
    %v1759 = vunpack.c.h.b16 %v464
    %v1760 = vunpack.c.l.b16 %v465
    %v1761 = vunpack.c.h.b16 %v465
    %v1762 = vunpack.c.l.b16 %v466
    %v1763 = vunpack.c.h.b16 %v466
    %v1764 = vunpack.c.l.b16 %v467
    %v1765 = vunpack.c.h.b16 %v467
    %v1766 = vunpack.c.l.b16 %v468
    %v1767 = vunpack.c.h.b16 %v468
    %v1768 = vunpack.c.l.b16 %v469
    %v1769 = vunpack.c.h.b16 %v469
    %v1770 = vunpack.c.l.b16 %v470
    %v1771 = vunpack.c.h.b16 %v470
    %v1772 = vunpack.c.l.b16 %v471
    %v1773 = vunpack.c.h.b16 %v471
    %v1774 = vunpack.c.l.b16 %v472
    %v1775 = vunpack.c.h.b16 %v472
    %v1776 = vunpack.c.l.b16 %v473
    %v1777 = vunpack.c.h.b16 %v473
    %v1778 = vunpack.c.l.b16 %v474
    %v1779 = vunpack.c.h.b16 %v474
    %v1780 = vunpack.c.l.b16 %v475
    %v1781 = vunpack.c.h.b16 %v475
    %v1782 = vunpack.c.l.b16 %v476
    %v1783 = vunpack.c.h.b16 %v476
    %v1784 = vunpack.c.l.b16 %v477
    %v1785 = vunpack.c.h.b16 %v477
    %v1786 = vunpack.c.l.b16 %v478
    %v1787 = vunpack.c.h.b16 %v478
    %v1788 = vunpack.c.l.b16 %v479
    %v1789 = vunpack.c.h.b16 %v479
    %v1790 = vunpack.c.l.b16 %v480
    %v1791 = vunpack.c.h.b16 %v480
    %v1792 = vunpack.c.l.b16 %v481
    %v1793 = vunpack.c.h.b16 %v481
    %v1794 = vunpack.c.l.b16 %v482
    %v1795 = vunpack.c.h.b16 %v482
    %v1796 = vunpack.c.l.b16 %v483
    %v1797 = vunpack.c.h.b16 %v483
    %v1798 = vunpack.c.l.b16 %v484
    %v1799 = vunpack.c.h.b16 %v484
    %v1800 = vunpack.c.l.b16 %v485
    %v1801 = vunpack.c.h.b16 %v485
    %v1802 = vunpack.c.l.b16 %v486
    %v1803 = vunpack.c.h.b16 %v486
    %v1804 = vunpack.c.l.b16 %v487
    %v1805 = vunpack.c.h.b16 %v487
    %v1806 = vunpack.c.l.b16 %v488
    %v1807 = vunpack.c.h.b16 %v488
    %v1808 = vunpack.c.l.b16 %v489
    %v1809 = vunpack.c.h.b16 %v489
    %v1810 = vunpack.c.l.b16 %v490
    %v1811 = vunpack.c.h.b16 %v490
    %v1812 = vunpack.c.l.b16 %v491
    %v1813 = vunpack.c.h.b16 %v491
    %v1814 = vunpack.c.l.b16 %v492
    %v1815 = vunpack.c.h.b16 %v492
    %v1816 = vunpack.c.l.b16 %v493
    %v1817 = vunpack.c.h.b16 %v493
    %v1818 = vunpack.c.l.b16 %v494
    %v1819 = vunpack.c.h.b16 %v494
    %v1820 = vunpack.c.l.b16 %v495
    %v1821 = vunpack.c.h.b16 %v495
    %v1822 = vunpack.c.l.b16 %v496
    %v1823 = vunpack.c.h.b16 %v496
    %v1824 = vunpack.c.l.b16 %v497
    %v1825 = vunpack.c.h.b16 %v497
    %v1826 = vunpack.c.l.b16 %v498
    %v1827 = vunpack.c.h.b16 %v498
    %v1828 = vunpack.c.l.b16 %v499
    %v1829 = vunpack.c.h.b16 %v499
    %v1830 = vunpack.c.l.b16 %v500
    %v1831 = vunpack.c.h.b16 %v500
    %v1832 = vunpack.c.l.b16 %v501
    %v1833 = vunpack.c.h.b16 %v501
    %v1834 = vunpack.c.l.b16 %v502
    %v1835 = vunpack.c.h.b16 %v502
    %v1836 = vunpack.c.l.b16 %v503
    %v1837 = vunpack.c.h.b16 %v503
    %v1838 = vunpack.c.l.b16 %v504
    %v1839 = vunpack.c.h.b16 %v504
    %v1840 = vunpack.c.l.b16 %v505
    %v1841 = vunpack.c.h.b16 %v505
    %v1842 = vunpack.c.l.b16 %v506
    %v1843 = vunpack.c.h.b16 %v506
    %v1844 = vunpack.c.l.b16 %v507
    %v1845 = vunpack.c.h.b16 %v507
    %v1846 = vunpack.c.l.b16 %v508
    %v1847 = vunpack.c.h.b16 %v508
    %v1848 = vunpack.c.l.b16 %v509
    %v1849 = vunpack.c.h.b16 %v509
    %v1850 = vunpack.c.l.b16 %v510
    %v1851 = vunpack.c.h.b16 %v510
    %v1852 = vunpack.c.l.b16 %v511
    %v1853 = vunpack.c.h.b16 %v511
    %v1854 = vunpack.c.l.b16 %v512
    %v1855 = vunpack.c.h.b16 %v512
    %v1856 = vunpack.c.l.b16 %v513
    %v1857 = vunpack.c.h.b16 %v513
    %v1858 = vunpack.c.l.b16 %v514
    %v1859 = vunpack.c.h.b16 %v514
    %v1860 = vunpack.c.l.b16 %v515
    %v1861 = vunpack.c.h.b16 %v515
    %v1862 = vunpack.c.l.b16 %v516
    %v1863 = vunpack.c.h.b16 %v516
    %v1864 = vunpack.c.l.b16 %v517
    %v1865 = vunpack.c.h.b16 %v517
    %v1866 = vunpack.c.l.b16 %v518
    %v1867 = vunpack.c.h.b16 %v518
    %v1868 = vunpack.c.l.b16 %v519
    %v1869 = vunpack.c.h.b16 %v519
    %v1870 = vunpack.c.l.b16 %v520
    %v1871 = vunpack.c.h.b16 %v520
    %v1872 = vunpack.c.l.b16 %v521
    %v1873 = vunpack.c.h.b16 %v521
    %v1874 = vunpack.c.l.b16 %v522
    %v1875 = vunpack.c.h.b16 %v522
    %v1876 = vunpack.c.l.b16 %v523
    %v1877 = vunpack.c.h.b16 %v523
    %v1878 = vunpack.c.l.b16 %v524
    %v1879 = vunpack.c.h.b16 %v524
    %v1880 = vunpack.c.l.b16 %v525
    %v1881 = vunpack.c.h.b16 %v525
    %v1882 = vunpack.c.l.b16 %v526
    %v1883 = vunpack.c.h.b16 %v526
    %v1884 = vunpack.c.l.b16 %v527
    %v1885 = vunpack.c.h.b16 %v527
    %v1886 = vunpack.c.l.b16 %v528
    %v1887 = vunpack.c.h.b16 %v528
    %v1888 = vunpack.c.l.b16 %v529
    %v1889 = vunpack.c.h.b16 %v529
    %v1890 = vunpack.c.l.b16 %v530
    %v1891 = vunpack.c.h.b16 %v530
    %v1892 = vunpack.c.l.b16 %v531
    %v1893 = vunpack.c.h.b16 %v531
    %v1894 = vunpack.c.l.b16 %v532
    %v1895 = vunpack.c.h.b16 %v532
    %v1896 = vunpack.c.l.b16 %v533
    %v1897 = vunpack.c.h.b16 %v533
    %v1898 = vunpack.c.l.b16 %v534
    %v1899 = vunpack.c.h.b16 %v534
    %v1900 = vunpack.c.l.b16 %v535
    %v1901 = vunpack.c.h.b16 %v535
    %v1902 = vunpack.c.l.b16 %v536
    %v1903 = vunpack.c.h.b16 %v536
    %v1904 = vunpack.c.l.b16 %v537
    %v1905 = vunpack.c.h.b16 %v537
    %v1906 = vunpack.c.l.b16 %v538
    %v1907 = vunpack.c.h.b16 %v538
    %v1908 = vunpack.c.l.b16 %v539
    %v1909 = vunpack.c.h.b16 %v539
    %v1910 = vunpack.c.l.b16 %v540
    %v1911 = vunpack.c.h.b16 %v540
    %v1912 = vunpack.c.l.b16 %v541
    %v1913 = vunpack.c.h.b16 %v541
    %v1914 = vunpack.c.l.b16 %v542
    %v1915 = vunpack.c.h.b16 %v542
    %v1916 = vunpack.c.l.b16 %v543
    %v1917 = vunpack.c.h.b16 %v543
    %v1918 = vunpack.c.l.b16 %v544
    %v1919 = vunpack.c.h.b16 %v544
    %v1920 = vunpack.c.l.b16 %v545
    %v1921 = vunpack.c.h.b16 %v545
    %v1922 = vunpack.c.l.b16 %v546
    %v1923 = vunpack.c.h.b16 %v546
    %v1924 = vunpack.c.l.b16 %v547
    %v1925 = vunpack.c.h.b16 %v547
    %v1926 = vunpack.c.l.b16 %v548
    %v1927 = vunpack.c.h.b16 %v548
    %v1928 = vunpack.c.l.b16 %v549
    %v1929 = vunpack.c.h.b16 %v549
    %v1930 = vunpack.c.l.b16 %v550
    %v1931 = vunpack.c.h.b16 %v550
    %v1932 = vunpack.c.l.b16 %v551
    %v1933 = vunpack.c.h.b16 %v551
    %v1934 = vunpack.c.l.b16 %v552
    %v1935 = vunpack.c.h.b16 %v552
    %v1936 = vunpack.c.l.b16 %v553
    %v1937 = vunpack.c.h.b16 %v553
    %v1938 = vunpack.c.l.b16 %v554
    %v1939 = vunpack.c.h.b16 %v554
    %v1940 = vunpack.c.l.b16 %v555
    %v1941 = vunpack.c.h.b16 %v555
    %v1942 = vunpack.c.l.b16 %v556
    %v1943 = vunpack.c.h.b16 %v556
    %v1944 = vunpack.c.l.b16 %v557
    %v1945 = vunpack.c.h.b16 %v557
    %v1946 = vunpack.c.l.b16 %v558
    %v1947 = vunpack.c.h.b16 %v558
    %v1948 = vunpack.c.l.b16 %v559
    %v1949 = vunpack.c.h.b16 %v559
    %v1950 = vunpack.c.l.b16 %v560
    %v1951 = vunpack.c.h.b16 %v560
    %v1952 = vunpack.c.l.b16 %v561
    %v1953 = vunpack.c.h.b16 %v561
    %v1954 = vunpack.c.l.b16 %v562
    %v1955 = vunpack.c.h.b16 %v562
    %v1956 = vunpack.c.l.b16 %v563
    %v1957 = vunpack.c.h.b16 %v563
    %v1958 = vunpack.c.l.b16 %v564
    %v1959 = vunpack.c.h.b16 %v564
    %v1960 = vunpack.c.l.b16 %v565
    %v1961 = vunpack.c.h.b16 %v565
    %v1962 = vunpack.c.l.b16 %v566
    %v1963 = vunpack.c.h.b16 %v566
    %v1964 = vunpack.c.l.b16 %v567
    %v1965 = vunpack.c.h.b16 %v567
    %v1966 = vunpack.c.l.b16 %v568
    %v1967 = vunpack.c.h.b16 %v568
    %v1968 = vunpack.c.l.b16 %v569
    %v1969 = vunpack.c.h.b16 %v569
    %v1970 = vunpack.c.l.b16 %v570
    %v1971 = vunpack.c.h.b16 %v570
    %v1972 = vunpack.c.l.b16 %v571
    %v1973 = vunpack.c.h.b16 %v571
    %v1974 = vunpack.c.l.b16 %v572
    %v1975 = vunpack.c.h.b16 %v572
    %v1976 = vunpack.c.l.b16 %v573
    %v1977 = vunpack.c.h.b16 %v573
    %v1978 = vunpack.c.l.b16 %v574
    %v1979 = vunpack.c.h.b16 %v574
    %v1980 = vunpack.c.l.b16 %v575
    %v1981 = vunpack.c.h.b16 %v575
    %v1982 = vunpack.c.l.b16 %v576
    %v1983 = vunpack.c.h.b16 %v576
    %v1984 = vunpack.c.l.b16 %v577
    %v1985 = vunpack.c.h.b16 %v577
    %v1986 = vunpack.c.l.b16 %v578
    %v1987 = vunpack.c.h.b16 %v578
    %v1988 = vunpack.c.l.b16 %v579
    %v1989 = vunpack.c.h.b16 %v579
    %v1990 = vunpack.c.l.b16 %v580
    %v1991 = vunpack.c.h.b16 %v580
    %v1992 = vunpack.c.l.b16 %v581
    %v1993 = vunpack.c.h.b16 %v581
    %v1994 = vunpack.c.l.b16 %v582
    %v1995 = vunpack.c.h.b16 %v582
    %v1996 = vunpack.c.l.b16 %v583
    %v1997 = vunpack.c.h.b16 %v583
    %v1998 = vunpack.c.l.b16 %v584
    %v1999 = vunpack.c.h.b16 %v584
    %v2000 = vunpack.c.l.b16 %v585
    %v2001 = vunpack.c.h.b16 %v585
    %v2002 = vunpack.c.l.b16 %v586
    %v2003 = vunpack.c.h.b16 %v586
    %v2004 = vunpack.c.l.b16 %v587
    %v2005 = vunpack.c.h.b16 %v587
    %v2006 = vunpack.c.l.b16 %v588
    %v2007 = vunpack.c.h.b16 %v588
    %v2008 = vunpack.c.l.b16 %v589
    %v2009 = vunpack.c.h.b16 %v589
    %v2010 = vunpack.c.l.b16 %v590
    %v2011 = vunpack.c.h.b16 %v590
    %v2012 = vunpack.c.l.b16 %v591
    %v2013 = vunpack.c.h.b16 %v591
    %v2014 = vpack.c.b16 %v1126, %v1118
    %v2015 = vpack.c.b16 %v1127, %v1119
    %v2016 = vpack.c.b16 %v1128, %v1120
    %v2017 = vpack.c.b16 %v1129, %v1121
    %v2018 = vpack.c.b16 %v1130, %v1122
    %v2019 = vpack.c.b16 %v1131, %v1123
    %v2020 = vpack.c.b16 %v1132, %v1124
    %v2021 = vpack.c.b16 %v1133, %v1125
    %v2022 = vpack.c.b16 %v1142, %v1134
    %v2023 = vpack.c.b16 %v1143, %v1135
    %v2024 = vpack.c.b16 %v1144, %v1136
    %v2025 = vpack.c.b16 %v1145, %v1137
    %v2026 = vpack.c.b16 %v1146, %v1138
    %v2027 = vpack.c.b16 %v1147, %v1139
    %v2028 = vpack.c.b16 %v1148, %v1140
    %v2029 = vpack.c.b16 %v1149, %v1141
    %v2030 = vpack.c.b16 %v1158, %v1150
    %v2031 = vpack.c.b16 %v1159, %v1151
    %v2032 = vpack.c.b16 %v1160, %v1152
    %v2033 = vpack.c.b16 %v1161, %v1153
    %v2034 = vpack.c.b16 %v1162, %v1154
    %v2035 = vpack.c.b16 %v1163, %v1155
    %v2036 = vpack.c.b16 %v1164, %v1156
    %v2037 = vpack.c.b16 %v1165, %v1157
    %v2038 = vpack.c.b16 %v1174, %v1166
    %v2039 = vpack.c.b16 %v1175, %v1167
    %v2040 = vpack.c.b16 %v1176, %v1168
    %v2041 = vpack.c.b16 %v1177, %v1169
    %v2042 = vpack.c.b16 %v1178, %v1170
    %v2043 = vpack.c.b16 %v1179, %v1171
    %v2044 = vpack.c.b16 %v1180, %v1172
    %v2045 = vpack.c.b16 %v1181, %v1173
    %v2046 = vpack.c.b16 %v1190, %v1182
    %v2047 = vpack.c.b16 %v1191, %v1183
    %v2048 = vpack.c.b16 %v1192, %v1184
    %v2049 = vpack.c.b16 %v1193, %v1185
    %v2050 = vpack.c.b16 %v1194, %v1186
    %v2051 = vpack.c.b16 %v1195, %v1187
    %v2052 = vpack.c.b16 %v1196, %v1188
    %v2053 = vpack.c.b16 %v1197, %v1189
    %v2054 = vpack.c.b16 %v1206, %v1198
    %v2055 = vpack.c.b16 %v1207, %v1199
    %v2056 = vpack.c.b16 %v1208, %v1200
    %v2057 = vpack.c.b16 %v1209, %v1201
    %v2058 = vpack.c.b16 %v1210, %v1202
    %v2059 = vpack.c.b16 %v1211, %v1203
    %v2060 = vpack.c.b16 %v1212, %v1204
    %v2061 = vpack.c.b16 %v1213, %v1205
    %v2062 = vpack.c.b16 %v1222, %v1214
    %v2063 = vpack.c.b16 %v1223, %v1215
    %v2064 = vpack.c.b16 %v1224, %v1216
    %v2065 = vpack.c.b16 %v1225, %v1217
    %v2066 = vpack.c.b16 %v1226, %v1218
    %v2067 = vpack.c.b16 %v1227, %v1219
    %v2068 = vpack.c.b16 %v1228, %v1220
    %v2069 = vpack.c.b16 %v1229, %v1221
    %v2070 = vpack.c.b16 %v1238, %v1230
    %v2071 = vpack.c.b16 %v1239, %v1231
    %v2072 = vpack.c.b16 %v1240, %v1232
    %v2073 = vpack.c.b16 %v1241, %v1233
    %v2074 = vpack.c.b16 %v1242, %v1234
    %v2075 = vpack.c.b16 %v1243, %v1235
    %v2076 = vpack.c.b16 %v1244, %v1236
    %v2077 = vpack.c.b16 %v1245, %v1237
    %v2078 = vpack.c.b16 %v1254, %v1246
    %v2079 = vpack.c.b16 %v1255, %v1247
    %v2080 = vpack.c.b16 %v1256, %v1248
    %v2081 = vpack.c.b16 %v1257, %v1249
    %v2082 = vpack.c.b16 %v1258, %v1250
    %v2083 = vpack.c.b16 %v1259, %v1251
    %v2084 = vpack.c.b16 %v1260, %v1252
    %v2085 = vpack.c.b16 %v1261, %v1253
    %v2086 = vpack.c.b16 %v1270, %v1262
    %v2087 = vpack.c.b16 %v1271, %v1263
    %v2088 = vpack.c.b16 %v1272, %v1264
    %v2089 = vpack.c.b16 %v1273, %v1265
    %v2090 = vpack.c.b16 %v1274, %v1266
    %v2091 = vpack.c.b16 %v1275, %v1267
    %v2092 = vpack.c.b16 %v1276, %v1268
    %v2093 = vpack.c.b16 %v1277, %v1269
    %v2094 = vpack.c.b16 %v1286, %v1278
    %v2095 = vpack.c.b16 %v1287, %v1279
    %v2096 = vpack.c.b16 %v1288, %v1280
    %v2097 = vpack.c.b16 %v1289, %v1281
    %v2098 = vpack.c.b16 %v1290, %v1282
    %v2099 = vpack.c.b16 %v1291, %v1283
    %v2100 = vpack.c.b16 %v1292, %v1284
    %v2101 = vpack.c.b16 %v1293, %v1285
    %v2102 = vpack.c.b16 %v1302, %v1294
    %v2103 = vpack.c.b16 %v1303, %v1295
    %v2104 = vpack.c.b16 %v1304, %v1296
    %v2105 = vpack.c.b16 %v1305, %v1297
    %v2106 = vpack.c.b16 %v1306, %v1298
    %v2107 = vpack.c.b16 %v1307, %v1299
    %v2108 = vpack.c.b16 %v1308, %v1300
    %v2109 = vpack.c.b16 %v1309, %v1301
    %v2110 = vpack.c.b16 %v1318, %v1310
    %v2111 = vpack.c.b16 %v1319, %v1311
    %v2112 = vpack.c.b16 %v1320, %v1312
    %v2113 = vpack.c.b16 %v1321, %v1313
    %v2114 = vpack.c.b16 %v1322, %v1314
    %v2115 = vpack.c.b16 %v1323, %v1315
    %v2116 = vpack.c.b16 %v1324, %v1316
    %v2117 = vpack.c.b16 %v1325, %v1317
    %v2118 = vpack.c.b16 %v1334, %v1326
    %v2119 = vpack.c.b16 %v1335, %v1327
    %v2120 = vpack.c.b16 %v1336, %v1328
    %v2121 = vpack.c.b16 %v1337, %v1329
    %v2122 = vpack.c.b16 %v1338, %v1330
    %v2123 = vpack.c.b16 %v1339, %v1331
    %v2124 = vpack.c.b16 %v1340, %v1332
    %v2125 = vpack.c.b16 %v1341, %v1333
    %v2126 = vpack.c.b16 %v1350, %v1342
    %v2127 = vpack.c.b16 %v1351, %v1343
    %v2128 = vpack.c.b16 %v1352, %v1344
    %v2129 = vpack.c.b16 %v1353, %v1345
    %v2130 = vpack.c.b16 %v1354, %v1346
    %v2131 = vpack.c.b16 %v1355, %v1347
    %v2132 = vpack.c.b16 %v1356, %v1348
    %v2133 = vpack.c.b16 %v1357, %v1349
    %v2134 = vpack.c.b16 %v1366, %v1358
    %v2135 = vpack.c.b16 %v1367, %v1359
    %v2136 = vpack.c.b16 %v1368, %v1360
    %v2137 = vpack.c.b16 %v1369, %v1361
    %v2138 = vpack.c.b16 %v1370, %v1362
    %v2139 = vpack.c.b16 %v1371, %v1363
    %v2140 = vpack.c.b16 %v1372, %v1364
    %v2141 = vpack.c.b16 %v1373, %v1365
    %v2142 = vpack.c.b16 %v1382, %v1374
    %v2143 = vpack.c.b16 %v1383, %v1375
    %v2144 = vpack.c.b16 %v1384, %v1376
    %v2145 = vpack.c.b16 %v1385, %v1377
    %v2146 = vpack.c.b16 %v1386, %v1378
    %v2147 = vpack.c.b16 %v1387, %v1379
    %v2148 = vpack.c.b16 %v1388, %v1380
    %v2149 = vpack.c.b16 %v1389, %v1381
    %v2150 = vpack.c.b16 %v1398, %v1390
    %v2151 = vpack.c.b16 %v1399, %v1391
    %v2152 = vpack.c.b16 %v1400, %v1392
    %v2153 = vpack.c.b16 %v1401, %v1393
    %v2154 = vpack.c.b16 %v1402, %v1394
    %v2155 = vpack.c.b16 %v1403, %v1395
    %v2156 = vpack.c.b16 %v1404, %v1396
    %v2157 = vpack.c.b16 %v1405, %v1397
    %v2158 = vpack.c.b16 %v1414, %v1406
    %v2159 = vpack.c.b16 %v1415, %v1407
    %v2160 = vpack.c.b16 %v1416, %v1408
    %v2161 = vpack.c.b16 %v1417, %v1409
    %v2162 = vpack.c.b16 %v1418, %v1410
    %v2163 = vpack.c.b16 %v1419, %v1411
    %v2164 = vpack.c.b16 %v1420, %v1412
    %v2165 = vpack.c.b16 %v1421, %v1413
    %v2166 = vpack.c.b16 %v1430, %v1422
    %v2167 = vpack.c.b16 %v1431, %v1423
    %v2168 = vpack.c.b16 %v1432, %v1424
    %v2169 = vpack.c.b16 %v1433, %v1425
    %v2170 = vpack.c.b16 %v1434, %v1426
    %v2171 = vpack.c.b16 %v1435, %v1427
    %v2172 = vpack.c.b16 %v1436, %v1428
    %v2173 = vpack.c.b16 %v1437, %v1429
    %v2174 = vpack.c.b16 %v1446, %v1438
    %v2175 = vpack.c.b16 %v1447, %v1439
    %v2176 = vpack.c.b16 %v1448, %v1440
    %v2177 = vpack.c.b16 %v1449, %v1441
    %v2178 = vpack.c.b16 %v1450, %v1442
    %v2179 = vpack.c.b16 %v1451, %v1443
    %v2180 = vpack.c.b16 %v1452, %v1444
    %v2181 = vpack.c.b16 %v1453, %v1445
    %v2182 = vpack.c.b16 %v1462, %v1454
    %v2183 = vpack.c.b16 %v1463, %v1455
    %v2184 = vpack.c.b16 %v1464, %v1456
    %v2185 = vpack.c.b16 %v1465, %v1457
    %v2186 = vpack.c.b16 %v1466, %v1458
    %v2187 = vpack.c.b16 %v1467, %v1459
    %v2188 = vpack.c.b16 %v1468, %v1460
    %v2189 = vpack.c.b16 %v1469, %v1461
    %v2190 = vpack.c.b16 %v1478, %v1470
    %v2191 = vpack.c.b16 %v1479, %v1471
    %v2192 = vpack.c.b16 %v1480, %v1472
    %v2193 = vpack.c.b16 %v1481, %v1473
    %v2194 = vpack.c.b16 %v1482, %v1474
    %v2195 = vpack.c.b16 %v1483, %v1475
    %v2196 = vpack.c.b16 %v1484, %v1476
    %v2197 = vpack.c.b16 %v1485, %v1477
    %v2198 = vpack.c.b16 %v1494, %v1486
    %v2199 = vpack.c.b16 %v1495, %v1487
    %v2200 = vpack.c.b16 %v1496, %v1488
    %v2201 = vpack.c.b16 %v1497, %v1489
    %v2202 = vpack.c.b16 %v1498, %v1490
    %v2203 = vpack.c.b16 %v1499, %v1491
    %v2204 = vpack.c.b16 %v1500, %v1492
    %v2205 = vpack.c.b16 %v1501, %v1493
    %v2206 = vpack.c.b16 %v1510, %v1502
    %v2207 = vpack.c.b16 %v1511, %v1503
    %v2208 = vpack.c.b16 %v1512, %v1504
    %v2209 = vpack.c.b16 %v1513, %v1505
    %v2210 = vpack.c.b16 %v1514, %v1506
    %v2211 = vpack.c.b16 %v1515, %v1507
    %v2212 = vpack.c.b16 %v1516, %v1508
    %v2213 = vpack.c.b16 %v1517, %v1509
    %v2214 = vpack.c.b16 %v1526, %v1518
    %v2215 = vpack.c.b16 %v1527, %v1519
    %v2216 = vpack.c.b16 %v1528, %v1520
    %v2217 = vpack.c.b16 %v1529, %v1521
    %v2218 = vpack.c.b16 %v1530, %v1522
    %v2219 = vpack.c.b16 %v1531, %v1523
    %v2220 = vpack.c.b16 %v1532, %v1524
    %v2221 = vpack.c.b16 %v1533, %v1525
    %v2222 = vpack.c.b16 %v1542, %v1534
    %v2223 = vpack.c.b16 %v1543, %v1535
    %v2224 = vpack.c.b16 %v1544, %v1536
    %v2225 = vpack.c.b16 %v1545, %v1537
    %v2226 = vpack.c.b16 %v1546, %v1538
    %v2227 = vpack.c.b16 %v1547, %v1539
    %v2228 = vpack.c.b16 %v1548, %v1540
    %v2229 = vpack.c.b16 %v1549, %v1541
    %v2230 = vpack.c.b16 %v1558, %v1550
    %v2231 = vpack.c.b16 %v1559, %v1551
    %v2232 = vpack.c.b16 %v1560, %v1552
    %v2233 = vpack.c.b16 %v1561, %v1553
    %v2234 = vpack.c.b16 %v1562, %v1554
    %v2235 = vpack.c.b16 %v1563, %v1555
    %v2236 = vpack.c.b16 %v1564, %v1556
    %v2237 = vpack.c.b16 %v1565, %v1557
    %v2238 = vpack.c.b16 %v1574, %v1566
    %v2239 = vpack.c.b16 %v1575, %v1567
    %v2240 = vpack.c.b16 %v1576, %v1568
    %v2241 = vpack.c.b16 %v1577, %v1569
    %v2242 = vpack.c.b16 %v1578, %v1570
    %v2243 = vpack.c.b16 %v1579, %v1571
    %v2244 = vpack.c.b16 %v1580, %v1572
    %v2245 = vpack.c.b16 %v1581, %v1573
    %v2246 = vpack.c.b16 %v1590, %v1582
    %v2247 = vpack.c.b16 %v1591, %v1583
    %v2248 = vpack.c.b16 %v1592, %v1584
    %v2249 = vpack.c.b16 %v1593, %v1585
    %v2250 = vpack.c.b16 %v1594, %v1586
    %v2251 = vpack.c.b16 %v1595, %v1587
    %v2252 = vpack.c.b16 %v1596, %v1588
    %v2253 = vpack.c.b16 %v1597, %v1589
    %v2254 = vpack.c.b16 %v1606, %v1598
    %v2255 = vpack.c.b16 %v1607, %v1599
    %v2256 = vpack.c.b16 %v1608, %v1600
    %v2257 = vpack.c.b16 %v1609, %v1601
    %v2258 = vpack.c.b16 %v1610, %v1602
    %v2259 = vpack.c.b16 %v1611, %v1603
    %v2260 = vpack.c.b16 %v1612, %v1604
    %v2261 = vpack.c.b16 %v1613, %v1605
    %v2262 = vpack.c.b16 %v1622, %v1614
    %v2263 = vpack.c.b16 %v1623, %v1615
    %v2264 = vpack.c.b16 %v1624, %v1616
    %v2265 = vpack.c.b16 %v1625, %v1617
    %v2266 = vpack.c.b16 %v1626, %v1618
    %v2267 = vpack.c.b16 %v1627, %v1619
    %v2268 = vpack.c.b16 %v1628, %v1620
    %v2269 = vpack.c.b16 %v1629, %v1621
    %v2270 = vpack.c.b16 %v1638, %v1630
    %v2271 = vpack.c.b16 %v1639, %v1631
    %v2272 = vpack.c.b16 %v1640, %v1632
    %v2273 = vpack.c.b16 %v1641, %v1633
    %v2274 = vpack.c.b16 %v1642, %v1634
    %v2275 = vpack.c.b16 %v1643, %v1635
    %v2276 = vpack.c.b16 %v1644, %v1636
    %v2277 = vpack.c.b16 %v1645, %v1637
    %v2278 = vpack.c.b16 %v1654, %v1646
    %v2279 = vpack.c.b16 %v1655, %v1647
    %v2280 = vpack.c.b16 %v1656, %v1648
    %v2281 = vpack.c.b16 %v1657, %v1649
    %v2282 = vpack.c.b16 %v1658, %v1650
    %v2283 = vpack.c.b16 %v1659, %v1651
    %v2284 = vpack.c.b16 %v1660, %v1652
    %v2285 = vpack.c.b16 %v1661, %v1653
    %v2286 = vpack.c.b16 %v1670, %v1662
    %v2287 = vpack.c.b16 %v1671, %v1663
    %v2288 = vpack.c.b16 %v1672, %v1664
    %v2289 = vpack.c.b16 %v1673, %v1665
    %v2290 = vpack.c.b16 %v1674, %v1666
    %v2291 = vpack.c.b16 %v1675, %v1667
    %v2292 = vpack.c.b16 %v1676, %v1668
    %v2293 = vpack.c.b16 %v1677, %v1669
    %v2294 = vpack.c.b16 %v1686, %v1678
    %v2295 = vpack.c.b16 %v1687, %v1679
    %v2296 = vpack.c.b16 %v1688, %v1680
    %v2297 = vpack.c.b16 %v1689, %v1681
    %v2298 = vpack.c.b16 %v1690, %v1682
    %v2299 = vpack.c.b16 %v1691, %v1683
    %v2300 = vpack.c.b16 %v1692, %v1684
    %v2301 = vpack.c.b16 %v1693, %v1685
    %v2302 = vpack.c.b16 %v1702, %v1694
    %v2303 = vpack.c.b16 %v1703, %v1695
    %v2304 = vpack.c.b16 %v1704, %v1696
    %v2305 = vpack.c.b16 %v1705, %v1697
    %v2306 = vpack.c.b16 %v1706, %v1698
    %v2307 = vpack.c.b16 %v1707, %v1699
    %v2308 = vpack.c.b16 %v1708, %v1700
    %v2309 = vpack.c.b16 %v1709, %v1701
    %v2310 = vpack.c.b16 %v1718, %v1710
    %v2311 = vpack.c.b16 %v1719, %v1711
    %v2312 = vpack.c.b16 %v1720, %v1712
    %v2313 = vpack.c.b16 %v1721, %v1713
    %v2314 = vpack.c.b16 %v1722, %v1714
    %v2315 = vpack.c.b16 %v1723, %v1715
    %v2316 = vpack.c.b16 %v1724, %v1716
    %v2317 = vpack.c.b16 %v1725, %v1717
    %v2318 = vpack.c.b16 %v1734, %v1726
    %v2319 = vpack.c.b16 %v1735, %v1727
    %v2320 = vpack.c.b16 %v1736, %v1728
    %v2321 = vpack.c.b16 %v1737, %v1729
    %v2322 = vpack.c.b16 %v1738, %v1730
    %v2323 = vpack.c.b16 %v1739, %v1731
    %v2324 = vpack.c.b16 %v1740, %v1732
    %v2325 = vpack.c.b16 %v1741, %v1733
    %v2326 = vpack.c.b16 %v1750, %v1742
    %v2327 = vpack.c.b16 %v1751, %v1743
    %v2328 = vpack.c.b16 %v1752, %v1744
    %v2329 = vpack.c.b16 %v1753, %v1745
    %v2330 = vpack.c.b16 %v1754, %v1746
    %v2331 = vpack.c.b16 %v1755, %v1747
    %v2332 = vpack.c.b16 %v1756, %v1748
    %v2333 = vpack.c.b16 %v1757, %v1749
    %v2334 = vpack.c.b16 %v1766, %v1758
    %v2335 = vpack.c.b16 %v1767, %v1759
    %v2336 = vpack.c.b16 %v1768, %v1760
    %v2337 = vpack.c.b16 %v1769, %v1761
    %v2338 = vpack.c.b16 %v1770, %v1762
    %v2339 = vpack.c.b16 %v1771, %v1763
    %v2340 = vpack.c.b16 %v1772, %v1764
    %v2341 = vpack.c.b16 %v1773, %v1765
    %v2342 = vpack.c.b16 %v1782, %v1774
    %v2343 = vpack.c.b16 %v1783, %v1775
    %v2344 = vpack.c.b16 %v1784, %v1776
    %v2345 = vpack.c.b16 %v1785, %v1777
    %v2346 = vpack.c.b16 %v1786, %v1778
    %v2347 = vpack.c.b16 %v1787, %v1779
    %v2348 = vpack.c.b16 %v1788, %v1780
    %v2349 = vpack.c.b16 %v1789, %v1781
    %v2350 = vpack.c.b16 %v1798, %v1790
    %v2351 = vpack.c.b16 %v1799, %v1791
    %v2352 = vpack.c.b16 %v1800, %v1792
    %v2353 = vpack.c.b16 %v1801, %v1793
    %v2354 = vpack.c.b16 %v1802, %v1794
    %v2355 = vpack.c.b16 %v1803, %v1795
    %v2356 = vpack.c.b16 %v1804, %v1796
    %v2357 = vpack.c.b16 %v1805, %v1797
    %v2358 = vpack.c.b16 %v1814, %v1806
    %v2359 = vpack.c.b16 %v1815, %v1807
    %v2360 = vpack.c.b16 %v1816, %v1808
    %v2361 = vpack.c.b16 %v1817, %v1809
    %v2362 = vpack.c.b16 %v1818, %v1810
    %v2363 = vpack.c.b16 %v1819, %v1811
    %v2364 = vpack.c.b16 %v1820, %v1812
    %v2365 = vpack.c.b16 %v1821, %v1813
    %v2366 = vpack.c.b16 %v1830, %v1822
    %v2367 = vpack.c.b16 %v1831, %v1823
    %v2368 = vpack.c.b16 %v1832, %v1824
    %v2369 = vpack.c.b16 %v1833, %v1825
    %v2370 = vpack.c.b16 %v1834, %v1826
    %v2371 = vpack.c.b16 %v1835, %v1827
    %v2372 = vpack.c.b16 %v1836, %v1828
    %v2373 = vpack.c.b16 %v1837, %v1829
    %v2374 = vpack.c.b16 %v1846, %v1838
    %v2375 = vpack.c.b16 %v1847, %v1839
    %v2376 = vpack.c.b16 %v1848, %v1840
    %v2377 = vpack.c.b16 %v1849, %v1841
    %v2378 = vpack.c.b16 %v1850, %v1842
    %v2379 = vpack.c.b16 %v1851, %v1843
    %v2380 = vpack.c.b16 %v1852, %v1844
    %v2381 = vpack.c.b16 %v1853, %v1845
    %v2382 = vpack.c.b16 %v1862, %v1854
    %v2383 = vpack.c.b16 %v1863, %v1855
    %v2384 = vpack.c.b16 %v1864, %v1856
    %v2385 = vpack.c.b16 %v1865, %v1857
    %v2386 = vpack.c.b16 %v1866, %v1858
    %v2387 = vpack.c.b16 %v1867, %v1859
    %v2388 = vpack.c.b16 %v1868, %v1860
    %v2389 = vpack.c.b16 %v1869, %v1861
    %v2390 = vpack.c.b16 %v1878, %v1870
    %v2391 = vpack.c.b16 %v1879, %v1871
    %v2392 = vpack.c.b16 %v1880, %v1872
    %v2393 = vpack.c.b16 %v1881, %v1873
    %v2394 = vpack.c.b16 %v1882, %v1874
    %v2395 = vpack.c.b16 %v1883, %v1875
    %v2396 = vpack.c.b16 %v1884, %v1876
    %v2397 = vpack.c.b16 %v1885, %v1877
    %v2398 = vpack.c.b16 %v1894, %v1886
    %v2399 = vpack.c.b16 %v1895, %v1887
    %v2400 = vpack.c.b16 %v1896, %v1888
    %v2401 = vpack.c.b16 %v1897, %v1889
    %v2402 = vpack.c.b16 %v1898, %v1890
    %v2403 = vpack.c.b16 %v1899, %v1891
    %v2404 = vpack.c.b16 %v1900, %v1892
    %v2405 = vpack.c.b16 %v1901, %v1893
    %v2406 = vpack.c.b16 %v1910, %v1902
    %v2407 = vpack.c.b16 %v1911, %v1903
    %v2408 = vpack.c.b16 %v1912, %v1904
    %v2409 = vpack.c.b16 %v1913, %v1905
    %v2410 = vpack.c.b16 %v1914, %v1906
    %v2411 = vpack.c.b16 %v1915, %v1907
    %v2412 = vpack.c.b16 %v1916, %v1908
    %v2413 = vpack.c.b16 %v1917, %v1909
    %v2414 = vpack.c.b16 %v1926, %v1918
    %v2415 = vpack.c.b16 %v1927, %v1919
    %v2416 = vpack.c.b16 %v1928, %v1920
    %v2417 = vpack.c.b16 %v1929, %v1921
    %v2418 = vpack.c.b16 %v1930, %v1922
    %v2419 = vpack.c.b16 %v1931, %v1923
    %v2420 = vpack.c.b16 %v1932, %v1924
    %v2421 = vpack.c.b16 %v1933, %v1925
    %v2422 = vpack.c.b16 %v1942, %v1934
    %v2423 = vpack.c.b16 %v1943, %v1935
    %v2424 = vpack.c.b16 %v1944, %v1936
    %v2425 = vpack.c.b16 %v1945, %v1937
    %v2426 = vpack.c.b16 %v1946, %v1938
    %v2427 = vpack.c.b16 %v1947, %v1939
    %v2428 = vpack.c.b16 %v1948, %v1940
    %v2429 = vpack.c.b16 %v1949, %v1941
    %v2430 = vpack.c.b16 %v1958, %v1950
    %v2431 = vpack.c.b16 %v1959, %v1951
    %v2432 = vpack.c.b16 %v1960, %v1952
    %v2433 = vpack.c.b16 %v1961, %v1953
    %v2434 = vpack.c.b16 %v1962, %v1954
    %v2435 = vpack.c.b16 %v1963, %v1955
    %v2436 = vpack.c.b16 %v1964, %v1956
    %v2437 = vpack.c.b16 %v1965, %v1957
    %v2438 = vpack.c.b16 %v1974, %v1966
    %v2439 = vpack.c.b16 %v1975, %v1967
    %v2440 = vpack.c.b16 %v1976, %v1968
    %v2441 = vpack.c.b16 %v1977, %v1969
    %v2442 = vpack.c.b16 %v1978, %v1970
    %v2443 = vpack.c.b16 %v1979, %v1971
    %v2444 = vpack.c.b16 %v1980, %v1972
    %v2445 = vpack.c.b16 %v1981, %v1973
    %v2446 = vpack.c.b16 %v1990, %v1982
    %v2447 = vpack.c.b16 %v1991, %v1983
    %v2448 = vpack.c.b16 %v1992, %v1984
    %v2449 = vpack.c.b16 %v1993, %v1985
    %v2450 = vpack.c.b16 %v1994, %v1986
    %v2451 = vpack.c.b16 %v1995, %v1987
    %v2452 = vpack.c.b16 %v1996, %v1988
    %v2453 = vpack.c.b16 %v1997, %v1989
    %v2454 = vpack.c.b16 %v2006, %v1998
    %v2455 = vpack.c.b16 %v2007, %v1999
    %v2456 = vpack.c.b16 %v2008, %v2000
    %v2457 = vpack.c.b16 %v2009, %v2001
    %v2458 = vpack.c.b16 %v2010, %v2002
    %v2459 = vpack.c.b16 %v2011, %v2003
    %v2460 = vpack.c.b16 %v2012, %v2004
    %v2461 = vpack.c.b16 %v2013, %v2005
    %2910 = vmatprep.subr.bf16.mxu0 %v2015
    %2911 = vmatpush1.bf16.msra.mxu0 %v2014
    %2912 = vmatprep.subr.bf16.mxu0 %v2023
    %2913 = vmatpush1.bf16.msra.mxu0 %v2022
    %2914 = vmatprep.subr.bf16.mxu0 %v2031
    %2915 = vmatpush1.bf16.msra.mxu0 %v2030
    %2916 = vmatprep.subr.bf16.mxu0 %v2039
    %2917 = vmatpush1.bf16.msra.mxu0 %v2038
    %2918 = vmatprep.subr.bf16.mxu0 %v2047
    %2919 = vmatpush1.bf16.msra.mxu0 %v2046
    %2920 = vmatprep.subr.bf16.mxu0 %v2055
    %2921 = vmatpush1.bf16.msra.mxu0 %v2054
    %2922 = vmatprep.subr.bf16.mxu0 %v2063
    %2923 = vmatpush1.bf16.msra.mxu0 %v2062
    %2924 = vmatprep.subr.bf16.mxu0 %v2071
    %2925 = vmatpush1.bf16.msra.mxu0 %v2070
    %2926 = vmatprep.subr.bf16.mxu0 %v2079
    %2927 = vmatpush1.bf16.msra.mxu0 %v2078
    %2928 = vmatprep.subr.bf16.mxu0 %v2087
    %2929 = vmatpush1.bf16.msra.mxu0 %v2086
    %2930 = vmatprep.subr.bf16.mxu0 %v2095
    %2931 = vmatpush1.bf16.msra.mxu0 %v2094
    %2932 = vmatprep.subr.bf16.mxu0 %v2103
    %2933 = vmatpush1.bf16.msra.mxu0 %v2102
    %2934 = vmatprep.subr.bf16.mxu0 %v2111
    %2935 = vmatpush1.bf16.msra.mxu0 %v2110
    %2936 = vmatprep.subr.bf16.mxu0 %v2119
    %2937 = vmatpush1.bf16.msra.mxu0 %v2118
    %2938 = vmatprep.subr.bf16.mxu0 %v2127
    %2939 = vmatpush1.bf16.msra.mxu0 %v2126
    %2940 = vmatprep.subr.bf16.mxu0 %v2135
    %2941 = vmatpush1.bf16.msra.mxu0 %v2134
    %2942 = vmatprep.mubr.bf16.mxu0 %v657
    %2943 = vmatmul.mubr.bf16.gmra.mrb[0].mxu0 %v656
    %v2944 = vpop.f32.mrb[0].mxu0
    %v2945 = vadd.f32 %v597, %v2944
    %v2946 = vpop.f32.mrb[0].mxu0
    %v2947 = vadd.f32 %v601, %v2946
    %v2948 = vpop.f32.mrb[0].mxu0
    %v2949 = vadd.f32 %v597, %v2948
    %v2950 = vpop.f32.mrb[0].mxu0
    %v2951 = vadd.f32 %v601, %v2950
    %2952 = vdwg.mxu0
    %2953 = vmatprep.subr.bf16.mxu0 %v2143
    %2954 = vmatpush1.bf16.msra.mxu0 %v2142
    %2955 = vmatprep.subr.bf16.mxu0 %v2151
    %2956 = vmatpush1.bf16.msra.mxu0 %v2150
    %2957 = vmatprep.subr.bf16.mxu0 %v2159
    %2958 = vmatpush1.bf16.msra.mxu0 %v2158
    %2959 = vmatprep.subr.bf16.mxu0 %v2167
    %2960 = vmatpush1.bf16.msra.mxu0 %v2166
    %2961 = vmatprep.subr.bf16.mxu0 %v2175
    %2962 = vmatpush1.bf16.msra.mxu0 %v2174
    %2963 = vmatprep.subr.bf16.mxu0 %v2183
    %2964 = vmatpush1.bf16.msra.mxu0 %v2182
    %2965 = vmatprep.subr.bf16.mxu0 %v2191
    %2966 = vmatpush1.bf16.msra.mxu0 %v2190
    %2967 = vmatprep.subr.bf16.mxu0 %v2199
    %2968 = vmatpush1.bf16.msra.mxu0 %v2198
    %2969 = vmatprep.subr.bf16.mxu0 %v2207
    %2970 = vmatpush1.bf16.msra.mxu0 %v2206
    %2971 = vmatprep.subr.bf16.mxu0 %v2215
    %2972 = vmatpush1.bf16.msra.mxu0 %v2214
    %2973 = vmatprep.subr.bf16.mxu0 %v2223
    %2974 = vmatpush1.bf16.msra.mxu0 %v2222
    %2975 = vmatprep.subr.bf16.mxu0 %v2231
    %2976 = vmatpush1.bf16.msra.mxu0 %v2230
    %2977 = vmatprep.subr.bf16.mxu0 %v2239
    %2978 = vmatpush1.bf16.msra.mxu0 %v2238
    %2979 = vmatprep.subr.bf16.mxu0 %v2247
    %2980 = vmatpush1.bf16.msra.mxu0 %v2246
    %2981 = vmatprep.subr.bf16.mxu0 %v2255
    %2982 = vmatpush1.bf16.msra.mxu0 %v2254
    %2983 = vmatprep.subr.bf16.mxu0 %v2263
    %2984 = vmatpush1.bf16.msra.mxu0 %v2262
    %2985 = vmatprep.mubr.bf16.mxu0 %v659
    %2986 = vmatmul.mubr.bf16.gmra.mrb[0].mxu0 %v658
    %v2987 = vpop.f32.mrb[0].mxu0
    %v2988 = vadd.f32 %v2945, %v2987
    %v2989 = vpop.f32.mrb[0].mxu0
    %v2990 = vadd.f32 %v2947, %v2989
    %v2991 = vpop.f32.mrb[0].mxu0
    %v2992 = vadd.f32 %v2949, %v2991
    %v2993 = vpop.f32.mrb[0].mxu0
    %v2994 = vadd.f32 %v2951, %v2993
    %2995 = vdwg.mxu0
    %2996 = vmatprep.subr.bf16.mxu0 %v2271
    %2997 = vmatpush1.bf16.msra.mxu0 %v2270
    %2998 = vmatprep.subr.bf16.mxu0 %v2279
    %2999 = vmatpush1.bf16.msra.mxu0 %v2278
    %3000 = vmatprep.subr.bf16.mxu0 %v2287
    %3001 = vmatpush1.bf16.msra.mxu0 %v2286
    %3002 = vmatprep.subr.bf16.mxu0 %v2295
    %3003 = vmatpush1.bf16.msra.mxu0 %v2294
    %3004 = vmatprep.subr.bf16.mxu0 %v2303
    %3005 = vmatpush1.bf16.msra.mxu0 %v2302
    %3006 = vmatprep.subr.bf16.mxu0 %v2311
    %3007 = vmatpush1.bf16.msra.mxu0 %v2310
    %3008 = vmatprep.subr.bf16.mxu0 %v2319
    %3009 = vmatpush1.bf16.msra.mxu0 %v2318
    %3010 = vmatprep.subr.bf16.mxu0 %v2327
    %3011 = vmatpush1.bf16.msra.mxu0 %v2326
    %3012 = vmatprep.subr.bf16.mxu0 %v2335
    %3013 = vmatpush1.bf16.msra.mxu0 %v2334
    %3014 = vmatprep.subr.bf16.mxu0 %v2343
    %3015 = vmatpush1.bf16.msra.mxu0 %v2342
    %3016 = vmatprep.subr.bf16.mxu0 %v2351
    %3017 = vmatpush1.bf16.msra.mxu0 %v2350
    %3018 = vmatprep.subr.bf16.mxu0 %v2359
    %3019 = vmatpush1.bf16.msra.mxu0 %v2358
    %3020 = vmatprep.subr.bf16.mxu0 %v2367
    %3021 = vmatpush1.bf16.msra.mxu0 %v2366
    %3022 = vmatprep.subr.bf16.mxu0 %v2375
    %3023 = vmatpush1.bf16.msra.mxu0 %v2374
    %3024 = vmatprep.subr.bf16.mxu0 %v2383
    %3025 = vmatpush1.bf16.msra.mxu0 %v2382
    %3026 = vmatprep.subr.bf16.mxu0 %v2391
    %3027 = vmatpush1.bf16.msra.mxu0 %v2390
    %3028 = vmatprep.mubr.bf16.mxu0 %v661
    %3029 = vmatmul.mubr.bf16.gmra.mrb[0].mxu0 %v660
    %v3030 = vpop.f32.mrb[0].mxu0
    %v3031 = vadd.f32 %v2988, %v3030
    %v3032 = vpop.f32.mrb[0].mxu0
    %v3033 = vadd.f32 %v2990, %v3032
    %v3034 = vpop.f32.mrb[0].mxu0
    %v3035 = vadd.f32 %v2992, %v3034
    %v3036 = vpop.f32.mrb[0].mxu0
    %v3037 = vadd.f32 %v2994, %v3036
    %3038 = vdwg.mxu0
    %3039 = vmatprep.subr.bf16.mxu0 %v2399
    %3040 = vmatpush1.bf16.msra.mxu0 %v2398
    %3041 = vmatprep.subr.bf16.mxu0 %v2407
    %3042 = vmatpush1.bf16.msra.mxu0 %v2406
    %3043 = vmatprep.subr.bf16.mxu0 %v2415
    %3044 = vmatpush1.bf16.msra.mxu0 %v2414
    %3045 = vmatprep.subr.bf16.mxu0 %v2423
    %3046 = vmatpush1.bf16.msra.mxu0 %v2422
    %3047 = vmatprep.subr.bf16.mxu0 %v2431
    %3048 = vmatpush1.bf16.msra.mxu0 %v2430
    %3049 = vmatprep.subr.bf16.mxu0 %v2439
    %3050 = vmatpush1.bf16.msra.mxu0 %v2438
    %3051 = vmatprep.subr.bf16.mxu0 %v2447
    %3052 = vmatpush1.bf16.msra.mxu0 %v2446
    %3053 = vmatprep.subr.bf16.mxu0 %v2455
    %3054 = vmatpush1.bf16.msra.mxu0 %v2454
    %3055 = vmatprep.subr.bf16.mxu0 0
    %3056 = vmatpush1.bf16.msra.mxu0 0
    %3057 = vmatprep.subr.bf16.mxu0 0
    %3058 = vmatpush1.bf16.msra.mxu0 0
    %3059 = vmatprep.subr.bf16.mxu0 0
    %3060 = vmatpush1.bf16.msra.mxu0 0
    %3061 = vmatprep.subr.bf16.mxu0 0
    %3062 = vmatpush1.bf16.msra.mxu0 0
    %3063 = vmatprep.subr.bf16.mxu0 0
    %3064 = vmatpush1.bf16.msra.mxu0 0
    %3065 = vmatprep.subr.bf16.mxu0 0
    %3066 = vmatpush1.bf16.msra.mxu0 0
    %3067 = vmatprep.subr.bf16.mxu0 0
    %3068 = vmatpush1.bf16.msra.mxu0 0
    %3069 = vmatprep.subr.bf16.mxu0 0
    %3070 = vmatpush1.bf16.msra.mxu0 0
    %3071 = vmatprep.mubr.bf16.mxu0 0
    %3072 = vmatmul.mubr.bf16.gmra.mrb[0].mxu0 %v662
    %v3073 = vpop.f32.mrb[0].mxu0
    %v3074 = vadd.f32 %v3031, %v3073
    %v3075 = vpop.f32.mrb[0].mxu0
    %v3076 = vadd.f32 %v3033, %v3075
    %v3077 = vpop.f32.mrb[0].mxu0
    %v3078 = vadd.f32 %v3035, %v3077
    %v3079 = vpop.f32.mrb[0].mxu0
    %v3080 = vadd.f32 %v3037, %v3079
    %3081 = vdwg.mxu0
    %3082 = vmatprep.subr.bf16.mxu0 %v2017
    %3083 = vmatpush1.bf16.msra.mxu0 %v2016
    %3084 = vmatprep.subr.bf16.mxu0 %v2025
    %3085 = vmatpush1.bf16.msra.mxu0 %v2024
    %3086 = vmatprep.subr.bf16.mxu0 %v2033
    %3087 = vmatpush1.bf16.msra.mxu0 %v2032
    %3088 = vmatprep.subr.bf16.mxu0 %v2041
    %3089 = vmatpush1.bf16.msra.mxu0 %v2040
    %3090 = vmatprep.subr.bf16.mxu0 %v2049
    %3091 = vmatpush1.bf16.msra.mxu0 %v2048
    %3092 = vmatprep.subr.bf16.mxu0 %v2057
    %3093 = vmatpush1.bf16.msra.mxu0 %v2056
    %3094 = vmatprep.subr.bf16.mxu0 %v2065
    %3095 = vmatpush1.bf16.msra.mxu0 %v2064
    %3096 = vmatprep.subr.bf16.mxu0 %v2073
    %3097 = vmatpush1.bf16.msra.mxu0 %v2072
    %3098 = vmatprep.subr.bf16.mxu0 %v2081
    %3099 = vmatpush1.bf16.msra.mxu0 %v2080
    %3100 = vmatprep.subr.bf16.mxu0 %v2089
    %3101 = vmatpush1.bf16.msra.mxu0 %v2088
    %3102 = vmatprep.subr.bf16.mxu0 %v2097
    %3103 = vmatpush1.bf16.msra.mxu0 %v2096
    %3104 = vmatprep.subr.bf16.mxu0 %v2105
    %3105 = vmatpush1.bf16.msra.mxu0 %v2104
    %3106 = vmatprep.subr.bf16.mxu0 %v2113
    %3107 = vmatpush1.bf16.msra.mxu0 %v2112
    %3108 = vmatprep.subr.bf16.mxu0 %v2121
    %3109 = vmatpush1.bf16.msra.mxu0 %v2120
    %3110 = vmatprep.subr.bf16.mxu0 %v2129
    %3111 = vmatpush1.bf16.msra.mxu0 %v2128
    %3112 = vmatprep.subr.bf16.mxu0 %v2137
    %3113 = vmatpush1.bf16.msra.mxu0 %v2136
    %3114 = vmatprep.mubr.bf16.mxu0 %v657
    %3115 = vmatmul.mubr.bf16.gmra.mrb[0].mxu0 %v656
    %v3116 = vpop.f32.mrb[0].mxu0
    %v3117 = vadd.f32 %v605, %v3116
    %v3118 = vpop.f32.mrb[0].mxu0
    %v3119 = vadd.f32 %v609, %v3118
    %v3120 = vpop.f32.mrb[0].mxu0
    %v3121 = vadd.f32 %v605, %v3120
    %v3122 = vpop.f32.mrb[0].mxu0
    %v3123 = vadd.f32 %v609, %v3122
    %3124 = vdwg.mxu0
    %3125 = vmatprep.subr.bf16.mxu0 %v2145
    %3126 = vmatpush1.bf16.msra.mxu0 %v2144
    %3127 = vmatprep.subr.bf16.mxu0 %v2153
    %3128 = vmatpush1.bf16.msra.mxu0 %v2152
    %3129 = vmatprep.subr.bf16.mxu0 %v2161
    %3130 = vmatpush1.bf16.msra.mxu0 %v2160
    %3131 = vmatprep.subr.bf16.mxu0 %v2169
    %3132 = vmatpush1.bf16.msra.mxu0 %v2168
    %3133 = vmatprep.subr.bf16.mxu0 %v2177
    %3134 = vmatpush1.bf16.msra.mxu0 %v2176
    %3135 = vmatprep.subr.bf16.mxu0 %v2185
    %3136 = vmatpush1.bf16.msra.mxu0 %v2184
    %3137 = vmatprep.subr.bf16.mxu0 %v2193
    %3138 = vmatpush1.bf16.msra.mxu0 %v2192
    %3139 = vmatprep.subr.bf16.mxu0 %v2201
    %3140 = vmatpush1.bf16.msra.mxu0 %v2200
    %3141 = vmatprep.subr.bf16.mxu0 %v2209
    %3142 = vmatpush1.bf16.msra.mxu0 %v2208
    %3143 = vmatprep.subr.bf16.mxu0 %v2217
    %3144 = vmatpush1.bf16.msra.mxu0 %v2216
    %3145 = vmatprep.subr.bf16.mxu0 %v2225
    %3146 = vmatpush1.bf16.msra.mxu0 %v2224
    %3147 = vmatprep.subr.bf16.mxu0 %v2233
    %3148 = vmatpush1.bf16.msra.mxu0 %v2232
    %3149 = vmatprep.subr.bf16.mxu0 %v2241
    %3150 = vmatpush1.bf16.msra.mxu0 %v2240
    %3151 = vmatprep.subr.bf16.mxu0 %v2249
    %3152 = vmatpush1.bf16.msra.mxu0 %v2248
    %3153 = vmatprep.subr.bf16.mxu0 %v2257
    %3154 = vmatpush1.bf16.msra.mxu0 %v2256
    %3155 = vmatprep.subr.bf16.mxu0 %v2265
    %3156 = vmatpush1.bf16.msra.mxu0 %v2264
    %3157 = vmatprep.mubr.bf16.mxu0 %v659
    %3158 = vmatmul.mubr.bf16.gmra.mrb[0].mxu0 %v658
    %v3159 = vpop.f32.mrb[0].mxu0
    %v3160 = vadd.f32 %v3117, %v3159
    %v3161 = vpop.f32.mrb[0].mxu0
    %v3162 = vadd.f32 %v3119, %v3161
    %v3163 = vpop.f32.mrb[0].mxu0
    %v3164 = vadd.f32 %v3121, %v3163
    %v3165 = vpop.f32.mrb[0].mxu0
    %v3166 = vadd.f32 %v3123, %v3165
    %3167 = vdwg.mxu0
    %3168 = vmatprep.subr.bf16.mxu0 %v2273
    %3169 = vmatpush1.bf16.msra.mxu0 %v2272
    %3170 = vmatprep.subr.bf16.mxu0 %v2281
    %3171 = vmatpush1.bf16.msra.mxu0 %v2280
    %3172 = vmatprep.subr.bf16.mxu0 %v2289
    %3173 = vmatpush1.bf16.msra.mxu0 %v2288
    %3174 = vmatprep.subr.bf16.mxu0 %v2297
    %3175 = vmatpush1.bf16.msra.mxu0 %v2296
    %3176 = vmatprep.subr.bf16.mxu0 %v2305
    %3177 = vmatpush1.bf16.msra.mxu0 %v2304
    %3178 = vmatprep.subr.bf16.mxu0 %v2313
    %3179 = vmatpush1.bf16.msra.mxu0 %v2312
    %3180 = vmatprep.subr.bf16.mxu0 %v2321
    %3181 = vmatpush1.bf16.msra.mxu0 %v2320
    %3182 = vmatprep.subr.bf16.mxu0 %v2329
    %3183 = vmatpush1.bf16.msra.mxu0 %v2328
    %3184 = vmatprep.subr.bf16.mxu0 %v2337
    %3185 = vmatpush1.bf16.msra.mxu0 %v2336
    %3186 = vmatprep.subr.bf16.mxu0 %v2345
    %3187 = vmatpush1.bf16.msra.mxu0 %v2344
    %3188 = vmatprep.subr.bf16.mxu0 %v2353
    %3189 = vmatpush1.bf16.msra.mxu0 %v2352
    %3190 = vmatprep.subr.bf16.mxu0 %v2361
    %3191 = vmatpush1.bf16.msra.mxu0 %v2360
    %3192 = vmatprep.subr.bf16.mxu0 %v2369
    %3193 = vmatpush1.bf16.msra.mxu0 %v2368
    %3194 = vmatprep.subr.bf16.mxu0 %v2377
    %3195 = vmatpush1.bf16.msra.mxu0 %v2376
    %3196 = vmatprep.subr.bf16.mxu0 %v2385
    %3197 = vmatpush1.bf16.msra.mxu0 %v2384
    %3198 = vmatprep.subr.bf16.mxu0 %v2393
    %3199 = vmatpush1.bf16.msra.mxu0 %v2392
    %3200 = vmatprep.mubr.bf16.mxu0 %v661
    %3201 = vmatmul.mubr.bf16.gmra.mrb[0].mxu0 %v660
    %v3202 = vpop.f32.mrb[0].mxu0
    %v3203 = vadd.f32 %v3160, %v3202
    %v3204 = vpop.f32.mrb[0].mxu0
    %v3205 = vadd.f32 %v3162, %v3204
    %v3206 = vpop.f32.mrb[0].mxu0
    %v3207 = vadd.f32 %v3164, %v3206
    %v3208 = vpop.f32.mrb[0].mxu0
    %v3209 = vadd.f32 %v3166, %v3208
    %3210 = vdwg.mxu0
    %3211 = vmatprep.subr.bf16.mxu0 %v2401
    %3212 = vmatpush1.bf16.msra.mxu0 %v2400
    %3213 = vmatprep.subr.bf16.mxu0 %v2409
    %3214 = vmatpush1.bf16.msra.mxu0 %v2408
    %3215 = vmatprep.subr.bf16.mxu0 %v2417
    %3216 = vmatpush1.bf16.msra.mxu0 %v2416
    %3217 = vmatprep.subr.bf16.mxu0 %v2425
    %3218 = vmatpush1.bf16.msra.mxu0 %v2424
    %3219 = vmatprep.subr.bf16.mxu0 %v2433
    %3220 = vmatpush1.bf16.msra.mxu0 %v2432
    %3221 = vmatprep.subr.bf16.mxu0 %v2441
    %3222 = vmatpush1.bf16.msra.mxu0 %v2440
    %3223 = vmatprep.subr.bf16.mxu0 %v2449
    %3224 = vmatpush1.bf16.msra.mxu0 %v2448
    %3225 = vmatprep.subr.bf16.mxu0 %v2457
    %3226 = vmatpush1.bf16.msra.mxu0 %v2456
    %3227 = vmatprep.subr.bf16.mxu0 0
    %3228 = vmatpush1.bf16.msra.mxu0 0
    %3229 = vmatprep.subr.bf16.mxu0 0
    %3230 = vmatpush1.bf16.msra.mxu0 0
    %3231 = vmatprep.subr.bf16.mxu0 0
    %3232 = vmatpush1.bf16.msra.mxu0 0
    %3233 = vmatprep.subr.bf16.mxu0 0
    %3234 = vmatpush1.bf16.msra.mxu0 0
    %3235 = vmatprep.subr.bf16.mxu0 0
    %3236 = vmatpush1.bf16.msra.mxu0 0
    %3237 = vmatprep.subr.bf16.mxu0 0
    %3238 = vmatpush1.bf16.msra.mxu0 0
    %3239 = vmatprep.subr.bf16.mxu0 0
    %3240 = vmatpush1.bf16.msra.mxu0 0
    %3241 = vmatprep.subr.bf16.mxu0 0
    %3242 = vmatpush1.bf16.msra.mxu0 0
    %3243 = vmatprep.mubr.bf16.mxu0 0
    %3244 = vmatmul.mubr.bf16.gmra.mrb[0].mxu0 %v662
    %v3245 = vpop.f32.mrb[0].mxu0
    %v3246 = vadd.f32 %v3203, %v3245
    %v3247 = vpop.f32.mrb[0].mxu0
    %v3248 = vadd.f32 %v3205, %v3247
    %v3249 = vpop.f32.mrb[0].mxu0
    %v3250 = vadd.f32 %v3207, %v3249
    %v3251 = vpop.f32.mrb[0].mxu0
    %v3252 = vadd.f32 %v3209, %v3251
    %3253 = vdwg.mxu0
    %3254 = vmatprep.subr.bf16.mxu0 %v2019
    %3255 = vmatpush1.bf16.msra.mxu0 %v2018
    %3256 = vmatprep.subr.bf16.mxu0 %v2027
    %3257 = vmatpush1.bf16.msra.mxu0 %v2026
    %3258 = vmatprep.subr.bf16.mxu0 %v2035
    %3259 = vmatpush1.bf16.msra.mxu0 %v2034
    %3260 = vmatprep.subr.bf16.mxu0 %v2043
    %3261 = vmatpush1.bf16.msra.mxu0 %v2042
    %3262 = vmatprep.subr.bf16.mxu0 %v2051
    %3263 = vmatpush1.bf16.msra.mxu0 %v2050
    %3264 = vmatprep.subr.bf16.mxu0 %v2059
    %3265 = vmatpush1.bf16.msra.mxu0 %v2058
    %3266 = vmatprep.subr.bf16.mxu0 %v2067
    %3267 = vmatpush1.bf16.msra.mxu0 %v2066
    %3268 = vmatprep.subr.bf16.mxu0 %v2075
    %3269 = vmatpush1.bf16.msra.mxu0 %v2074
    %3270 = vmatprep.subr.bf16.mxu0 %v2083
    %3271 = vmatpush1.bf16.msra.mxu0 %v2082
    %3272 = vmatprep.subr.bf16.mxu0 %v2091
    %3273 = vmatpush1.bf16.msra.mxu0 %v2090
    %3274 = vmatprep.subr.bf16.mxu0 %v2099
    %3275 = vmatpush1.bf16.msra.mxu0 %v2098
    %3276 = vmatprep.subr.bf16.mxu0 %v2107
    %3277 = vmatpush1.bf16.msra.mxu0 %v2106
    %3278 = vmatprep.subr.bf16.mxu0 %v2115
    %3279 = vmatpush1.bf16.msra.mxu0 %v2114
    %3280 = vmatprep.subr.bf16.mxu0 %v2123
    %3281 = vmatpush1.bf16.msra.mxu0 %v2122
    %3282 = vmatprep.subr.bf16.mxu0 %v2131
    %3283 = vmatpush1.bf16.msra.mxu0 %v2130
    %3284 = vmatprep.subr.bf16.mxu0 %v2139
    %3285 = vmatpush1.bf16.msra.mxu0 %v2138
    %3286 = vmatprep.mubr.bf16.mxu0 %v657
    %3287 = vmatmul.mubr.bf16.gmra.mrb[0].mxu0 %v656
    %v3288 = vpop.f32.mrb[0].mxu0
    %v3289 = vadd.f32 %v613, %v3288
    %v3290 = vpop.f32.mrb[0].mxu0
    %v3291 = vadd.f32 %v617, %v3290
    %v3292 = vpop.f32.mrb[0].mxu0
    %v3293 = vadd.f32 %v613, %v3292
    %v3294 = vpop.f32.mrb[0].mxu0
    %v3295 = vadd.f32 %v617, %v3294
    %3296 = vdwg.mxu0
    %3297 = vmatprep.subr.bf16.mxu0 %v2147
    %3298 = vmatpush1.bf16.msra.mxu0 %v2146
    %3299 = vmatprep.subr.bf16.mxu0 %v2155
    %3300 = vmatpush1.bf16.msra.mxu0 %v2154
    %3301 = vmatprep.subr.bf16.mxu0 %v2163
    %3302 = vmatpush1.bf16.msra.mxu0 %v2162
    %3303 = vmatprep.subr.bf16.mxu0 %v2171
    %3304 = vmatpush1.bf16.msra.mxu0 %v2170
    %3305 = vmatprep.subr.bf16.mxu0 %v2179
    %3306 = vmatpush1.bf16.msra.mxu0 %v2178
    %3307 = vmatprep.subr.bf16.mxu0 %v2187
    %3308 = vmatpush1.bf16.msra.mxu0 %v2186
    %3309 = vmatprep.subr.bf16.mxu0 %v2195
    %3310 = vmatpush1.bf16.msra.mxu0 %v2194
    %3311 = vmatprep.subr.bf16.mxu0 %v2203
    %3312 = vmatpush1.bf16.msra.mxu0 %v2202
    %3313 = vmatprep.subr.bf16.mxu0 %v2211
    %3314 = vmatpush1.bf16.msra.mxu0 %v2210
    %3315 = vmatprep.subr.bf16.mxu0 %v2219
    %3316 = vmatpush1.bf16.msra.mxu0 %v2218
    %3317 = vmatprep.subr.bf16.mxu0 %v2227
    %3318 = vmatpush1.bf16.msra.mxu0 %v2226
    %3319 = vmatprep.subr.bf16.mxu0 %v2235
    %3320 = vmatpush1.bf16.msra.mxu0 %v2234
    %3321 = vmatprep.subr.bf16.mxu0 %v2243
    %3322 = vmatpush1.bf16.msra.mxu0 %v2242
    %3323 = vmatprep.subr.bf16.mxu0 %v2251
    %3324 = vmatpush1.bf16.msra.mxu0 %v2250
    %3325 = vmatprep.subr.bf16.mxu0 %v2259
    %3326 = vmatpush1.bf16.msra.mxu0 %v2258
    %3327 = vmatprep.subr.bf16.mxu0 %v2267
    %3328 = vmatpush1.bf16.msra.mxu0 %v2266
    %3329 = vmatprep.mubr.bf16.mxu0 %v659
    %3330 = vmatmul.mubr.bf16.gmra.mrb[0].mxu0 %v658
    %v3331 = vpop.f32.mrb[0].mxu0
    %v3332 = vadd.f32 %v3289, %v3331
    %v3333 = vpop.f32.mrb[0].mxu0
    %v3334 = vadd.f32 %v3291, %v3333
    %v3335 = vpop.f32.mrb[0].mxu0
    %v3336 = vadd.f32 %v3293, %v3335
    %v3337 = vpop.f32.mrb[0].mxu0
    %v3338 = vadd.f32 %v3295, %v3337
    %3339 = vdwg.mxu0
    %3340 = vmatprep.subr.bf16.mxu0 %v2275
    %3341 = vmatpush1.bf16.msra.mxu0 %v2274
    %3342 = vmatprep.subr.bf16.mxu0 %v2283
    %3343 = vmatpush1.bf16.msra.mxu0 %v2282
    %3344 = vmatprep.subr.bf16.mxu0 %v2291
    %3345 = vmatpush1.bf16.msra.mxu0 %v2290
    %3346 = vmatprep.subr.bf16.mxu0 %v2299
    %3347 = vmatpush1.bf16.msra.mxu0 %v2298
    %3348 = vmatprep.subr.bf16.mxu0 %v2307
    %3349 = vmatpush1.bf16.msra.mxu0 %v2306
    %3350 = vmatprep.subr.bf16.mxu0 %v2315
    %3351 = vmatpush1.bf16.msra.mxu0 %v2314
    %3352 = vmatprep.subr.bf16.mxu0 %v2323
    %3353 = vmatpush1.bf16.msra.mxu0 %v2322
    %3354 = vmatprep.subr.bf16.mxu0 %v2331
    %3355 = vmatpush1.bf16.msra.mxu0 %v2330
    %3356 = vmatprep.subr.bf16.mxu0 %v2339
    %3357 = vmatpush1.bf16.msra.mxu0 %v2338
    %3358 = vmatprep.subr.bf16.mxu0 %v2347
    %3359 = vmatpush1.bf16.msra.mxu0 %v2346
    %3360 = vmatprep.subr.bf16.mxu0 %v2355
    %3361 = vmatpush1.bf16.msra.mxu0 %v2354
    %3362 = vmatprep.subr.bf16.mxu0 %v2363
    %3363 = vmatpush1.bf16.msra.mxu0 %v2362
    %3364 = vmatprep.subr.bf16.mxu0 %v2371
    %3365 = vmatpush1.bf16.msra.mxu0 %v2370
    %3366 = vmatprep.subr.bf16.mxu0 %v2379
    %3367 = vmatpush1.bf16.msra.mxu0 %v2378
    %3368 = vmatprep.subr.bf16.mxu0 %v2387
    %3369 = vmatpush1.bf16.msra.mxu0 %v2386
    %3370 = vmatprep.subr.bf16.mxu0 %v2395
    %3371 = vmatpush1.bf16.msra.mxu0 %v2394
    %3372 = vmatprep.mubr.bf16.mxu0 %v661
    %3373 = vmatmul.mubr.bf16.gmra.mrb[0].mxu0 %v660
    %v3374 = vpop.f32.mrb[0].mxu0
    %v3375 = vadd.f32 %v3332, %v3374
    %v3376 = vpop.f32.mrb[0].mxu0
    %v3377 = vadd.f32 %v3334, %v3376
    %v3378 = vpop.f32.mrb[0].mxu0
    %v3379 = vadd.f32 %v3336, %v3378
    %v3380 = vpop.f32.mrb[0].mxu0
    %v3381 = vadd.f32 %v3338, %v3380
    %3382 = vdwg.mxu0
    %3383 = vmatprep.subr.bf16.mxu0 %v2403
    %3384 = vmatpush1.bf16.msra.mxu0 %v2402
    %3385 = vmatprep.subr.bf16.mxu0 %v2411
    %3386 = vmatpush1.bf16.msra.mxu0 %v2410
    %3387 = vmatprep.subr.bf16.mxu0 %v2419
    %3388 = vmatpush1.bf16.msra.mxu0 %v2418
    %3389 = vmatprep.subr.bf16.mxu0 %v2427
    %3390 = vmatpush1.bf16.msra.mxu0 %v2426
    %3391 = vmatprep.subr.bf16.mxu0 %v2435
    %3392 = vmatpush1.bf16.msra.mxu0 %v2434
    %3393 = vmatprep.subr.bf16.mxu0 %v2443
    %3394 = vmatpush1.bf16.msra.mxu0 %v2442
    %3395 = vmatprep.subr.bf16.mxu0 %v2451
    %3396 = vmatpush1.bf16.msra.mxu0 %v2450
    %3397 = vmatprep.subr.bf16.mxu0 %v2459
    %3398 = vmatpush1.bf16.msra.mxu0 %v2458
    %3399 = vmatprep.subr.bf16.mxu0 0
    %3400 = vmatpush1.bf16.msra.mxu0 0
    %3401 = vmatprep.subr.bf16.mxu0 0
    %3402 = vmatpush1.bf16.msra.mxu0 0
    %3403 = vmatprep.subr.bf16.mxu0 0
    %3404 = vmatpush1.bf16.msra.mxu0 0
    %3405 = vmatprep.subr.bf16.mxu0 0
    %3406 = vmatpush1.bf16.msra.mxu0 0
    %3407 = vmatprep.subr.bf16.mxu0 0
    %3408 = vmatpush1.bf16.msra.mxu0 0
    %3409 = vmatprep.subr.bf16.mxu0 0
    %3410 = vmatpush1.bf16.msra.mxu0 0
    %3411 = vmatprep.subr.bf16.mxu0 0
    %3412 = vmatpush1.bf16.msra.mxu0 0
    %3413 = vmatprep.subr.bf16.mxu0 0
    %3414 = vmatpush1.bf16.msra.mxu0 0
    %3415 = vmatprep.mubr.bf16.mxu0 0
    %3416 = vmatmul.mubr.bf16.gmra.mrb[0].mxu0 %v662
    %v3417 = vpop.f32.mrb[0].mxu0
    %v3418 = vadd.f32 %v3375, %v3417
    %v3419 = vpop.f32.mrb[0].mxu0
    %v3420 = vadd.f32 %v3377, %v3419
    %v3421 = vpop.f32.mrb[0].mxu0
    %v3422 = vadd.f32 %v3379, %v3421
    %v3423 = vpop.f32.mrb[0].mxu0
    %v3424 = vadd.f32 %v3381, %v3423
    %3425 = vdwg.mxu0
    %3426 = vmatprep.subr.bf16.mxu0 %v2021
    %3427 = vmatpush1.bf16.msra.mxu0 %v2020
    %3428 = vmatprep.subr.bf16.mxu0 %v2029
    %3429 = vmatpush1.bf16.msra.mxu0 %v2028
    %3430 = vmatprep.subr.bf16.mxu0 %v2037
    %3431 = vmatpush1.bf16.msra.mxu0 %v2036
    %3432 = vmatprep.subr.bf16.mxu0 %v2045
    %3433 = vmatpush1.bf16.msra.mxu0 %v2044
    %3434 = vmatprep.subr.bf16.mxu0 %v2053
    %3435 = vmatpush1.bf16.msra.mxu0 %v2052
    %3436 = vmatprep.subr.bf16.mxu0 %v2061
    %3437 = vmatpush1.bf16.msra.mxu0 %v2060
    %3438 = vmatprep.subr.bf16.mxu0 %v2069
    %3439 = vmatpush1.bf16.msra.mxu0 %v2068
    %3440 = vmatprep.subr.bf16.mxu0 %v2077
    %3441 = vmatpush1.bf16.msra.mxu0 %v2076
    %3442 = vmatprep.subr.bf16.mxu0 %v2085
    %3443 = vmatpush1.bf16.msra.mxu0 %v2084
    %3444 = vmatprep.subr.bf16.mxu0 %v2093
    %3445 = vmatpush1.bf16.msra.mxu0 %v2092
    %3446 = vmatprep.subr.bf16.mxu0 %v2101
    %3447 = vmatpush1.bf16.msra.mxu0 %v2100
    %3448 = vmatprep.subr.bf16.mxu0 %v2109
    %3449 = vmatpush1.bf16.msra.mxu0 %v2108
    %3450 = vmatprep.subr.bf16.mxu0 %v2117
    %3451 = vmatpush1.bf16.msra.mxu0 %v2116
    %3452 = vmatprep.subr.bf16.mxu0 %v2125
    %3453 = vmatpush1.bf16.msra.mxu0 %v2124
    %3454 = vmatprep.subr.bf16.mxu0 %v2133
    %3455 = vmatpush1.bf16.msra.mxu0 %v2132
    %3456 = vmatprep.subr.bf16.mxu0 %v2141
    %3457 = vmatpush1.bf16.msra.mxu0 %v2140
    %3458 = vmatprep.mubr.bf16.mxu0 %v657
    %3459 = vmatmul.mubr.bf16.gmra.mrb[0].mxu0 %v656
    %v3460 = vpop.f32.mrb[0].mxu0
    %v3461 = vadd.f32 %v621, %v3460
    %v3462 = vpop.f32.mrb[0].mxu0
    %v3463 = vadd.f32 %v625, %v3462
    %v3464 = vpop.f32.mrb[0].mxu0
    %v3465 = vadd.f32 %v621, %v3464
    %v3466 = vpop.f32.mrb[0].mxu0
    %v3467 = vadd.f32 %v625, %v3466
    %3468 = vdwg.mxu0
    %3469 = vmatprep.subr.bf16.mxu0 %v2149
    %3470 = vmatpush1.bf16.msra.mxu0 %v2148
    %3471 = vmatprep.subr.bf16.mxu0 %v2157
    %3472 = vmatpush1.bf16.msra.mxu0 %v2156
    %3473 = vmatprep.subr.bf16.mxu0 %v2165
    %3474 = vmatpush1.bf16.msra.mxu0 %v2164
    %3475 = vmatprep.subr.bf16.mxu0 %v2173
    %3476 = vmatpush1.bf16.msra.mxu0 %v2172
    %3477 = vmatprep.subr.bf16.mxu0 %v2181
    %3478 = vmatpush1.bf16.msra.mxu0 %v2180
    %3479 = vmatprep.subr.bf16.mxu0 %v2189
    %3480 = vmatpush1.bf16.msra.mxu0 %v2188
    %3481 = vmatprep.subr.bf16.mxu0 %v2197
    %3482 = vmatpush1.bf16.msra.mxu0 %v2196
    %3483 = vmatprep.subr.bf16.mxu0 %v2205
    %3484 = vmatpush1.bf16.msra.mxu0 %v2204
    %3485 = vmatprep.subr.bf16.mxu0 %v2213
    %3486 = vmatpush1.bf16.msra.mxu0 %v2212
    %3487 = vmatprep.subr.bf16.mxu0 %v2221
    %3488 = vmatpush1.bf16.msra.mxu0 %v2220
    %3489 = vmatprep.subr.bf16.mxu0 %v2229
    %3490 = vmatpush1.bf16.msra.mxu0 %v2228
    %3491 = vmatprep.subr.bf16.mxu0 %v2237
    %3492 = vmatpush1.bf16.msra.mxu0 %v2236
    %3493 = vmatprep.subr.bf16.mxu0 %v2245
    %3494 = vmatpush1.bf16.msra.mxu0 %v2244
    %3495 = vmatprep.subr.bf16.mxu0 %v2253
    %3496 = vmatpush1.bf16.msra.mxu0 %v2252
    %3497 = vmatprep.subr.bf16.mxu0 %v2261
    %3498 = vmatpush1.bf16.msra.mxu0 %v2260
    %3499 = vmatprep.subr.bf16.mxu0 %v2269
    %3500 = vmatpush1.bf16.msra.mxu0 %v2268
    %3501 = vmatprep.mubr.bf16.mxu0 %v659
    %3502 = vmatmul.mubr.bf16.gmra.mrb[0].mxu0 %v658
    %v3503 = vpop.f32.mrb[0].mxu0
    %v3504 = vadd.f32 %v3461, %v3503
    %v3505 = vpop.f32.mrb[0].mxu0
    %v3506 = vadd.f32 %v3463, %v3505
    %v3507 = vpop.f32.mrb[0].mxu0
    %v3508 = vadd.f32 %v3465, %v3507
    %v3509 = vpop.f32.mrb[0].mxu0
    %v3510 = vadd.f32 %v3467, %v3509
    %3511 = vdwg.mxu0
    %3512 = vmatprep.subr.bf16.mxu0 %v2277
    %3513 = vmatpush1.bf16.msra.mxu0 %v2276
    %3514 = vmatprep.subr.bf16.mxu0 %v2285
    %3515 = vmatpush1.bf16.msra.mxu0 %v2284
    %3516 = vmatprep.subr.bf16.mxu0 %v2293
    %3517 = vmatpush1.bf16.msra.mxu0 %v2292
    %3518 = vmatprep.subr.bf16.mxu0 %v2301
    %3519 = vmatpush1.bf16.msra.mxu0 %v2300
    %3520 = vmatprep.subr.bf16.mxu0 %v2309
    %3521 = vmatpush1.bf16.msra.mxu0 %v2308
    %3522 = vmatprep.subr.bf16.mxu0 %v2317
    %3523 = vmatpush1.bf16.msra.mxu0 %v2316
    %3524 = vmatprep.subr.bf16.mxu0 %v2325
    %3525 = vmatpush1.bf16.msra.mxu0 %v2324
    %3526 = vmatprep.subr.bf16.mxu0 %v2333
    %3527 = vmatpush1.bf16.msra.mxu0 %v2332
    %3528 = vmatprep.subr.bf16.mxu0 %v2341
    %3529 = vmatpush1.bf16.msra.mxu0 %v2340
    %3530 = vmatprep.subr.bf16.mxu0 %v2349
    %3531 = vmatpush1.bf16.msra.mxu0 %v2348
    %3532 = vmatprep.subr.bf16.mxu0 %v2357
    %3533 = vmatpush1.bf16.msra.mxu0 %v2356
    %3534 = vmatprep.subr.bf16.mxu0 %v2365
    %3535 = vmatpush1.bf16.msra.mxu0 %v2364
    %3536 = vmatprep.subr.bf16.mxu0 %v2373
    %3537 = vmatpush1.bf16.msra.mxu0 %v2372
    %3538 = vmatprep.subr.bf16.mxu0 %v2381
    %3539 = vmatpush1.bf16.msra.mxu0 %v2380
    %3540 = vmatprep.subr.bf16.mxu0 %v2389
    %3541 = vmatpush1.bf16.msra.mxu0 %v2388
    %3542 = vmatprep.subr.bf16.mxu0 %v2397
    %3543 = vmatpush1.bf16.msra.mxu0 %v2396
    %3544 = vmatprep.mubr.bf16.mxu0 %v661
    %3545 = vmatmul.mubr.bf16.gmra.mrb[0].mxu0 %v660
    %v3546 = vpop.f32.mrb[0].mxu0
    %v3547 = vadd.f32 %v3504, %v3546
    %v3548 = vpop.f32.mrb[0].mxu0
    %v3549 = vadd.f32 %v3506, %v3548
    %v3550 = vpop.f32.mrb[0].mxu0
    %v3551 = vadd.f32 %v3508, %v3550
    %v3552 = vpop.f32.mrb[0].mxu0
    %v3553 = vadd.f32 %v3510, %v3552
    %3554 = vdwg.mxu0
    %3555 = vmatprep.subr.bf16.mxu0 %v2405
    %3556 = vmatpush1.bf16.msra.mxu0 %v2404
    %3557 = vmatprep.subr.bf16.mxu0 %v2413
    %3558 = vmatpush1.bf16.msra.mxu0 %v2412
    %3559 = vmatprep.subr.bf16.mxu0 %v2421
    %3560 = vmatpush1.bf16.msra.mxu0 %v2420
    %3561 = vmatprep.subr.bf16.mxu0 %v2429
    %3562 = vmatpush1.bf16.msra.mxu0 %v2428
    %3563 = vmatprep.subr.bf16.mxu0 %v2437
    %3564 = vmatpush1.bf16.msra.mxu0 %v2436
    %3565 = vmatprep.subr.bf16.mxu0 %v2445
    %3566 = vmatpush1.bf16.msra.mxu0 %v2444
    %3567 = vmatprep.subr.bf16.mxu0 %v2453
    %3568 = vmatpush1.bf16.msra.mxu0 %v2452
    %3569 = vmatprep.subr.bf16.mxu0 %v2461
    %3570 = vmatpush1.bf16.msra.mxu0 %v2460
    %3571 = vmatprep.subr.bf16.mxu0 0
    %3572 = vmatpush1.bf16.msra.mxu0 0
    %3573 = vmatprep.subr.bf16.mxu0 0
    %3574 = vmatpush1.bf16.msra.mxu0 0
    %3575 = vmatprep.subr.bf16.mxu0 0
    %3576 = vmatpush1.bf16.msra.mxu0 0
    %3577 = vmatprep.subr.bf16.mxu0 0
    %3578 = vmatpush1.bf16.msra.mxu0 0
    %3579 = vmatprep.subr.bf16.mxu0 0
    %3580 = vmatpush1.bf16.msra.mxu0 0
    %3581 = vmatprep.subr.bf16.mxu0 0
    %3582 = vmatpush1.bf16.msra.mxu0 0
    %3583 = vmatprep.subr.bf16.mxu0 0
    %3584 = vmatpush1.bf16.msra.mxu0 0
    %3585 = vmatprep.subr.bf16.mxu0 0
    %3586 = vmatpush1.bf16.msra.mxu0 0
    %3587 = vmatprep.mubr.bf16.mxu0 0
    %3588 = vmatmul.mubr.bf16.gmra.mrb[0].mxu0 %v662
    %v3589 = vpop.f32.mrb[0].mxu0
    %v3590 = vadd.f32 %v3547, %v3589
    %v3591 = vpop.f32.mrb[0].mxu0
    %v3592 = vadd.f32 %v3549, %v3591
    %v3593 = vpop.f32.mrb[0].mxu0
    %v3594 = vadd.f32 %v3551, %v3593
    %v3595 = vpop.f32.mrb[0].mxu0
    %v3596 = vadd.f32 %v3553, %v3595
    %3597 = vdwg.mxu0
    %v3598 = vmax.f32 %v3074, 0.0
    %v3599 = vmax.f32 %v3076, 0.0
    %v3600 = vmax.f32 %v3246, 0.0
    %v3601 = vmax.f32 %v3248, 0.0
    %v3602 = vmax.f32 %v3418, 0.0
    %v3603 = vmax.f32 %v3420, 0.0
    %v3604 = vmax.f32 %v3590, 0.0
    %v3605 = vmax.f32 %v3592, 0.0
    %v3606 = vmax.f32 %v3078, 0.0
    %v3607 = vmax.f32 %v3080, 0.0
    %v3608 = vmax.f32 %v3250, 0.0
    %v3609 = vmax.f32 %v3252, 0.0
    %v3610 = vmax.f32 %v3422, 0.0
    %v3611 = vmax.f32 %v3424, 0.0
    %v3612 = vmax.f32 %v3594, 0.0
    %v3613 = vmax.f32 %v3596, 0.0
    %v3614 = vpack.c.bf16 %v3606, %v3598
    %v3615 = vpack.c.bf16 %v3607, %v3599
    %v3616 = vpack.c.bf16 %v3608, %v3600
    %v3617 = vpack.c.bf16 %v3609, %v3601
    %v3618 = vpack.c.bf16 %v3610, %v3602
    %v3619 = vpack.c.bf16 %v3611, %v3603
    %v3620 = vpack.c.bf16 %v3612, %v3604
    %v3621 = vpack.c.bf16 %v3613, %v3605
    %v3622 = vld [vmem:[#allocation6] sm:$0xff]
    %v3623 = vld [vmem:[#allocation6 + $0x8] sm:$0xff]
    %v3624 = vld [vmem:[#allocation6 + $0x10] sm:$0xff]
    %v3625 = vld [vmem:[#allocation6 + $0x18] sm:$0xff]
    %v3626 = vld [vmem:[#allocation6 + $0x20] sm:$0xff]
    %v3627 = vld [vmem:[#allocation6 + $0x28] sm:$0xff]
    %v3628 = vld [vmem:[#allocation6 + $0x30] sm:$0xff]
    %v3629 = vld [vmem:[#allocation6 + $0x38] sm:$0xff]
    %v3630 = vld [vmem:[#allocation6 + $0x40] sm:$0xff]
    %v3631 = vld [vmem:[#allocation6 + $0x48] sm:$0xff]
    %v3632 = vld [vmem:[#allocation6 + $0x50] sm:$0xff]
    %v3633 = vld [vmem:[#allocation6 + $0x58] sm:$0xff]
    %v3634 = vld [vmem:[#allocation6 + $0x60] sm:$0xff]
    %v3635 = vld [vmem:[#allocation6 + $0x68] sm:$0xff]
    %v3636 = vld [vmem:[#allocation6 + $0x70] sm:$0xff]
    %v3637 = vld [vmem:[#allocation6 + $0x78] sm:$0xff]
    %v3638 = vld [vmem:[#allocation6 + $0x80] sm:$0xff]
    %v3639 = vld [vmem:[#allocation6 + $0x88] sm:$0xff]
    %v3640 = vld [vmem:[#allocation6 + $0x90] sm:$0xff]
    %v3641 = vld [vmem:[#allocation6 + $0x98] sm:$0xff]
    %v3642 = vld [vmem:[#allocation6 + $0xa0] sm:$0xff]
    %v3643 = vld [vmem:[#allocation6 + $0xa8] sm:$0xff]
    %v3644 = vld [vmem:[#allocation6 + $0xb0] sm:$0xff]
    %v3645 = vld [vmem:[#allocation6 + $0xb8] sm:$0xff]
    %v3646 = vld [vmem:[#allocation6 + $0xc0] sm:$0xff]
    %v3647 = vld [vmem:[#allocation6 + $0xc8] sm:$0xff]
    %v3648 = vld [vmem:[#allocation6 + $0xd0] sm:$0xff]
    %v3649 = vld [vmem:[#allocation6 + $0xd8] sm:$0xff]
    %v3650 = vld [vmem:[#allocation6 + $0xe0] sm:$0xff]
    %v3651 = vld [vmem:[#allocation6 + $0xe8] sm:$0xff]
    %v3652 = vld [vmem:[#allocation6 + $0xf0] sm:$0xff]
    %v3653 = vld [vmem:[#allocation6 + $0xf8] sm:$0xff]
    %v3654 = vld [vmem:[#allocation6 + $0x100] sm:$0xff]
    %v3655 = vld [vmem:[#allocation6 + $0x108] sm:$0xff]
    %v3656 = vld [vmem:[#allocation6 + $0x110] sm:$0xff]
    %v3657 = vld [vmem:[#allocation6 + $0x118] sm:$0xff]
    %v3658 = vld [vmem:[#allocation6 + $0x120] sm:$0xff]
    %v3659 = vld [vmem:[#allocation6 + $0x128] sm:$0xff]
    %v3660 = vld [vmem:[#allocation6 + $0x130] sm:$0xff]
    %v3661 = vld [vmem:[#allocation6 + $0x138] sm:$0xff]
    %v3662 = vld [vmem:[#allocation6 + $0x140] sm:$0xff]
    %v3663 = vld [vmem:[#allocation6 + $0x148] sm:$0xff]
    %v3664 = vld [vmem:[#allocation6 + $0x150] sm:$0xff]
    %v3665 = vld [vmem:[#allocation6 + $0x158] sm:$0xff]
    %v3666 = vld [vmem:[#allocation6 + $0x160] sm:$0xff]
    %v3667 = vld [vmem:[#allocation6 + $0x168] sm:$0xff]
    %v3668 = vld [vmem:[#allocation6 + $0x170] sm:$0xff]
    %v3669 = vld [vmem:[#allocation6 + $0x178] sm:$0xff]
    %v3670 = vld [vmem:[#allocation6 + $0x180] sm:$0xff]
    %v3671 = vld [vmem:[#allocation6 + $0x188] sm:$0xff]
    %v3672 = vld [vmem:[#allocation6 + $0x190] sm:$0xff]
    %v3673 = vld [vmem:[#allocation6 + $0x198] sm:$0xff]
    %v3674 = vld [vmem:[#allocation6 + $0x1a0] sm:$0xff]
    %v3675 = vld [vmem:[#allocation6 + $0x1a8] sm:$0xff]
    %v3676 = vld [vmem:[#allocation6 + $0x1b0] sm:$0xff]
    %v3677 = vld [vmem:[#allocation6 + $0x1b8] sm:$0xff]
    %v3678 = vld [vmem:[#allocation6 + $0x1c0] sm:$0xff]
    %v3679 = vld [vmem:[#allocation6 + $0x1c8] sm:$0xff]
    %v3680 = vld [vmem:[#allocation6 + $0x1d0] sm:$0xff]
    %v3681 = vld [vmem:[#allocation6 + $0x1d8] sm:$0xff]
    %v3682 = vld [vmem:[#allocation6 + $0x1e0] sm:$0xff]
    %v3683 = vld [vmem:[#allocation6 + $0x1e8] sm:$0xff]
    %v3684 = vld [vmem:[#allocation6 + $0x1f0] sm:$0xff]
    %v3685 = vld [vmem:[#allocation6 + $0x1f8] sm:$0xff]
    %v3686 = vld [vmem:[#allocation6 + $0x200] sm:$0xff]
    %v3687 = vld [vmem:[#allocation6 + $0x208] sm:$0xff]
    %v3688 = vld [vmem:[#allocation6 + $0x210] sm:$0xff]
    %v3689 = vld [vmem:[#allocation6 + $0x218] sm:$0xff]
    %v3690 = vld [vmem:[#allocation6 + $0x220] sm:$0xff]
    %v3691 = vld [vmem:[#allocation6 + $0x228] sm:$0xff]
    %v3692 = vld [vmem:[#allocation6 + $0x230] sm:$0xff]
    %v3693 = vld [vmem:[#allocation6 + $0x238] sm:$0xff]
    %v3694 = vld [vmem:[#allocation6 + $0x240] sm:$0xff]
    %v3695 = vld [vmem:[#allocation6 + $0x248] sm:$0xff]
    %v3696 = vld [vmem:[#allocation6 + $0x250] sm:$0xff]
    %v3697 = vld [vmem:[#allocation6 + $0x258] sm:$0xff]
    %v3698 = vld [vmem:[#allocation6 + $0x260] sm:$0xff]
    %v3699 = vld [vmem:[#allocation6 + $0x268] sm:$0xff]
    %v3700 = vld [vmem:[#allocation6 + $0x270] sm:$0xff]
    %v3701 = vld [vmem:[#allocation6 + $0x278] sm:$0xff]
    %v3702 = vld [vmem:[#allocation6 + $0x280] sm:$0xff]
    %v3703 = vld [vmem:[#allocation6 + $0x288] sm:$0xff]
    %v3704 = vld [vmem:[#allocation6 + $0x290] sm:$0xff]
    %v3705 = vld [vmem:[#allocation6 + $0x298] sm:$0xff]
    %v3706 = vld [vmem:[#allocation6 + $0x2a0] sm:$0xff]
    %v3707 = vld [vmem:[#allocation6 + $0x2a8] sm:$0xff]
    %v3708 = vld [vmem:[#allocation6 + $0x2b0] sm:$0xff]
    %v3709 = vld [vmem:[#allocation6 + $0x2b8] sm:$0xff]
    %v3710 = vld [vmem:[#allocation6 + $0x2c0] sm:$0xff]
    %v3711 = vld [vmem:[#allocation6 + $0x2c8] sm:$0xff]
    %v3712 = vld [vmem:[#allocation6 + $0x2d0] sm:$0xff]
    %v3713 = vld [vmem:[#allocation6 + $0x2d8] sm:$0xff]
    %v3714 = vld [vmem:[#allocation6 + $0x2e0] sm:$0xff]
    %v3715 = vld [vmem:[#allocation6 + $0x2e8] sm:$0xff]
    %v3716 = vld [vmem:[#allocation6 + $0x2f0] sm:$0xff]
    %v3717 = vld [vmem:[#allocation6 + $0x2f8] sm:$0xff]
    %v3718 = vld [vmem:[#allocation6 + $0x300] sm:$0xff]
    %v3719 = vld [vmem:[#allocation6 + $0x308] sm:$0xff]
    %v3720 = vld [vmem:[#allocation6 + $0x310] sm:$0xff]
    %v3721 = vld [vmem:[#allocation6 + $0x318] sm:$0xff]
    %v3722 = vld [vmem:[#allocation6 + $0x320] sm:$0xff]
    %v3723 = vld [vmem:[#allocation6 + $0x328] sm:$0xff]
    %v3724 = vld [vmem:[#allocation6 + $0x330] sm:$0xff]
    %v3725 = vld [vmem:[#allocation6 + $0x338] sm:$0xff]
    %v3726 = vld [vmem:[#allocation6 + $0x340] sm:$0xff]
    %v3727 = vld [vmem:[#allocation6 + $0x348] sm:$0xff]
    %v3728 = vld [vmem:[#allocation6 + $0x350] sm:$0xff]
    %v3729 = vld [vmem:[#allocation6 + $0x358] sm:$0xff]
    %v3730 = vld [vmem:[#allocation6 + $0x360] sm:$0xff]
    %v3731 = vld [vmem:[#allocation6 + $0x368] sm:$0xff]
    %v3732 = vld [vmem:[#allocation6 + $0x370] sm:$0xff]
    %v3733 = vld [vmem:[#allocation6 + $0x378] sm:$0xff]
    %v3734 = vld [vmem:[#allocation6 + $0x380] sm:$0xff]
    %v3735 = vld [vmem:[#allocation6 + $0x388] sm:$0xff]
    %v3736 = vld [vmem:[#allocation6 + $0x390] sm:$0xff]
    %v3737 = vld [vmem:[#allocation6 + $0x398] sm:$0xff]
    %v3738 = vld [vmem:[#allocation6 + $0x3a0] sm:$0xff]
    %v3739 = vld [vmem:[#allocation6 + $0x3a8] sm:$0xff]
    %v3740 = vld [vmem:[#allocation6 + $0x3b0] sm:$0xff]
    %v3741 = vld [vmem:[#allocation6 + $0x3b8] sm:$0xff]
    %v3742 = vld [vmem:[#allocation6 + $0x3c0] sm:$0xff]
    %v3743 = vld [vmem:[#allocation6 + $0x3c8] sm:$0xff]
    %v3744 = vld [vmem:[#allocation6 + $0x3d0] sm:$0xff]
    %v3745 = vld [vmem:[#allocation6 + $0x3d8] sm:$0xff]
    %v3746 = vld [vmem:[#allocation6 + $0x3e0] sm:$0xff]
    %v3747 = vld [vmem:[#allocation6 + $0x3e8] sm:$0xff]
    %v3748 = vld [vmem:[#allocation6 + $0x3f0] sm:$0xff]
    %v3749 = vld [vmem:[#allocation6 + $0x3f8] sm:$0xff]
    %v3750 = vld [vmem:[#allocation6 + $0x400] sm:$0xff]
    %v3751 = vld [vmem:[#allocation6 + $0x408] sm:$0xff]
    %v3752 = vld [vmem:[#allocation6 + $0x410] sm:$0xff]
    %v3753 = vld [vmem:[#allocation6 + $0x418] sm:$0xff]
    %v3754 = vld [vmem:[#allocation6 + $0x420] sm:$0xff]
    %v3755 = vld [vmem:[#allocation6 + $0x428] sm:$0xff]
    %v3756 = vld [vmem:[#allocation6 + $0x430] sm:$0xff]
    %v3757 = vld [vmem:[#allocation6 + $0x438] sm:$0xff]
    %v3758 = vld [vmem:[#allocation6 + $0x440] sm:$0xff]
    %v3759 = vld [vmem:[#allocation6 + $0x448] sm:$0xff]
    %v3760 = vld [vmem:[#allocation6 + $0x450] sm:$0xff]
    %v3761 = vld [vmem:[#allocation6 + $0x458] sm:$0xff]
    %v3762 = vld [vmem:[#allocation6 + $0x460] sm:$0xff]
    %v3763 = vld [vmem:[#allocation6 + $0x468] sm:$0xff]
    %v3764 = vld [vmem:[#allocation6 + $0x470] sm:$0xff]
    %v3765 = vld [vmem:[#allocation6 + $0x478] sm:$0xff]
    %v3766 = vld [vmem:[#allocation6 + $0x480] sm:$0xff]
    %v3767 = vld [vmem:[#allocation6 + $0x488] sm:$0xff]
    %v3768 = vld [vmem:[#allocation6 + $0x490] sm:$0xff]
    %v3769 = vld [vmem:[#allocation6 + $0x498] sm:$0xff]
    %v3770 = vld [vmem:[#allocation6 + $0x4a0] sm:$0xff]
    %v3771 = vld [vmem:[#allocation6 + $0x4a8] sm:$0xff]
    %v3772 = vld [vmem:[#allocation6 + $0x4b0] sm:$0xff]
    %v3773 = vld [vmem:[#allocation6 + $0x4b8] sm:$0xff]
    %v3774 = vld [vmem:[#allocation6 + $0x4c0] sm:$0xff]
    %v3775 = vld [vmem:[#allocation6 + $0x4c8] sm:$0xff]
    %v3776 = vld [vmem:[#allocation6 + $0x4d0] sm:$0xff]
    %v3777 = vld [vmem:[#allocation6 + $0x4d8] sm:$0xff]
    %v3778 = vld [vmem:[#allocation6 + $0x4e0] sm:$0xff]
    %v3779 = vld [vmem:[#allocation6 + $0x4e8] sm:$0xff]
    %v3780 = vld [vmem:[#allocation6 + $0x4f0] sm:$0xff]
    %v3781 = vld [vmem:[#allocation6 + $0x4f8] sm:$0xff]
    %v3782 = vld [vmem:[#allocation6 + $0x500] sm:$0xff]
    %v3783 = vld [vmem:[#allocation6 + $0x508] sm:$0xff]
    %v3784 = vld [vmem:[#allocation6 + $0x510] sm:$0xff]
    %v3785 = vld [vmem:[#allocation6 + $0x518] sm:$0xff]
    %v3786 = vld [vmem:[#allocation6 + $0x520] sm:$0xff]
    %v3787 = vld [vmem:[#allocation6 + $0x528] sm:$0xff]
    %v3788 = vld [vmem:[#allocation6 + $0x530] sm:$0xff]
    %v3789 = vld [vmem:[#allocation6 + $0x538] sm:$0xff]
    %v3790 = vld [vmem:[#allocation6 + $0x540] sm:$0xff]
    %v3791 = vld [vmem:[#allocation6 + $0x548] sm:$0xff]
    %v3792 = vld [vmem:[#allocation6 + $0x550] sm:$0xff]
    %v3793 = vld [vmem:[#allocation6 + $0x558] sm:$0xff]
    %v3794 = vld [vmem:[#allocation6 + $0x560] sm:$0xff]
    %v3795 = vld [vmem:[#allocation6 + $0x568] sm:$0xff]
    %v3796 = vld [vmem:[#allocation6 + $0x570] sm:$0xff]
    %v3797 = vld [vmem:[#allocation6 + $0x578] sm:$0xff]
    %v3798 = vld [vmem:[#allocation6 + $0x580] sm:$0xff]
    %v3799 = vld [vmem:[#allocation6 + $0x588] sm:$0xff]
    %v3800 = vld [vmem:[#allocation6 + $0x590] sm:$0xff]
    %v3801 = vld [vmem:[#allocation6 + $0x598] sm:$0xff]
    %v3802 = vld [vmem:[#allocation6 + $0x5a0] sm:$0xff]
    %v3803 = vld [vmem:[#allocation6 + $0x5a8] sm:$0xff]
    %v3804 = vld [vmem:[#allocation6 + $0x5b0] sm:$0xff]
    %v3805 = vld [vmem:[#allocation6 + $0x5b8] sm:$0xff]
    %v3806 = vld [vmem:[#allocation6 + $0x5c0] sm:$0xff]
    %v3807 = vld [vmem:[#allocation6 + $0x5c8] sm:$0xff]
    %v3808 = vld [vmem:[#allocation6 + $0x5d0] sm:$0xff]
    %v3809 = vld [vmem:[#allocation6 + $0x5d8] sm:$0xff]
    %v3810 = vld [vmem:[#allocation6 + $0x5e0] sm:$0xff]
    %v3811 = vld [vmem:[#allocation6 + $0x5e8] sm:$0xff]
    %v3812 = vld [vmem:[#allocation6 + $0x5f0] sm:$0xff]
    %v3813 = vld [vmem:[#allocation6 + $0x5f8] sm:$0xff]
    %v3814 = vld [vmem:[#allocation6 + $0x600] sm:$0xff]
    %v3815 = vld [vmem:[#allocation6 + $0x608] sm:$0xff]
    %v3816 = vld [vmem:[#allocation6 + $0x610] sm:$0xff]
    %v3817 = vld [vmem:[#allocation6 + $0x618] sm:$0xff]
    %v3818 = vld [vmem:[#allocation6 + $0x620] sm:$0xff]
    %v3819 = vld [vmem:[#allocation6 + $0x628] sm:$0xff]
    %v3820 = vld [vmem:[#allocation6 + $0x630] sm:$0xff]
    %v3821 = vld [vmem:[#allocation6 + $0x638] sm:$0xff]
    %v3822 = vld [vmem:[#allocation6 + $0x640] sm:$0xff]
    %v3823 = vld [vmem:[#allocation6 + $0x648] sm:$0xff]
    %v3824 = vld [vmem:[#allocation6 + $0x650] sm:$0xff]
    %v3825 = vld [vmem:[#allocation6 + $0x658] sm:$0xff]
    %v3826 = vld [vmem:[#allocation6 + $0x660] sm:$0xff]
    %v3827 = vld [vmem:[#allocation6 + $0x668] sm:$0xff]
    %v3828 = vld [vmem:[#allocation6 + $0x670] sm:$0xff]
    %v3829 = vld [vmem:[#allocation6 + $0x678] sm:$0xff]
    %v3830 = vld [vmem:[#allocation6 + $0x680] sm:$0xff]
    %v3831 = vld [vmem:[#allocation6 + $0x688] sm:$0xff]
    %v3832 = vld [vmem:[#allocation6 + $0x690] sm:$0xff]
    %v3833 = vld [vmem:[#allocation6 + $0x698] sm:$0xff]
    %v3834 = vld [vmem:[#allocation6 + $0x6a0] sm:$0xff]
    %v3835 = vld [vmem:[#allocation6 + $0x6a8] sm:$0xff]
    %v3836 = vld [vmem:[#allocation6 + $0x6b0] sm:$0xff]
    %v3837 = vld [vmem:[#allocation6 + $0x6b8] sm:$0xff]
    %v3838 = vld [vmem:[#allocation6 + $0x6c0] sm:$0xff]
    %v3839 = vld [vmem:[#allocation6 + $0x6c8] sm:$0xff]
    %v3840 = vld [vmem:[#allocation6 + $0x6d0] sm:$0xff]
    %v3841 = vld [vmem:[#allocation6 + $0x6d8] sm:$0xff]
    %v3842 = vld [vmem:[#allocation6 + $0x6e0] sm:$0xff]
    %v3843 = vld [vmem:[#allocation6 + $0x6e8] sm:$0xff]
    %v3844 = vld [vmem:[#allocation6 + $0x6f0] sm:$0xff]
    %v3845 = vld [vmem:[#allocation6 + $0x6f8] sm:$0xff]
    %v3846 = vld [vmem:[#allocation6 + $0x700] sm:$0xff]
    %v3847 = vld [vmem:[#allocation6 + $0x708] sm:$0xff]
    %v3848 = vld [vmem:[#allocation6 + $0x710] sm:$0xff]
    %v3849 = vld [vmem:[#allocation6 + $0x718] sm:$0xff]
    %v3850 = vld [vmem:[#allocation6 + $0x720] sm:$0xff]
    %v3851 = vld [vmem:[#allocation6 + $0x728] sm:$0xff]
    %v3852 = vld [vmem:[#allocation6 + $0x730] sm:$0xff]
    %v3853 = vld [vmem:[#allocation6 + $0x738] sm:$0xff]
    %v3854 = vld [vmem:[#allocation6 + $0x740] sm:$0xff]
    %v3855 = vld [vmem:[#allocation6 + $0x748] sm:$0xff]
    %v3856 = vld [vmem:[#allocation6 + $0x750] sm:$0xff]
    %v3857 = vld [vmem:[#allocation6 + $0x758] sm:$0xff]
    %v3858 = vld [vmem:[#allocation6 + $0x760] sm:$0xff]
    %v3859 = vld [vmem:[#allocation6 + $0x768] sm:$0xff]
    %v3860 = vld [vmem:[#allocation6 + $0x770] sm:$0xff]
    %v3861 = vld [vmem:[#allocation6 + $0x778] sm:$0xff]
    %v3862 = vld [vmem:[#allocation6 + $0x780] sm:$0xff]
    %v3863 = vld [vmem:[#allocation6 + $0x788] sm:$0xff]
    %v3864 = vld [vmem:[#allocation6 + $0x790] sm:$0xff]
    %v3865 = vld [vmem:[#allocation6 + $0x798] sm:$0xff]
    %v3866 = vld [vmem:[#allocation6 + $0x7a0] sm:$0xff]
    %v3867 = vld [vmem:[#allocation6 + $0x7a8] sm:$0xff]
    %v3868 = vld [vmem:[#allocation6 + $0x7b0] sm:$0xff]
    %v3869 = vld [vmem:[#allocation6 + $0x7b8] sm:$0xff]
    %v3870 = vld [vmem:[#allocation6 + $0x7c0] sm:$0xff]
    %v3871 = vld [vmem:[#allocation6 + $0x7c8] sm:$0xff]
    %v3872 = vld [vmem:[#allocation6 + $0x7d0] sm:$0xff]
    %v3873 = vld [vmem:[#allocation6 + $0x7d8] sm:$0xff]
    %v3874 = vld [vmem:[#allocation6 + $0x7e0] sm:$0xff]
    %v3875 = vld [vmem:[#allocation6 + $0x7e8] sm:$0xff]
    %v3876 = vld [vmem:[#allocation6 + $0x7f0] sm:$0xff]
    %v3877 = vld [vmem:[#allocation6 + $0x7f8] sm:$0xff]
    %v3878 = vld [vmem:[#allocation6 + $0x800] sm:$0xff]
    %v3879 = vld [vmem:[#allocation6 + $0x808] sm:$0xff]
    %v3880 = vld [vmem:[#allocation6 + $0x810] sm:$0xff]
    %v3881 = vld [vmem:[#allocation6 + $0x818] sm:$0xff]
    %v3882 = vld [vmem:[#allocation6 + $0x820] sm:$0xff]
    %v3883 = vld [vmem:[#allocation6 + $0x828] sm:$0xff]
    %v3884 = vld [vmem:[#allocation6 + $0x830] sm:$0xff]
    %v3885 = vld [vmem:[#allocation6 + $0x838] sm:$0xff]
    %v3886 = vld [vmem:[#allocation6 + $0x840] sm:$0xff]
    %v3887 = vld [vmem:[#allocation6 + $0x848] sm:$0xff]
    %v3888 = vld [vmem:[#allocation6 + $0x850] sm:$0xff]
    %v3889 = vld [vmem:[#allocation6 + $0x858] sm:$0xff]
    %v3890 = vld [vmem:[#allocation6 + $0x860] sm:$0xff]
    %v3891 = vld [vmem:[#allocation6 + $0x868] sm:$0xff]
    %v3892 = vld [vmem:[#allocation6 + $0x870] sm:$0xff]
    %v3893 = vld [vmem:[#allocation6 + $0x878] sm:$0xff]
    %v3894 = vld [vmem:[#allocation6 + $0x880] sm:$0xff]
    %v3895 = vld [vmem:[#allocation6 + $0x888] sm:$0xff]
    %v3896 = vld [vmem:[#allocation6 + $0x890] sm:$0xff]
    %v3897 = vld [vmem:[#allocation6 + $0x898] sm:$0xff]
    %v3898 = vld [vmem:[#allocation6 + $0x8a0] sm:$0xff]
    %v3899 = vld [vmem:[#allocation6 + $0x8a8] sm:$0xff]
    %v3900 = vld [vmem:[#allocation6 + $0x8b0] sm:$0xff]
    %v3901 = vld [vmem:[#allocation6 + $0x8b8] sm:$0xff]
    %v3902 = vld [vmem:[#allocation6 + $0x8c0] sm:$0xff]
    %v3903 = vld [vmem:[#allocation6 + $0x8c8] sm:$0xff]
    %v3904 = vld [vmem:[#allocation6 + $0x8d0] sm:$0xff]
    %v3905 = vld [vmem:[#allocation6 + $0x8d8] sm:$0xff]
    %v3906 = vld [vmem:[#allocation6 + $0x8e0] sm:$0xff]
    %v3907 = vld [vmem:[#allocation6 + $0x8e8] sm:$0xff]
    %v3908 = vld [vmem:[#allocation6 + $0x8f0] sm:$0xff]
    %v3909 = vld [vmem:[#allocation6 + $0x8f8] sm:$0xff]
    %v3910 = vld [vmem:[#allocation6 + $0x900] sm:$0xff]
    %v3911 = vld [vmem:[#allocation6 + $0x908] sm:$0xff]
    %v3912 = vld [vmem:[#allocation6 + $0x910] sm:$0xff]
    %v3913 = vld [vmem:[#allocation6 + $0x918] sm:$0xff]
    %v3914 = vld [vmem:[#allocation6 + $0x920] sm:$0xff]
    %v3915 = vld [vmem:[#allocation6 + $0x928] sm:$0xff]
    %v3916 = vld [vmem:[#allocation6 + $0x930] sm:$0xff]
    %v3917 = vld [vmem:[#allocation6 + $0x938] sm:$0xff]
    %v3918 = vld [vmem:[#allocation6 + $0x940] sm:$0xff]
    %v3919 = vld [vmem:[#allocation6 + $0x948] sm:$0xff]
    %v3920 = vld [vmem:[#allocation6 + $0x950] sm:$0xff]
    %v3921 = vld [vmem:[#allocation6 + $0x958] sm:$0xff]
    %v3922 = vld [vmem:[#allocation6 + $0x960] sm:$0xff]
    %v3923 = vld [vmem:[#allocation6 + $0x968] sm:$0xff]
    %v3924 = vld [vmem:[#allocation6 + $0x970] sm:$0xff]
    %v3925 = vld [vmem:[#allocation6 + $0x978] sm:$0xff]
    %v3926 = vld [vmem:[#allocation6 + $0x980] sm:$0xff]
    %v3927 = vld [vmem:[#allocation6 + $0x988] sm:$0xff]
    %v3928 = vld [vmem:[#allocation6 + $0x990] sm:$0xff]
    %v3929 = vld [vmem:[#allocation6 + $0x998] sm:$0xff]
    %v3930 = vld [vmem:[#allocation6 + $0x9a0] sm:$0xff]
    %v3931 = vld [vmem:[#allocation6 + $0x9a8] sm:$0xff]
    %v3932 = vld [vmem:[#allocation6 + $0x9b0] sm:$0xff]
    %v3933 = vld [vmem:[#allocation6 + $0x9b8] sm:$0xff]
    %v3934 = vld [vmem:[#allocation6 + $0x9c0] sm:$0xff]
    %v3935 = vld [vmem:[#allocation6 + $0x9c8] sm:$0xff]
    %v3936 = vld [vmem:[#allocation6 + $0x9d0] sm:$0xff]
    %v3937 = vld [vmem:[#allocation6 + $0x9d8] sm:$0xff]
    %v3938 = vld [vmem:[#allocation6 + $0x9e0] sm:$0xff]
    %v3939 = vld [vmem:[#allocation6 + $0x9e8] sm:$0xff]
    %v3940 = vld [vmem:[#allocation6 + $0x9f0] sm:$0xff]
    %v3941 = vld [vmem:[#allocation6 + $0x9f8] sm:$0xff]
    %v3942 = vld [vmem:[#allocation6 + $0xa00] sm:$0xff]
    %v3943 = vld [vmem:[#allocation6 + $0xa08] sm:$0xff]
    %v3944 = vld [vmem:[#allocation6 + $0xa10] sm:$0xff]
    %v3945 = vld [vmem:[#allocation6 + $0xa18] sm:$0xff]
    %v3946 = vld [vmem:[#allocation6 + $0xa20] sm:$0xff]
    %v3947 = vld [vmem:[#allocation6 + $0xa28] sm:$0xff]
    %v3948 = vld [vmem:[#allocation6 + $0xa30] sm:$0xff]
    %v3949 = vld [vmem:[#allocation6 + $0xa38] sm:$0xff]
    %v3950 = vld [vmem:[#allocation6 + $0xa40] sm:$0xff]
    %v3951 = vld [vmem:[#allocation6 + $0xa48] sm:$0xff]
    %v3952 = vld [vmem:[#allocation6 + $0xa50] sm:$0xff]
    %v3953 = vld [vmem:[#allocation6 + $0xa58] sm:$0xff]
    %v3954 = vld [vmem:[#allocation6 + $0xa60] sm:$0xff]
    %v3955 = vld [vmem:[#allocation6 + $0xa68] sm:$0xff]
    %v3956 = vld [vmem:[#allocation6 + $0xa70] sm:$0xff]
    %v3957 = vld [vmem:[#allocation6 + $0xa78] sm:$0xff]
    %v3958 = vld [vmem:[#allocation6 + $0xa80] sm:$0xff]
    %v3959 = vld [vmem:[#allocation6 + $0xa88] sm:$0xff]
    %v3960 = vld [vmem:[#allocation6 + $0xa90] sm:$0xff]
    %v3961 = vld [vmem:[#allocation6 + $0xa98] sm:$0xff]
    %v3962 = vld [vmem:[#allocation6 + $0xaa0] sm:$0xff]
    %v3963 = vld [vmem:[#allocation6 + $0xaa8] sm:$0xff]
    %v3964 = vld [vmem:[#allocation6 + $0xab0] sm:$0xff]
    %v3965 = vld [vmem:[#allocation6 + $0xab8] sm:$0xff]
    %v3966 = vld [vmem:[#allocation6 + $0xac0] sm:$0xff]
    %v3967 = vld [vmem:[#allocation6 + $0xac8] sm:$0xff]
    %v3968 = vld [vmem:[#allocation6 + $0xad0] sm:$0xff]
    %v3969 = vld [vmem:[#allocation6 + $0xad8] sm:$0xff]
    %v3970 = vld [vmem:[#allocation6 + $0xae0] sm:$0xff]
    %v3971 = vld [vmem:[#allocation6 + $0xae8] sm:$0xff]
    %v3972 = vld [vmem:[#allocation6 + $0xaf0] sm:$0xff]
    %v3973 = vld [vmem:[#allocation6 + $0xaf8] sm:$0xff]
    %v3974 = vld [vmem:[#allocation6 + $0xb00] sm:$0xff]
    %v3975 = vld [vmem:[#allocation6 + $0xb08] sm:$0xff]
    %v3976 = vld [vmem:[#allocation6 + $0xb10] sm:$0xff]
    %v3977 = vld [vmem:[#allocation6 + $0xb18] sm:$0xff]
    %v3978 = vld [vmem:[#allocation6 + $0xb20] sm:$0xff]
    %v3979 = vld [vmem:[#allocation6 + $0xb28] sm:$0xff]
    %v3980 = vld [vmem:[#allocation6 + $0xb30] sm:$0xff]
    %v3981 = vld [vmem:[#allocation6 + $0xb38] sm:$0xff]
    %v3982 = vld [vmem:[#allocation6 + $0xb40] sm:$0xff]
    %v3983 = vld [vmem:[#allocation6 + $0xb48] sm:$0xff]
    %v3984 = vld [vmem:[#allocation6 + $0xb50] sm:$0xff]
    %v3985 = vld [vmem:[#allocation6 + $0xb58] sm:$0xff]
    %v3986 = vld [vmem:[#allocation6 + $0xb60] sm:$0xff]
    %v3987 = vld [vmem:[#allocation6 + $0xb68] sm:$0xff]
    %v3988 = vld [vmem:[#allocation6 + $0xb70] sm:$0xff]
    %v3989 = vld [vmem:[#allocation6 + $0xb78] sm:$0xff]
    %v3990 = vld [vmem:[#allocation6 + $0xb80] sm:$0xff]
    %v3991 = vld [vmem:[#allocation6 + $0xb88] sm:$0xff]
    %v3992 = vld [vmem:[#allocation6 + $0xb90] sm:$0xff]
    %v3993 = vld [vmem:[#allocation6 + $0xb98] sm:$0xff]
    %v3994 = vld [vmem:[#allocation6 + $0xba0] sm:$0xff]
    %v3995 = vld [vmem:[#allocation6 + $0xba8] sm:$0xff]
    %v3996 = vld [vmem:[#allocation6 + $0xbb0] sm:$0xff]
    %v3997 = vld [vmem:[#allocation6 + $0xbb8] sm:$0xff]
    %v3998 = vld [vmem:[#allocation6 + $0xbc0] sm:$0xff]
    %v3999 = vld [vmem:[#allocation6 + $0xbc8] sm:$0xff]
    %v4000 = vld [vmem:[#allocation6 + $0xbd0] sm:$0xff]
    %v4001 = vld [vmem:[#allocation6 + $0xbd8] sm:$0xff]
    %v4002 = vld [vmem:[#allocation6 + $0xbe0] sm:$0xff]
    %v4003 = vld [vmem:[#allocation6 + $0xbe8] sm:$0xff]
    %v4004 = vld [vmem:[#allocation6 + $0xbf0] sm:$0xff]
    %v4005 = vld [vmem:[#allocation6 + $0xbf8] sm:$0xff]
    %v4006 = vld [vmem:[#allocation6 + $0xc00] sm:$0xff]
    %v4007 = vld [vmem:[#allocation6 + $0xc08] sm:$0xff]
    %v4008 = vld [vmem:[#allocation6 + $0xc10] sm:$0xff]
    %v4009 = vld [vmem:[#allocation6 + $0xc18] sm:$0xff]
    %v4010 = vld [vmem:[#allocation6 + $0xc20] sm:$0xff]
    %v4011 = vld [vmem:[#allocation6 + $0xc28] sm:$0xff]
    %v4012 = vld [vmem:[#allocation6 + $0xc30] sm:$0xff]
    %v4013 = vld [vmem:[#allocation6 + $0xc38] sm:$0xff]
    %v4014 = vld [vmem:[#allocation6 + $0xc40] sm:$0xff]
    %v4015 = vld [vmem:[#allocation6 + $0xc48] sm:$0xff]
    %v4016 = vld [vmem:[#allocation6 + $0xc50] sm:$0xff]
    %v4017 = vld [vmem:[#allocation6 + $0xc58] sm:$0xff]
    %v4018 = vld [vmem:[#allocation6 + $0xc60] sm:$0xff]
    %v4019 = vld [vmem:[#allocation6 + $0xc68] sm:$0xff]
    %v4020 = vld [vmem:[#allocation6 + $0xc70] sm:$0xff]
    %v4021 = vld [vmem:[#allocation6 + $0xc78] sm:$0xff]
    %v4022 = vld [vmem:[#allocation6 + $0xc80] sm:$0xff]
    %v4023 = vld [vmem:[#allocation6 + $0xc88] sm:$0xff]
    %v4024 = vld [vmem:[#allocation6 + $0xc90] sm:$0xff]
    %v4025 = vld [vmem:[#allocation6 + $0xc98] sm:$0xff]
    %v4026 = vld [vmem:[#allocation6 + $0xca0] sm:$0xff]
    %v4027 = vld [vmem:[#allocation6 + $0xca8] sm:$0xff]
    %v4028 = vld [vmem:[#allocation6 + $0xcb0] sm:$0xff]
    %v4029 = vld [vmem:[#allocation6 + $0xcb8] sm:$0xff]
    %v4030 = vld [vmem:[#allocation6 + $0xcc0] sm:$0xff]
    %v4031 = vld [vmem:[#allocation6 + $0xcc8] sm:$0xff]
    %v4032 = vld [vmem:[#allocation6 + $0xcd0] sm:$0xff]
    %v4033 = vld [vmem:[#allocation6 + $0xcd8] sm:$0xff]
    %v4034 = vld [vmem:[#allocation6 + $0xce0] sm:$0xff]
    %v4035 = vld [vmem:[#allocation6 + $0xce8] sm:$0xff]
    %v4036 = vld [vmem:[#allocation6 + $0xcf0] sm:$0xff]
    %v4037 = vld [vmem:[#allocation6 + $0xcf8] sm:$0xff]
    %v4038 = vld [vmem:[#allocation6 + $0xd00] sm:$0xff]
    %v4039 = vld [vmem:[#allocation6 + $0xd08] sm:$0xff]
    %v4040 = vld [vmem:[#allocation6 + $0xd10] sm:$0xff]
    %v4041 = vld [vmem:[#allocation6 + $0xd18] sm:$0xff]
    %v4042 = vld [vmem:[#allocation6 + $0xd20] sm:$0xff]
    %v4043 = vld [vmem:[#allocation6 + $0xd28] sm:$0xff]
    %v4044 = vld [vmem:[#allocation6 + $0xd30] sm:$0xff]
    %v4045 = vld [vmem:[#allocation6 + $0xd38] sm:$0xff]
    %v4046 = vld [vmem:[#allocation6 + $0xd40] sm:$0xff]
    %v4047 = vld [vmem:[#allocation6 + $0xd48] sm:$0xff]
    %v4048 = vld [vmem:[#allocation6 + $0xd50] sm:$0xff]
    %v4049 = vld [vmem:[#allocation6 + $0xd58] sm:$0xff]
    %v4050 = vld [vmem:[#allocation6 + $0xd60] sm:$0xff]
    %v4051 = vld [vmem:[#allocation6 + $0xd68] sm:$0xff]
    %v4052 = vld [vmem:[#allocation6 + $0xd70] sm:$0xff]
    %v4053 = vld [vmem:[#allocation6 + $0xd78] sm:$0xff]
    %v4054 = vld [vmem:[#allocation6 + $0xd80] sm:$0xff]
    %v4055 = vld [vmem:[#allocation6 + $0xd88] sm:$0xff]
    %v4056 = vld [vmem:[#allocation6 + $0xd90] sm:$0xff]
    %v4057 = vld [vmem:[#allocation6 + $0xd98] sm:$0xff]
    %v4058 = vld [vmem:[#allocation6 + $0xda0] sm:$0xff]
    %v4059 = vld [vmem:[#allocation6 + $0xda8] sm:$0xff]
    %v4060 = vld [vmem:[#allocation6 + $0xdb0] sm:$0xff]
    %v4061 = vld [vmem:[#allocation6 + $0xdb8] sm:$0xff]
    %v4062 = vld [vmem:[#allocation6 + $0xdc0] sm:$0xff]
    %v4063 = vld [vmem:[#allocation6 + $0xdc8] sm:$0xff]
    %v4064 = vld [vmem:[#allocation6 + $0xdd0] sm:$0xff]
    %v4065 = vld [vmem:[#allocation6 + $0xdd8] sm:$0xff]
    %v4066 = vld [vmem:[#allocation6 + $0xde0] sm:$0xff]
    %v4067 = vld [vmem:[#allocation6 + $0xde8] sm:$0xff]
    %v4068 = vld [vmem:[#allocation6 + $0xdf0] sm:$0xff]
    %v4069 = vld [vmem:[#allocation6 + $0xdf8] sm:$0xff]
    %v4070 = vld [vmem:[#allocation6 + $0xe00] sm:$0xff]
    %v4071 = vld [vmem:[#allocation6 + $0xe08] sm:$0xff]
    %v4072 = vld [vmem:[#allocation6 + $0xe10] sm:$0xff]
    %v4073 = vld [vmem:[#allocation6 + $0xe18] sm:$0xff]
    %v4074 = vld [vmem:[#allocation6 + $0xe20] sm:$0xff]
    %v4075 = vld [vmem:[#allocation6 + $0xe28] sm:$0xff]
    %v4076 = vld [vmem:[#allocation6 + $0xe30] sm:$0xff]
    %v4077 = vld [vmem:[#allocation6 + $0xe38] sm:$0xff]
    %v4078 = vld [vmem:[#allocation6 + $0xe40] sm:$0xff]
    %v4079 = vld [vmem:[#allocation6 + $0xe48] sm:$0xff]
    %v4080 = vld [vmem:[#allocation6 + $0xe50] sm:$0xff]
    %v4081 = vld [vmem:[#allocation6 + $0xe58] sm:$0xff]
    %v4082 = vld [vmem:[#allocation6 + $0xe60] sm:$0xff]
    %v4083 = vld [vmem:[#allocation6 + $0xe68] sm:$0xff]
    %v4084 = vld [vmem:[#allocation6 + $0xe70] sm:$0xff]
    %v4085 = vld [vmem:[#allocation6 + $0xe78] sm:$0xff]
    %v4086 = vld [vmem:[#allocation6 + $0xe80] sm:$0xff]
    %v4087 = vld [vmem:[#allocation6 + $0xe88] sm:$0xff]
    %v4088 = vld [vmem:[#allocation6 + $0xe90] sm:$0xff]
    %v4089 = vld [vmem:[#allocation6 + $0xe98] sm:$0xff]
    %v4090 = vld [vmem:[#allocation6 + $0xea0] sm:$0xff]
    %v4091 = vld [vmem:[#allocation6 + $0xea8] sm:$0xff]
    %v4092 = vld [vmem:[#allocation6 + $0xeb0] sm:$0xff]
    %v4093 = vld [vmem:[#allocation6 + $0xeb8] sm:$0xff]
    %v4094 = vld [vmem:[#allocation6 + $0xec0] sm:$0xff]
    %v4095 = vld [vmem:[#allocation6 + $0xec8] sm:$0xff]
    %v4096 = vld [vmem:[#allocation6 + $0xed0] sm:$0xff]
    %v4097 = vld [vmem:[#allocation6 + $0xed8] sm:$0xff]
    %v4098 = vld [vmem:[#allocation6 + $0xee0] sm:$0xff]
    %v4099 = vld [vmem:[#allocation6 + $0xee8] sm:$0xff]
    %v4100 = vld [vmem:[#allocation6 + $0xef0] sm:$0xff]
    %v4101 = vld [vmem:[#allocation6 + $0xef8] sm:$0xff]
    %v4102 = vld [vmem:[#allocation6 + $0xf00] sm:$0xff]
    %v4103 = vld [vmem:[#allocation6 + $0xf08] sm:$0xff]
    %v4104 = vld [vmem:[#allocation6 + $0xf10] sm:$0xff]
    %v4105 = vld [vmem:[#allocation6 + $0xf18] sm:$0xff]
    %v4106 = vld [vmem:[#allocation6 + $0xf20] sm:$0xff]
    %v4107 = vld [vmem:[#allocation6 + $0xf28] sm:$0xff]
    %v4108 = vld [vmem:[#allocation6 + $0xf30] sm:$0xff]
    %v4109 = vld [vmem:[#allocation6 + $0xf38] sm:$0xff]
    %v4110 = vld [vmem:[#allocation6 + $0xf40] sm:$0xff]
    %v4111 = vld [vmem:[#allocation6 + $0xf48] sm:$0xff]
    %v4112 = vld [vmem:[#allocation6 + $0xf50] sm:$0xff]
    %v4113 = vld [vmem:[#allocation6 + $0xf58] sm:$0xff]
    %v4114 = vld [vmem:[#allocation6 + $0xf60] sm:$0xff]
    %v4115 = vld [vmem:[#allocation6 + $0xf68] sm:$0xff]
    %v4116 = vld [vmem:[#allocation6 + $0xf70] sm:$0xff]
    %v4117 = vld [vmem:[#allocation6 + $0xf78] sm:$0xff]
    %v4118 = vld [vmem:[#allocation6 + $0xf80] sm:$0xff]
    %v4119 = vld [vmem:[#allocation6 + $0xf88] sm:$0xff]
    %v4120 = vld [vmem:[#allocation6 + $0xf90] sm:$0xff]
    %v4121 = vld [vmem:[#allocation6 + $0xf98] sm:$0xff]
    %v4122 = vld [vmem:[#allocation6 + $0xfa0] sm:$0xff]
    %v4123 = vld [vmem:[#allocation6 + $0xfa8] sm:$0xff]
    %v4124 = vld [vmem:[#allocation6 + $0xfb0] sm:$0xff]
    %v4125 = vld [vmem:[#allocation6 + $0xfb8] sm:$0xff]
    %v4126 = vld [vmem:[#allocation6 + $0xfc0] sm:$0xff]
    %v4127 = vld [vmem:[#allocation6 + $0xfc8] sm:$0xff]
    %v4128 = vld [vmem:[#allocation6 + $0xfd0] sm:$0xff]
    %v4129 = vld [vmem:[#allocation6 + $0xfd8] sm:$0xff]
    %v4130 = vld [vmem:[#allocation6 + $0xfe0] sm:$0xff]
    %v4131 = vld [vmem:[#allocation6 + $0xfe8] sm:$0xff]
    %v4132 = vld [vmem:[#allocation6 + $0xff0] sm:$0xff]
    %v4133 = vld [vmem:[#allocation6 + $0xff8] sm:$0xff]
    %v4134 = vld [vmem:[#allocation7] sm:$0xff]
    %v4136 = vlaneseq
    %v4137 = vshrl.u32 %v4136, 7
    %v4138 = vsub.s32 0, %v4137
    %v4139 = vrot.slane %v4134, %v4138
    %v4140 = vlaneseq
    %v4141 = vshrl.u32 %v4140, 7
    %v4142 = vsub.s32 1, %v4141
    %v4143 = vrot.slane %v4134, %v4142
    %v4144 = vlaneseq
    %v4145 = vshrl.u32 %v4144, 7
    %v4146 = vsub.s32 2, %v4145
    %v4147 = vrot.slane %v4134, %v4146
    %v4148 = vlaneseq
    %v4149 = vshrl.u32 %v4148, 7
    %v4150 = vsub.s32 3, %v4149
    %v4151 = vrot.slane %v4134, %v4150
    %v4152 = vlaneseq
    %v4153 = vshrl.u32 %v4152, 7
    %v4154 = vsub.s32 4, %v4153
    %v4155 = vrot.slane %v4134, %v4154
    %v4156 = vlaneseq
    %v4157 = vshrl.u32 %v4156, 7
    %v4158 = vsub.s32 5, %v4157
    %v4159 = vrot.slane %v4134, %v4158
    %v4160 = vlaneseq
    %v4161 = vshrl.u32 %v4160, 7
    %v4162 = vsub.s32 6, %v4161
    %v4163 = vrot.slane %v4134, %v4162
    %v4164 = vlaneseq
    %v4165 = vshrl.u32 %v4164, 7
    %v4166 = vsub.s32 7, %v4165
    %v4167 = vrot.slane %v4134, %v4166
    %v4688 = vunpack.c.l.b16 %v3622
    %v4689 = vunpack.c.h.b16 %v3622
    %v4690 = vunpack.c.l.b16 %v3623
    %v4691 = vunpack.c.h.b16 %v3623
    %v4692 = vunpack.c.l.b16 %v3624
    %v4693 = vunpack.c.h.b16 %v3624
    %v4694 = vunpack.c.l.b16 %v3625
    %v4695 = vunpack.c.h.b16 %v3625
    %v4696 = vunpack.c.l.b16 %v3626
    %v4697 = vunpack.c.h.b16 %v3626
    %v4698 = vunpack.c.l.b16 %v3627
    %v4699 = vunpack.c.h.b16 %v3627
    %v4700 = vunpack.c.l.b16 %v3628
    %v4701 = vunpack.c.h.b16 %v3628
    %v4702 = vunpack.c.l.b16 %v3629
    %v4703 = vunpack.c.h.b16 %v3629
    %v4704 = vunpack.c.l.b16 %v3630
    %v4705 = vunpack.c.h.b16 %v3630
    %v4706 = vunpack.c.l.b16 %v3631
    %v4707 = vunpack.c.h.b16 %v3631
    %v4708 = vunpack.c.l.b16 %v3632
    %v4709 = vunpack.c.h.b16 %v3632
    %v4710 = vunpack.c.l.b16 %v3633
    %v4711 = vunpack.c.h.b16 %v3633
    %v4712 = vunpack.c.l.b16 %v3634
    %v4713 = vunpack.c.h.b16 %v3634
    %v4714 = vunpack.c.l.b16 %v3635
    %v4715 = vunpack.c.h.b16 %v3635
    %v4716 = vunpack.c.l.b16 %v3636
    %v4717 = vunpack.c.h.b16 %v3636
    %v4718 = vunpack.c.l.b16 %v3637
    %v4719 = vunpack.c.h.b16 %v3637
    %v4720 = vunpack.c.l.b16 %v3638
    %v4721 = vunpack.c.h.b16 %v3638
    %v4722 = vunpack.c.l.b16 %v3639
    %v4723 = vunpack.c.h.b16 %v3639
    %v4724 = vunpack.c.l.b16 %v3640
    %v4725 = vunpack.c.h.b16 %v3640
    %v4726 = vunpack.c.l.b16 %v3641
    %v4727 = vunpack.c.h.b16 %v3641
    %v4728 = vunpack.c.l.b16 %v3642
    %v4729 = vunpack.c.h.b16 %v3642
    %v4730 = vunpack.c.l.b16 %v3643
    %v4731 = vunpack.c.h.b16 %v3643
    %v4732 = vunpack.c.l.b16 %v3644
    %v4733 = vunpack.c.h.b16 %v3644
    %v4734 = vunpack.c.l.b16 %v3645
    %v4735 = vunpack.c.h.b16 %v3645
    %v4736 = vunpack.c.l.b16 %v3646
    %v4737 = vunpack.c.h.b16 %v3646
    %v4738 = vunpack.c.l.b16 %v3647
    %v4739 = vunpack.c.h.b16 %v3647
    %v4740 = vunpack.c.l.b16 %v3648
    %v4741 = vunpack.c.h.b16 %v3648
    %v4742 = vunpack.c.l.b16 %v3649
    %v4743 = vunpack.c.h.b16 %v3649
    %v4744 = vunpack.c.l.b16 %v3650
    %v4745 = vunpack.c.h.b16 %v3650
    %v4746 = vunpack.c.l.b16 %v3651
    %v4747 = vunpack.c.h.b16 %v3651
    %v4748 = vunpack.c.l.b16 %v3652
    %v4749 = vunpack.c.h.b16 %v3652
    %v4750 = vunpack.c.l.b16 %v3653
    %v4751 = vunpack.c.h.b16 %v3653
    %v4752 = vunpack.c.l.b16 %v3654
    %v4753 = vunpack.c.h.b16 %v3654
    %v4754 = vunpack.c.l.b16 %v3655
    %v4755 = vunpack.c.h.b16 %v3655
    %v4756 = vunpack.c.l.b16 %v3656
    %v4757 = vunpack.c.h.b16 %v3656
    %v4758 = vunpack.c.l.b16 %v3657
    %v4759 = vunpack.c.h.b16 %v3657
    %v4760 = vunpack.c.l.b16 %v3658
    %v4761 = vunpack.c.h.b16 %v3658
    %v4762 = vunpack.c.l.b16 %v3659
    %v4763 = vunpack.c.h.b16 %v3659
    %v4764 = vunpack.c.l.b16 %v3660
    %v4765 = vunpack.c.h.b16 %v3660
    %v4766 = vunpack.c.l.b16 %v3661
    %v4767 = vunpack.c.h.b16 %v3661
    %v4768 = vunpack.c.l.b16 %v3662
    %v4769 = vunpack.c.h.b16 %v3662
    %v4770 = vunpack.c.l.b16 %v3663
    %v4771 = vunpack.c.h.b16 %v3663
    %v4772 = vunpack.c.l.b16 %v3664
    %v4773 = vunpack.c.h.b16 %v3664
    %v4774 = vunpack.c.l.b16 %v3665
    %v4775 = vunpack.c.h.b16 %v3665
    %v4776 = vunpack.c.l.b16 %v3666
    %v4777 = vunpack.c.h.b16 %v3666
    %v4778 = vunpack.c.l.b16 %v3667
    %v4779 = vunpack.c.h.b16 %v3667
    %v4780 = vunpack.c.l.b16 %v3668
    %v4781 = vunpack.c.h.b16 %v3668
    %v4782 = vunpack.c.l.b16 %v3669
    %v4783 = vunpack.c.h.b16 %v3669
    %v4784 = vunpack.c.l.b16 %v3670
    %v4785 = vunpack.c.h.b16 %v3670
    %v4786 = vunpack.c.l.b16 %v3671
    %v4787 = vunpack.c.h.b16 %v3671
    %v4788 = vunpack.c.l.b16 %v3672
    %v4789 = vunpack.c.h.b16 %v3672
    %v4790 = vunpack.c.l.b16 %v3673
    %v4791 = vunpack.c.h.b16 %v3673
    %v4792 = vunpack.c.l.b16 %v3674
    %v4793 = vunpack.c.h.b16 %v3674
    %v4794 = vunpack.c.l.b16 %v3675
    %v4795 = vunpack.c.h.b16 %v3675
    %v4796 = vunpack.c.l.b16 %v3676
    %v4797 = vunpack.c.h.b16 %v3676
    %v4798 = vunpack.c.l.b16 %v3677
    %v4799 = vunpack.c.h.b16 %v3677
    %v4800 = vunpack.c.l.b16 %v3678
    %v4801 = vunpack.c.h.b16 %v3678
    %v4802 = vunpack.c.l.b16 %v3679
    %v4803 = vunpack.c.h.b16 %v3679
    %v4804 = vunpack.c.l.b16 %v3680
    %v4805 = vunpack.c.h.b16 %v3680
    %v4806 = vunpack.c.l.b16 %v3681
    %v4807 = vunpack.c.h.b16 %v3681
    %v4808 = vunpack.c.l.b16 %v3682
    %v4809 = vunpack.c.h.b16 %v3682
    %v4810 = vunpack.c.l.b16 %v3683
    %v4811 = vunpack.c.h.b16 %v3683
    %v4812 = vunpack.c.l.b16 %v3684
    %v4813 = vunpack.c.h.b16 %v3684
    %v4814 = vunpack.c.l.b16 %v3685
    %v4815 = vunpack.c.h.b16 %v3685
    %v4816 = vunpack.c.l.b16 %v3686
    %v4817 = vunpack.c.h.b16 %v3686
    %v4818 = vunpack.c.l.b16 %v3687
    %v4819 = vunpack.c.h.b16 %v3687
    %v4820 = vunpack.c.l.b16 %v3688
    %v4821 = vunpack.c.h.b16 %v3688
    %v4822 = vunpack.c.l.b16 %v3689
    %v4823 = vunpack.c.h.b16 %v3689
    %v4824 = vunpack.c.l.b16 %v3690
    %v4825 = vunpack.c.h.b16 %v3690
    %v4826 = vunpack.c.l.b16 %v3691
    %v4827 = vunpack.c.h.b16 %v3691
    %v4828 = vunpack.c.l.b16 %v3692
    %v4829 = vunpack.c.h.b16 %v3692
    %v4830 = vunpack.c.l.b16 %v3693
    %v4831 = vunpack.c.h.b16 %v3693
    %v4832 = vunpack.c.l.b16 %v3694
    %v4833 = vunpack.c.h.b16 %v3694
    %v4834 = vunpack.c.l.b16 %v3695
    %v4835 = vunpack.c.h.b16 %v3695
    %v4836 = vunpack.c.l.b16 %v3696
    %v4837 = vunpack.c.h.b16 %v3696
    %v4838 = vunpack.c.l.b16 %v3697
    %v4839 = vunpack.c.h.b16 %v3697
    %v4840 = vunpack.c.l.b16 %v3698
    %v4841 = vunpack.c.h.b16 %v3698
    %v4842 = vunpack.c.l.b16 %v3699
    %v4843 = vunpack.c.h.b16 %v3699
    %v4844 = vunpack.c.l.b16 %v3700
    %v4845 = vunpack.c.h.b16 %v3700
    %v4846 = vunpack.c.l.b16 %v3701
    %v4847 = vunpack.c.h.b16 %v3701
    %v4848 = vunpack.c.l.b16 %v3702
    %v4849 = vunpack.c.h.b16 %v3702
    %v4850 = vunpack.c.l.b16 %v3703
    %v4851 = vunpack.c.h.b16 %v3703
    %v4852 = vunpack.c.l.b16 %v3704
    %v4853 = vunpack.c.h.b16 %v3704
    %v4854 = vunpack.c.l.b16 %v3705
    %v4855 = vunpack.c.h.b16 %v3705
    %v4856 = vunpack.c.l.b16 %v3706
    %v4857 = vunpack.c.h.b16 %v3706
    %v4858 = vunpack.c.l.b16 %v3707
    %v4859 = vunpack.c.h.b16 %v3707
    %v4860 = vunpack.c.l.b16 %v3708
    %v4861 = vunpack.c.h.b16 %v3708
    %v4862 = vunpack.c.l.b16 %v3709
    %v4863 = vunpack.c.h.b16 %v3709
    %v4864 = vunpack.c.l.b16 %v3710
    %v4865 = vunpack.c.h.b16 %v3710
    %v4866 = vunpack.c.l.b16 %v3711
    %v4867 = vunpack.c.h.b16 %v3711
    %v4868 = vunpack.c.l.b16 %v3712
    %v4869 = vunpack.c.h.b16 %v3712
    %v4870 = vunpack.c.l.b16 %v3713
    %v4871 = vunpack.c.h.b16 %v3713
    %v4872 = vunpack.c.l.b16 %v3714
    %v4873 = vunpack.c.h.b16 %v3714
    %v4874 = vunpack.c.l.b16 %v3715
    %v4875 = vunpack.c.h.b16 %v3715
    %v4876 = vunpack.c.l.b16 %v3716
    %v4877 = vunpack.c.h.b16 %v3716
    %v4878 = vunpack.c.l.b16 %v3717
    %v4879 = vunpack.c.h.b16 %v3717
    %v4880 = vunpack.c.l.b16 %v3718
    %v4881 = vunpack.c.h.b16 %v3718
    %v4882 = vunpack.c.l.b16 %v3719
    %v4883 = vunpack.c.h.b16 %v3719
    %v4884 = vunpack.c.l.b16 %v3720
    %v4885 = vunpack.c.h.b16 %v3720
    %v4886 = vunpack.c.l.b16 %v3721
    %v4887 = vunpack.c.h.b16 %v3721
    %v4888 = vunpack.c.l.b16 %v3722
    %v4889 = vunpack.c.h.b16 %v3722
    %v4890 = vunpack.c.l.b16 %v3723
    %v4891 = vunpack.c.h.b16 %v3723
    %v4892 = vunpack.c.l.b16 %v3724
    %v4893 = vunpack.c.h.b16 %v3724
    %v4894 = vunpack.c.l.b16 %v3725
    %v4895 = vunpack.c.h.b16 %v3725
    %v4896 = vunpack.c.l.b16 %v3726
    %v4897 = vunpack.c.h.b16 %v3726
    %v4898 = vunpack.c.l.b16 %v3727
    %v4899 = vunpack.c.h.b16 %v3727
    %v4900 = vunpack.c.l.b16 %v3728
    %v4901 = vunpack.c.h.b16 %v3728
    %v4902 = vunpack.c.l.b16 %v3729
    %v4903 = vunpack.c.h.b16 %v3729
    %v4904 = vunpack.c.l.b16 %v3730
    %v4905 = vunpack.c.h.b16 %v3730
    %v4906 = vunpack.c.l.b16 %v3731
    %v4907 = vunpack.c.h.b16 %v3731
    %v4908 = vunpack.c.l.b16 %v3732
    %v4909 = vunpack.c.h.b16 %v3732
    %v4910 = vunpack.c.l.b16 %v3733
    %v4911 = vunpack.c.h.b16 %v3733
    %v4912 = vunpack.c.l.b16 %v3734
    %v4913 = vunpack.c.h.b16 %v3734
    %v4914 = vunpack.c.l.b16 %v3735
    %v4915 = vunpack.c.h.b16 %v3735
    %v4916 = vunpack.c.l.b16 %v3736
    %v4917 = vunpack.c.h.b16 %v3736
    %v4918 = vunpack.c.l.b16 %v3737
    %v4919 = vunpack.c.h.b16 %v3737
    %v4920 = vunpack.c.l.b16 %v3738
    %v4921 = vunpack.c.h.b16 %v3738
    %v4922 = vunpack.c.l.b16 %v3739
    %v4923 = vunpack.c.h.b16 %v3739
    %v4924 = vunpack.c.l.b16 %v3740
    %v4925 = vunpack.c.h.b16 %v3740
    %v4926 = vunpack.c.l.b16 %v3741
    %v4927 = vunpack.c.h.b16 %v3741
    %v4928 = vunpack.c.l.b16 %v3742
    %v4929 = vunpack.c.h.b16 %v3742
    %v4930 = vunpack.c.l.b16 %v3743
    %v4931 = vunpack.c.h.b16 %v3743
    %v4932 = vunpack.c.l.b16 %v3744
    %v4933 = vunpack.c.h.b16 %v3744
    %v4934 = vunpack.c.l.b16 %v3745
    %v4935 = vunpack.c.h.b16 %v3745
    %v4936 = vunpack.c.l.b16 %v3746
    %v4937 = vunpack.c.h.b16 %v3746
    %v4938 = vunpack.c.l.b16 %v3747
    %v4939 = vunpack.c.h.b16 %v3747
    %v4940 = vunpack.c.l.b16 %v3748
    %v4941 = vunpack.c.h.b16 %v3748
    %v4942 = vunpack.c.l.b16 %v3749
    %v4943 = vunpack.c.h.b16 %v3749
    %v4944 = vunpack.c.l.b16 %v3750
    %v4945 = vunpack.c.h.b16 %v3750
    %v4946 = vunpack.c.l.b16 %v3751
    %v4947 = vunpack.c.h.b16 %v3751
    %v4948 = vunpack.c.l.b16 %v3752
    %v4949 = vunpack.c.h.b16 %v3752
    %v4950 = vunpack.c.l.b16 %v3753
    %v4951 = vunpack.c.h.b16 %v3753
    %v4952 = vunpack.c.l.b16 %v3754
    %v4953 = vunpack.c.h.b16 %v3754
    %v4954 = vunpack.c.l.b16 %v3755
    %v4955 = vunpack.c.h.b16 %v3755
    %v4956 = vunpack.c.l.b16 %v3756
    %v4957 = vunpack.c.h.b16 %v3756
    %v4958 = vunpack.c.l.b16 %v3757
    %v4959 = vunpack.c.h.b16 %v3757
    %v4960 = vunpack.c.l.b16 %v3758
    %v4961 = vunpack.c.h.b16 %v3758
    %v4962 = vunpack.c.l.b16 %v3759
    %v4963 = vunpack.c.h.b16 %v3759
    %v4964 = vunpack.c.l.b16 %v3760
    %v4965 = vunpack.c.h.b16 %v3760
    %v4966 = vunpack.c.l.b16 %v3761
    %v4967 = vunpack.c.h.b16 %v3761
    %v4968 = vunpack.c.l.b16 %v3762
    %v4969 = vunpack.c.h.b16 %v3762
    %v4970 = vunpack.c.l.b16 %v3763
    %v4971 = vunpack.c.h.b16 %v3763
    %v4972 = vunpack.c.l.b16 %v3764
    %v4973 = vunpack.c.h.b16 %v3764
    %v4974 = vunpack.c.l.b16 %v3765
    %v4975 = vunpack.c.h.b16 %v3765
    %v4976 = vunpack.c.l.b16 %v3766
    %v4977 = vunpack.c.h.b16 %v3766
    %v4978 = vunpack.c.l.b16 %v3767
    %v4979 = vunpack.c.h.b16 %v3767
    %v4980 = vunpack.c.l.b16 %v3768
    %v4981 = vunpack.c.h.b16 %v3768
    %v4982 = vunpack.c.l.b16 %v3769
    %v4983 = vunpack.c.h.b16 %v3769
    %v4984 = vunpack.c.l.b16 %v3770
    %v4985 = vunpack.c.h.b16 %v3770
    %v4986 = vunpack.c.l.b16 %v3771
    %v4987 = vunpack.c.h.b16 %v3771
    %v4988 = vunpack.c.l.b16 %v3772
    %v4989 = vunpack.c.h.b16 %v3772
    %v4990 = vunpack.c.l.b16 %v3773
    %v4991 = vunpack.c.h.b16 %v3773
    %v4992 = vunpack.c.l.b16 %v3774
    %v4993 = vunpack.c.h.b16 %v3774
    %v4994 = vunpack.c.l.b16 %v3775
    %v4995 = vunpack.c.h.b16 %v3775
    %v4996 = vunpack.c.l.b16 %v3776
    %v4997 = vunpack.c.h.b16 %v3776
    %v4998 = vunpack.c.l.b16 %v3777
    %v4999 = vunpack.c.h.b16 %v3777
    %v5000 = vunpack.c.l.b16 %v3778
    %v5001 = vunpack.c.h.b16 %v3778
    %v5002 = vunpack.c.l.b16 %v3779
    %v5003 = vunpack.c.h.b16 %v3779
    %v5004 = vunpack.c.l.b16 %v3780
    %v5005 = vunpack.c.h.b16 %v3780
    %v5006 = vunpack.c.l.b16 %v3781
    %v5007 = vunpack.c.h.b16 %v3781
    %v5008 = vunpack.c.l.b16 %v3782
    %v5009 = vunpack.c.h.b16 %v3782
    %v5010 = vunpack.c.l.b16 %v3783
    %v5011 = vunpack.c.h.b16 %v3783
    %v5012 = vunpack.c.l.b16 %v3784
    %v5013 = vunpack.c.h.b16 %v3784
    %v5014 = vunpack.c.l.b16 %v3785
    %v5015 = vunpack.c.h.b16 %v3785
    %v5016 = vunpack.c.l.b16 %v3786
    %v5017 = vunpack.c.h.b16 %v3786
    %v5018 = vunpack.c.l.b16 %v3787
    %v5019 = vunpack.c.h.b16 %v3787
    %v5020 = vunpack.c.l.b16 %v3788
    %v5021 = vunpack.c.h.b16 %v3788
    %v5022 = vunpack.c.l.b16 %v3789
    %v5023 = vunpack.c.h.b16 %v3789
    %v5024 = vunpack.c.l.b16 %v3790
    %v5025 = vunpack.c.h.b16 %v3790
    %v5026 = vunpack.c.l.b16 %v3791
    %v5027 = vunpack.c.h.b16 %v3791
    %v5028 = vunpack.c.l.b16 %v3792
    %v5029 = vunpack.c.h.b16 %v3792
    %v5030 = vunpack.c.l.b16 %v3793
    %v5031 = vunpack.c.h.b16 %v3793
    %v5032 = vunpack.c.l.b16 %v3794
    %v5033 = vunpack.c.h.b16 %v3794
    %v5034 = vunpack.c.l.b16 %v3795
    %v5035 = vunpack.c.h.b16 %v3795
    %v5036 = vunpack.c.l.b16 %v3796
    %v5037 = vunpack.c.h.b16 %v3796
    %v5038 = vunpack.c.l.b16 %v3797
    %v5039 = vunpack.c.h.b16 %v3797
    %v5040 = vunpack.c.l.b16 %v3798
    %v5041 = vunpack.c.h.b16 %v3798
    %v5042 = vunpack.c.l.b16 %v3799
    %v5043 = vunpack.c.h.b16 %v3799
    %v5044 = vunpack.c.l.b16 %v3800
    %v5045 = vunpack.c.h.b16 %v3800
    %v5046 = vunpack.c.l.b16 %v3801
    %v5047 = vunpack.c.h.b16 %v3801
    %v5048 = vunpack.c.l.b16 %v3802
    %v5049 = vunpack.c.h.b16 %v3802
    %v5050 = vunpack.c.l.b16 %v3803
    %v5051 = vunpack.c.h.b16 %v3803
    %v5052 = vunpack.c.l.b16 %v3804
    %v5053 = vunpack.c.h.b16 %v3804
    %v5054 = vunpack.c.l.b16 %v3805
    %v5055 = vunpack.c.h.b16 %v3805
    %v5056 = vunpack.c.l.b16 %v3806
    %v5057 = vunpack.c.h.b16 %v3806
    %v5058 = vunpack.c.l.b16 %v3807
    %v5059 = vunpack.c.h.b16 %v3807
    %v5060 = vunpack.c.l.b16 %v3808
    %v5061 = vunpack.c.h.b16 %v3808
    %v5062 = vunpack.c.l.b16 %v3809
    %v5063 = vunpack.c.h.b16 %v3809
    %v5064 = vunpack.c.l.b16 %v3810
    %v5065 = vunpack.c.h.b16 %v3810
    %v5066 = vunpack.c.l.b16 %v3811
    %v5067 = vunpack.c.h.b16 %v3811
    %v5068 = vunpack.c.l.b16 %v3812
    %v5069 = vunpack.c.h.b16 %v3812
    %v5070 = vunpack.c.l.b16 %v3813
    %v5071 = vunpack.c.h.b16 %v3813
    %v5072 = vunpack.c.l.b16 %v3814
    %v5073 = vunpack.c.h.b16 %v3814
    %v5074 = vunpack.c.l.b16 %v3815
    %v5075 = vunpack.c.h.b16 %v3815
    %v5076 = vunpack.c.l.b16 %v3816
    %v5077 = vunpack.c.h.b16 %v3816
    %v5078 = vunpack.c.l.b16 %v3817
    %v5079 = vunpack.c.h.b16 %v3817
    %v5080 = vunpack.c.l.b16 %v3818
    %v5081 = vunpack.c.h.b16 %v3818
    %v5082 = vunpack.c.l.b16 %v3819
    %v5083 = vunpack.c.h.b16 %v3819
    %v5084 = vunpack.c.l.b16 %v3820
    %v5085 = vunpack.c.h.b16 %v3820
    %v5086 = vunpack.c.l.b16 %v3821
    %v5087 = vunpack.c.h.b16 %v3821
    %v5088 = vunpack.c.l.b16 %v3822
    %v5089 = vunpack.c.h.b16 %v3822
    %v5090 = vunpack.c.l.b16 %v3823
    %v5091 = vunpack.c.h.b16 %v3823
    %v5092 = vunpack.c.l.b16 %v3824
    %v5093 = vunpack.c.h.b16 %v3824
    %v5094 = vunpack.c.l.b16 %v3825
    %v5095 = vunpack.c.h.b16 %v3825
    %v5096 = vunpack.c.l.b16 %v3826
    %v5097 = vunpack.c.h.b16 %v3826
    %v5098 = vunpack.c.l.b16 %v3827
    %v5099 = vunpack.c.h.b16 %v3827
    %v5100 = vunpack.c.l.b16 %v3828
    %v5101 = vunpack.c.h.b16 %v3828
    %v5102 = vunpack.c.l.b16 %v3829
    %v5103 = vunpack.c.h.b16 %v3829
    %v5104 = vunpack.c.l.b16 %v3830
    %v5105 = vunpack.c.h.b16 %v3830
    %v5106 = vunpack.c.l.b16 %v3831
    %v5107 = vunpack.c.h.b16 %v3831
    %v5108 = vunpack.c.l.b16 %v3832
    %v5109 = vunpack.c.h.b16 %v3832
    %v5110 = vunpack.c.l.b16 %v3833
    %v5111 = vunpack.c.h.b16 %v3833
    %v5112 = vunpack.c.l.b16 %v3834
    %v5113 = vunpack.c.h.b16 %v3834
    %v5114 = vunpack.c.l.b16 %v3835
    %v5115 = vunpack.c.h.b16 %v3835
    %v5116 = vunpack.c.l.b16 %v3836
    %v5117 = vunpack.c.h.b16 %v3836
    %v5118 = vunpack.c.l.b16 %v3837
    %v5119 = vunpack.c.h.b16 %v3837
    %v5120 = vunpack.c.l.b16 %v3838
    %v5121 = vunpack.c.h.b16 %v3838
    %v5122 = vunpack.c.l.b16 %v3839
    %v5123 = vunpack.c.h.b16 %v3839
    %v5124 = vunpack.c.l.b16 %v3840
    %v5125 = vunpack.c.h.b16 %v3840
    %v5126 = vunpack.c.l.b16 %v3841
    %v5127 = vunpack.c.h.b16 %v3841
    %v5128 = vunpack.c.l.b16 %v3842
    %v5129 = vunpack.c.h.b16 %v3842
    %v5130 = vunpack.c.l.b16 %v3843
    %v5131 = vunpack.c.h.b16 %v3843
    %v5132 = vunpack.c.l.b16 %v3844
    %v5133 = vunpack.c.h.b16 %v3844
    %v5134 = vunpack.c.l.b16 %v3845
    %v5135 = vunpack.c.h.b16 %v3845
    %v5136 = vunpack.c.l.b16 %v3846
    %v5137 = vunpack.c.h.b16 %v3846
    %v5138 = vunpack.c.l.b16 %v3847
    %v5139 = vunpack.c.h.b16 %v3847
    %v5140 = vunpack.c.l.b16 %v3848
    %v5141 = vunpack.c.h.b16 %v3848
    %v5142 = vunpack.c.l.b16 %v3849
    %v5143 = vunpack.c.h.b16 %v3849
    %v5144 = vunpack.c.l.b16 %v3850
    %v5145 = vunpack.c.h.b16 %v3850
    %v5146 = vunpack.c.l.b16 %v3851
    %v5147 = vunpack.c.h.b16 %v3851
    %v5148 = vunpack.c.l.b16 %v3852
    %v5149 = vunpack.c.h.b16 %v3852
    %v5150 = vunpack.c.l.b16 %v3853
    %v5151 = vunpack.c.h.b16 %v3853
    %v5152 = vunpack.c.l.b16 %v3854
    %v5153 = vunpack.c.h.b16 %v3854
    %v5154 = vunpack.c.l.b16 %v3855
    %v5155 = vunpack.c.h.b16 %v3855
    %v5156 = vunpack.c.l.b16 %v3856
    %v5157 = vunpack.c.h.b16 %v3856
    %v5158 = vunpack.c.l.b16 %v3857
    %v5159 = vunpack.c.h.b16 %v3857
    %v5160 = vunpack.c.l.b16 %v3858
    %v5161 = vunpack.c.h.b16 %v3858
    %v5162 = vunpack.c.l.b16 %v3859
    %v5163 = vunpack.c.h.b16 %v3859
    %v5164 = vunpack.c.l.b16 %v3860
    %v5165 = vunpack.c.h.b16 %v3860
    %v5166 = vunpack.c.l.b16 %v3861
    %v5167 = vunpack.c.h.b16 %v3861
    %v5168 = vunpack.c.l.b16 %v3862
    %v5169 = vunpack.c.h.b16 %v3862
    %v5170 = vunpack.c.l.b16 %v3863
    %v5171 = vunpack.c.h.b16 %v3863
    %v5172 = vunpack.c.l.b16 %v3864
    %v5173 = vunpack.c.h.b16 %v3864
    %v5174 = vunpack.c.l.b16 %v3865
    %v5175 = vunpack.c.h.b16 %v3865
    %v5176 = vunpack.c.l.b16 %v3866
    %v5177 = vunpack.c.h.b16 %v3866
    %v5178 = vunpack.c.l.b16 %v3867
    %v5179 = vunpack.c.h.b16 %v3867
    %v5180 = vunpack.c.l.b16 %v3868
    %v5181 = vunpack.c.h.b16 %v3868
    %v5182 = vunpack.c.l.b16 %v3869
    %v5183 = vunpack.c.h.b16 %v3869
    %v5184 = vunpack.c.l.b16 %v3870
    %v5185 = vunpack.c.h.b16 %v3870
    %v5186 = vunpack.c.l.b16 %v3871
    %v5187 = vunpack.c.h.b16 %v3871
    %v5188 = vunpack.c.l.b16 %v3872
    %v5189 = vunpack.c.h.b16 %v3872
    %v5190 = vunpack.c.l.b16 %v3873
    %v5191 = vunpack.c.h.b16 %v3873
    %v5192 = vunpack.c.l.b16 %v3874
    %v5193 = vunpack.c.h.b16 %v3874
    %v5194 = vunpack.c.l.b16 %v3875
    %v5195 = vunpack.c.h.b16 %v3875
    %v5196 = vunpack.c.l.b16 %v3876
    %v5197 = vunpack.c.h.b16 %v3876
    %v5198 = vunpack.c.l.b16 %v3877
    %v5199 = vunpack.c.h.b16 %v3877
    %v5200 = vunpack.c.l.b16 %v3878
    %v5201 = vunpack.c.h.b16 %v3878
    %v5202 = vunpack.c.l.b16 %v3879
    %v5203 = vunpack.c.h.b16 %v3879
    %v5204 = vunpack.c.l.b16 %v3880
    %v5205 = vunpack.c.h.b16 %v3880
    %v5206 = vunpack.c.l.b16 %v3881
    %v5207 = vunpack.c.h.b16 %v3881
    %v5208 = vunpack.c.l.b16 %v3882
    %v5209 = vunpack.c.h.b16 %v3882
    %v5210 = vunpack.c.l.b16 %v3883
    %v5211 = vunpack.c.h.b16 %v3883
    %v5212 = vunpack.c.l.b16 %v3884
    %v5213 = vunpack.c.h.b16 %v3884
    %v5214 = vunpack.c.l.b16 %v3885
    %v5215 = vunpack.c.h.b16 %v3885
    %v5216 = vunpack.c.l.b16 %v3886
    %v5217 = vunpack.c.h.b16 %v3886
    %v5218 = vunpack.c.l.b16 %v3887
    %v5219 = vunpack.c.h.b16 %v3887
    %v5220 = vunpack.c.l.b16 %v3888
    %v5221 = vunpack.c.h.b16 %v3888
    %v5222 = vunpack.c.l.b16 %v3889
    %v5223 = vunpack.c.h.b16 %v3889
    %v5224 = vunpack.c.l.b16 %v3890
    %v5225 = vunpack.c.h.b16 %v3890
    %v5226 = vunpack.c.l.b16 %v3891
    %v5227 = vunpack.c.h.b16 %v3891
    %v5228 = vunpack.c.l.b16 %v3892
    %v5229 = vunpack.c.h.b16 %v3892
    %v5230 = vunpack.c.l.b16 %v3893
    %v5231 = vunpack.c.h.b16 %v3893
    %v5232 = vunpack.c.l.b16 %v3894
    %v5233 = vunpack.c.h.b16 %v3894
    %v5234 = vunpack.c.l.b16 %v3895
    %v5235 = vunpack.c.h.b16 %v3895
    %v5236 = vunpack.c.l.b16 %v3896
    %v5237 = vunpack.c.h.b16 %v3896
    %v5238 = vunpack.c.l.b16 %v3897
    %v5239 = vunpack.c.h.b16 %v3897
    %v5240 = vunpack.c.l.b16 %v3898
    %v5241 = vunpack.c.h.b16 %v3898
    %v5242 = vunpack.c.l.b16 %v3899
    %v5243 = vunpack.c.h.b16 %v3899
    %v5244 = vunpack.c.l.b16 %v3900
    %v5245 = vunpack.c.h.b16 %v3900
    %v5246 = vunpack.c.l.b16 %v3901
    %v5247 = vunpack.c.h.b16 %v3901
    %v5248 = vunpack.c.l.b16 %v3902
    %v5249 = vunpack.c.h.b16 %v3902
    %v5250 = vunpack.c.l.b16 %v3903
    %v5251 = vunpack.c.h.b16 %v3903
    %v5252 = vunpack.c.l.b16 %v3904
    %v5253 = vunpack.c.h.b16 %v3904
    %v5254 = vunpack.c.l.b16 %v3905
    %v5255 = vunpack.c.h.b16 %v3905
    %v5256 = vunpack.c.l.b16 %v3906
    %v5257 = vunpack.c.h.b16 %v3906
    %v5258 = vunpack.c.l.b16 %v3907
    %v5259 = vunpack.c.h.b16 %v3907
    %v5260 = vunpack.c.l.b16 %v3908
    %v5261 = vunpack.c.h.b16 %v3908
    %v5262 = vunpack.c.l.b16 %v3909
    %v5263 = vunpack.c.h.b16 %v3909
    %v5264 = vunpack.c.l.b16 %v3910
    %v5265 = vunpack.c.h.b16 %v3910
    %v5266 = vunpack.c.l.b16 %v3911
    %v5267 = vunpack.c.h.b16 %v3911
    %v5268 = vunpack.c.l.b16 %v3912
    %v5269 = vunpack.c.h.b16 %v3912
    %v5270 = vunpack.c.l.b16 %v3913
    %v5271 = vunpack.c.h.b16 %v3913
    %v5272 = vunpack.c.l.b16 %v3914
    %v5273 = vunpack.c.h.b16 %v3914
    %v5274 = vunpack.c.l.b16 %v3915
    %v5275 = vunpack.c.h.b16 %v3915
    %v5276 = vunpack.c.l.b16 %v3916
    %v5277 = vunpack.c.h.b16 %v3916
    %v5278 = vunpack.c.l.b16 %v3917
    %v5279 = vunpack.c.h.b16 %v3917
    %v5280 = vunpack.c.l.b16 %v3918
    %v5281 = vunpack.c.h.b16 %v3918
    %v5282 = vunpack.c.l.b16 %v3919
    %v5283 = vunpack.c.h.b16 %v3919
    %v5284 = vunpack.c.l.b16 %v3920
    %v5285 = vunpack.c.h.b16 %v3920
    %v5286 = vunpack.c.l.b16 %v3921
    %v5287 = vunpack.c.h.b16 %v3921
    %v5288 = vunpack.c.l.b16 %v3922
    %v5289 = vunpack.c.h.b16 %v3922
    %v5290 = vunpack.c.l.b16 %v3923
    %v5291 = vunpack.c.h.b16 %v3923
    %v5292 = vunpack.c.l.b16 %v3924
    %v5293 = vunpack.c.h.b16 %v3924
    %v5294 = vunpack.c.l.b16 %v3925
    %v5295 = vunpack.c.h.b16 %v3925
    %v5296 = vunpack.c.l.b16 %v3926
    %v5297 = vunpack.c.h.b16 %v3926
    %v5298 = vunpack.c.l.b16 %v3927
    %v5299 = vunpack.c.h.b16 %v3927
    %v5300 = vunpack.c.l.b16 %v3928
    %v5301 = vunpack.c.h.b16 %v3928
    %v5302 = vunpack.c.l.b16 %v3929
    %v5303 = vunpack.c.h.b16 %v3929
    %v5304 = vunpack.c.l.b16 %v3930
    %v5305 = vunpack.c.h.b16 %v3930
    %v5306 = vunpack.c.l.b16 %v3931
    %v5307 = vunpack.c.h.b16 %v3931
    %v5308 = vunpack.c.l.b16 %v3932
    %v5309 = vunpack.c.h.b16 %v3932
    %v5310 = vunpack.c.l.b16 %v3933
    %v5311 = vunpack.c.h.b16 %v3933
    %v5312 = vunpack.c.l.b16 %v3934
    %v5313 = vunpack.c.h.b16 %v3934
    %v5314 = vunpack.c.l.b16 %v3935
    %v5315 = vunpack.c.h.b16 %v3935
    %v5316 = vunpack.c.l.b16 %v3936
    %v5317 = vunpack.c.h.b16 %v3936
    %v5318 = vunpack.c.l.b16 %v3937
    %v5319 = vunpack.c.h.b16 %v3937
    %v5320 = vunpack.c.l.b16 %v3938
    %v5321 = vunpack.c.h.b16 %v3938
    %v5322 = vunpack.c.l.b16 %v3939
    %v5323 = vunpack.c.h.b16 %v3939
    %v5324 = vunpack.c.l.b16 %v3940
    %v5325 = vunpack.c.h.b16 %v3940
    %v5326 = vunpack.c.l.b16 %v3941
    %v5327 = vunpack.c.h.b16 %v3941
    %v5328 = vunpack.c.l.b16 %v3942
    %v5329 = vunpack.c.h.b16 %v3942
    %v5330 = vunpack.c.l.b16 %v3943
    %v5331 = vunpack.c.h.b16 %v3943
    %v5332 = vunpack.c.l.b16 %v3944
    %v5333 = vunpack.c.h.b16 %v3944
    %v5334 = vunpack.c.l.b16 %v3945
    %v5335 = vunpack.c.h.b16 %v3945
    %v5336 = vunpack.c.l.b16 %v3946
    %v5337 = vunpack.c.h.b16 %v3946
    %v5338 = vunpack.c.l.b16 %v3947
    %v5339 = vunpack.c.h.b16 %v3947
    %v5340 = vunpack.c.l.b16 %v3948
    %v5341 = vunpack.c.h.b16 %v3948
    %v5342 = vunpack.c.l.b16 %v3949
    %v5343 = vunpack.c.h.b16 %v3949
    %v5344 = vunpack.c.l.b16 %v3950
    %v5345 = vunpack.c.h.b16 %v3950
    %v5346 = vunpack.c.l.b16 %v3951
    %v5347 = vunpack.c.h.b16 %v3951
    %v5348 = vunpack.c.l.b16 %v3952
    %v5349 = vunpack.c.h.b16 %v3952
    %v5350 = vunpack.c.l.b16 %v3953
    %v5351 = vunpack.c.h.b16 %v3953
    %v5352 = vunpack.c.l.b16 %v3954
    %v5353 = vunpack.c.h.b16 %v3954
    %v5354 = vunpack.c.l.b16 %v3955
    %v5355 = vunpack.c.h.b16 %v3955
    %v5356 = vunpack.c.l.b16 %v3956
    %v5357 = vunpack.c.h.b16 %v3956
    %v5358 = vunpack.c.l.b16 %v3957
    %v5359 = vunpack.c.h.b16 %v3957
    %v5360 = vunpack.c.l.b16 %v3958
    %v5361 = vunpack.c.h.b16 %v3958
    %v5362 = vunpack.c.l.b16 %v3959
    %v5363 = vunpack.c.h.b16 %v3959
    %v5364 = vunpack.c.l.b16 %v3960
    %v5365 = vunpack.c.h.b16 %v3960
    %v5366 = vunpack.c.l.b16 %v3961
    %v5367 = vunpack.c.h.b16 %v3961
    %v5368 = vunpack.c.l.b16 %v3962
    %v5369 = vunpack.c.h.b16 %v3962
    %v5370 = vunpack.c.l.b16 %v3963
    %v5371 = vunpack.c.h.b16 %v3963
    %v5372 = vunpack.c.l.b16 %v3964
    %v5373 = vunpack.c.h.b16 %v3964
    %v5374 = vunpack.c.l.b16 %v3965
    %v5375 = vunpack.c.h.b16 %v3965
    %v5376 = vunpack.c.l.b16 %v3966
    %v5377 = vunpack.c.h.b16 %v3966
    %v5378 = vunpack.c.l.b16 %v3967
    %v5379 = vunpack.c.h.b16 %v3967
    %v5380 = vunpack.c.l.b16 %v3968
    %v5381 = vunpack.c.h.b16 %v3968
    %v5382 = vunpack.c.l.b16 %v3969
    %v5383 = vunpack.c.h.b16 %v3969
    %v5384 = vunpack.c.l.b16 %v3970
    %v5385 = vunpack.c.h.b16 %v3970
    %v5386 = vunpack.c.l.b16 %v3971
    %v5387 = vunpack.c.h.b16 %v3971
    %v5388 = vunpack.c.l.b16 %v3972
    %v5389 = vunpack.c.h.b16 %v3972
    %v5390 = vunpack.c.l.b16 %v3973
    %v5391 = vunpack.c.h.b16 %v3973
    %v5392 = vunpack.c.l.b16 %v3974
    %v5393 = vunpack.c.h.b16 %v3974
    %v5394 = vunpack.c.l.b16 %v3975
    %v5395 = vunpack.c.h.b16 %v3975
    %v5396 = vunpack.c.l.b16 %v3976
    %v5397 = vunpack.c.h.b16 %v3976
    %v5398 = vunpack.c.l.b16 %v3977
    %v5399 = vunpack.c.h.b16 %v3977
    %v5400 = vunpack.c.l.b16 %v3978
    %v5401 = vunpack.c.h.b16 %v3978
    %v5402 = vunpack.c.l.b16 %v3979
    %v5403 = vunpack.c.h.b16 %v3979
    %v5404 = vunpack.c.l.b16 %v3980
    %v5405 = vunpack.c.h.b16 %v3980
    %v5406 = vunpack.c.l.b16 %v3981
    %v5407 = vunpack.c.h.b16 %v3981
    %v5408 = vunpack.c.l.b16 %v3982
    %v5409 = vunpack.c.h.b16 %v3982
    %v5410 = vunpack.c.l.b16 %v3983
    %v5411 = vunpack.c.h.b16 %v3983
    %v5412 = vunpack.c.l.b16 %v3984
    %v5413 = vunpack.c.h.b16 %v3984
    %v5414 = vunpack.c.l.b16 %v3985
    %v5415 = vunpack.c.h.b16 %v3985
    %v5416 = vunpack.c.l.b16 %v3986
    %v5417 = vunpack.c.h.b16 %v3986
    %v5418 = vunpack.c.l.b16 %v3987
    %v5419 = vunpack.c.h.b16 %v3987
    %v5420 = vunpack.c.l.b16 %v3988
    %v5421 = vunpack.c.h.b16 %v3988
    %v5422 = vunpack.c.l.b16 %v3989
    %v5423 = vunpack.c.h.b16 %v3989
    %v5424 = vunpack.c.l.b16 %v3990
    %v5425 = vunpack.c.h.b16 %v3990
    %v5426 = vunpack.c.l.b16 %v3991
    %v5427 = vunpack.c.h.b16 %v3991
    %v5428 = vunpack.c.l.b16 %v3992
    %v5429 = vunpack.c.h.b16 %v3992
    %v5430 = vunpack.c.l.b16 %v3993
    %v5431 = vunpack.c.h.b16 %v3993
    %v5432 = vunpack.c.l.b16 %v3994
    %v5433 = vunpack.c.h.b16 %v3994
    %v5434 = vunpack.c.l.b16 %v3995
    %v5435 = vunpack.c.h.b16 %v3995
    %v5436 = vunpack.c.l.b16 %v3996
    %v5437 = vunpack.c.h.b16 %v3996
    %v5438 = vunpack.c.l.b16 %v3997
    %v5439 = vunpack.c.h.b16 %v3997
    %v5440 = vunpack.c.l.b16 %v3998
    %v5441 = vunpack.c.h.b16 %v3998
    %v5442 = vunpack.c.l.b16 %v3999
    %v5443 = vunpack.c.h.b16 %v3999
    %v5444 = vunpack.c.l.b16 %v4000
    %v5445 = vunpack.c.h.b16 %v4000
    %v5446 = vunpack.c.l.b16 %v4001
    %v5447 = vunpack.c.h.b16 %v4001
    %v5448 = vunpack.c.l.b16 %v4002
    %v5449 = vunpack.c.h.b16 %v4002
    %v5450 = vunpack.c.l.b16 %v4003
    %v5451 = vunpack.c.h.b16 %v4003
    %v5452 = vunpack.c.l.b16 %v4004
    %v5453 = vunpack.c.h.b16 %v4004
    %v5454 = vunpack.c.l.b16 %v4005
    %v5455 = vunpack.c.h.b16 %v4005
    %v5456 = vunpack.c.l.b16 %v4006
    %v5457 = vunpack.c.h.b16 %v4006
    %v5458 = vunpack.c.l.b16 %v4007
    %v5459 = vunpack.c.h.b16 %v4007
    %v5460 = vunpack.c.l.b16 %v4008
    %v5461 = vunpack.c.h.b16 %v4008
    %v5462 = vunpack.c.l.b16 %v4009
    %v5463 = vunpack.c.h.b16 %v4009
    %v5464 = vunpack.c.l.b16 %v4010
    %v5465 = vunpack.c.h.b16 %v4010
    %v5466 = vunpack.c.l.b16 %v4011
    %v5467 = vunpack.c.h.b16 %v4011
    %v5468 = vunpack.c.l.b16 %v4012
    %v5469 = vunpack.c.h.b16 %v4012
    %v5470 = vunpack.c.l.b16 %v4013
    %v5471 = vunpack.c.h.b16 %v4013
    %v5472 = vunpack.c.l.b16 %v4014
    %v5473 = vunpack.c.h.b16 %v4014
    %v5474 = vunpack.c.l.b16 %v4015
    %v5475 = vunpack.c.h.b16 %v4015
    %v5476 = vunpack.c.l.b16 %v4016
    %v5477 = vunpack.c.h.b16 %v4016
    %v5478 = vunpack.c.l.b16 %v4017
    %v5479 = vunpack.c.h.b16 %v4017
    %v5480 = vunpack.c.l.b16 %v4018
    %v5481 = vunpack.c.h.b16 %v4018
    %v5482 = vunpack.c.l.b16 %v4019
    %v5483 = vunpack.c.h.b16 %v4019
    %v5484 = vunpack.c.l.b16 %v4020
    %v5485 = vunpack.c.h.b16 %v4020
    %v5486 = vunpack.c.l.b16 %v4021
    %v5487 = vunpack.c.h.b16 %v4021
    %v5488 = vunpack.c.l.b16 %v4022
    %v5489 = vunpack.c.h.b16 %v4022
    %v5490 = vunpack.c.l.b16 %v4023
    %v5491 = vunpack.c.h.b16 %v4023
    %v5492 = vunpack.c.l.b16 %v4024
    %v5493 = vunpack.c.h.b16 %v4024
    %v5494 = vunpack.c.l.b16 %v4025
    %v5495 = vunpack.c.h.b16 %v4025
    %v5496 = vunpack.c.l.b16 %v4026
    %v5497 = vunpack.c.h.b16 %v4026
    %v5498 = vunpack.c.l.b16 %v4027
    %v5499 = vunpack.c.h.b16 %v4027
    %v5500 = vunpack.c.l.b16 %v4028
    %v5501 = vunpack.c.h.b16 %v4028
    %v5502 = vunpack.c.l.b16 %v4029
    %v5503 = vunpack.c.h.b16 %v4029
    %v5504 = vunpack.c.l.b16 %v4030
    %v5505 = vunpack.c.h.b16 %v4030
    %v5506 = vunpack.c.l.b16 %v4031
    %v5507 = vunpack.c.h.b16 %v4031
    %v5508 = vunpack.c.l.b16 %v4032
    %v5509 = vunpack.c.h.b16 %v4032
    %v5510 = vunpack.c.l.b16 %v4033
    %v5511 = vunpack.c.h.b16 %v4033
    %v5512 = vunpack.c.l.b16 %v4034
    %v5513 = vunpack.c.h.b16 %v4034
    %v5514 = vunpack.c.l.b16 %v4035
    %v5515 = vunpack.c.h.b16 %v4035
    %v5516 = vunpack.c.l.b16 %v4036
    %v5517 = vunpack.c.h.b16 %v4036
    %v5518 = vunpack.c.l.b16 %v4037
    %v5519 = vunpack.c.h.b16 %v4037
    %v5520 = vunpack.c.l.b16 %v4038
    %v5521 = vunpack.c.h.b16 %v4038
    %v5522 = vunpack.c.l.b16 %v4039
    %v5523 = vunpack.c.h.b16 %v4039
    %v5524 = vunpack.c.l.b16 %v4040
    %v5525 = vunpack.c.h.b16 %v4040
    %v5526 = vunpack.c.l.b16 %v4041
    %v5527 = vunpack.c.h.b16 %v4041
    %v5528 = vunpack.c.l.b16 %v4042
    %v5529 = vunpack.c.h.b16 %v4042
    %v5530 = vunpack.c.l.b16 %v4043
    %v5531 = vunpack.c.h.b16 %v4043
    %v5532 = vunpack.c.l.b16 %v4044
    %v5533 = vunpack.c.h.b16 %v4044
    %v5534 = vunpack.c.l.b16 %v4045
    %v5535 = vunpack.c.h.b16 %v4045
    %v5536 = vunpack.c.l.b16 %v4046
    %v5537 = vunpack.c.h.b16 %v4046
    %v5538 = vunpack.c.l.b16 %v4047
    %v5539 = vunpack.c.h.b16 %v4047
    %v5540 = vunpack.c.l.b16 %v4048
    %v5541 = vunpack.c.h.b16 %v4048
    %v5542 = vunpack.c.l.b16 %v4049
    %v5543 = vunpack.c.h.b16 %v4049
    %v5544 = vunpack.c.l.b16 %v4050
    %v5545 = vunpack.c.h.b16 %v4050
    %v5546 = vunpack.c.l.b16 %v4051
    %v5547 = vunpack.c.h.b16 %v4051
    %v5548 = vunpack.c.l.b16 %v4052
    %v5549 = vunpack.c.h.b16 %v4052
    %v5550 = vunpack.c.l.b16 %v4053
    %v5551 = vunpack.c.h.b16 %v4053
    %v5552 = vunpack.c.l.b16 %v4054
    %v5553 = vunpack.c.h.b16 %v4054
    %v5554 = vunpack.c.l.b16 %v4055
    %v5555 = vunpack.c.h.b16 %v4055
    %v5556 = vunpack.c.l.b16 %v4056
    %v5557 = vunpack.c.h.b16 %v4056
    %v5558 = vunpack.c.l.b16 %v4057
    %v5559 = vunpack.c.h.b16 %v4057
    %v5560 = vunpack.c.l.b16 %v4058
    %v5561 = vunpack.c.h.b16 %v4058
    %v5562 = vunpack.c.l.b16 %v4059
    %v5563 = vunpack.c.h.b16 %v4059
    %v5564 = vunpack.c.l.b16 %v4060
    %v5565 = vunpack.c.h.b16 %v4060
    %v5566 = vunpack.c.l.b16 %v4061
    %v5567 = vunpack.c.h.b16 %v4061
    %v5568 = vunpack.c.l.b16 %v4062
    %v5569 = vunpack.c.h.b16 %v4062
    %v5570 = vunpack.c.l.b16 %v4063
    %v5571 = vunpack.c.h.b16 %v4063
    %v5572 = vunpack.c.l.b16 %v4064
    %v5573 = vunpack.c.h.b16 %v4064
    %v5574 = vunpack.c.l.b16 %v4065
    %v5575 = vunpack.c.h.b16 %v4065
    %v5576 = vunpack.c.l.b16 %v4066
    %v5577 = vunpack.c.h.b16 %v4066
    %v5578 = vunpack.c.l.b16 %v4067
    %v5579 = vunpack.c.h.b16 %v4067
    %v5580 = vunpack.c.l.b16 %v4068
    %v5581 = vunpack.c.h.b16 %v4068
    %v5582 = vunpack.c.l.b16 %v4069
    %v5583 = vunpack.c.h.b16 %v4069
    %v5584 = vunpack.c.l.b16 %v4070
    %v5585 = vunpack.c.h.b16 %v4070
    %v5586 = vunpack.c.l.b16 %v4071
    %v5587 = vunpack.c.h.b16 %v4071
    %v5588 = vunpack.c.l.b16 %v4072
    %v5589 = vunpack.c.h.b16 %v4072
    %v5590 = vunpack.c.l.b16 %v4073
    %v5591 = vunpack.c.h.b16 %v4073
    %v5592 = vunpack.c.l.b16 %v4074
    %v5593 = vunpack.c.h.b16 %v4074
    %v5594 = vunpack.c.l.b16 %v4075
    %v5595 = vunpack.c.h.b16 %v4075
    %v5596 = vunpack.c.l.b16 %v4076
    %v5597 = vunpack.c.h.b16 %v4076
    %v5598 = vunpack.c.l.b16 %v4077
    %v5599 = vunpack.c.h.b16 %v4077
    %v5600 = vunpack.c.l.b16 %v4078
    %v5601 = vunpack.c.h.b16 %v4078
    %v5602 = vunpack.c.l.b16 %v4079
    %v5603 = vunpack.c.h.b16 %v4079
    %v5604 = vunpack.c.l.b16 %v4080
    %v5605 = vunpack.c.h.b16 %v4080
    %v5606 = vunpack.c.l.b16 %v4081
    %v5607 = vunpack.c.h.b16 %v4081
    %v5608 = vunpack.c.l.b16 %v4082
    %v5609 = vunpack.c.h.b16 %v4082
    %v5610 = vunpack.c.l.b16 %v4083
    %v5611 = vunpack.c.h.b16 %v4083
    %v5612 = vunpack.c.l.b16 %v4084
    %v5613 = vunpack.c.h.b16 %v4084
    %v5614 = vunpack.c.l.b16 %v4085
    %v5615 = vunpack.c.h.b16 %v4085
    %v5616 = vunpack.c.l.b16 %v4086
    %v5617 = vunpack.c.h.b16 %v4086
    %v5618 = vunpack.c.l.b16 %v4087
    %v5619 = vunpack.c.h.b16 %v4087
    %v5620 = vunpack.c.l.b16 %v4088
    %v5621 = vunpack.c.h.b16 %v4088
    %v5622 = vunpack.c.l.b16 %v4089
    %v5623 = vunpack.c.h.b16 %v4089
    %v5624 = vunpack.c.l.b16 %v4090
    %v5625 = vunpack.c.h.b16 %v4090
    %v5626 = vunpack.c.l.b16 %v4091
    %v5627 = vunpack.c.h.b16 %v4091
    %v5628 = vunpack.c.l.b16 %v4092
    %v5629 = vunpack.c.h.b16 %v4092
    %v5630 = vunpack.c.l.b16 %v4093
    %v5631 = vunpack.c.h.b16 %v4093
    %v5632 = vunpack.c.l.b16 %v4094
    %v5633 = vunpack.c.h.b16 %v4094
    %v5634 = vunpack.c.l.b16 %v4095
    %v5635 = vunpack.c.h.b16 %v4095
    %v5636 = vunpack.c.l.b16 %v4096
    %v5637 = vunpack.c.h.b16 %v4096
    %v5638 = vunpack.c.l.b16 %v4097
    %v5639 = vunpack.c.h.b16 %v4097
    %v5640 = vunpack.c.l.b16 %v4098
    %v5641 = vunpack.c.h.b16 %v4098
    %v5642 = vunpack.c.l.b16 %v4099
    %v5643 = vunpack.c.h.b16 %v4099
    %v5644 = vunpack.c.l.b16 %v4100
    %v5645 = vunpack.c.h.b16 %v4100
    %v5646 = vunpack.c.l.b16 %v4101
    %v5647 = vunpack.c.h.b16 %v4101
    %v5648 = vunpack.c.l.b16 %v4102
    %v5649 = vunpack.c.h.b16 %v4102
    %v5650 = vunpack.c.l.b16 %v4103
    %v5651 = vunpack.c.h.b16 %v4103
    %v5652 = vunpack.c.l.b16 %v4104
    %v5653 = vunpack.c.h.b16 %v4104
    %v5654 = vunpack.c.l.b16 %v4105
    %v5655 = vunpack.c.h.b16 %v4105
    %v5656 = vunpack.c.l.b16 %v4106
    %v5657 = vunpack.c.h.b16 %v4106
    %v5658 = vunpack.c.l.b16 %v4107
    %v5659 = vunpack.c.h.b16 %v4107
    %v5660 = vunpack.c.l.b16 %v4108
    %v5661 = vunpack.c.h.b16 %v4108
    %v5662 = vunpack.c.l.b16 %v4109
    %v5663 = vunpack.c.h.b16 %v4109
    %v5664 = vunpack.c.l.b16 %v4110
    %v5665 = vunpack.c.h.b16 %v4110
    %v5666 = vunpack.c.l.b16 %v4111
    %v5667 = vunpack.c.h.b16 %v4111
    %v5668 = vunpack.c.l.b16 %v4112
    %v5669 = vunpack.c.h.b16 %v4112
    %v5670 = vunpack.c.l.b16 %v4113
    %v5671 = vunpack.c.h.b16 %v4113
    %v5672 = vunpack.c.l.b16 %v4114
    %v5673 = vunpack.c.h.b16 %v4114
    %v5674 = vunpack.c.l.b16 %v4115
    %v5675 = vunpack.c.h.b16 %v4115
    %v5676 = vunpack.c.l.b16 %v4116
    %v5677 = vunpack.c.h.b16 %v4116
    %v5678 = vunpack.c.l.b16 %v4117
    %v5679 = vunpack.c.h.b16 %v4117
    %v5680 = vunpack.c.l.b16 %v4118
    %v5681 = vunpack.c.h.b16 %v4118
    %v5682 = vunpack.c.l.b16 %v4119
    %v5683 = vunpack.c.h.b16 %v4119
    %v5684 = vunpack.c.l.b16 %v4120
    %v5685 = vunpack.c.h.b16 %v4120
    %v5686 = vunpack.c.l.b16 %v4121
    %v5687 = vunpack.c.h.b16 %v4121
    %v5688 = vunpack.c.l.b16 %v4122
    %v5689 = vunpack.c.h.b16 %v4122
    %v5690 = vunpack.c.l.b16 %v4123
    %v5691 = vunpack.c.h.b16 %v4123
    %v5692 = vunpack.c.l.b16 %v4124
    %v5693 = vunpack.c.h.b16 %v4124
    %v5694 = vunpack.c.l.b16 %v4125
    %v5695 = vunpack.c.h.b16 %v4125
    %v5696 = vunpack.c.l.b16 %v4126
    %v5697 = vunpack.c.h.b16 %v4126
    %v5698 = vunpack.c.l.b16 %v4127
    %v5699 = vunpack.c.h.b16 %v4127
    %v5700 = vunpack.c.l.b16 %v4128
    %v5701 = vunpack.c.h.b16 %v4128
    %v5702 = vunpack.c.l.b16 %v4129
    %v5703 = vunpack.c.h.b16 %v4129
    %v5704 = vunpack.c.l.b16 %v4130
    %v5705 = vunpack.c.h.b16 %v4130
    %v5706 = vunpack.c.l.b16 %v4131
    %v5707 = vunpack.c.h.b16 %v4131
    %v5708 = vunpack.c.l.b16 %v4132
    %v5709 = vunpack.c.h.b16 %v4132
    %v5710 = vunpack.c.l.b16 %v4133
    %v5711 = vunpack.c.h.b16 %v4133
    %v5712 = vpack.c.b16 %v4696, %v4688
    %v5713 = vpack.c.b16 %v4697, %v4689
    %v5714 = vpack.c.b16 %v4698, %v4690
    %v5715 = vpack.c.b16 %v4699, %v4691
    %v5716 = vpack.c.b16 %v4700, %v4692
    %v5717 = vpack.c.b16 %v4701, %v4693
    %v5718 = vpack.c.b16 %v4702, %v4694
    %v5719 = vpack.c.b16 %v4703, %v4695
    %v5720 = vpack.c.b16 %v4712, %v4704
    %v5721 = vpack.c.b16 %v4713, %v4705
    %v5722 = vpack.c.b16 %v4714, %v4706
    %v5723 = vpack.c.b16 %v4715, %v4707
    %v5724 = vpack.c.b16 %v4716, %v4708
    %v5725 = vpack.c.b16 %v4717, %v4709
    %v5726 = vpack.c.b16 %v4718, %v4710
    %v5727 = vpack.c.b16 %v4719, %v4711
    %v5728 = vpack.c.b16 %v4728, %v4720
    %v5729 = vpack.c.b16 %v4729, %v4721
    %v5730 = vpack.c.b16 %v4730, %v4722
    %v5731 = vpack.c.b16 %v4731, %v4723
    %v5732 = vpack.c.b16 %v4732, %v4724
    %v5733 = vpack.c.b16 %v4733, %v4725
    %v5734 = vpack.c.b16 %v4734, %v4726
    %v5735 = vpack.c.b16 %v4735, %v4727
    %v5736 = vpack.c.b16 %v4744, %v4736
    %v5737 = vpack.c.b16 %v4745, %v4737
    %v5738 = vpack.c.b16 %v4746, %v4738
    %v5739 = vpack.c.b16 %v4747, %v4739
    %v5740 = vpack.c.b16 %v4748, %v4740
    %v5741 = vpack.c.b16 %v4749, %v4741
    %v5742 = vpack.c.b16 %v4750, %v4742
    %v5743 = vpack.c.b16 %v4751, %v4743
    %v5744 = vpack.c.b16 %v4760, %v4752
    %v5745 = vpack.c.b16 %v4761, %v4753
    %v5746 = vpack.c.b16 %v4762, %v4754
    %v5747 = vpack.c.b16 %v4763, %v4755
    %v5748 = vpack.c.b16 %v4764, %v4756
    %v5749 = vpack.c.b16 %v4765, %v4757
    %v5750 = vpack.c.b16 %v4766, %v4758
    %v5751 = vpack.c.b16 %v4767, %v4759
    %v5752 = vpack.c.b16 %v4776, %v4768
    %v5753 = vpack.c.b16 %v4777, %v4769
    %v5754 = vpack.c.b16 %v4778, %v4770
    %v5755 = vpack.c.b16 %v4779, %v4771
    %v5756 = vpack.c.b16 %v4780, %v4772
    %v5757 = vpack.c.b16 %v4781, %v4773
    %v5758 = vpack.c.b16 %v4782, %v4774
    %v5759 = vpack.c.b16 %v4783, %v4775
    %v5760 = vpack.c.b16 %v4792, %v4784
    %v5761 = vpack.c.b16 %v4793, %v4785
    %v5762 = vpack.c.b16 %v4794, %v4786
    %v5763 = vpack.c.b16 %v4795, %v4787
    %v5764 = vpack.c.b16 %v4796, %v4788
    %v5765 = vpack.c.b16 %v4797, %v4789
    %v5766 = vpack.c.b16 %v4798, %v4790
    %v5767 = vpack.c.b16 %v4799, %v4791
    %v5768 = vpack.c.b16 %v4808, %v4800
    %v5769 = vpack.c.b16 %v4809, %v4801
    %v5770 = vpack.c.b16 %v4810, %v4802
    %v5771 = vpack.c.b16 %v4811, %v4803
    %v5772 = vpack.c.b16 %v4812, %v4804
    %v5773 = vpack.c.b16 %v4813, %v4805
    %v5774 = vpack.c.b16 %v4814, %v4806
    %v5775 = vpack.c.b16 %v4815, %v4807
    %v5776 = vpack.c.b16 %v4824, %v4816
    %v5777 = vpack.c.b16 %v4825, %v4817
    %v5778 = vpack.c.b16 %v4826, %v4818
    %v5779 = vpack.c.b16 %v4827, %v4819
    %v5780 = vpack.c.b16 %v4828, %v4820
    %v5781 = vpack.c.b16 %v4829, %v4821
    %v5782 = vpack.c.b16 %v4830, %v4822
    %v5783 = vpack.c.b16 %v4831, %v4823
    %v5784 = vpack.c.b16 %v4840, %v4832
    %v5785 = vpack.c.b16 %v4841, %v4833
    %v5786 = vpack.c.b16 %v4842, %v4834
    %v5787 = vpack.c.b16 %v4843, %v4835
    %v5788 = vpack.c.b16 %v4844, %v4836
    %v5789 = vpack.c.b16 %v4845, %v4837
    %v5790 = vpack.c.b16 %v4846, %v4838
    %v5791 = vpack.c.b16 %v4847, %v4839
    %v5792 = vpack.c.b16 %v4856, %v4848
    %v5793 = vpack.c.b16 %v4857, %v4849
    %v5794 = vpack.c.b16 %v4858, %v4850
    %v5795 = vpack.c.b16 %v4859, %v4851
    %v5796 = vpack.c.b16 %v4860, %v4852
    %v5797 = vpack.c.b16 %v4861, %v4853
    %v5798 = vpack.c.b16 %v4862, %v4854
    %v5799 = vpack.c.b16 %v4863, %v4855
    %v5800 = vpack.c.b16 %v4872, %v4864
    %v5801 = vpack.c.b16 %v4873, %v4865
    %v5802 = vpack.c.b16 %v4874, %v4866
    %v5803 = vpack.c.b16 %v4875, %v4867
    %v5804 = vpack.c.b16 %v4876, %v4868
    %v5805 = vpack.c.b16 %v4877, %v4869
    %v5806 = vpack.c.b16 %v4878, %v4870
    %v5807 = vpack.c.b16 %v4879, %v4871
    %v5808 = vpack.c.b16 %v4888, %v4880
    %v5809 = vpack.c.b16 %v4889, %v4881
    %v5810 = vpack.c.b16 %v4890, %v4882
    %v5811 = vpack.c.b16 %v4891, %v4883
    %v5812 = vpack.c.b16 %v4892, %v4884
    %v5813 = vpack.c.b16 %v4893, %v4885
    %v5814 = vpack.c.b16 %v4894, %v4886
    %v5815 = vpack.c.b16 %v4895, %v4887
    %v5816 = vpack.c.b16 %v4904, %v4896
    %v5817 = vpack.c.b16 %v4905, %v4897
    %v5818 = vpack.c.b16 %v4906, %v4898
    %v5819 = vpack.c.b16 %v4907, %v4899
    %v5820 = vpack.c.b16 %v4908, %v4900
    %v5821 = vpack.c.b16 %v4909, %v4901
    %v5822 = vpack.c.b16 %v4910, %v4902
    %v5823 = vpack.c.b16 %v4911, %v4903
    %v5824 = vpack.c.b16 %v4920, %v4912
    %v5825 = vpack.c.b16 %v4921, %v4913
    %v5826 = vpack.c.b16 %v4922, %v4914
    %v5827 = vpack.c.b16 %v4923, %v4915
    %v5828 = vpack.c.b16 %v4924, %v4916
    %v5829 = vpack.c.b16 %v4925, %v4917
    %v5830 = vpack.c.b16 %v4926, %v4918
    %v5831 = vpack.c.b16 %v4927, %v4919
    %v5832 = vpack.c.b16 %v4936, %v4928
    %v5833 = vpack.c.b16 %v4937, %v4929
    %v5834 = vpack.c.b16 %v4938, %v4930
    %v5835 = vpack.c.b16 %v4939, %v4931
    %v5836 = vpack.c.b16 %v4940, %v4932
    %v5837 = vpack.c.b16 %v4941, %v4933
    %v5838 = vpack.c.b16 %v4942, %v4934
    %v5839 = vpack.c.b16 %v4943, %v4935
    %v5840 = vpack.c.b16 %v4952, %v4944
    %v5841 = vpack.c.b16 %v4953, %v4945
    %v5842 = vpack.c.b16 %v4954, %v4946
    %v5843 = vpack.c.b16 %v4955, %v4947
    %v5844 = vpack.c.b16 %v4956, %v4948
    %v5845 = vpack.c.b16 %v4957, %v4949
    %v5846 = vpack.c.b16 %v4958, %v4950
    %v5847 = vpack.c.b16 %v4959, %v4951
    %v5848 = vpack.c.b16 %v4968, %v4960
    %v5849 = vpack.c.b16 %v4969, %v4961
    %v5850 = vpack.c.b16 %v4970, %v4962
    %v5851 = vpack.c.b16 %v4971, %v4963
    %v5852 = vpack.c.b16 %v4972, %v4964
    %v5853 = vpack.c.b16 %v4973, %v4965
    %v5854 = vpack.c.b16 %v4974, %v4966
    %v5855 = vpack.c.b16 %v4975, %v4967
    %v5856 = vpack.c.b16 %v4984, %v4976
    %v5857 = vpack.c.b16 %v4985, %v4977
    %v5858 = vpack.c.b16 %v4986, %v4978
    %v5859 = vpack.c.b16 %v4987, %v4979
    %v5860 = vpack.c.b16 %v4988, %v4980
    %v5861 = vpack.c.b16 %v4989, %v4981
    %v5862 = vpack.c.b16 %v4990, %v4982
    %v5863 = vpack.c.b16 %v4991, %v4983
    %v5864 = vpack.c.b16 %v5000, %v4992
    %v5865 = vpack.c.b16 %v5001, %v4993
    %v5866 = vpack.c.b16 %v5002, %v4994
    %v5867 = vpack.c.b16 %v5003, %v4995
    %v5868 = vpack.c.b16 %v5004, %v4996
    %v5869 = vpack.c.b16 %v5005, %v4997
    %v5870 = vpack.c.b16 %v5006, %v4998
    %v5871 = vpack.c.b16 %v5007, %v4999
    %v5872 = vpack.c.b16 %v5016, %v5008
    %v5873 = vpack.c.b16 %v5017, %v5009
    %v5874 = vpack.c.b16 %v5018, %v5010
    %v5875 = vpack.c.b16 %v5019, %v5011
    %v5876 = vpack.c.b16 %v5020, %v5012
    %v5877 = vpack.c.b16 %v5021, %v5013
    %v5878 = vpack.c.b16 %v5022, %v5014
    %v5879 = vpack.c.b16 %v5023, %v5015
    %v5880 = vpack.c.b16 %v5032, %v5024
    %v5881 = vpack.c.b16 %v5033, %v5025
    %v5882 = vpack.c.b16 %v5034, %v5026
    %v5883 = vpack.c.b16 %v5035, %v5027
    %v5884 = vpack.c.b16 %v5036, %v5028
    %v5885 = vpack.c.b16 %v5037, %v5029
    %v5886 = vpack.c.b16 %v5038, %v5030
    %v5887 = vpack.c.b16 %v5039, %v5031
    %v5888 = vpack.c.b16 %v5048, %v5040
    %v5889 = vpack.c.b16 %v5049, %v5041
    %v5890 = vpack.c.b16 %v5050, %v5042
    %v5891 = vpack.c.b16 %v5051, %v5043
    %v5892 = vpack.c.b16 %v5052, %v5044
    %v5893 = vpack.c.b16 %v5053, %v5045
    %v5894 = vpack.c.b16 %v5054, %v5046
    %v5895 = vpack.c.b16 %v5055, %v5047
    %v5896 = vpack.c.b16 %v5064, %v5056
    %v5897 = vpack.c.b16 %v5065, %v5057
    %v5898 = vpack.c.b16 %v5066, %v5058
    %v5899 = vpack.c.b16 %v5067, %v5059
    %v5900 = vpack.c.b16 %v5068, %v5060
    %v5901 = vpack.c.b16 %v5069, %v5061
    %v5902 = vpack.c.b16 %v5070, %v5062
    %v5903 = vpack.c.b16 %v5071, %v5063
    %v5904 = vpack.c.b16 %v5080, %v5072
    %v5905 = vpack.c.b16 %v5081, %v5073
    %v5906 = vpack.c.b16 %v5082, %v5074
    %v5907 = vpack.c.b16 %v5083, %v5075
    %v5908 = vpack.c.b16 %v5084, %v5076
    %v5909 = vpack.c.b16 %v5085, %v5077
    %v5910 = vpack.c.b16 %v5086, %v5078
    %v5911 = vpack.c.b16 %v5087, %v5079
    %v5912 = vpack.c.b16 %v5096, %v5088
    %v5913 = vpack.c.b16 %v5097, %v5089
    %v5914 = vpack.c.b16 %v5098, %v5090
    %v5915 = vpack.c.b16 %v5099, %v5091
    %v5916 = vpack.c.b16 %v5100, %v5092
    %v5917 = vpack.c.b16 %v5101, %v5093
    %v5918 = vpack.c.b16 %v5102, %v5094
    %v5919 = vpack.c.b16 %v5103, %v5095
    %v5920 = vpack.c.b16 %v5112, %v5104
    %v5921 = vpack.c.b16 %v5113, %v5105
    %v5922 = vpack.c.b16 %v5114, %v5106
    %v5923 = vpack.c.b16 %v5115, %v5107
    %v5924 = vpack.c.b16 %v5116, %v5108
    %v5925 = vpack.c.b16 %v5117, %v5109
    %v5926 = vpack.c.b16 %v5118, %v5110
    %v5927 = vpack.c.b16 %v5119, %v5111
    %v5928 = vpack.c.b16 %v5128, %v5120
    %v5929 = vpack.c.b16 %v5129, %v5121
    %v5930 = vpack.c.b16 %v5130, %v5122
    %v5931 = vpack.c.b16 %v5131, %v5123
    %v5932 = vpack.c.b16 %v5132, %v5124
    %v5933 = vpack.c.b16 %v5133, %v5125
    %v5934 = vpack.c.b16 %v5134, %v5126
    %v5935 = vpack.c.b16 %v5135, %v5127
    %v5936 = vpack.c.b16 %v5144, %v5136
    %v5937 = vpack.c.b16 %v5145, %v5137
    %v5938 = vpack.c.b16 %v5146, %v5138
    %v5939 = vpack.c.b16 %v5147, %v5139
    %v5940 = vpack.c.b16 %v5148, %v5140
    %v5941 = vpack.c.b16 %v5149, %v5141
    %v5942 = vpack.c.b16 %v5150, %v5142
    %v5943 = vpack.c.b16 %v5151, %v5143
    %v5944 = vpack.c.b16 %v5160, %v5152
    %v5945 = vpack.c.b16 %v5161, %v5153
    %v5946 = vpack.c.b16 %v5162, %v5154
    %v5947 = vpack.c.b16 %v5163, %v5155
    %v5948 = vpack.c.b16 %v5164, %v5156
    %v5949 = vpack.c.b16 %v5165, %v5157
    %v5950 = vpack.c.b16 %v5166, %v5158
    %v5951 = vpack.c.b16 %v5167, %v5159
    %v5952 = vpack.c.b16 %v5176, %v5168
    %v5953 = vpack.c.b16 %v5177, %v5169
    %v5954 = vpack.c.b16 %v5178, %v5170
    %v5955 = vpack.c.b16 %v5179, %v5171
    %v5956 = vpack.c.b16 %v5180, %v5172
    %v5957 = vpack.c.b16 %v5181, %v5173
    %v5958 = vpack.c.b16 %v5182, %v5174
    %v5959 = vpack.c.b16 %v5183, %v5175
    %v5960 = vpack.c.b16 %v5192, %v5184
    %v5961 = vpack.c.b16 %v5193, %v5185
    %v5962 = vpack.c.b16 %v5194, %v5186
    %v5963 = vpack.c.b16 %v5195, %v5187
    %v5964 = vpack.c.b16 %v5196, %v5188
    %v5965 = vpack.c.b16 %v5197, %v5189
    %v5966 = vpack.c.b16 %v5198, %v5190
    %v5967 = vpack.c.b16 %v5199, %v5191
    %v5968 = vpack.c.b16 %v5208, %v5200
    %v5969 = vpack.c.b16 %v5209, %v5201
    %v5970 = vpack.c.b16 %v5210, %v5202
    %v5971 = vpack.c.b16 %v5211, %v5203
    %v5972 = vpack.c.b16 %v5212, %v5204
    %v5973 = vpack.c.b16 %v5213, %v5205
    %v5974 = vpack.c.b16 %v5214, %v5206
    %v5975 = vpack.c.b16 %v5215, %v5207
    %v5976 = vpack.c.b16 %v5224, %v5216
    %v5977 = vpack.c.b16 %v5225, %v5217
    %v5978 = vpack.c.b16 %v5226, %v5218
    %v5979 = vpack.c.b16 %v5227, %v5219
    %v5980 = vpack.c.b16 %v5228, %v5220
    %v5981 = vpack.c.b16 %v5229, %v5221
    %v5982 = vpack.c.b16 %v5230, %v5222
    %v5983 = vpack.c.b16 %v5231, %v5223
    %v5984 = vpack.c.b16 %v5240, %v5232
    %v5985 = vpack.c.b16 %v5241, %v5233
    %v5986 = vpack.c.b16 %v5242, %v5234
    %v5987 = vpack.c.b16 %v5243, %v5235
    %v5988 = vpack.c.b16 %v5244, %v5236
    %v5989 = vpack.c.b16 %v5245, %v5237
    %v5990 = vpack.c.b16 %v5246, %v5238
    %v5991 = vpack.c.b16 %v5247, %v5239
    %v5992 = vpack.c.b16 %v5256, %v5248
    %v5993 = vpack.c.b16 %v5257, %v5249
    %v5994 = vpack.c.b16 %v5258, %v5250
    %v5995 = vpack.c.b16 %v5259, %v5251
    %v5996 = vpack.c.b16 %v5260, %v5252
    %v5997 = vpack.c.b16 %v5261, %v5253
    %v5998 = vpack.c.b16 %v5262, %v5254
    %v5999 = vpack.c.b16 %v5263, %v5255
    %v6000 = vpack.c.b16 %v5272, %v5264
    %v6001 = vpack.c.b16 %v5273, %v5265
    %v6002 = vpack.c.b16 %v5274, %v5266
    %v6003 = vpack.c.b16 %v5275, %v5267
    %v6004 = vpack.c.b16 %v5276, %v5268
    %v6005 = vpack.c.b16 %v5277, %v5269
    %v6006 = vpack.c.b16 %v5278, %v5270
    %v6007 = vpack.c.b16 %v5279, %v5271
    %v6008 = vpack.c.b16 %v5288, %v5280
    %v6009 = vpack.c.b16 %v5289, %v5281
    %v6010 = vpack.c.b16 %v5290, %v5282
    %v6011 = vpack.c.b16 %v5291, %v5283
    %v6012 = vpack.c.b16 %v5292, %v5284
    %v6013 = vpack.c.b16 %v5293, %v5285
    %v6014 = vpack.c.b16 %v5294, %v5286
    %v6015 = vpack.c.b16 %v5295, %v5287
    %v6016 = vpack.c.b16 %v5304, %v5296
    %v6017 = vpack.c.b16 %v5305, %v5297
    %v6018 = vpack.c.b16 %v5306, %v5298
    %v6019 = vpack.c.b16 %v5307, %v5299
    %v6020 = vpack.c.b16 %v5308, %v5300
    %v6021 = vpack.c.b16 %v5309, %v5301
    %v6022 = vpack.c.b16 %v5310, %v5302
    %v6023 = vpack.c.b16 %v5311, %v5303
    %v6024 = vpack.c.b16 %v5320, %v5312
    %v6025 = vpack.c.b16 %v5321, %v5313
    %v6026 = vpack.c.b16 %v5322, %v5314
    %v6027 = vpack.c.b16 %v5323, %v5315
    %v6028 = vpack.c.b16 %v5324, %v5316
    %v6029 = vpack.c.b16 %v5325, %v5317
    %v6030 = vpack.c.b16 %v5326, %v5318
    %v6031 = vpack.c.b16 %v5327, %v5319
    %v6032 = vpack.c.b16 %v5336, %v5328
    %v6033 = vpack.c.b16 %v5337, %v5329
    %v6034 = vpack.c.b16 %v5338, %v5330
    %v6035 = vpack.c.b16 %v5339, %v5331
    %v6036 = vpack.c.b16 %v5340, %v5332
    %v6037 = vpack.c.b16 %v5341, %v5333
    %v6038 = vpack.c.b16 %v5342, %v5334
    %v6039 = vpack.c.b16 %v5343, %v5335
    %v6040 = vpack.c.b16 %v5352, %v5344
    %v6041 = vpack.c.b16 %v5353, %v5345
    %v6042 = vpack.c.b16 %v5354, %v5346
    %v6043 = vpack.c.b16 %v5355, %v5347
    %v6044 = vpack.c.b16 %v5356, %v5348
    %v6045 = vpack.c.b16 %v5357, %v5349
    %v6046 = vpack.c.b16 %v5358, %v5350
    %v6047 = vpack.c.b16 %v5359, %v5351
    %v6048 = vpack.c.b16 %v5368, %v5360
    %v6049 = vpack.c.b16 %v5369, %v5361
    %v6050 = vpack.c.b16 %v5370, %v5362
    %v6051 = vpack.c.b16 %v5371, %v5363
    %v6052 = vpack.c.b16 %v5372, %v5364
    %v6053 = vpack.c.b16 %v5373, %v5365
    %v6054 = vpack.c.b16 %v5374, %v5366
    %v6055 = vpack.c.b16 %v5375, %v5367
    %v6056 = vpack.c.b16 %v5384, %v5376
    %v6057 = vpack.c.b16 %v5385, %v5377
    %v6058 = vpack.c.b16 %v5386, %v5378
    %v6059 = vpack.c.b16 %v5387, %v5379
    %v6060 = vpack.c.b16 %v5388, %v5380
    %v6061 = vpack.c.b16 %v5389, %v5381
    %v6062 = vpack.c.b16 %v5390, %v5382
    %v6063 = vpack.c.b16 %v5391, %v5383
    %v6064 = vpack.c.b16 %v5400, %v5392
    %v6065 = vpack.c.b16 %v5401, %v5393
    %v6066 = vpack.c.b16 %v5402, %v5394
    %v6067 = vpack.c.b16 %v5403, %v5395
    %v6068 = vpack.c.b16 %v5404, %v5396
    %v6069 = vpack.c.b16 %v5405, %v5397
    %v6070 = vpack.c.b16 %v5406, %v5398
    %v6071 = vpack.c.b16 %v5407, %v5399
    %v6072 = vpack.c.b16 %v5416, %v5408
    %v6073 = vpack.c.b16 %v5417, %v5409
    %v6074 = vpack.c.b16 %v5418, %v5410
    %v6075 = vpack.c.b16 %v5419, %v5411
    %v6076 = vpack.c.b16 %v5420, %v5412
    %v6077 = vpack.c.b16 %v5421, %v5413
    %v6078 = vpack.c.b16 %v5422, %v5414
    %v6079 = vpack.c.b16 %v5423, %v5415
    %v6080 = vpack.c.b16 %v5432, %v5424
    %v6081 = vpack.c.b16 %v5433, %v5425
    %v6082 = vpack.c.b16 %v5434, %v5426
    %v6083 = vpack.c.b16 %v5435, %v5427
    %v6084 = vpack.c.b16 %v5436, %v5428
    %v6085 = vpack.c.b16 %v5437, %v5429
    %v6086 = vpack.c.b16 %v5438, %v5430
    %v6087 = vpack.c.b16 %v5439, %v5431
    %v6088 = vpack.c.b16 %v5448, %v5440
    %v6089 = vpack.c.b16 %v5449, %v5441
    %v6090 = vpack.c.b16 %v5450, %v5442
    %v6091 = vpack.c.b16 %v5451, %v5443
    %v6092 = vpack.c.b16 %v5452, %v5444
    %v6093 = vpack.c.b16 %v5453, %v5445
    %v6094 = vpack.c.b16 %v5454, %v5446
    %v6095 = vpack.c.b16 %v5455, %v5447
    %v6096 = vpack.c.b16 %v5464, %v5456
    %v6097 = vpack.c.b16 %v5465, %v5457
    %v6098 = vpack.c.b16 %v5466, %v5458
    %v6099 = vpack.c.b16 %v5467, %v5459
    %v6100 = vpack.c.b16 %v5468, %v5460
    %v6101 = vpack.c.b16 %v5469, %v5461
    %v6102 = vpack.c.b16 %v5470, %v5462
    %v6103 = vpack.c.b16 %v5471, %v5463
    %v6104 = vpack.c.b16 %v5480, %v5472
    %v6105 = vpack.c.b16 %v5481, %v5473
    %v6106 = vpack.c.b16 %v5482, %v5474
    %v6107 = vpack.c.b16 %v5483, %v5475
    %v6108 = vpack.c.b16 %v5484, %v5476
    %v6109 = vpack.c.b16 %v5485, %v5477
    %v6110 = vpack.c.b16 %v5486, %v5478
    %v6111 = vpack.c.b16 %v5487, %v5479
    %v6112 = vpack.c.b16 %v5496, %v5488
    %v6113 = vpack.c.b16 %v5497, %v5489
    %v6114 = vpack.c.b16 %v5498, %v5490
    %v6115 = vpack.c.b16 %v5499, %v5491
    %v6116 = vpack.c.b16 %v5500, %v5492
    %v6117 = vpack.c.b16 %v5501, %v5493
    %v6118 = vpack.c.b16 %v5502, %v5494
    %v6119 = vpack.c.b16 %v5503, %v5495
    %v6120 = vpack.c.b16 %v5512, %v5504
    %v6121 = vpack.c.b16 %v5513, %v5505
    %v6122 = vpack.c.b16 %v5514, %v5506
    %v6123 = vpack.c.b16 %v5515, %v5507
    %v6124 = vpack.c.b16 %v5516, %v5508
    %v6125 = vpack.c.b16 %v5517, %v5509
    %v6126 = vpack.c.b16 %v5518, %v5510
    %v6127 = vpack.c.b16 %v5519, %v5511
    %v6128 = vpack.c.b16 %v5528, %v5520
    %v6129 = vpack.c.b16 %v5529, %v5521
    %v6130 = vpack.c.b16 %v5530, %v5522
    %v6131 = vpack.c.b16 %v5531, %v5523
    %v6132 = vpack.c.b16 %v5532, %v5524
    %v6133 = vpack.c.b16 %v5533, %v5525
    %v6134 = vpack.c.b16 %v5534, %v5526
    %v6135 = vpack.c.b16 %v5535, %v5527
    %v6136 = vpack.c.b16 %v5544, %v5536
    %v6137 = vpack.c.b16 %v5545, %v5537
    %v6138 = vpack.c.b16 %v5546, %v5538
    %v6139 = vpack.c.b16 %v5547, %v5539
    %v6140 = vpack.c.b16 %v5548, %v5540
    %v6141 = vpack.c.b16 %v5549, %v5541
    %v6142 = vpack.c.b16 %v5550, %v5542
    %v6143 = vpack.c.b16 %v5551, %v5543
    %v6144 = vpack.c.b16 %v5560, %v5552
    %v6145 = vpack.c.b16 %v5561, %v5553
    %v6146 = vpack.c.b16 %v5562, %v5554
    %v6147 = vpack.c.b16 %v5563, %v5555
    %v6148 = vpack.c.b16 %v5564, %v5556
    %v6149 = vpack.c.b16 %v5565, %v5557
    %v6150 = vpack.c.b16 %v5566, %v5558
    %v6151 = vpack.c.b16 %v5567, %v5559
    %v6152 = vpack.c.b16 %v5576, %v5568
    %v6153 = vpack.c.b16 %v5577, %v5569
    %v6154 = vpack.c.b16 %v5578, %v5570
    %v6155 = vpack.c.b16 %v5579, %v5571
    %v6156 = vpack.c.b16 %v5580, %v5572
    %v6157 = vpack.c.b16 %v5581, %v5573
    %v6158 = vpack.c.b16 %v5582, %v5574
    %v6159 = vpack.c.b16 %v5583, %v5575
    %v6160 = vpack.c.b16 %v5592, %v5584
    %v6161 = vpack.c.b16 %v5593, %v5585
    %v6162 = vpack.c.b16 %v5594, %v5586
    %v6163 = vpack.c.b16 %v5595, %v5587
    %v6164 = vpack.c.b16 %v5596, %v5588
    %v6165 = vpack.c.b16 %v5597, %v5589
    %v6166 = vpack.c.b16 %v5598, %v5590
    %v6167 = vpack.c.b16 %v5599, %v5591
    %v6168 = vpack.c.b16 %v5608, %v5600
    %v6169 = vpack.c.b16 %v5609, %v5601
    %v6170 = vpack.c.b16 %v5610, %v5602
    %v6171 = vpack.c.b16 %v5611, %v5603
    %v6172 = vpack.c.b16 %v5612, %v5604
    %v6173 = vpack.c.b16 %v5613, %v5605
    %v6174 = vpack.c.b16 %v5614, %v5606
    %v6175 = vpack.c.b16 %v5615, %v5607
    %v6176 = vpack.c.b16 %v5624, %v5616
    %v6177 = vpack.c.b16 %v5625, %v5617
    %v6178 = vpack.c.b16 %v5626, %v5618
    %v6179 = vpack.c.b16 %v5627, %v5619
    %v6180 = vpack.c.b16 %v5628, %v5620
    %v6181 = vpack.c.b16 %v5629, %v5621
    %v6182 = vpack.c.b16 %v5630, %v5622
    %v6183 = vpack.c.b16 %v5631, %v5623
    %v6184 = vpack.c.b16 %v5640, %v5632
    %v6185 = vpack.c.b16 %v5641, %v5633
    %v6186 = vpack.c.b16 %v5642, %v5634
    %v6187 = vpack.c.b16 %v5643, %v5635
    %v6188 = vpack.c.b16 %v5644, %v5636
    %v6189 = vpack.c.b16 %v5645, %v5637
    %v6190 = vpack.c.b16 %v5646, %v5638
    %v6191 = vpack.c.b16 %v5647, %v5639
    %v6192 = vpack.c.b16 %v5656, %v5648
    %v6193 = vpack.c.b16 %v5657, %v5649
    %v6194 = vpack.c.b16 %v5658, %v5650
    %v6195 = vpack.c.b16 %v5659, %v5651
    %v6196 = vpack.c.b16 %v5660, %v5652
    %v6197 = vpack.c.b16 %v5661, %v5653
    %v6198 = vpack.c.b16 %v5662, %v5654
    %v6199 = vpack.c.b16 %v5663, %v5655
    %v6200 = vpack.c.b16 %v5672, %v5664
    %v6201 = vpack.c.b16 %v5673, %v5665
    %v6202 = vpack.c.b16 %v5674, %v5666
    %v6203 = vpack.c.b16 %v5675, %v5667
    %v6204 = vpack.c.b16 %v5676, %v5668
    %v6205 = vpack.c.b16 %v5677, %v5669
    %v6206 = vpack.c.b16 %v5678, %v5670
    %v6207 = vpack.c.b16 %v5679, %v5671
    %v6208 = vpack.c.b16 %v5688, %v5680
    %v6209 = vpack.c.b16 %v5689, %v5681
    %v6210 = vpack.c.b16 %v5690, %v5682
    %v6211 = vpack.c.b16 %v5691, %v5683
    %v6212 = vpack.c.b16 %v5692, %v5684
    %v6213 = vpack.c.b16 %v5693, %v5685
    %v6214 = vpack.c.b16 %v5694, %v5686
    %v6215 = vpack.c.b16 %v5695, %v5687
    %v6216 = vpack.c.b16 %v5704, %v5696
    %v6217 = vpack.c.b16 %v5705, %v5697
    %v6218 = vpack.c.b16 %v5706, %v5698
    %v6219 = vpack.c.b16 %v5707, %v5699
    %v6220 = vpack.c.b16 %v5708, %v5700
    %v6221 = vpack.c.b16 %v5709, %v5701
    %v6222 = vpack.c.b16 %v5710, %v5702
    %v6223 = vpack.c.b16 %v5711, %v5703
    %6736 = vmatprep.subr.bf16.mxu0 %v5713
    %6737 = vmatpush1.bf16.msra.mxu0 %v5712
    %6738 = vmatprep.subr.bf16.mxu0 %v5721
    %6739 = vmatpush1.bf16.msra.mxu0 %v5720
    %6740 = vmatprep.subr.bf16.mxu0 %v5729
    %6741 = vmatpush1.bf16.msra.mxu0 %v5728
    %6742 = vmatprep.subr.bf16.mxu0 %v5737
    %6743 = vmatpush1.bf16.msra.mxu0 %v5736
    %6744 = vmatprep.subr.bf16.mxu0 %v5745
    %6745 = vmatpush1.bf16.msra.mxu0 %v5744
    %6746 = vmatprep.subr.bf16.mxu0 %v5753
    %6747 = vmatpush1.bf16.msra.mxu0 %v5752
    %6748 = vmatprep.subr.bf16.mxu0 %v5761
    %6749 = vmatpush1.bf16.msra.mxu0 %v5760
    %6750 = vmatprep.subr.bf16.mxu0 %v5769
    %6751 = vmatpush1.bf16.msra.mxu0 %v5768
    %6752 = vmatprep.subr.bf16.mxu0 %v5777
    %6753 = vmatpush1.bf16.msra.mxu0 %v5776
    %6754 = vmatprep.subr.bf16.mxu0 %v5785
    %6755 = vmatpush1.bf16.msra.mxu0 %v5784
    %6756 = vmatprep.subr.bf16.mxu0 %v5793
    %6757 = vmatpush1.bf16.msra.mxu0 %v5792
    %6758 = vmatprep.subr.bf16.mxu0 %v5801
    %6759 = vmatpush1.bf16.msra.mxu0 %v5800
    %6760 = vmatprep.subr.bf16.mxu0 %v5809
    %6761 = vmatpush1.bf16.msra.mxu0 %v5808
    %6762 = vmatprep.subr.bf16.mxu0 %v5817
    %6763 = vmatpush1.bf16.msra.mxu0 %v5816
    %6764 = vmatprep.subr.bf16.mxu0 %v5825
    %6765 = vmatpush1.bf16.msra.mxu0 %v5824
    %6766 = vmatprep.subr.bf16.mxu0 %v5833
    %6767 = vmatpush1.bf16.msra.mxu0 %v5832
    %6768 = vmatprep.mubr.bf16.mxu0 %v3615
    %6769 = vmatmul.mubr.bf16.gmra.mrb[0].mxu0 %v3614
    %v6770 = vpop.f32.mrb[0].mxu0
    %v6771 = vadd.f32 %v4139, %v6770
    %v6772 = vpop.f32.mrb[0].mxu0
    %v6773 = vadd.f32 %v4143, %v6772
    %v6774 = vpop.f32.mrb[0].mxu0
    %v6775 = vadd.f32 %v4139, %v6774
    %v6776 = vpop.f32.mrb[0].mxu0
    %v6777 = vadd.f32 %v4143, %v6776
    %6778 = vdwg.mxu0
    %6779 = vmatprep.subr.bf16.mxu0 %v5841
    %6780 = vmatpush1.bf16.msra.mxu0 %v5840
    %6781 = vmatprep.subr.bf16.mxu0 %v5849
    %6782 = vmatpush1.bf16.msra.mxu0 %v5848
    %6783 = vmatprep.subr.bf16.mxu0 %v5857
    %6784 = vmatpush1.bf16.msra.mxu0 %v5856
    %6785 = vmatprep.subr.bf16.mxu0 %v5865
    %6786 = vmatpush1.bf16.msra.mxu0 %v5864
    %6787 = vmatprep.subr.bf16.mxu0 %v5873
    %6788 = vmatpush1.bf16.msra.mxu0 %v5872
    %6789 = vmatprep.subr.bf16.mxu0 %v5881
    %6790 = vmatpush1.bf16.msra.mxu0 %v5880
    %6791 = vmatprep.subr.bf16.mxu0 %v5889
    %6792 = vmatpush1.bf16.msra.mxu0 %v5888
    %6793 = vmatprep.subr.bf16.mxu0 %v5897
    %6794 = vmatpush1.bf16.msra.mxu0 %v5896
    %6795 = vmatprep.subr.bf16.mxu0 %v5905
    %6796 = vmatpush1.bf16.msra.mxu0 %v5904
    %6797 = vmatprep.subr.bf16.mxu0 %v5913
    %6798 = vmatpush1.bf16.msra.mxu0 %v5912
    %6799 = vmatprep.subr.bf16.mxu0 %v5921
    %6800 = vmatpush1.bf16.msra.mxu0 %v5920
    %6801 = vmatprep.subr.bf16.mxu0 %v5929
    %6802 = vmatpush1.bf16.msra.mxu0 %v5928
    %6803 = vmatprep.subr.bf16.mxu0 %v5937
    %6804 = vmatpush1.bf16.msra.mxu0 %v5936
    %6805 = vmatprep.subr.bf16.mxu0 %v5945
    %6806 = vmatpush1.bf16.msra.mxu0 %v5944
    %6807 = vmatprep.subr.bf16.mxu0 %v5953
    %6808 = vmatpush1.bf16.msra.mxu0 %v5952
    %6809 = vmatprep.subr.bf16.mxu0 %v5961
    %6810 = vmatpush1.bf16.msra.mxu0 %v5960
    %6811 = vmatprep.mubr.bf16.mxu0 %v3617
    %6812 = vmatmul.mubr.bf16.gmra.mrb[0].mxu0 %v3616
    %v6813 = vpop.f32.mrb[0].mxu0
    %v6814 = vadd.f32 %v6771, %v6813
    %v6815 = vpop.f32.mrb[0].mxu0
    %v6816 = vadd.f32 %v6773, %v6815
    %v6817 = vpop.f32.mrb[0].mxu0
    %v6818 = vadd.f32 %v6775, %v6817
    %v6819 = vpop.f32.mrb[0].mxu0
    %v6820 = vadd.f32 %v6777, %v6819
    %6821 = vdwg.mxu0
    %6822 = vmatprep.subr.bf16.mxu0 %v5969
    %6823 = vmatpush1.bf16.msra.mxu0 %v5968
    %6824 = vmatprep.subr.bf16.mxu0 %v5977
    %6825 = vmatpush1.bf16.msra.mxu0 %v5976
    %6826 = vmatprep.subr.bf16.mxu0 %v5985
    %6827 = vmatpush1.bf16.msra.mxu0 %v5984
    %6828 = vmatprep.subr.bf16.mxu0 %v5993
    %6829 = vmatpush1.bf16.msra.mxu0 %v5992
    %6830 = vmatprep.subr.bf16.mxu0 %v6001
    %6831 = vmatpush1.bf16.msra.mxu0 %v6000
    %6832 = vmatprep.subr.bf16.mxu0 %v6009
    %6833 = vmatpush1.bf16.msra.mxu0 %v6008
    %6834 = vmatprep.subr.bf16.mxu0 %v6017
    %6835 = vmatpush1.bf16.msra.mxu0 %v6016
    %6836 = vmatprep.subr.bf16.mxu0 %v6025
    %6837 = vmatpush1.bf16.msra.mxu0 %v6024
    %6838 = vmatprep.subr.bf16.mxu0 %v6033
    %6839 = vmatpush1.bf16.msra.mxu0 %v6032
    %6840 = vmatprep.subr.bf16.mxu0 %v6041
    %6841 = vmatpush1.bf16.msra.mxu0 %v6040
    %6842 = vmatprep.subr.bf16.mxu0 %v6049
    %6843 = vmatpush1.bf16.msra.mxu0 %v6048
    %6844 = vmatprep.subr.bf16.mxu0 %v6057
    %6845 = vmatpush1.bf16.msra.mxu0 %v6056
    %6846 = vmatprep.subr.bf16.mxu0 %v6065
    %6847 = vmatpush1.bf16.msra.mxu0 %v6064
    %6848 = vmatprep.subr.bf16.mxu0 %v6073
    %6849 = vmatpush1.bf16.msra.mxu0 %v6072
    %6850 = vmatprep.subr.bf16.mxu0 %v6081
    %6851 = vmatpush1.bf16.msra.mxu0 %v6080
    %6852 = vmatprep.subr.bf16.mxu0 %v6089
    %6853 = vmatpush1.bf16.msra.mxu0 %v6088
    %6854 = vmatprep.mubr.bf16.mxu0 %v3619
    %6855 = vmatmul.mubr.bf16.gmra.mrb[0].mxu0 %v3618
    %v6856 = vpop.f32.mrb[0].mxu0
    %v6857 = vadd.f32 %v6814, %v6856
    %v6858 = vpop.f32.mrb[0].mxu0
    %v6859 = vadd.f32 %v6816, %v6858
    %v6860 = vpop.f32.mrb[0].mxu0
    %v6861 = vadd.f32 %v6818, %v6860
    %v6862 = vpop.f32.mrb[0].mxu0
    %v6863 = vadd.f32 %v6820, %v6862
    %6864 = vdwg.mxu0
    %6865 = vmatprep.subr.bf16.mxu0 %v6097
    %6866 = vmatpush1.bf16.msra.mxu0 %v6096
    %6867 = vmatprep.subr.bf16.mxu0 %v6105
    %6868 = vmatpush1.bf16.msra.mxu0 %v6104
    %6869 = vmatprep.subr.bf16.mxu0 %v6113
    %6870 = vmatpush1.bf16.msra.mxu0 %v6112
    %6871 = vmatprep.subr.bf16.mxu0 %v6121
    %6872 = vmatpush1.bf16.msra.mxu0 %v6120
    %6873 = vmatprep.subr.bf16.mxu0 %v6129
    %6874 = vmatpush1.bf16.msra.mxu0 %v6128
    %6875 = vmatprep.subr.bf16.mxu0 %v6137
    %6876 = vmatpush1.bf16.msra.mxu0 %v6136
    %6877 = vmatprep.subr.bf16.mxu0 %v6145
    %6878 = vmatpush1.bf16.msra.mxu0 %v6144
    %6879 = vmatprep.subr.bf16.mxu0 %v6153
    %6880 = vmatpush1.bf16.msra.mxu0 %v6152
    %6881 = vmatprep.subr.bf16.mxu0 %v6161
    %6882 = vmatpush1.bf16.msra.mxu0 %v6160
    %6883 = vmatprep.subr.bf16.mxu0 %v6169
    %6884 = vmatpush1.bf16.msra.mxu0 %v6168
    %6885 = vmatprep.subr.bf16.mxu0 %v6177
    %6886 = vmatpush1.bf16.msra.mxu0 %v6176
    %6887 = vmatprep.subr.bf16.mxu0 %v6185
    %6888 = vmatpush1.bf16.msra.mxu0 %v6184
    %6889 = vmatprep.subr.bf16.mxu0 %v6193
    %6890 = vmatpush1.bf16.msra.mxu0 %v6192
    %6891 = vmatprep.subr.bf16.mxu0 %v6201
    %6892 = vmatpush1.bf16.msra.mxu0 %v6200
    %6893 = vmatprep.subr.bf16.mxu0 %v6209
    %6894 = vmatpush1.bf16.msra.mxu0 %v6208
    %6895 = vmatprep.subr.bf16.mxu0 %v6217
    %6896 = vmatpush1.bf16.msra.mxu0 %v6216
    %6897 = vmatprep.mubr.bf16.mxu0 %v3621
    %6898 = vmatmul.mubr.bf16.gmra.mrb[0].mxu0 %v3620
    %v6899 = vpop.f32.mrb[0].mxu0
    %v6900 = vadd.f32 %v6857, %v6899
    %v6901 = vpop.f32.mrb[0].mxu0
    %v6902 = vadd.f32 %v6859, %v6901
    %v6903 = vpop.f32.mrb[0].mxu0
    %v6904 = vadd.f32 %v6861, %v6903
    %v6905 = vpop.f32.mrb[0].mxu0
    %v6906 = vadd.f32 %v6863, %v6905
    %6907 = vdwg.mxu0
    %6908 = vmatprep.subr.bf16.mxu0 %v5715
    %6909 = vmatpush1.bf16.msra.mxu0 %v5714
    %6910 = vmatprep.subr.bf16.mxu0 %v5723
    %6911 = vmatpush1.bf16.msra.mxu0 %v5722
    %6912 = vmatprep.subr.bf16.mxu0 %v5731
    %6913 = vmatpush1.bf16.msra.mxu0 %v5730
    %6914 = vmatprep.subr.bf16.mxu0 %v5739
    %6915 = vmatpush1.bf16.msra.mxu0 %v5738
    %6916 = vmatprep.subr.bf16.mxu0 %v5747
    %6917 = vmatpush1.bf16.msra.mxu0 %v5746
    %6918 = vmatprep.subr.bf16.mxu0 %v5755
    %6919 = vmatpush1.bf16.msra.mxu0 %v5754
    %6920 = vmatprep.subr.bf16.mxu0 %v5763
    %6921 = vmatpush1.bf16.msra.mxu0 %v5762
    %6922 = vmatprep.subr.bf16.mxu0 %v5771
    %6923 = vmatpush1.bf16.msra.mxu0 %v5770
    %6924 = vmatprep.subr.bf16.mxu0 %v5779
    %6925 = vmatpush1.bf16.msra.mxu0 %v5778
    %6926 = vmatprep.subr.bf16.mxu0 %v5787
    %6927 = vmatpush1.bf16.msra.mxu0 %v5786
    %6928 = vmatprep.subr.bf16.mxu0 %v5795
    %6929 = vmatpush1.bf16.msra.mxu0 %v5794
    %6930 = vmatprep.subr.bf16.mxu0 %v5803
    %6931 = vmatpush1.bf16.msra.mxu0 %v5802
    %6932 = vmatprep.subr.bf16.mxu0 %v5811
    %6933 = vmatpush1.bf16.msra.mxu0 %v5810
    %6934 = vmatprep.subr.bf16.mxu0 %v5819
    %6935 = vmatpush1.bf16.msra.mxu0 %v5818
    %6936 = vmatprep.subr.bf16.mxu0 %v5827
    %6937 = vmatpush1.bf16.msra.mxu0 %v5826
    %6938 = vmatprep.subr.bf16.mxu0 %v5835
    %6939 = vmatpush1.bf16.msra.mxu0 %v5834
    %6940 = vmatprep.mubr.bf16.mxu0 %v3615
    %6941 = vmatmul.mubr.bf16.gmra.mrb[0].mxu0 %v3614
    %v6942 = vpop.f32.mrb[0].mxu0
    %v6943 = vadd.f32 %v4147, %v6942
    %v6944 = vpop.f32.mrb[0].mxu0
    %v6945 = vadd.f32 %v4151, %v6944
    %v6946 = vpop.f32.mrb[0].mxu0
    %v6947 = vadd.f32 %v4147, %v6946
    %v6948 = vpop.f32.mrb[0].mxu0
    %v6949 = vadd.f32 %v4151, %v6948
    %6950 = vdwg.mxu0
    %6951 = vmatprep.subr.bf16.mxu0 %v5843
    %6952 = vmatpush1.bf16.msra.mxu0 %v5842
    %6953 = vmatprep.subr.bf16.mxu0 %v5851
    %6954 = vmatpush1.bf16.msra.mxu0 %v5850
    %6955 = vmatprep.subr.bf16.mxu0 %v5859
    %6956 = vmatpush1.bf16.msra.mxu0 %v5858
    %6957 = vmatprep.subr.bf16.mxu0 %v5867
    %6958 = vmatpush1.bf16.msra.mxu0 %v5866
    %6959 = vmatprep.subr.bf16.mxu0 %v5875
    %6960 = vmatpush1.bf16.msra.mxu0 %v5874
    %6961 = vmatprep.subr.bf16.mxu0 %v5883
    %6962 = vmatpush1.bf16.msra.mxu0 %v5882
    %6963 = vmatprep.subr.bf16.mxu0 %v5891
    %6964 = vmatpush1.bf16.msra.mxu0 %v5890
    %6965 = vmatprep.subr.bf16.mxu0 %v5899
    %6966 = vmatpush1.bf16.msra.mxu0 %v5898
    %6967 = vmatprep.subr.bf16.mxu0 %v5907
    %6968 = vmatpush1.bf16.msra.mxu0 %v5906
    %6969 = vmatprep.subr.bf16.mxu0 %v5915
    %6970 = vmatpush1.bf16.msra.mxu0 %v5914
    %6971 = vmatprep.subr.bf16.mxu0 %v5923
    %6972 = vmatpush1.bf16.msra.mxu0 %v5922
    %6973 = vmatprep.subr.bf16.mxu0 %v5931
    %6974 = vmatpush1.bf16.msra.mxu0 %v5930
    %6975 = vmatprep.subr.bf16.mxu0 %v5939
    %6976 = vmatpush1.bf16.msra.mxu0 %v5938
    %6977 = vmatprep.subr.bf16.mxu0 %v5947
    %6978 = vmatpush1.bf16.msra.mxu0 %v5946
    %6979 = vmatprep.subr.bf16.mxu0 %v5955
    %6980 = vmatpush1.bf16.msra.mxu0 %v5954
    %6981 = vmatprep.subr.bf16.mxu0 %v5963
    %6982 = vmatpush1.bf16.msra.mxu0 %v5962
    %6983 = vmatprep.mubr.bf16.mxu0 %v3617
    %6984 = vmatmul.mubr.bf16.gmra.mrb[0].mxu0 %v3616
    %v6985 = vpop.f32.mrb[0].mxu0
    %v6986 = vadd.f32 %v6943, %v6985
    %v6987 = vpop.f32.mrb[0].mxu0
    %v6988 = vadd.f32 %v6945, %v6987
    %v6989 = vpop.f32.mrb[0].mxu0
    %v6990 = vadd.f32 %v6947, %v6989
    %v6991 = vpop.f32.mrb[0].mxu0
    %v6992 = vadd.f32 %v6949, %v6991
    %6993 = vdwg.mxu0
    %6994 = vmatprep.subr.bf16.mxu0 %v5971
    %6995 = vmatpush1.bf16.msra.mxu0 %v5970
    %6996 = vmatprep.subr.bf16.mxu0 %v5979
    %6997 = vmatpush1.bf16.msra.mxu0 %v5978
    %6998 = vmatprep.subr.bf16.mxu0 %v5987
    %6999 = vmatpush1.bf16.msra.mxu0 %v5986
    %7000 = vmatprep.subr.bf16.mxu0 %v5995
    %7001 = vmatpush1.bf16.msra.mxu0 %v5994
    %7002 = vmatprep.subr.bf16.mxu0 %v6003
    %7003 = vmatpush1.bf16.msra.mxu0 %v6002
    %7004 = vmatprep.subr.bf16.mxu0 %v6011
    %7005 = vmatpush1.bf16.msra.mxu0 %v6010
    %7006 = vmatprep.subr.bf16.mxu0 %v6019
    %7007 = vmatpush1.bf16.msra.mxu0 %v6018
    %7008 = vmatprep.subr.bf16.mxu0 %v6027
    %7009 = vmatpush1.bf16.msra.mxu0 %v6026
    %7010 = vmatprep.subr.bf16.mxu0 %v6035
    %7011 = vmatpush1.bf16.msra.mxu0 %v6034
    %7012 = vmatprep.subr.bf16.mxu0 %v6043
    %7013 = vmatpush1.bf16.msra.mxu0 %v6042
    %7014 = vmatprep.subr.bf16.mxu0 %v6051
    %7015 = vmatpush1.bf16.msra.mxu0 %v6050
    %7016 = vmatprep.subr.bf16.mxu0 %v6059
    %7017 = vmatpush1.bf16.msra.mxu0 %v6058
    %7018 = vmatprep.subr.bf16.mxu0 %v6067
    %7019 = vmatpush1.bf16.msra.mxu0 %v6066
    %7020 = vmatprep.subr.bf16.mxu0 %v6075
    %7021 = vmatpush1.bf16.msra.mxu0 %v6074
    %7022 = vmatprep.subr.bf16.mxu0 %v6083
    %7023 = vmatpush1.bf16.msra.mxu0 %v6082
    %7024 = vmatprep.subr.bf16.mxu0 %v6091
    %7025 = vmatpush1.bf16.msra.mxu0 %v6090
    %7026 = vmatprep.mubr.bf16.mxu0 %v3619
    %7027 = vmatmul.mubr.bf16.gmra.mrb[0].mxu0 %v3618
    %v7028 = vpop.f32.mrb[0].mxu0
    %v7029 = vadd.f32 %v6986, %v7028
    %v7030 = vpop.f32.mrb[0].mxu0
    %v7031 = vadd.f32 %v6988, %v7030
    %v7032 = vpop.f32.mrb[0].mxu0
    %v7033 = vadd.f32 %v6990, %v7032
    %v7034 = vpop.f32.mrb[0].mxu0
    %v7035 = vadd.f32 %v6992, %v7034
    %7036 = vdwg.mxu0
    %7037 = vmatprep.subr.bf16.mxu0 %v6099
    %7038 = vmatpush1.bf16.msra.mxu0 %v6098
    %7039 = vmatprep.subr.bf16.mxu0 %v6107
    %7040 = vmatpush1.bf16.msra.mxu0 %v6106
    %7041 = vmatprep.subr.bf16.mxu0 %v6115
    %7042 = vmatpush1.bf16.msra.mxu0 %v6114
    %7043 = vmatprep.subr.bf16.mxu0 %v6123
    %7044 = vmatpush1.bf16.msra.mxu0 %v6122
    %7045 = vmatprep.subr.bf16.mxu0 %v6131
    %7046 = vmatpush1.bf16.msra.mxu0 %v6130
    %7047 = vmatprep.subr.bf16.mxu0 %v6139
    %7048 = vmatpush1.bf16.msra.mxu0 %v6138
    %7049 = vmatprep.subr.bf16.mxu0 %v6147
    %7050 = vmatpush1.bf16.msra.mxu0 %v6146
    %7051 = vmatprep.subr.bf16.mxu0 %v6155
    %7052 = vmatpush1.bf16.msra.mxu0 %v6154
    %7053 = vmatprep.subr.bf16.mxu0 %v6163
    %7054 = vmatpush1.bf16.msra.mxu0 %v6162
    %7055 = vmatprep.subr.bf16.mxu0 %v6171
    %7056 = vmatpush1.bf16.msra.mxu0 %v6170
    %7057 = vmatprep.subr.bf16.mxu0 %v6179
    %7058 = vmatpush1.bf16.msra.mxu0 %v6178
    %7059 = vmatprep.subr.bf16.mxu0 %v6187
    %7060 = vmatpush1.bf16.msra.mxu0 %v6186
    %7061 = vmatprep.subr.bf16.mxu0 %v6195
    %7062 = vmatpush1.bf16.msra.mxu0 %v6194
    %7063 = vmatprep.subr.bf16.mxu0 %v6203
    %7064 = vmatpush1.bf16.msra.mxu0 %v6202
    %7065 = vmatprep.subr.bf16.mxu0 %v6211
    %7066 = vmatpush1.bf16.msra.mxu0 %v6210
    %7067 = vmatprep.subr.bf16.mxu0 %v6219
    %7068 = vmatpush1.bf16.msra.mxu0 %v6218
    %7069 = vmatprep.mubr.bf16.mxu0 %v3621
    %7070 = vmatmul.mubr.bf16.gmra.mrb[0].mxu0 %v3620
    %v7071 = vpop.f32.mrb[0].mxu0
    %v7072 = vadd.f32 %v7029, %v7071
    %v7073 = vpop.f32.mrb[0].mxu0
    %v7074 = vadd.f32 %v7031, %v7073
    %v7075 = vpop.f32.mrb[0].mxu0
    %v7076 = vadd.f32 %v7033, %v7075
    %v7077 = vpop.f32.mrb[0].mxu0
    %v7078 = vadd.f32 %v7035, %v7077
    %7079 = vdwg.mxu0
    %7080 = vmatprep.subr.bf16.mxu0 %v5717
    %7081 = vmatpush1.bf16.msra.mxu0 %v5716
    %7082 = vmatprep.subr.bf16.mxu0 %v5725
    %7083 = vmatpush1.bf16.msra.mxu0 %v5724
    %7084 = vmatprep.subr.bf16.mxu0 %v5733
    %7085 = vmatpush1.bf16.msra.mxu0 %v5732
    %7086 = vmatprep.subr.bf16.mxu0 %v5741
    %7087 = vmatpush1.bf16.msra.mxu0 %v5740
    %7088 = vmatprep.subr.bf16.mxu0 %v5749
    %7089 = vmatpush1.bf16.msra.mxu0 %v5748
    %7090 = vmatprep.subr.bf16.mxu0 %v5757
    %7091 = vmatpush1.bf16.msra.mxu0 %v5756
    %7092 = vmatprep.subr.bf16.mxu0 %v5765
    %7093 = vmatpush1.bf16.msra.mxu0 %v5764
    %7094 = vmatprep.subr.bf16.mxu0 %v5773
    %7095 = vmatpush1.bf16.msra.mxu0 %v5772
    %7096 = vmatprep.subr.bf16.mxu0 %v5781
    %7097 = vmatpush1.bf16.msra.mxu0 %v5780
    %7098 = vmatprep.subr.bf16.mxu0 %v5789
    %7099 = vmatpush1.bf16.msra.mxu0 %v5788
    %7100 = vmatprep.subr.bf16.mxu0 %v5797
    %7101 = vmatpush1.bf16.msra.mxu0 %v5796
    %7102 = vmatprep.subr.bf16.mxu0 %v5805
    %7103 = vmatpush1.bf16.msra.mxu0 %v5804
    %7104 = vmatprep.subr.bf16.mxu0 %v5813
    %7105 = vmatpush1.bf16.msra.mxu0 %v5812
    %7106 = vmatprep.subr.bf16.mxu0 %v5821
    %7107 = vmatpush1.bf16.msra.mxu0 %v5820
    %7108 = vmatprep.subr.bf16.mxu0 %v5829
    %7109 = vmatpush1.bf16.msra.mxu0 %v5828
    %7110 = vmatprep.subr.bf16.mxu0 %v5837
    %7111 = vmatpush1.bf16.msra.mxu0 %v5836
    %7112 = vmatprep.mubr.bf16.mxu0 %v3615
    %7113 = vmatmul.mubr.bf16.gmra.mrb[0].mxu0 %v3614
    %v7114 = vpop.f32.mrb[0].mxu0
    %v7115 = vadd.f32 %v4155, %v7114
    %v7116 = vpop.f32.mrb[0].mxu0
    %v7117 = vadd.f32 %v4159, %v7116
    %v7118 = vpop.f32.mrb[0].mxu0
    %v7119 = vadd.f32 %v4155, %v7118
    %v7120 = vpop.f32.mrb[0].mxu0
    %v7121 = vadd.f32 %v4159, %v7120
    %7122 = vdwg.mxu0
    %7123 = vmatprep.subr.bf16.mxu0 %v5845
    %7124 = vmatpush1.bf16.msra.mxu0 %v5844
    %7125 = vmatprep.subr.bf16.mxu0 %v5853
    %7126 = vmatpush1.bf16.msra.mxu0 %v5852
    %7127 = vmatprep.subr.bf16.mxu0 %v5861
    %7128 = vmatpush1.bf16.msra.mxu0 %v5860
    %7129 = vmatprep.subr.bf16.mxu0 %v5869
    %7130 = vmatpush1.bf16.msra.mxu0 %v5868
    %7131 = vmatprep.subr.bf16.mxu0 %v5877
    %7132 = vmatpush1.bf16.msra.mxu0 %v5876
    %7133 = vmatprep.subr.bf16.mxu0 %v5885
    %7134 = vmatpush1.bf16.msra.mxu0 %v5884
    %7135 = vmatprep.subr.bf16.mxu0 %v5893
    %7136 = vmatpush1.bf16.msra.mxu0 %v5892
    %7137 = vmatprep.subr.bf16.mxu0 %v5901
    %7138 = vmatpush1.bf16.msra.mxu0 %v5900
    %7139 = vmatprep.subr.bf16.mxu0 %v5909
    %7140 = vmatpush1.bf16.msra.mxu0 %v5908
    %7141 = vmatprep.subr.bf16.mxu0 %v5917
    %7142 = vmatpush1.bf16.msra.mxu0 %v5916
    %7143 = vmatprep.subr.bf16.mxu0 %v5925
    %7144 = vmatpush1.bf16.msra.mxu0 %v5924
    %7145 = vmatprep.subr.bf16.mxu0 %v5933
    %7146 = vmatpush1.bf16.msra.mxu0 %v5932
    %7147 = vmatprep.subr.bf16.mxu0 %v5941
    %7148 = vmatpush1.bf16.msra.mxu0 %v5940
    %7149 = vmatprep.subr.bf16.mxu0 %v5949
    %7150 = vmatpush1.bf16.msra.mxu0 %v5948
    %7151 = vmatprep.subr.bf16.mxu0 %v5957
    %7152 = vmatpush1.bf16.msra.mxu0 %v5956
    %7153 = vmatprep.subr.bf16.mxu0 %v5965
    %7154 = vmatpush1.bf16.msra.mxu0 %v5964
    %7155 = vmatprep.mubr.bf16.mxu0 %v3617
    %7156 = vmatmul.mubr.bf16.gmra.mrb[0].mxu0 %v3616
    %v7157 = vpop.f32.mrb[0].mxu0
    %v7158 = vadd.f32 %v7115, %v7157
    %v7159 = vpop.f32.mrb[0].mxu0
    %v7160 = vadd.f32 %v7117, %v7159
    %v7161 = vpop.f32.mrb[0].mxu0
    %v7162 = vadd.f32 %v7119, %v7161
    %v7163 = vpop.f32.mrb[0].mxu0
    %v7164 = vadd.f32 %v7121, %v7163
    %7165 = vdwg.mxu0
    %7166 = vmatprep.subr.bf16.mxu0 %v5973
    %7167 = vmatpush1.bf16.msra.mxu0 %v5972
    %7168 = vmatprep.subr.bf16.mxu0 %v5981
    %7169 = vmatpush1.bf16.msra.mxu0 %v5980
    %7170 = vmatprep.subr.bf16.mxu0 %v5989
    %7171 = vmatpush1.bf16.msra.mxu0 %v5988
    %7172 = vmatprep.subr.bf16.mxu0 %v5997
    %7173 = vmatpush1.bf16.msra.mxu0 %v5996
    %7174 = vmatprep.subr.bf16.mxu0 %v6005
    %7175 = vmatpush1.bf16.msra.mxu0 %v6004
    %7176 = vmatprep.subr.bf16.mxu0 %v6013
    %7177 = vmatpush1.bf16.msra.mxu0 %v6012
    %7178 = vmatprep.subr.bf16.mxu0 %v6021
    %7179 = vmatpush1.bf16.msra.mxu0 %v6020
    %7180 = vmatprep.subr.bf16.mxu0 %v6029
    %7181 = vmatpush1.bf16.msra.mxu0 %v6028
    %7182 = vmatprep.subr.bf16.mxu0 %v6037
    %7183 = vmatpush1.bf16.msra.mxu0 %v6036
    %7184 = vmatprep.subr.bf16.mxu0 %v6045
    %7185 = vmatpush1.bf16.msra.mxu0 %v6044
    %7186 = vmatprep.subr.bf16.mxu0 %v6053
    %7187 = vmatpush1.bf16.msra.mxu0 %v6052
    %7188 = vmatprep.subr.bf16.mxu0 %v6061
    %7189 = vmatpush1.bf16.msra.mxu0 %v6060
    %7190 = vmatprep.subr.bf16.mxu0 %v6069
    %7191 = vmatpush1.bf16.msra.mxu0 %v6068
    %7192 = vmatprep.subr.bf16.mxu0 %v6077
    %7193 = vmatpush1.bf16.msra.mxu0 %v6076
    %7194 = vmatprep.subr.bf16.mxu0 %v6085
    %7195 = vmatpush1.bf16.msra.mxu0 %v6084
    %7196 = vmatprep.subr.bf16.mxu0 %v6093
    %7197 = vmatpush1.bf16.msra.mxu0 %v6092
    %7198 = vmatprep.mubr.bf16.mxu0 %v3619
    %7199 = vmatmul.mubr.bf16.gmra.mrb[0].mxu0 %v3618
    %v7200 = vpop.f32.mrb[0].mxu0
    %v7201 = vadd.f32 %v7158, %v7200
    %v7202 = vpop.f32.mrb[0].mxu0
    %v7203 = vadd.f32 %v7160, %v7202
    %v7204 = vpop.f32.mrb[0].mxu0
    %v7205 = vadd.f32 %v7162, %v7204
    %v7206 = vpop.f32.mrb[0].mxu0
    %v7207 = vadd.f32 %v7164, %v7206
    %7208 = vdwg.mxu0
    %7209 = vmatprep.subr.bf16.mxu0 %v6101
    %7210 = vmatpush1.bf16.msra.mxu0 %v6100
    %7211 = vmatprep.subr.bf16.mxu0 %v6109
    %7212 = vmatpush1.bf16.msra.mxu0 %v6108
    %7213 = vmatprep.subr.bf16.mxu0 %v6117
    %7214 = vmatpush1.bf16.msra.mxu0 %v6116
    %7215 = vmatprep.subr.bf16.mxu0 %v6125
    %7216 = vmatpush1.bf16.msra.mxu0 %v6124
    %7217 = vmatprep.subr.bf16.mxu0 %v6133
    %7218 = vmatpush1.bf16.msra.mxu0 %v6132
    %7219 = vmatprep.subr.bf16.mxu0 %v6141
    %7220 = vmatpush1.bf16.msra.mxu0 %v6140
    %7221 = vmatprep.subr.bf16.mxu0 %v6149
    %7222 = vmatpush1.bf16.msra.mxu0 %v6148
    %7223 = vmatprep.subr.bf16.mxu0 %v6157
    %7224 = vmatpush1.bf16.msra.mxu0 %v6156
    %7225 = vmatprep.subr.bf16.mxu0 %v6165
    %7226 = vmatpush1.bf16.msra.mxu0 %v6164
    %7227 = vmatprep.subr.bf16.mxu0 %v6173
    %7228 = vmatpush1.bf16.msra.mxu0 %v6172
    %7229 = vmatprep.subr.bf16.mxu0 %v6181
    %7230 = vmatpush1.bf16.msra.mxu0 %v6180
    %7231 = vmatprep.subr.bf16.mxu0 %v6189
    %7232 = vmatpush1.bf16.msra.mxu0 %v6188
    %7233 = vmatprep.subr.bf16.mxu0 %v6197
    %7234 = vmatpush1.bf16.msra.mxu0 %v6196
    %7235 = vmatprep.subr.bf16.mxu0 %v6205
    %7236 = vmatpush1.bf16.msra.mxu0 %v6204
    %7237 = vmatprep.subr.bf16.mxu0 %v6213
    %7238 = vmatpush1.bf16.msra.mxu0 %v6212
    %7239 = vmatprep.subr.bf16.mxu0 %v6221
    %7240 = vmatpush1.bf16.msra.mxu0 %v6220
    %7241 = vmatprep.mubr.bf16.mxu0 %v3621
    %7242 = vmatmul.mubr.bf16.gmra.mrb[0].mxu0 %v3620
    %v7243 = vpop.f32.mrb[0].mxu0
    %v7244 = vadd.f32 %v7201, %v7243
    %v7245 = vpop.f32.mrb[0].mxu0
    %v7246 = vadd.f32 %v7203, %v7245
    %v7247 = vpop.f32.mrb[0].mxu0
    %v7248 = vadd.f32 %v7205, %v7247
    %v7249 = vpop.f32.mrb[0].mxu0
    %v7250 = vadd.f32 %v7207, %v7249
    %7251 = vdwg.mxu0
    %7252 = vmatprep.subr.bf16.mxu0 %v5719
    %7253 = vmatpush1.bf16.msra.mxu0 %v5718
    %7254 = vmatprep.subr.bf16.mxu0 %v5727
    %7255 = vmatpush1.bf16.msra.mxu0 %v5726
    %7256 = vmatprep.subr.bf16.mxu0 %v5735
    %7257 = vmatpush1.bf16.msra.mxu0 %v5734
    %7258 = vmatprep.subr.bf16.mxu0 %v5743
    %7259 = vmatpush1.bf16.msra.mxu0 %v5742
    %7260 = vmatprep.subr.bf16.mxu0 %v5751
    %7261 = vmatpush1.bf16.msra.mxu0 %v5750
    %7262 = vmatprep.subr.bf16.mxu0 %v5759
    %7263 = vmatpush1.bf16.msra.mxu0 %v5758
    %7264 = vmatprep.subr.bf16.mxu0 %v5767
    %7265 = vmatpush1.bf16.msra.mxu0 %v5766
    %7266 = vmatprep.subr.bf16.mxu0 %v5775
    %7267 = vmatpush1.bf16.msra.mxu0 %v5774
    %7268 = vmatprep.subr.bf16.mxu0 %v5783
    %7269 = vmatpush1.bf16.msra.mxu0 %v5782
    %7270 = vmatprep.subr.bf16.mxu0 %v5791
    %7271 = vmatpush1.bf16.msra.mxu0 %v5790
    %7272 = vmatprep.subr.bf16.mxu0 %v5799
    %7273 = vmatpush1.bf16.msra.mxu0 %v5798
    %7274 = vmatprep.subr.bf16.mxu0 %v5807
    %7275 = vmatpush1.bf16.msra.mxu0 %v5806
    %7276 = vmatprep.subr.bf16.mxu0 %v5815
    %7277 = vmatpush1.bf16.msra.mxu0 %v5814
    %7278 = vmatprep.subr.bf16.mxu0 %v5823
    %7279 = vmatpush1.bf16.msra.mxu0 %v5822
    %7280 = vmatprep.subr.bf16.mxu0 %v5831
    %7281 = vmatpush1.bf16.msra.mxu0 %v5830
    %7282 = vmatprep.subr.bf16.mxu0 %v5839
    %7283 = vmatpush1.bf16.msra.mxu0 %v5838
    %7284 = vmatprep.mubr.bf16.mxu0 %v3615
    %7285 = vmatmul.mubr.bf16.gmra.mrb[0].mxu0 %v3614
    %v7286 = vpop.f32.mrb[0].mxu0
    %v7287 = vadd.f32 %v4163, %v7286
    %v7288 = vpop.f32.mrb[0].mxu0
    %v7289 = vadd.f32 %v4167, %v7288
    %v7290 = vpop.f32.mrb[0].mxu0
    %v7291 = vadd.f32 %v4163, %v7290
    %v7292 = vpop.f32.mrb[0].mxu0
    %v7293 = vadd.f32 %v4167, %v7292
    %7294 = vdwg.mxu0
    %7295 = vmatprep.subr.bf16.mxu0 %v5847
    %7296 = vmatpush1.bf16.msra.mxu0 %v5846
    %7297 = vmatprep.subr.bf16.mxu0 %v5855
    %7298 = vmatpush1.bf16.msra.mxu0 %v5854
    %7299 = vmatprep.subr.bf16.mxu0 %v5863
    %7300 = vmatpush1.bf16.msra.mxu0 %v5862
    %7301 = vmatprep.subr.bf16.mxu0 %v5871
    %7302 = vmatpush1.bf16.msra.mxu0 %v5870
    %7303 = vmatprep.subr.bf16.mxu0 %v5879
    %7304 = vmatpush1.bf16.msra.mxu0 %v5878
    %7305 = vmatprep.subr.bf16.mxu0 %v5887
    %7306 = vmatpush1.bf16.msra.mxu0 %v5886
    %7307 = vmatprep.subr.bf16.mxu0 %v5895
    %7308 = vmatpush1.bf16.msra.mxu0 %v5894
    %7309 = vmatprep.subr.bf16.mxu0 %v5903
    %7310 = vmatpush1.bf16.msra.mxu0 %v5902
    %7311 = vmatprep.subr.bf16.mxu0 %v5911
    %7312 = vmatpush1.bf16.msra.mxu0 %v5910
    %7313 = vmatprep.subr.bf16.mxu0 %v5919
    %7314 = vmatpush1.bf16.msra.mxu0 %v5918
    %7315 = vmatprep.subr.bf16.mxu0 %v5927
    %7316 = vmatpush1.bf16.msra.mxu0 %v5926
    %7317 = vmatprep.subr.bf16.mxu0 %v5935
    %7318 = vmatpush1.bf16.msra.mxu0 %v5934
    %7319 = vmatprep.subr.bf16.mxu0 %v5943
    %7320 = vmatpush1.bf16.msra.mxu0 %v5942
    %7321 = vmatprep.subr.bf16.mxu0 %v5951
    %7322 = vmatpush1.bf16.msra.mxu0 %v5950
    %7323 = vmatprep.subr.bf16.mxu0 %v5959
    %7324 = vmatpush1.bf16.msra.mxu0 %v5958
    %7325 = vmatprep.subr.bf16.mxu0 %v5967
    %7326 = vmatpush1.bf16.msra.mxu0 %v5966
    %7327 = vmatprep.mubr.bf16.mxu0 %v3617
    %7328 = vmatmul.mubr.bf16.gmra.mrb[0].mxu0 %v3616
    %v7329 = vpop.f32.mrb[0].mxu0
    %v7330 = vadd.f32 %v7287, %v7329
    %v7331 = vpop.f32.mrb[0].mxu0
    %v7332 = vadd.f32 %v7289, %v7331
    %v7333 = vpop.f32.mrb[0].mxu0
    %v7334 = vadd.f32 %v7291, %v7333
    %v7335 = vpop.f32.mrb[0].mxu0
    %v7336 = vadd.f32 %v7293, %v7335
    %7337 = vdwg.mxu0
    %7338 = vmatprep.subr.bf16.mxu0 %v5975
    %7339 = vmatpush1.bf16.msra.mxu0 %v5974
    %7340 = vmatprep.subr.bf16.mxu0 %v5983
    %7341 = vmatpush1.bf16.msra.mxu0 %v5982
    %7342 = vmatprep.subr.bf16.mxu0 %v5991
    %7343 = vmatpush1.bf16.msra.mxu0 %v5990
    %7344 = vmatprep.subr.bf16.mxu0 %v5999
    %7345 = vmatpush1.bf16.msra.mxu0 %v5998
    %7346 = vmatprep.subr.bf16.mxu0 %v6007
    %7347 = vmatpush1.bf16.msra.mxu0 %v6006
    %7348 = vmatprep.subr.bf16.mxu0 %v6015
    %7349 = vmatpush1.bf16.msra.mxu0 %v6014
    %7350 = vmatprep.subr.bf16.mxu0 %v6023
    %7351 = vmatpush1.bf16.msra.mxu0 %v6022
    %7352 = vmatprep.subr.bf16.mxu0 %v6031
    %7353 = vmatpush1.bf16.msra.mxu0 %v6030
    %7354 = vmatprep.subr.bf16.mxu0 %v6039
    %7355 = vmatpush1.bf16.msra.mxu0 %v6038
    %7356 = vmatprep.subr.bf16.mxu0 %v6047
    %7357 = vmatpush1.bf16.msra.mxu0 %v6046
    %7358 = vmatprep.subr.bf16.mxu0 %v6055
    %7359 = vmatpush1.bf16.msra.mxu0 %v6054
    %7360 = vmatprep.subr.bf16.mxu0 %v6063
    %7361 = vmatpush1.bf16.msra.mxu0 %v6062
    %7362 = vmatprep.subr.bf16.mxu0 %v6071
    %7363 = vmatpush1.bf16.msra.mxu0 %v6070
    %7364 = vmatprep.subr.bf16.mxu0 %v6079
    %7365 = vmatpush1.bf16.msra.mxu0 %v6078
    %7366 = vmatprep.subr.bf16.mxu0 %v6087
    %7367 = vmatpush1.bf16.msra.mxu0 %v6086
    %7368 = vmatprep.subr.bf16.mxu0 %v6095
    %7369 = vmatpush1.bf16.msra.mxu0 %v6094
    %7370 = vmatprep.mubr.bf16.mxu0 %v3619
    %7371 = vmatmul.mubr.bf16.gmra.mrb[0].mxu0 %v3618
    %v7372 = vpop.f32.mrb[0].mxu0
    %v7373 = vadd.f32 %v7330, %v7372
    %v7374 = vpop.f32.mrb[0].mxu0
    %v7375 = vadd.f32 %v7332, %v7374
    %v7376 = vpop.f32.mrb[0].mxu0
    %v7377 = vadd.f32 %v7334, %v7376
    %v7378 = vpop.f32.mrb[0].mxu0
    %v7379 = vadd.f32 %v7336, %v7378
    %7380 = vdwg.mxu0
    %7381 = vmatprep.subr.bf16.mxu0 %v6103
    %7382 = vmatpush1.bf16.msra.mxu0 %v6102
    %7383 = vmatprep.subr.bf16.mxu0 %v6111
    %7384 = vmatpush1.bf16.msra.mxu0 %v6110
    %7385 = vmatprep.subr.bf16.mxu0 %v6119
    %7386 = vmatpush1.bf16.msra.mxu0 %v6118
    %7387 = vmatprep.subr.bf16.mxu0 %v6127
    %7388 = vmatpush1.bf16.msra.mxu0 %v6126
    %7389 = vmatprep.subr.bf16.mxu0 %v6135
    %7390 = vmatpush1.bf16.msra.mxu0 %v6134
    %7391 = vmatprep.subr.bf16.mxu0 %v6143
    %7392 = vmatpush1.bf16.msra.mxu0 %v6142
    %7393 = vmatprep.subr.bf16.mxu0 %v6151
    %7394 = vmatpush1.bf16.msra.mxu0 %v6150
    %7395 = vmatprep.subr.bf16.mxu0 %v6159
    %7396 = vmatpush1.bf16.msra.mxu0 %v6158
    %7397 = vmatprep.subr.bf16.mxu0 %v6167
    %7398 = vmatpush1.bf16.msra.mxu0 %v6166
    %7399 = vmatprep.subr.bf16.mxu0 %v6175
    %7400 = vmatpush1.bf16.msra.mxu0 %v6174
    %7401 = vmatprep.subr.bf16.mxu0 %v6183
    %7402 = vmatpush1.bf16.msra.mxu0 %v6182
    %7403 = vmatprep.subr.bf16.mxu0 %v6191
    %7404 = vmatpush1.bf16.msra.mxu0 %v6190
    %7405 = vmatprep.subr.bf16.mxu0 %v6199
    %7406 = vmatpush1.bf16.msra.mxu0 %v6198
    %7407 = vmatprep.subr.bf16.mxu0 %v6207
    %7408 = vmatpush1.bf16.msra.mxu0 %v6206
    %7409 = vmatprep.subr.bf16.mxu0 %v6215
    %7410 = vmatpush1.bf16.msra.mxu0 %v6214
    %7411 = vmatprep.subr.bf16.mxu0 %v6223
    %7412 = vmatpush1.bf16.msra.mxu0 %v6222
    %7413 = vmatprep.mubr.bf16.mxu0 %v3621
    %7414 = vmatmul.mubr.bf16.gmra.mrb[0].mxu0 %v3620
    %v7415 = vpop.f32.mrb[0].mxu0
    %v7416 = vadd.f32 %v7373, %v7415
    %v7417 = vpop.f32.mrb[0].mxu0
    %v7418 = vadd.f32 %v7375, %v7417
    %v7419 = vpop.f32.mrb[0].mxu0
    %v7420 = vadd.f32 %v7377, %v7419
    %v7421 = vpop.f32.mrb[0].mxu0
    %v7422 = vadd.f32 %v7379, %v7421
    %7423 = vdwg.mxu0
    %v7424 = vmax.f32 %v6900, 0.0
    %v7425 = vmax.f32 %v6902, 0.0
    %v7426 = vmax.f32 %v7072, 0.0
    %v7427 = vmax.f32 %v7074, 0.0
    %v7428 = vmax.f32 %v7244, 0.0
    %v7429 = vmax.f32 %v7246, 0.0
    %v7430 = vmax.f32 %v7416, 0.0
    %v7431 = vmax.f32 %v7418, 0.0
    %v7432 = vmax.f32 %v6904, 0.0
    %v7433 = vmax.f32 %v6906, 0.0
    %v7434 = vmax.f32 %v7076, 0.0
    %v7435 = vmax.f32 %v7078, 0.0
    %v7436 = vmax.f32 %v7248, 0.0
    %v7437 = vmax.f32 %v7250, 0.0
    %v7438 = vmax.f32 %v7420, 0.0
    %v7439 = vmax.f32 %v7422, 0.0
    %v7440 = vld [vmem:[#allocation9] sm:$0xff]
    %v7441 = vld [vmem:[#allocation9 + $0x8] sm:$0xff]
    %v7442 = vld [vmem:[#allocation9 + $0x10] sm:$0xff]
    %v7443 = vld [vmem:[#allocation9 + $0x18] sm:$0xff]
    %v7444 = vld [vmem:[#allocation9 + $0x20] sm:$0xff]
    %v7445 = vld [vmem:[#allocation9 + $0x28] sm:$0xff]
    %v7446 = vld [vmem:[#allocation9 + $0x30] sm:$0xff]
    %v7447 = vld [vmem:[#allocation9 + $0x38] sm:$0xff]
    %v7448 = vld [vmem:[#allocation9 + $0x40] sm:$0xff]
    %v7449 = vld [vmem:[#allocation9 + $0x48] sm:$0xff]
    %v7450 = vld [vmem:[#allocation9 + $0x50] sm:$0xff]
    %v7451 = vld [vmem:[#allocation9 + $0x58] sm:$0xff]
    %v7452 = vld [vmem:[#allocation9 + $0x60] sm:$0xff]
    %v7453 = vld [vmem:[#allocation9 + $0x68] sm:$0xff]
    %v7454 = vld [vmem:[#allocation9 + $0x70] sm:$0xff]
    %v7455 = vld [vmem:[#allocation9 + $0x78] sm:$0xff]
    %v7456 = vld [vmem:[#allocation9 + $0x80] sm:$0xff]
    %v7457 = vld [vmem:[#allocation9 + $0x88] sm:$0xff]
    %v7458 = vld [vmem:[#allocation9 + $0x90] sm:$0xff]
    %v7459 = vld [vmem:[#allocation9 + $0x98] sm:$0xff]
    %v7460 = vld [vmem:[#allocation9 + $0xa0] sm:$0xff]
    %v7461 = vld [vmem:[#allocation9 + $0xa8] sm:$0xff]
    %v7462 = vld [vmem:[#allocation9 + $0xb0] sm:$0xff]
    %v7463 = vld [vmem:[#allocation9 + $0xb8] sm:$0xff]
    %v7464 = vld [vmem:[#allocation9 + $0xc0] sm:$0xff]
    %v7465 = vld [vmem:[#allocation9 + $0xc8] sm:$0xff]
    %v7466 = vld [vmem:[#allocation9 + $0xd0] sm:$0xff]
    %v7467 = vld [vmem:[#allocation9 + $0xd8] sm:$0xff]
    %v7468 = vld [vmem:[#allocation9 + $0xe0] sm:$0xff]
    %v7469 = vld [vmem:[#allocation9 + $0xe8] sm:$0xff]
    %v7470 = vld [vmem:[#allocation9 + $0xf0] sm:$0xff]
    %v7471 = vld [vmem:[#allocation9 + $0xf8] sm:$0xff]
    %v7472 = vld [vmem:[#allocation9 + $0x100] sm:$0xff]
    %v7473 = vld [vmem:[#allocation9 + $0x108] sm:$0xff]
    %v7474 = vld [vmem:[#allocation9 + $0x110] sm:$0xff]
    %v7475 = vld [vmem:[#allocation9 + $0x118] sm:$0xff]
    %v7476 = vld [vmem:[#allocation9 + $0x120] sm:$0xff]
    %v7477 = vld [vmem:[#allocation9 + $0x128] sm:$0xff]
    %v7478 = vld [vmem:[#allocation9 + $0x130] sm:$0xff]
    %v7479 = vld [vmem:[#allocation9 + $0x138] sm:$0xff]
    %v7480 = vld [vmem:[#allocation9 + $0x140] sm:$0xff]
    %v7481 = vld [vmem:[#allocation9 + $0x148] sm:$0xff]
    %v7482 = vld [vmem:[#allocation9 + $0x150] sm:$0xff]
    %v7483 = vld [vmem:[#allocation9 + $0x158] sm:$0xff]
    %v7484 = vld [vmem:[#allocation9 + $0x160] sm:$0xff]
    %v7485 = vld [vmem:[#allocation9 + $0x168] sm:$0xff]
    %v7486 = vld [vmem:[#allocation9 + $0x170] sm:$0xff]
    %v7487 = vld [vmem:[#allocation9 + $0x178] sm:$0xff]
    %v7488 = vld [vmem:[#allocation9 + $0x180] sm:$0xff]
    %v7489 = vld [vmem:[#allocation9 + $0x188] sm:$0xff]
    %v7490 = vld [vmem:[#allocation9 + $0x190] sm:$0xff]
    %v7491 = vld [vmem:[#allocation9 + $0x198] sm:$0xff]
    %v7492 = vld [vmem:[#allocation9 + $0x1a0] sm:$0xff]
    %v7493 = vld [vmem:[#allocation9 + $0x1a8] sm:$0xff]
    %v7494 = vld [vmem:[#allocation9 + $0x1b0] sm:$0xff]
    %v7495 = vld [vmem:[#allocation9 + $0x1b8] sm:$0xff]
    %v7496 = vld [vmem:[#allocation9 + $0x1c0] sm:$0xff]
    %v7497 = vld [vmem:[#allocation9 + $0x1c8] sm:$0xff]
    %v7498 = vld [vmem:[#allocation9 + $0x1d0] sm:$0xff]
    %v7499 = vld [vmem:[#allocation9 + $0x1d8] sm:$0xff]
    %v7500 = vld [vmem:[#allocation9 + $0x1e0] sm:$0xff]
    %v7501 = vld [vmem:[#allocation9 + $0x1e8] sm:$0xff]
    %v7502 = vld [vmem:[#allocation9 + $0x1f0] sm:$0xff]
    %v7503 = vld [vmem:[#allocation9 + $0x1f8] sm:$0xff]
    %v7504 = vld [vmem:[#allocation9 + $0x200] sm:$0xff]
    %v7505 = vld [vmem:[#allocation9 + $0x208] sm:$0xff]
    %v7506 = vld [vmem:[#allocation9 + $0x210] sm:$0xff]
    %v7507 = vld [vmem:[#allocation9 + $0x218] sm:$0xff]
    %v7508 = vld [vmem:[#allocation9 + $0x220] sm:$0xff]
    %v7509 = vld [vmem:[#allocation9 + $0x228] sm:$0xff]
    %v7510 = vld [vmem:[#allocation9 + $0x230] sm:$0xff]
    %v7511 = vld [vmem:[#allocation9 + $0x238] sm:$0xff]
    %v7512 = vld [vmem:[#allocation9 + $0x240] sm:$0xff]
    %v7513 = vld [vmem:[#allocation9 + $0x248] sm:$0xff]
    %v7514 = vld [vmem:[#allocation9 + $0x250] sm:$0xff]
    %v7515 = vld [vmem:[#allocation9 + $0x258] sm:$0xff]
    %v7516 = vld [vmem:[#allocation9 + $0x260] sm:$0xff]
    %v7517 = vld [vmem:[#allocation9 + $0x268] sm:$0xff]
    %v7518 = vld [vmem:[#allocation9 + $0x270] sm:$0xff]
    %v7519 = vld [vmem:[#allocation9 + $0x278] sm:$0xff]
    %v7520 = vld [vmem:[#allocation9 + $0x280] sm:$0xff]
    %v7521 = vld [vmem:[#allocation9 + $0x288] sm:$0xff]
    %v7522 = vld [vmem:[#allocation9 + $0x290] sm:$0xff]
    %v7523 = vld [vmem:[#allocation9 + $0x298] sm:$0xff]
    %v7524 = vld [vmem:[#allocation9 + $0x2a0] sm:$0xff]
    %v7525 = vld [vmem:[#allocation9 + $0x2a8] sm:$0xff]
    %v7526 = vld [vmem:[#allocation9 + $0x2b0] sm:$0xff]
    %v7527 = vld [vmem:[#allocation9 + $0x2b8] sm:$0xff]
    %v7528 = vld [vmem:[#allocation9 + $0x2c0] sm:$0xff]
    %v7529 = vld [vmem:[#allocation9 + $0x2c8] sm:$0xff]
    %v7530 = vld [vmem:[#allocation9 + $0x2d0] sm:$0xff]
    %v7531 = vld [vmem:[#allocation9 + $0x2d8] sm:$0xff]
    %v7532 = vld [vmem:[#allocation9 + $0x2e0] sm:$0xff]
    %v7533 = vld [vmem:[#allocation9 + $0x2e8] sm:$0xff]
    %v7534 = vld [vmem:[#allocation9 + $0x2f0] sm:$0xff]
    %v7535 = vld [vmem:[#allocation9 + $0x2f8] sm:$0xff]
    %v7536 = vld [vmem:[#allocation9 + $0x300] sm:$0xff]
    %v7537 = vld [vmem:[#allocation9 + $0x308] sm:$0xff]
    %v7538 = vld [vmem:[#allocation9 + $0x310] sm:$0xff]
    %v7539 = vld [vmem:[#allocation9 + $0x318] sm:$0xff]
    %v7540 = vld [vmem:[#allocation9 + $0x320] sm:$0xff]
    %v7541 = vld [vmem:[#allocation9 + $0x328] sm:$0xff]
    %v7542 = vld [vmem:[#allocation9 + $0x330] sm:$0xff]
    %v7543 = vld [vmem:[#allocation9 + $0x338] sm:$0xff]
    %v7544 = vld [vmem:[#allocation9 + $0x340] sm:$0xff]
    %v7545 = vld [vmem:[#allocation9 + $0x348] sm:$0xff]
    %v7546 = vld [vmem:[#allocation9 + $0x350] sm:$0xff]
    %v7547 = vld [vmem:[#allocation9 + $0x358] sm:$0xff]
    %v7548 = vld [vmem:[#allocation9 + $0x360] sm:$0xff]
    %v7549 = vld [vmem:[#allocation9 + $0x368] sm:$0xff]
    %v7550 = vld [vmem:[#allocation9 + $0x370] sm:$0xff]
    %v7551 = vld [vmem:[#allocation9 + $0x378] sm:$0xff]
    %v7552 = vld [vmem:[#allocation9 + $0x380] sm:$0xff]
    %v7553 = vld [vmem:[#allocation9 + $0x388] sm:$0xff]
    %v7554 = vld [vmem:[#allocation9 + $0x390] sm:$0xff]
    %v7555 = vld [vmem:[#allocation9 + $0x398] sm:$0xff]
    %v7556 = vld [vmem:[#allocation9 + $0x3a0] sm:$0xff]
    %v7557 = vld [vmem:[#allocation9 + $0x3a8] sm:$0xff]
    %v7558 = vld [vmem:[#allocation9 + $0x3b0] sm:$0xff]
    %v7559 = vld [vmem:[#allocation9 + $0x3b8] sm:$0xff]
    %v7560 = vld [vmem:[#allocation9 + $0x3c0] sm:$0xff]
    %v7561 = vld [vmem:[#allocation9 + $0x3c8] sm:$0xff]
    %v7562 = vld [vmem:[#allocation9 + $0x3d0] sm:$0xff]
    %v7563 = vld [vmem:[#allocation9 + $0x3d8] sm:$0xff]
    %v7564 = vld [vmem:[#allocation9 + $0x3e0] sm:$0xff]
    %v7565 = vld [vmem:[#allocation9 + $0x3e8] sm:$0xff]
    %v7566 = vld [vmem:[#allocation9 + $0x3f0] sm:$0xff]
    %v7567 = vld [vmem:[#allocation9 + $0x3f8] sm:$0xff]
    %v7568 = vld [vmem:[#allocation10] sm:$0x1]
    %v7570 = vlaneseq
    %v7571 = vshrl.u32 %v7570, 7
    %v7572 = vsub.s32 0, %v7571
    %v7573 = vrot.slane %v7568, %v7572
    %7575 = vmatprep.subr.mxu0 0.0
    %7576 = vmatpush1.msra.mxu0 %v7440
    %7577 = vmatprep.subr.mxu0 0.0
    %7578 = vmatpush1.msra.mxu0 %v7441
    %7579 = vmatprep.subr.mxu0 0.0
    %7580 = vmatpush1.msra.mxu0 %v7442
    %7581 = vmatprep.subr.mxu0 0.0
    %7582 = vmatpush1.msra.mxu0 %v7443
    %7583 = vmatprep.subr.mxu0 0.0
    %7584 = vmatpush1.msra.mxu0 %v7444
    %7585 = vmatprep.subr.mxu0 0.0
    %7586 = vmatpush1.msra.mxu0 %v7445
    %7587 = vmatprep.subr.mxu0 0.0
    %7588 = vmatpush1.msra.mxu0 %v7446
    %7589 = vmatprep.subr.mxu0 0.0
    %7590 = vmatpush1.msra.mxu0 %v7447
    %7591 = vmatprep.subr.mxu0 0.0
    %7592 = vmatpush1.msra.mxu0 %v7448
    %7593 = vmatprep.subr.mxu0 0.0
    %7594 = vmatpush1.msra.mxu0 %v7449
    %7595 = vmatprep.subr.mxu0 0.0
    %7596 = vmatpush1.msra.mxu0 %v7450
    %7597 = vmatprep.subr.mxu0 0.0
    %7598 = vmatpush1.msra.mxu0 %v7451
    %7599 = vmatprep.subr.mxu0 0.0
    %7600 = vmatpush1.msra.mxu0 %v7452
    %7601 = vmatprep.subr.mxu0 0.0
    %7602 = vmatpush1.msra.mxu0 %v7453
    %7603 = vmatprep.subr.mxu0 0.0
    %7604 = vmatpush1.msra.mxu0 %v7454
    %7605 = vmatprep.subr.mxu0 0.0
    %7606 = vmatpush1.msra.mxu0 %v7455
    %7607 = vmatprep.subr.mxu0 0.0
    %7608 = vmatpush1.msra.mxu0 %v7456
    %7609 = vmatprep.subr.mxu0 0.0
    %7610 = vmatpush1.msra.mxu0 %v7457
    %7611 = vmatprep.subr.mxu0 0.0
    %7612 = vmatpush1.msra.mxu0 %v7458
    %7613 = vmatprep.subr.mxu0 0.0
    %7614 = vmatpush1.msra.mxu0 %v7459
    %7615 = vmatprep.subr.mxu0 0.0
    %7616 = vmatpush1.msra.mxu0 %v7460
    %7617 = vmatprep.subr.mxu0 0.0
    %7618 = vmatpush1.msra.mxu0 %v7461
    %7619 = vmatprep.subr.mxu0 0.0
    %7620 = vmatpush1.msra.mxu0 %v7462
    %7621 = vmatprep.subr.mxu0 0.0
    %7622 = vmatpush1.msra.mxu0 %v7463
    %7623 = vmatprep.subr.mxu0 0.0
    %7624 = vmatpush1.msra.mxu0 %v7464
    %7625 = vmatprep.subr.mxu0 0.0
    %7626 = vmatpush1.msra.mxu0 %v7465
    %7627 = vmatprep.subr.mxu0 0.0
    %7628 = vmatpush1.msra.mxu0 %v7466
    %7629 = vmatprep.subr.mxu0 0.0
    %7630 = vmatpush1.msra.mxu0 %v7467
    %7631 = vmatprep.subr.mxu0 0.0
    %7632 = vmatpush1.msra.mxu0 %v7468
    %7633 = vmatprep.subr.mxu0 0.0
    %7634 = vmatpush1.msra.mxu0 %v7469
    %7635 = vmatprep.subr.mxu0 0.0
    %7636 = vmatpush1.msra.mxu0 %v7470
    %7637 = vmatprep.subr.mxu0 0.0
    %7638 = vmatpush1.msra.mxu0 %v7471
    %7639 = vmatprep.mubr.f32.mxu0 %v7425
    %7640 = vmatmul.mubr.f32.gmra.mrb[0].mxu0 %v7424
    %v7641 = vpop.f32.mrb[0].mxu0
    %v7642 = vadd.f32 %v7573, %v7641
    %v7643 = vpop.f32.mrb[0].mxu0
    %7644 = vmatprep.mubr.f32.mxu0 %v7433
    %7645 = vmatmul.mubr.f32.gmra.mrb[0].mxu0 %v7432
    %v7646 = vpop.f32.mrb[0].mxu0
    %v7647 = vadd.f32 %v7573, %v7646
    %v7648 = vpop.f32.mrb[0].mxu0
    %7649 = vdwg.mxu0
    %7650 = vmatprep.subr.mxu0 0.0
    %7651 = vmatpush1.msra.mxu0 %v7472
    %7652 = vmatprep.subr.mxu0 0.0
    %7653 = vmatpush1.msra.mxu0 %v7473
    %7654 = vmatprep.subr.mxu0 0.0
    %7655 = vmatpush1.msra.mxu0 %v7474
    %7656 = vmatprep.subr.mxu0 0.0
    %7657 = vmatpush1.msra.mxu0 %v7475
    %7658 = vmatprep.subr.mxu0 0.0
    %7659 = vmatpush1.msra.mxu0 %v7476
    %7660 = vmatprep.subr.mxu0 0.0
    %7661 = vmatpush1.msra.mxu0 %v7477
    %7662 = vmatprep.subr.mxu0 0.0
    %7663 = vmatpush1.msra.mxu0 %v7478
    %7664 = vmatprep.subr.mxu0 0.0
    %7665 = vmatpush1.msra.mxu0 %v7479
    %7666 = vmatprep.subr.mxu0 0.0
    %7667 = vmatpush1.msra.mxu0 %v7480
    %7668 = vmatprep.subr.mxu0 0.0
    %7669 = vmatpush1.msra.mxu0 %v7481
    %7670 = vmatprep.subr.mxu0 0.0
    %7671 = vmatpush1.msra.mxu0 %v7482
    %7672 = vmatprep.subr.mxu0 0.0
    %7673 = vmatpush1.msra.mxu0 %v7483
    %7674 = vmatprep.subr.mxu0 0.0
    %7675 = vmatpush1.msra.mxu0 %v7484
    %7676 = vmatprep.subr.mxu0 0.0
    %7677 = vmatpush1.msra.mxu0 %v7485
    %7678 = vmatprep.subr.mxu0 0.0
    %7679 = vmatpush1.msra.mxu0 %v7486
    %7680 = vmatprep.subr.mxu0 0.0
    %7681 = vmatpush1.msra.mxu0 %v7487
    %7682 = vmatprep.subr.mxu0 0.0
    %7683 = vmatpush1.msra.mxu0 %v7488
    %7684 = vmatprep.subr.mxu0 0.0
    %7685 = vmatpush1.msra.mxu0 %v7489
    %7686 = vmatprep.subr.mxu0 0.0
    %7687 = vmatpush1.msra.mxu0 %v7490
    %7688 = vmatprep.subr.mxu0 0.0
    %7689 = vmatpush1.msra.mxu0 %v7491
    %7690 = vmatprep.subr.mxu0 0.0
    %7691 = vmatpush1.msra.mxu0 %v7492
    %7692 = vmatprep.subr.mxu0 0.0
    %7693 = vmatpush1.msra.mxu0 %v7493
    %7694 = vmatprep.subr.mxu0 0.0
    %7695 = vmatpush1.msra.mxu0 %v7494
    %7696 = vmatprep.subr.mxu0 0.0
    %7697 = vmatpush1.msra.mxu0 %v7495
    %7698 = vmatprep.subr.mxu0 0.0
    %7699 = vmatpush1.msra.mxu0 %v7496
    %7700 = vmatprep.subr.mxu0 0.0
    %7701 = vmatpush1.msra.mxu0 %v7497
    %7702 = vmatprep.subr.mxu0 0.0
    %7703 = vmatpush1.msra.mxu0 %v7498
    %7704 = vmatprep.subr.mxu0 0.0
    %7705 = vmatpush1.msra.mxu0 %v7499
    %7706 = vmatprep.subr.mxu0 0.0
    %7707 = vmatpush1.msra.mxu0 %v7500
    %7708 = vmatprep.subr.mxu0 0.0
    %7709 = vmatpush1.msra.mxu0 %v7501
    %7710 = vmatprep.subr.mxu0 0.0
    %7711 = vmatpush1.msra.mxu0 %v7502
    %7712 = vmatprep.subr.mxu0 0.0
    %7713 = vmatpush1.msra.mxu0 %v7503
    %7714 = vmatprep.mubr.f32.mxu0 %v7427
    %7715 = vmatmul.mubr.f32.gmra.mrb[0].mxu0 %v7426
    %v7716 = vpop.f32.mrb[0].mxu0
    %v7717 = vadd.f32 %v7642, %v7716
    %v7718 = vpop.f32.mrb[0].mxu0
    %7719 = vmatprep.mubr.f32.mxu0 %v7435
    %7720 = vmatmul.mubr.f32.gmra.mrb[0].mxu0 %v7434
    %v7721 = vpop.f32.mrb[0].mxu0
    %v7722 = vadd.f32 %v7647, %v7721
    %v7723 = vpop.f32.mrb[0].mxu0
    %7724 = vdwg.mxu0
    %7725 = vmatprep.subr.mxu0 0.0
    %7726 = vmatpush1.msra.mxu0 %v7504
    %7727 = vmatprep.subr.mxu0 0.0
    %7728 = vmatpush1.msra.mxu0 %v7505
    %7729 = vmatprep.subr.mxu0 0.0
    %7730 = vmatpush1.msra.mxu0 %v7506
    %7731 = vmatprep.subr.mxu0 0.0
    %7732 = vmatpush1.msra.mxu0 %v7507
    %7733 = vmatprep.subr.mxu0 0.0
    %7734 = vmatpush1.msra.mxu0 %v7508
    %7735 = vmatprep.subr.mxu0 0.0
    %7736 = vmatpush1.msra.mxu0 %v7509
    %7737 = vmatprep.subr.mxu0 0.0
    %7738 = vmatpush1.msra.mxu0 %v7510
    %7739 = vmatprep.subr.mxu0 0.0
    %7740 = vmatpush1.msra.mxu0 %v7511
    %7741 = vmatprep.subr.mxu0 0.0
    %7742 = vmatpush1.msra.mxu0 %v7512
    %7743 = vmatprep.subr.mxu0 0.0
    %7744 = vmatpush1.msra.mxu0 %v7513
    %7745 = vmatprep.subr.mxu0 0.0
    %7746 = vmatpush1.msra.mxu0 %v7514
    %7747 = vmatprep.subr.mxu0 0.0
    %7748 = vmatpush1.msra.mxu0 %v7515
    %7749 = vmatprep.subr.mxu0 0.0
    %7750 = vmatpush1.msra.mxu0 %v7516
    %7751 = vmatprep.subr.mxu0 0.0
    %7752 = vmatpush1.msra.mxu0 %v7517
    %7753 = vmatprep.subr.mxu0 0.0
    %7754 = vmatpush1.msra.mxu0 %v7518
    %7755 = vmatprep.subr.mxu0 0.0
    %7756 = vmatpush1.msra.mxu0 %v7519
    %7757 = vmatprep.subr.mxu0 0.0
    %7758 = vmatpush1.msra.mxu0 %v7520
    %7759 = vmatprep.subr.mxu0 0.0
    %7760 = vmatpush1.msra.mxu0 %v7521
    %7761 = vmatprep.subr.mxu0 0.0
    %7762 = vmatpush1.msra.mxu0 %v7522
    %7763 = vmatprep.subr.mxu0 0.0
    %7764 = vmatpush1.msra.mxu0 %v7523
    %7765 = vmatprep.subr.mxu0 0.0
    %7766 = vmatpush1.msra.mxu0 %v7524
    %7767 = vmatprep.subr.mxu0 0.0
    %7768 = vmatpush1.msra.mxu0 %v7525
    %7769 = vmatprep.subr.mxu0 0.0
    %7770 = vmatpush1.msra.mxu0 %v7526
    %7771 = vmatprep.subr.mxu0 0.0
    %7772 = vmatpush1.msra.mxu0 %v7527
    %7773 = vmatprep.subr.mxu0 0.0
    %7774 = vmatpush1.msra.mxu0 %v7528
    %7775 = vmatprep.subr.mxu0 0.0
    %7776 = vmatpush1.msra.mxu0 %v7529
    %7777 = vmatprep.subr.mxu0 0.0
    %7778 = vmatpush1.msra.mxu0 %v7530
    %7779 = vmatprep.subr.mxu0 0.0
    %7780 = vmatpush1.msra.mxu0 %v7531
    %7781 = vmatprep.subr.mxu0 0.0
    %7782 = vmatpush1.msra.mxu0 %v7532
    %7783 = vmatprep.subr.mxu0 0.0
    %7784 = vmatpush1.msra.mxu0 %v7533
    %7785 = vmatprep.subr.mxu0 0.0
    %7786 = vmatpush1.msra.mxu0 %v7534
    %7787 = vmatprep.subr.mxu0 0.0
    %7788 = vmatpush1.msra.mxu0 %v7535
    %7789 = vmatprep.mubr.f32.mxu0 %v7429
    %7790 = vmatmul.mubr.f32.gmra.mrb[0].mxu0 %v7428
    %v7791 = vpop.f32.mrb[0].mxu0
    %v7792 = vadd.f32 %v7717, %v7791
    %v7793 = vpop.f32.mrb[0].mxu0
    %7794 = vmatprep.mubr.f32.mxu0 %v7437
    %7795 = vmatmul.mubr.f32.gmra.mrb[0].mxu0 %v7436
    %v7796 = vpop.f32.mrb[0].mxu0
    %v7797 = vadd.f32 %v7722, %v7796
    %v7798 = vpop.f32.mrb[0].mxu0
    %7799 = vdwg.mxu0
    %7800 = vmatprep.subr.mxu0 0.0
    %7801 = vmatpush1.msra.mxu0 %v7536
    %7802 = vmatprep.subr.mxu0 0.0
    %7803 = vmatpush1.msra.mxu0 %v7537
    %7804 = vmatprep.subr.mxu0 0.0
    %7805 = vmatpush1.msra.mxu0 %v7538
    %7806 = vmatprep.subr.mxu0 0.0
    %7807 = vmatpush1.msra.mxu0 %v7539
    %7808 = vmatprep.subr.mxu0 0.0
    %7809 = vmatpush1.msra.mxu0 %v7540
    %7810 = vmatprep.subr.mxu0 0.0
    %7811 = vmatpush1.msra.mxu0 %v7541
    %7812 = vmatprep.subr.mxu0 0.0
    %7813 = vmatpush1.msra.mxu0 %v7542
    %7814 = vmatprep.subr.mxu0 0.0
    %7815 = vmatpush1.msra.mxu0 %v7543
    %7816 = vmatprep.subr.mxu0 0.0
    %7817 = vmatpush1.msra.mxu0 %v7544
    %7818 = vmatprep.subr.mxu0 0.0
    %7819 = vmatpush1.msra.mxu0 %v7545
    %7820 = vmatprep.subr.mxu0 0.0
    %7821 = vmatpush1.msra.mxu0 %v7546
    %7822 = vmatprep.subr.mxu0 0.0
    %7823 = vmatpush1.msra.mxu0 %v7547
    %7824 = vmatprep.subr.mxu0 0.0
    %7825 = vmatpush1.msra.mxu0 %v7548
    %7826 = vmatprep.subr.mxu0 0.0
    %7827 = vmatpush1.msra.mxu0 %v7549
    %7828 = vmatprep.subr.mxu0 0.0
    %7829 = vmatpush1.msra.mxu0 %v7550
    %7830 = vmatprep.subr.mxu0 0.0
    %7831 = vmatpush1.msra.mxu0 %v7551
    %7832 = vmatprep.subr.mxu0 0.0
    %7833 = vmatpush1.msra.mxu0 %v7552
    %7834 = vmatprep.subr.mxu0 0.0
    %7835 = vmatpush1.msra.mxu0 %v7553
    %7836 = vmatprep.subr.mxu0 0.0
    %7837 = vmatpush1.msra.mxu0 %v7554
    %7838 = vmatprep.subr.mxu0 0.0
    %7839 = vmatpush1.msra.mxu0 %v7555
    %7840 = vmatprep.subr.mxu0 0.0
    %7841 = vmatpush1.msra.mxu0 %v7556
    %7842 = vmatprep.subr.mxu0 0.0
    %7843 = vmatpush1.msra.mxu0 %v7557
    %7844 = vmatprep.subr.mxu0 0.0
    %7845 = vmatpush1.msra.mxu0 %v7558
    %7846 = vmatprep.subr.mxu0 0.0
    %7847 = vmatpush1.msra.mxu0 %v7559
    %7848 = vmatprep.subr.mxu0 0.0
    %7849 = vmatpush1.msra.mxu0 %v7560
    %7850 = vmatprep.subr.mxu0 0.0
    %7851 = vmatpush1.msra.mxu0 %v7561
    %7852 = vmatprep.subr.mxu0 0.0
    %7853 = vmatpush1.msra.mxu0 %v7562
    %7854 = vmatprep.subr.mxu0 0.0
    %7855 = vmatpush1.msra.mxu0 %v7563
    %7856 = vmatprep.subr.mxu0 0.0
    %7857 = vmatpush1.msra.mxu0 %v7564
    %7858 = vmatprep.subr.mxu0 0.0
    %7859 = vmatpush1.msra.mxu0 %v7565
    %7860 = vmatprep.subr.mxu0 0.0
    %7861 = vmatpush1.msra.mxu0 %v7566
    %7862 = vmatprep.subr.mxu0 0.0
    %7863 = vmatpush1.msra.mxu0 %v7567
    %7864 = vmatprep.mubr.f32.mxu0 %v7431
    %7865 = vmatmul.mubr.f32.gmra.mrb[0].mxu0 %v7430
    %v7866 = vpop.f32.mrb[0].mxu0
    %v7867 = vadd.f32 %v7792, %v7866
    %v7868 = vpop.f32.mrb[0].mxu0
    %7869 = vmatprep.mubr.f32.mxu0 %v7439
    %7870 = vmatmul.mubr.f32.gmra.mrb[0].mxu0 %v7438
    %v7871 = vpop.f32.mrb[0].mxu0
    %v7872 = vadd.f32 %v7797, %v7871
    %v7873 = vpop.f32.mrb[0].mxu0
    %7874 = vdwg.mxu0
    %7875 = vst [vmem:[%s10] sm:$0xff] %v7867
    %7876 = vst [vmem:[%s10 + $0x8] sm:$0xff] %v7872
    %v7877 = vld [vmem:[#allocation12] sm:$0xff]
    %v7878 = vld [vmem:[#allocation12 + $0x8] sm:$0xff]
    %v7879 = vld [vmem:[#allocation12 + $0x10] sm:$0xff]
    %v7880 = vld [vmem:[#allocation12 + $0x18] sm:$0xff]
    %v7881 = vld [vmem:[#allocation12 + $0x20] sm:$0xff]
    %v7882 = vld [vmem:[#allocation12 + $0x28] sm:$0xff]
    %v7883 = vld [vmem:[#allocation12 + $0x30] sm:$0xff]
    %v7884 = vld [vmem:[#allocation12 + $0x38] sm:$0xff]
    %v7885 = vld [vmem:[#allocation12 + $0x40] sm:$0xff]
    %v7886 = vld [vmem:[#allocation12 + $0x48] sm:$0xff]
    %v7887 = vld [vmem:[#allocation12 + $0x50] sm:$0xff]
    %v7888 = vld [vmem:[#allocation12 + $0x58] sm:$0xff]
    %v7889 = vld [vmem:[#allocation12 + $0x60] sm:$0xff]
    %v7890 = vld [vmem:[#allocation12 + $0x68] sm:$0xff]
    %v7891 = vld [vmem:[#allocation12 + $0x70] sm:$0xff]
    %v7892 = vld [vmem:[#allocation12 + $0x78] sm:$0xff]
    %v7893 = vld [vmem:[#allocation12 + $0x80] sm:$0xff]
    %v7894 = vld [vmem:[#allocation12 + $0x88] sm:$0xff]
    %v7895 = vld [vmem:[#allocation12 + $0x90] sm:$0xff]
    %v7896 = vld [vmem:[#allocation12 + $0x98] sm:$0xff]
    %v7897 = vld [vmem:[#allocation12 + $0xa0] sm:$0xff]
    %v7898 = vld [vmem:[#allocation12 + $0xa8] sm:$0xff]
    %v7899 = vld [vmem:[#allocation12 + $0xb0] sm:$0xff]
    %v7900 = vld [vmem:[#allocation12 + $0xb8] sm:$0xff]
    %v7901 = vld [vmem:[#allocation12 + $0xc0] sm:$0xff]
    %v7902 = vld [vmem:[#allocation12 + $0xc8] sm:$0xff]
    %v7903 = vld [vmem:[#allocation12 + $0xd0] sm:$0xff]
    %v7904 = vld [vmem:[#allocation12 + $0xd8] sm:$0xff]
    %v7905 = vld [vmem:[#allocation12 + $0xe0] sm:$0xff]
    %v7906 = vld [vmem:[#allocation12 + $0xe8] sm:$0xff]
    %v7907 = vld [vmem:[#allocation12 + $0xf0] sm:$0xff]
    %v7908 = vld [vmem:[#allocation12 + $0xf8] sm:$0xff]
    %v7909 = vld [vmem:[#allocation12 + $0x100] sm:$0xff]
    %v7910 = vld [vmem:[#allocation12 + $0x108] sm:$0xff]
    %v7911 = vld [vmem:[#allocation12 + $0x110] sm:$0xff]
    %v7912 = vld [vmem:[#allocation12 + $0x118] sm:$0xff]
    %v7913 = vld [vmem:[#allocation12 + $0x120] sm:$0xff]
    %v7914 = vld [vmem:[#allocation12 + $0x128] sm:$0xff]
    %v7915 = vld [vmem:[#allocation12 + $0x130] sm:$0xff]
    %v7916 = vld [vmem:[#allocation12 + $0x138] sm:$0xff]
    %v7917 = vld [vmem:[#allocation12 + $0x140] sm:$0xff]
    %v7918 = vld [vmem:[#allocation12 + $0x148] sm:$0xff]
    %v7919 = vld [vmem:[#allocation12 + $0x150] sm:$0xff]
    %v7920 = vld [vmem:[#allocation12 + $0x158] sm:$0xff]
    %v7921 = vld [vmem:[#allocation12 + $0x160] sm:$0xff]
    %v7922 = vld [vmem:[#allocation12 + $0x168] sm:$0xff]
    %v7923 = vld [vmem:[#allocation12 + $0x170] sm:$0xff]
    %v7924 = vld [vmem:[#allocation12 + $0x178] sm:$0xff]
    %v7925 = vld [vmem:[#allocation12 + $0x180] sm:$0xff]
    %v7926 = vld [vmem:[#allocation12 + $0x188] sm:$0xff]
    %v7927 = vld [vmem:[#allocation12 + $0x190] sm:$0xff]
    %v7928 = vld [vmem:[#allocation12 + $0x198] sm:$0xff]
    %v7929 = vld [vmem:[#allocation12 + $0x1a0] sm:$0xff]
    %v7930 = vld [vmem:[#allocation12 + $0x1a8] sm:$0xff]
    %v7931 = vld [vmem:[#allocation12 + $0x1b0] sm:$0xff]
    %v7932 = vld [vmem:[#allocation12 + $0x1b8] sm:$0xff]
    %v7933 = vld [vmem:[#allocation12 + $0x1c0] sm:$0xff]
    %v7934 = vld [vmem:[#allocation12 + $0x1c8] sm:$0xff]
    %v7935 = vld [vmem:[#allocation12 + $0x1d0] sm:$0xff]
    %v7936 = vld [vmem:[#allocation12 + $0x1d8] sm:$0xff]
    %v7937 = vld [vmem:[#allocation12 + $0x1e0] sm:$0xff]
    %v7938 = vld [vmem:[#allocation12 + $0x1e8] sm:$0xff]
    %v7939 = vld [vmem:[#allocation12 + $0x1f0] sm:$0xff]
    %v7940 = vld [vmem:[#allocation12 + $0x1f8] sm:$0xff]
    %v7941 = vld [vmem:[#allocation12 + $0x200] sm:$0xff]
    %v7942 = vld [vmem:[#allocation12 + $0x208] sm:$0xff]
    %v7943 = vld [vmem:[#allocation12 + $0x210] sm:$0xff]
    %v7944 = vld [vmem:[#allocation12 + $0x218] sm:$0xff]
    %v7945 = vld [vmem:[#allocation12 + $0x220] sm:$0xff]
    %v7946 = vld [vmem:[#allocation12 + $0x228] sm:$0xff]
    %v7947 = vld [vmem:[#allocation12 + $0x230] sm:$0xff]
    %v7948 = vld [vmem:[#allocation12 + $0x238] sm:$0xff]
    %v7949 = vld [vmem:[#allocation12 + $0x240] sm:$0xff]
    %v7950 = vld [vmem:[#allocation12 + $0x248] sm:$0xff]
    %v7951 = vld [vmem:[#allocation12 + $0x250] sm:$0xff]
    %v7952 = vld [vmem:[#allocation12 + $0x258] sm:$0xff]
    %v7953 = vld [vmem:[#allocation12 + $0x260] sm:$0xff]
    %v7954 = vld [vmem:[#allocation12 + $0x268] sm:$0xff]
    %v7955 = vld [vmem:[#allocation12 + $0x270] sm:$0xff]
    %v7956 = vld [vmem:[#allocation12 + $0x278] sm:$0xff]
    %v7957 = vld [vmem:[#allocation12 + $0x280] sm:$0xff]
    %v7958 = vld [vmem:[#allocation12 + $0x288] sm:$0xff]
    %v7959 = vld [vmem:[#allocation12 + $0x290] sm:$0xff]
    %v7960 = vld [vmem:[#allocation12 + $0x298] sm:$0xff]
    %v7961 = vld [vmem:[#allocation12 + $0x2a0] sm:$0xff]
    %v7962 = vld [vmem:[#allocation12 + $0x2a8] sm:$0xff]
    %v7963 = vld [vmem:[#allocation12 + $0x2b0] sm:$0xff]
    %v7964 = vld [vmem:[#allocation12 + $0x2b8] sm:$0xff]
    %v7965 = vld [vmem:[#allocation12 + $0x2c0] sm:$0xff]
    %v7966 = vld [vmem:[#allocation12 + $0x2c8] sm:$0xff]
    %v7967 = vld [vmem:[#allocation12 + $0x2d0] sm:$0xff]
    %v7968 = vld [vmem:[#allocation12 + $0x2d8] sm:$0xff]
    %v7969 = vld [vmem:[#allocation12 + $0x2e0] sm:$0xff]
    %v7970 = vld [vmem:[#allocation12 + $0x2e8] sm:$0xff]
    %v7971 = vld [vmem:[#allocation12 + $0x2f0] sm:$0xff]
    %v7972 = vld [vmem:[#allocation12 + $0x2f8] sm:$0xff]
    %v7973 = vld [vmem:[#allocation12 + $0x300] sm:$0xff]
    %v7974 = vld [vmem:[#allocation12 + $0x308] sm:$0xff]
    %v7975 = vld [vmem:[#allocation12 + $0x310] sm:$0xff]
    %v7976 = vld [vmem:[#allocation12 + $0x318] sm:$0xff]
    %v7977 = vld [vmem:[#allocation12 + $0x320] sm:$0xff]
    %v7978 = vld [vmem:[#allocation12 + $0x328] sm:$0xff]
    %v7979 = vld [vmem:[#allocation12 + $0x330] sm:$0xff]
    %v7980 = vld [vmem:[#allocation12 + $0x338] sm:$0xff]
    %v7981 = vld [vmem:[#allocation12 + $0x340] sm:$0xff]
    %v7982 = vld [vmem:[#allocation12 + $0x348] sm:$0xff]
    %v7983 = vld [vmem:[#allocation12 + $0x350] sm:$0xff]
    %v7984 = vld [vmem:[#allocation12 + $0x358] sm:$0xff]
    %v7985 = vld [vmem:[#allocation12 + $0x360] sm:$0xff]
    %v7986 = vld [vmem:[#allocation12 + $0x368] sm:$0xff]
    %v7987 = vld [vmem:[#allocation12 + $0x370] sm:$0xff]
    %v7988 = vld [vmem:[#allocation12 + $0x378] sm:$0xff]
    %v7989 = vld [vmem:[#allocation12 + $0x380] sm:$0xff]
    %v7990 = vld [vmem:[#allocation12 + $0x388] sm:$0xff]
    %v7991 = vld [vmem:[#allocation12 + $0x390] sm:$0xff]
    %v7992 = vld [vmem:[#allocation12 + $0x398] sm:$0xff]
    %v7993 = vld [vmem:[#allocation12 + $0x3a0] sm:$0xff]
    %v7994 = vld [vmem:[#allocation12 + $0x3a8] sm:$0xff]
    %v7995 = vld [vmem:[#allocation12 + $0x3b0] sm:$0xff]
    %v7996 = vld [vmem:[#allocation12 + $0x3b8] sm:$0xff]
    %v7997 = vld [vmem:[#allocation12 + $0x3c0] sm:$0xff]
    %v7998 = vld [vmem:[#allocation12 + $0x3c8] sm:$0xff]
    %v7999 = vld [vmem:[#allocation12 + $0x3d0] sm:$0xff]
    %v8000 = vld [vmem:[#allocation12 + $0x3d8] sm:$0xff]
    %v8001 = vld [vmem:[#allocation12 + $0x3e0] sm:$0xff]
    %v8002 = vld [vmem:[#allocation12 + $0x3e8] sm:$0xff]
    %v8003 = vld [vmem:[#allocation12 + $0x3f0] sm:$0xff]
    %v8004 = vld [vmem:[#allocation12 + $0x3f8] sm:$0xff]
    %v8005 = vld [vmem:[#allocation13] sm:$0x1]
    %v8007 = vlaneseq
    %v8008 = vshrl.u32 %v8007, 7
    %v8009 = vsub.s32 0, %v8008
    %v8010 = vrot.slane %v8005, %v8009
    %8012 = vmatprep.subr.mxu0 0.0
    %8013 = vmatpush1.msra.mxu0 %v7877
    %8014 = vmatprep.subr.mxu0 0.0
    %8015 = vmatpush1.msra.mxu0 %v7878
    %8016 = vmatprep.subr.mxu0 0.0
    %8017 = vmatpush1.msra.mxu0 %v7879
    %8018 = vmatprep.subr.mxu0 0.0
    %8019 = vmatpush1.msra.mxu0 %v7880
    %8020 = vmatprep.subr.mxu0 0.0
    %8021 = vmatpush1.msra.mxu0 %v7881
    %8022 = vmatprep.subr.mxu0 0.0
    %8023 = vmatpush1.msra.mxu0 %v7882
    %8024 = vmatprep.subr.mxu0 0.0
    %8025 = vmatpush1.msra.mxu0 %v7883
    %8026 = vmatprep.subr.mxu0 0.0
    %8027 = vmatpush1.msra.mxu0 %v7884
    %8028 = vmatprep.subr.mxu0 0.0
    %8029 = vmatpush1.msra.mxu0 %v7885
    %8030 = vmatprep.subr.mxu0 0.0
    %8031 = vmatpush1.msra.mxu0 %v7886
    %8032 = vmatprep.subr.mxu0 0.0
    %8033 = vmatpush1.msra.mxu0 %v7887
    %8034 = vmatprep.subr.mxu0 0.0
    %8035 = vmatpush1.msra.mxu0 %v7888
    %8036 = vmatprep.subr.mxu0 0.0
    %8037 = vmatpush1.msra.mxu0 %v7889
    %8038 = vmatprep.subr.mxu0 0.0
    %8039 = vmatpush1.msra.mxu0 %v7890
    %8040 = vmatprep.subr.mxu0 0.0
    %8041 = vmatpush1.msra.mxu0 %v7891
    %8042 = vmatprep.subr.mxu0 0.0
    %8043 = vmatpush1.msra.mxu0 %v7892
    %8044 = vmatprep.subr.mxu0 0.0
    %8045 = vmatpush1.msra.mxu0 %v7893
    %8046 = vmatprep.subr.mxu0 0.0
    %8047 = vmatpush1.msra.mxu0 %v7894
    %8048 = vmatprep.subr.mxu0 0.0
    %8049 = vmatpush1.msra.mxu0 %v7895
    %8050 = vmatprep.subr.mxu0 0.0
    %8051 = vmatpush1.msra.mxu0 %v7896
    %8052 = vmatprep.subr.mxu0 0.0
    %8053 = vmatpush1.msra.mxu0 %v7897
    %8054 = vmatprep.subr.mxu0 0.0
    %8055 = vmatpush1.msra.mxu0 %v7898
    %8056 = vmatprep.subr.mxu0 0.0
    %8057 = vmatpush1.msra.mxu0 %v7899
    %8058 = vmatprep.subr.mxu0 0.0
    %8059 = vmatpush1.msra.mxu0 %v7900
    %8060 = vmatprep.subr.mxu0 0.0
    %8061 = vmatpush1.msra.mxu0 %v7901
    %8062 = vmatprep.subr.mxu0 0.0
    %8063 = vmatpush1.msra.mxu0 %v7902
    %8064 = vmatprep.subr.mxu0 0.0
    %8065 = vmatpush1.msra.mxu0 %v7903
    %8066 = vmatprep.subr.mxu0 0.0
    %8067 = vmatpush1.msra.mxu0 %v7904
    %8068 = vmatprep.subr.mxu0 0.0
    %8069 = vmatpush1.msra.mxu0 %v7905
    %8070 = vmatprep.subr.mxu0 0.0
    %8071 = vmatpush1.msra.mxu0 %v7906
    %8072 = vmatprep.subr.mxu0 0.0
    %8073 = vmatpush1.msra.mxu0 %v7907
    %8074 = vmatprep.subr.mxu0 0.0
    %8075 = vmatpush1.msra.mxu0 %v7908
    %8076 = vmatprep.mubr.f32.mxu0 %v7425
    %8077 = vmatmul.mubr.f32.gmra.mrb[0].mxu0 %v7424
    %v8078 = vpop.f32.mrb[0].mxu0
    %v8079 = vadd.f32 %v8010, %v8078
    %v8080 = vpop.f32.mrb[0].mxu0
    %8081 = vmatprep.mubr.f32.mxu0 %v7433
    %8082 = vmatmul.mubr.f32.gmra.mrb[0].mxu0 %v7432
    %v8083 = vpop.f32.mrb[0].mxu0
    %v8084 = vadd.f32 %v8010, %v8083
    %v8085 = vpop.f32.mrb[0].mxu0
    %8086 = vdwg.mxu0
    %8087 = vmatprep.subr.mxu0 0.0
    %8088 = vmatpush1.msra.mxu0 %v7909
    %8089 = vmatprep.subr.mxu0 0.0
    %8090 = vmatpush1.msra.mxu0 %v7910
    %8091 = vmatprep.subr.mxu0 0.0
    %8092 = vmatpush1.msra.mxu0 %v7911
    %8093 = vmatprep.subr.mxu0 0.0
    %8094 = vmatpush1.msra.mxu0 %v7912
    %8095 = vmatprep.subr.mxu0 0.0
    %8096 = vmatpush1.msra.mxu0 %v7913
    %8097 = vmatprep.subr.mxu0 0.0
    %8098 = vmatpush1.msra.mxu0 %v7914
    %8099 = vmatprep.subr.mxu0 0.0
    %8100 = vmatpush1.msra.mxu0 %v7915
    %8101 = vmatprep.subr.mxu0 0.0
    %8102 = vmatpush1.msra.mxu0 %v7916
    %8103 = vmatprep.subr.mxu0 0.0
    %8104 = vmatpush1.msra.mxu0 %v7917
    %8105 = vmatprep.subr.mxu0 0.0
    %8106 = vmatpush1.msra.mxu0 %v7918
    %8107 = vmatprep.subr.mxu0 0.0
    %8108 = vmatpush1.msra.mxu0 %v7919
    %8109 = vmatprep.subr.mxu0 0.0
    %8110 = vmatpush1.msra.mxu0 %v7920
    %8111 = vmatprep.subr.mxu0 0.0
    %8112 = vmatpush1.msra.mxu0 %v7921
    %8113 = vmatprep.subr.mxu0 0.0
    %8114 = vmatpush1.msra.mxu0 %v7922
    %8115 = vmatprep.subr.mxu0 0.0
    %8116 = vmatpush1.msra.mxu0 %v7923
    %8117 = vmatprep.subr.mxu0 0.0
    %8118 = vmatpush1.msra.mxu0 %v7924
    %8119 = vmatprep.subr.mxu0 0.0
    %8120 = vmatpush1.msra.mxu0 %v7925
    %8121 = vmatprep.subr.mxu0 0.0
    %8122 = vmatpush1.msra.mxu0 %v7926
    %8123 = vmatprep.subr.mxu0 0.0
    %8124 = vmatpush1.msra.mxu0 %v7927
    %8125 = vmatprep.subr.mxu0 0.0
    %8126 = vmatpush1.msra.mxu0 %v7928
    %8127 = vmatprep.subr.mxu0 0.0
    %8128 = vmatpush1.msra.mxu0 %v7929
    %8129 = vmatprep.subr.mxu0 0.0
    %8130 = vmatpush1.msra.mxu0 %v7930
    %8131 = vmatprep.subr.mxu0 0.0
    %8132 = vmatpush1.msra.mxu0 %v7931
    %8133 = vmatprep.subr.mxu0 0.0
    %8134 = vmatpush1.msra.mxu0 %v7932
    %8135 = vmatprep.subr.mxu0 0.0
    %8136 = vmatpush1.msra.mxu0 %v7933
    %8137 = vmatprep.subr.mxu0 0.0
    %8138 = vmatpush1.msra.mxu0 %v7934
    %8139 = vmatprep.subr.mxu0 0.0
    %8140 = vmatpush1.msra.mxu0 %v7935
    %8141 = vmatprep.subr.mxu0 0.0
    %8142 = vmatpush1.msra.mxu0 %v7936
    %8143 = vmatprep.subr.mxu0 0.0
    %8144 = vmatpush1.msra.mxu0 %v7937
    %8145 = vmatprep.subr.mxu0 0.0
    %8146 = vmatpush1.msra.mxu0 %v7938
    %8147 = vmatprep.subr.mxu0 0.0
    %8148 = vmatpush1.msra.mxu0 %v7939
    %8149 = vmatprep.subr.mxu0 0.0
    %8150 = vmatpush1.msra.mxu0 %v7940
    %8151 = vmatprep.mubr.f32.mxu0 %v7427
    %8152 = vmatmul.mubr.f32.gmra.mrb[0].mxu0 %v7426
    %v8153 = vpop.f32.mrb[0].mxu0
    %v8154 = vadd.f32 %v8079, %v8153
    %v8155 = vpop.f32.mrb[0].mxu0
    %8156 = vmatprep.mubr.f32.mxu0 %v7435
    %8157 = vmatmul.mubr.f32.gmra.mrb[0].mxu0 %v7434
    %v8158 = vpop.f32.mrb[0].mxu0
    %v8159 = vadd.f32 %v8084, %v8158
    %v8160 = vpop.f32.mrb[0].mxu0
    %8161 = vdwg.mxu0
    %8162 = vmatprep.subr.mxu0 0.0
    %8163 = vmatpush1.msra.mxu0 %v7941
    %8164 = vmatprep.subr.mxu0 0.0
    %8165 = vmatpush1.msra.mxu0 %v7942
    %8166 = vmatprep.subr.mxu0 0.0
    %8167 = vmatpush1.msra.mxu0 %v7943
    %8168 = vmatprep.subr.mxu0 0.0
    %8169 = vmatpush1.msra.mxu0 %v7944
    %8170 = vmatprep.subr.mxu0 0.0
    %8171 = vmatpush1.msra.mxu0 %v7945
    %8172 = vmatprep.subr.mxu0 0.0
    %8173 = vmatpush1.msra.mxu0 %v7946
    %8174 = vmatprep.subr.mxu0 0.0
    %8175 = vmatpush1.msra.mxu0 %v7947
    %8176 = vmatprep.subr.mxu0 0.0
    %8177 = vmatpush1.msra.mxu0 %v7948
    %8178 = vmatprep.subr.mxu0 0.0
    %8179 = vmatpush1.msra.mxu0 %v7949
    %8180 = vmatprep.subr.mxu0 0.0
    %8181 = vmatpush1.msra.mxu0 %v7950
    %8182 = vmatprep.subr.mxu0 0.0
    %8183 = vmatpush1.msra.mxu0 %v7951
    %8184 = vmatprep.subr.mxu0 0.0
    %8185 = vmatpush1.msra.mxu0 %v7952
    %8186 = vmatprep.subr.mxu0 0.0
    %8187 = vmatpush1.msra.mxu0 %v7953
    %8188 = vmatprep.subr.mxu0 0.0
    %8189 = vmatpush1.msra.mxu0 %v7954
    %8190 = vmatprep.subr.mxu0 0.0
    %8191 = vmatpush1.msra.mxu0 %v7955
    %8192 = vmatprep.subr.mxu0 0.0
    %8193 = vmatpush1.msra.mxu0 %v7956
    %8194 = vmatprep.subr.mxu0 0.0
    %8195 = vmatpush1.msra.mxu0 %v7957
    %8196 = vmatprep.subr.mxu0 0.0
    %8197 = vmatpush1.msra.mxu0 %v7958
    %8198 = vmatprep.subr.mxu0 0.0
    %8199 = vmatpush1.msra.mxu0 %v7959
    %8200 = vmatprep.subr.mxu0 0.0
    %8201 = vmatpush1.msra.mxu0 %v7960
    %8202 = vmatprep.subr.mxu0 0.0
    %8203 = vmatpush1.msra.mxu0 %v7961
    %8204 = vmatprep.subr.mxu0 0.0
    %8205 = vmatpush1.msra.mxu0 %v7962
    %8206 = vmatprep.subr.mxu0 0.0
    %8207 = vmatpush1.msra.mxu0 %v7963
    %8208 = vmatprep.subr.mxu0 0.0
    %8209 = vmatpush1.msra.mxu0 %v7964
    %8210 = vmatprep.subr.mxu0 0.0
    %8211 = vmatpush1.msra.mxu0 %v7965
    %8212 = vmatprep.subr.mxu0 0.0
    %8213 = vmatpush1.msra.mxu0 %v7966
    %8214 = vmatprep.subr.mxu0 0.0
    %8215 = vmatpush1.msra.mxu0 %v7967
    %8216 = vmatprep.subr.mxu0 0.0
    %8217 = vmatpush1.msra.mxu0 %v7968
    %8218 = vmatprep.subr.mxu0 0.0
    %8219 = vmatpush1.msra.mxu0 %v7969
    %8220 = vmatprep.subr.mxu0 0.0
    %8221 = vmatpush1.msra.mxu0 %v7970
    %8222 = vmatprep.subr.mxu0 0.0
    %8223 = vmatpush1.msra.mxu0 %v7971
    %8224 = vmatprep.subr.mxu0 0.0
    %8225 = vmatpush1.msra.mxu0 %v7972
    %8226 = vmatprep.mubr.f32.mxu0 %v7429
    %8227 = vmatmul.mubr.f32.gmra.mrb[0].mxu0 %v7428
    %v8228 = vpop.f32.mrb[0].mxu0
    %v8229 = vadd.f32 %v8154, %v8228
    %v8230 = vpop.f32.mrb[0].mxu0
    %8231 = vmatprep.mubr.f32.mxu0 %v7437
    %8232 = vmatmul.mubr.f32.gmra.mrb[0].mxu0 %v7436
    %v8233 = vpop.f32.mrb[0].mxu0
    %v8234 = vadd.f32 %v8159, %v8233
    %v8235 = vpop.f32.mrb[0].mxu0
    %8236 = vdwg.mxu0
    %8237 = vmatprep.subr.mxu0 0.0
    %8238 = vmatpush1.msra.mxu0 %v7973
    %8239 = vmatprep.subr.mxu0 0.0
    %8240 = vmatpush1.msra.mxu0 %v7974
    %8241 = vmatprep.subr.mxu0 0.0
    %8242 = vmatpush1.msra.mxu0 %v7975
    %8243 = vmatprep.subr.mxu0 0.0
    %8244 = vmatpush1.msra.mxu0 %v7976
    %8245 = vmatprep.subr.mxu0 0.0
    %8246 = vmatpush1.msra.mxu0 %v7977
    %8247 = vmatprep.subr.mxu0 0.0
    %8248 = vmatpush1.msra.mxu0 %v7978
    %8249 = vmatprep.subr.mxu0 0.0
    %8250 = vmatpush1.msra.mxu0 %v7979
    %8251 = vmatprep.subr.mxu0 0.0
    %8252 = vmatpush1.msra.mxu0 %v7980
    %8253 = vmatprep.subr.mxu0 0.0
    %8254 = vmatpush1.msra.mxu0 %v7981
    %8255 = vmatprep.subr.mxu0 0.0
    %8256 = vmatpush1.msra.mxu0 %v7982
    %8257 = vmatprep.subr.mxu0 0.0
    %8258 = vmatpush1.msra.mxu0 %v7983
    %8259 = vmatprep.subr.mxu0 0.0
    %8260 = vmatpush1.msra.mxu0 %v7984
    %8261 = vmatprep.subr.mxu0 0.0
    %8262 = vmatpush1.msra.mxu0 %v7985
    %8263 = vmatprep.subr.mxu0 0.0
    %8264 = vmatpush1.msra.mxu0 %v7986
    %8265 = vmatprep.subr.mxu0 0.0
    %8266 = vmatpush1.msra.mxu0 %v7987
    %8267 = vmatprep.subr.mxu0 0.0
    %8268 = vmatpush1.msra.mxu0 %v7988
    %8269 = vmatprep.subr.mxu0 0.0
    %8270 = vmatpush1.msra.mxu0 %v7989
    %8271 = vmatprep.subr.mxu0 0.0
    %8272 = vmatpush1.msra.mxu0 %v7990
    %8273 = vmatprep.subr.mxu0 0.0
    %8274 = vmatpush1.msra.mxu0 %v7991
    %8275 = vmatprep.subr.mxu0 0.0
    %8276 = vmatpush1.msra.mxu0 %v7992
    %8277 = vmatprep.subr.mxu0 0.0
    %8278 = vmatpush1.msra.mxu0 %v7993
    %8279 = vmatprep.subr.mxu0 0.0
    %8280 = vmatpush1.msra.mxu0 %v7994
    %8281 = vmatprep.subr.mxu0 0.0
    %8282 = vmatpush1.msra.mxu0 %v7995
    %8283 = vmatprep.subr.mxu0 0.0
    %8284 = vmatpush1.msra.mxu0 %v7996
    %8285 = vmatprep.subr.mxu0 0.0
    %8286 = vmatpush1.msra.mxu0 %v7997
    %8287 = vmatprep.subr.mxu0 0.0
    %8288 = vmatpush1.msra.mxu0 %v7998
    %8289 = vmatprep.subr.mxu0 0.0
    %8290 = vmatpush1.msra.mxu0 %v7999
    %8291 = vmatprep.subr.mxu0 0.0
    %8292 = vmatpush1.msra.mxu0 %v8000
    %8293 = vmatprep.subr.mxu0 0.0
    %8294 = vmatpush1.msra.mxu0 %v8001
    %8295 = vmatprep.subr.mxu0 0.0
    %8296 = vmatpush1.msra.mxu0 %v8002
    %8297 = vmatprep.subr.mxu0 0.0
    %8298 = vmatpush1.msra.mxu0 %v8003
    %8299 = vmatprep.subr.mxu0 0.0
    %8300 = vmatpush1.msra.mxu0 %v8004
    %8301 = vmatprep.mubr.f32.mxu0 %v7431
    %8302 = vmatmul.mubr.f32.gmra.mrb[0].mxu0 %v7430
    %v8303 = vpop.f32.mrb[0].mxu0
    %v8304 = vadd.f32 %v8229, %v8303
    %v8305 = vpop.f32.mrb[0].mxu0
    %8306 = vmatprep.mubr.f32.mxu0 %v7439
    %8307 = vmatmul.mubr.f32.gmra.mrb[0].mxu0 %v7438
    %v8308 = vpop.f32.mrb[0].mxu0
    %v8309 = vadd.f32 %v8234, %v8308
    %v8310 = vpop.f32.mrb[0].mxu0
    %8311 = vdwg.mxu0
    %8312 = vst [vmem:[%s9] sm:$0xff] %v8304
    %8313 = vst [vmem:[%s9 + $0x8] sm:$0xff] %v8309
    // Predicated region
    $region70: #{classifier_forward.1} parent=1 // pred_check
      _
    $region71: #{classifier_forward.1} parent=1 // pred_check_branch
      %8315 = sbr.rel (0) target = $region73
    $region72: #{classifier_forward.1} parent=1 // pred_region
      _
    $region73: #{classifier_forward.1} parent=1 // pred_fallthru
      _
    // Predicated region
    $region74: #{classifier_forward.1} parent=1 // pred_check
      _
    $region75: #{classifier_forward.1} parent=1 // pred_check_branch
      %8317 = sbr.rel (0) target = $region77
    $region76: #{classifier_forward.1} parent=1 // pred_region
      _
    $region77: #{classifier_forward.1} parent=1 // pred_fallthru
      _
    // Predicated region
    $region78: #{classifier_forward.1} parent=1 // pred_check
      _
    $region79: #{classifier_forward.1} parent=1 // pred_check_branch
      %8319 = sbr.rel (0) target = $region81
    $region80: #{classifier_forward.1} parent=1 // pred_region
      _
    $region81: #{classifier_forward.1} parent=1 // pred_fallthru
      _
    // Predicated region
    $region82: #{classifier_forward.1} parent=1 // pred_check
      _
    $region83: #{classifier_forward.1} parent=1 // pred_check_branch
      %8321 = sbr.rel (0) target = $region85
    $region84: #{classifier_forward.1} parent=1 // pred_region
      _
    $region85: #{classifier_forward.1} parent=1 // pred_fallthru
      _
    %8322 = vsyncpa [#allocation3], 1
    %8323 = vsyncpa [#allocation5], 1
    %8324 = vsyncpa [#allocation8], 1
    %8325 = vsyncpa [#allocation11], 1
    %8326 = vsyncpa [#allocation14], 1

</llo_original>
